<compile_context>
chip_gen: v7x
topology: tpu7x:2x2x1
jax: 0.10.0
libtpu: 0.0.40
codegen_flags: <defaults>
</compile_context>

<pallas_src>
import jax
import jax.numpy as jnp
from jax import lax
from jax.experimental import pallas as pl
from jax.experimental.pallas import tpu as pltpu

B, T, F = 2, 8, 30            # batch, tracks per event, features (15 hits + 13 geo + r + pz)
N = B * T                     # flattened track rows
D, K = 32, 4                  # hidden width, # aggregator nodes
C = 2                         # num_classes
NOISE_DIM = 5 * (9 + 2)       # 55  (ln=True branch of the noiser head)
LN_EPS = 1e-5

LANE = 128                    # lane-dense output width
GOOD_COL = 64                 # lanes [GOOD_COL, GOOD_COL+5) of the slab = good-hit flags

_PIO2 = 1.5707963267948966
_PIO4 = 0.7853981633974483


# --------------------------------------------------------------------------- #
# Packed-parameter layout: one (PACK_ROWS, 128) f32 slab, static slices in-kernel
# --------------------------------------------------------------------------- #
def _round8(n):
    return ((n + 7) // 8) * 8


_PARAM_DEFS = (
    ("w_enc",  F, D), ("b_enc",  1, D),
    ("w_att",  F, K), ("b_att",  1, K),
    ("w_out",  D, D), ("b_out",  1, D),
    ("wn1",    D, D), ("bn1",    1, D), ("g1", 1, D), ("be1", 1, D),
    ("wn2",    D, D), ("bn2",    1, D), ("g2", 1, D), ("be2", 1, D),
    ("wn3",    D, LANE), ("bn3", 1, LANE),     # 55 real cols, zero-padded to 128
    ("w_enc2", F, D), ("b_enc2", 1, D),
    ("w_att2", F, 1), ("b_att2", 1, 1),
    ("w_h",    D, D), ("b_h",    1, D),
    ("w_cls",  D, LANE), ("b_cls", 1, LANE),   # C=2 real cols, zero-padded to 128
)

LAYOUT = {}
_row = 0
for _n, _din, _dout in _PARAM_DEFS:
    LAYOUT[_n] = (_row, _din, _dout)
    _row += _round8(_din)
PACK_ROWS = _row              # 432 rows (all blocks 8-row aligned)


# --------------------------------------------------------------------------- #
# Helpers usable both inside the Pallas kernel and in plain JAX
# --------------------------------------------------------------------------- #
def _softplus(v):
    # manual form (exp/log/max/abs only) so kernel and wrapper use the same math
    return jnp.maximum(v, 0.0) + jnp.log(1.0 + jnp.exp(-jnp.abs(v)))


def _atan(x):
    """Cephes-style float32 arctan (|rel err| ~1e-7), built only from ops with
    guaranteed Mosaic lowerings (abs / where / div / mul / add)."""
    ax = jnp.abs(x)
    sgn = jnp.where(x > 0, 1.0, jnp.where(x < 0, -1.0, 0.0))
    big = ax > 2.414213562373095      # tan(3*pi/8)
    mid = ax > 0.4142135623730951     # tan(pi/8)
    y0 = jnp.where(big, _PIO2, jnp.where(mid, _PIO4, 0.0))
    xr = jnp.where(big, -1.0 / jnp.maximum(ax, 1e-30),
                   jnp.where(mid, (ax - 1.0) / (ax + 1.0), ax))
    z = xr * xr
    p = ((((8.05374449538e-2 * z - 1.38776856032e-1) * z
           + 1.99777106478e-1) * z - 3.33329491539e-1) * z * xr + xr)
    return sgn * (y0 + p)


def _acos(x):
    # caller pre-clamps x to [-1+1e-6, 1-1e-6]
    s = jnp.sqrt(jnp.maximum(1.0 - x * x, 1e-12))
    return _PIO2 - _atan(x / s)


# --------------------------------------------------------------------------- #
# The single fused Pallas kernel
# --------------------------------------------------------------------------- #
def _fused_forward_kernel(x_ref, m_ref, s0_ref, s1_ref, w_ref,
                          slab_ref, pred_ref, emb_scr):
    f32, bf16 = jnp.float32, jnp.bfloat16

    x = x_ref[...]            # (N, F)   original features
    m = m_ref[...]            # (N, 1)   0/1 track mask
    s0 = s0_ref[...]          # (N, 15)  gaussian noise, channel 0
    s1 = s1_ref[...]          # (N, 15)  gaussian noise, channel 1
    mpos = m > 0.0            # single mask compare, reused everywhere

    # ---- packed-parameter access (static slices of the single weight slab) ----
    def mat(name):
        r0, din, dout = LAYOUT[name]
        return w_ref[r0:r0 + din, 0:dout].astype(bf16)

    def vec(name):
        r0, _, dout = LAYOUT[name]
        return w_ref[r0:r0 + 1, 0:dout]

    def mm(a, wname, bname):          # bf16 MXU inputs, f32 accumulation
        return (jnp.dot(a.astype(bf16), mat(wname), preferred_element_type=f32)
                + vec(bname))

    def ln(v, gname, bname):          # LayerNorm kept in f32
        mu = jnp.mean(v, axis=-1, keepdims=True)
        var = jnp.mean((v - mu) ** 2, axis=-1, keepdims=True)
        return (v - mu) * lax.rsqrt(var + LN_EPS) * vec(gname) + vec(bname)

    # column extraction / assembly via lane-iota masks (avoids relying on
    # unaligned minor-dim slicing / concatenation support)
    def col(arr, j):
        lane = lax.broadcasted_iota(jnp.int32, (1, arr.shape[1]), 1)
        return jnp.sum(jnp.where(lane == j, arr, 0.0), axis=1, keepdims=True)

    def place_cols(cols, width):
        lane = lax.broadcasted_iota(jnp.int32, (1, width), 1)
        out = jnp.zeros((N, width), f32)
        for j, cj in enumerate(cols):
            if cj is not None:
                out = out + jnp.where(lane == j, cj, 0.0)
        return out

    def masked_softmax_cols(lb, mb):  # softmax over tracks (axis 0) of one event
        lmax = jnp.max(lb, axis=0, keepdims=True)
        p = jnp.exp(lb - lmax) * mb
        denom = jnp.maximum(jnp.sum(p, axis=0, keepdims=True), f32(1e-30))
        return p * pl.reciprocal(denom, approx=True)

    # ================= interpreter: surrogate masked bipartite attention ======
    h_enc = jnp.tanh(mm(x, "w_enc", "b_enc"))                     # (N, D)
    lg = jnp.where(mpos, mm(x, "w_att", "b_att"), f32(-1e30))     # (N, K)

    for b in range(B):                                            # static unroll
        hb = h_enc[b * T:(b + 1) * T]
        lb = lg[b * T:(b + 1) * T]
        mb = m[b * T:(b + 1) * T]
        att = masked_softmax_cols(lb, mb)                         # (T, K)
        agg = lax.dot_general(att, hb, (((0,), (0,)), ((), ())),
                              preferred_element_type=f32)         # (K, D)
        back = jnp.dot(att, agg, preferred_element_type=f32)      # (T, D)
        emb_scr[b * T:(b + 1) * T, :] = hb + back                 # aligned store
    emb = jnp.tanh(mm(emb_scr[...], "w_out", "b_out"))            # (N, D)

    # ================= noiser MLP =============================================
    h1 = jnp.tanh(ln(mm(emb, "wn1", "bn1"), "g1", "be1"))
    h2 = jnp.tanh(ln(mm(h1, "wn2", "bn2"), "g2", "be2"))
    noise = mm(h2, "wn3", "bn3") * m          # (N, 128); lanes >= 55 are zero

    # ================= U / a / e_v (noise -> hit perturbation) ================
    ev_cols = []
    for h in range(5):
        a0 = _softplus(col(noise, 45 + 2 * h))
        a1 = _softplus(col(noise, 46 + 2 * h))
        sa0, sa1 = jnp.sqrt(a0), jnp.sqrt(a1)
        s0h = [col(s0, 3 * h + j) for j in range(3)]
        for i in range(3):
            mv = (col(noise, 9 * h + 3 * i + 0) * s0h[0]
                  + col(noise, 9 * h + 3 * i + 1) * s0h[1]
                  + col(noise, 9 * h + 3 * i + 2) * s0h[2])
            ev_cols.append(sa0 * mv + sa1 * col(s1, 3 * h + i))   # (N, 1)

    # ================= recalculate_geometric_features =========================
    xc = [col(x, j) for j in range(15)]                           # original hits
    goodf = []
    for h in range(5):
        gh = ((xc[3 * h] != 0.0) | (xc[3 * h + 1] != 0.0)
              | (xc[3 * h + 2] != 0.0))
        goodf.append(gh.astype(f32))                              # (N, 1)

    # perturbed hits, zeroed for missing hits
    hx = [(xc[3 * h + 0] + ev_cols[3 * h + 0]) * goodf[h] for h in range(5)]
    hy = [(xc[3 * h + 1] + ev_cols[3 * h + 1]) * goodf[h] for h in range(5)]
    hz = [(xc[3 * h + 2] + ev_cols[3 * h + 2]) * goodf[h] for h in range(5)]

    def dist(i, j):
        return jnp.sqrt((hx[j] - hx[i]) ** 2 + (hy[j] - hy[i]) ** 2
                        + (hz[j] - hz[i]) ** 2)

    # TODO(synk): reproduces the reference quirk `x_hits = hits[...,0]+hits[...,0]==0`
    #             (atan2 of y against a 0/1 indicator, not against x).
    phi = []
    for h in range(5):
        xzero = (hx[h] + hx[h]) == 0.0
        phi.append(jnp.where(xzero, _atan(hy[h]),
                             jnp.where(hy[h] > 0, _PIO2,
                                       jnp.where(hy[h] < 0, -_PIO2, 0.0))))

    # weighted circle fit (normal equations; 0/1 weights reproduce the reference
    # per-n_hit least-squares solve)
    wgt = goodf
    Sxx = sum(wgt[h] * hx[h] * hx[h] for h in range(5))
    Sxy = sum(wgt[h] * hx[h] * hy[h] for h in range(5))
    Sx = sum(wgt[h] * hx[h] for h in range(5))
    Syy = sum(wgt[h] * hy[h] * hy[h] for h in range(5))
    Sy = sum(wgt[h] * hy[h] for h in range(5))
    Sw = sum(wgt[h] for h in range(5))
    tt = [-(hx[h] ** 2 + hy[h] ** 2) for h in range(5)]
    R0 = sum(wgt[h] * hx[h] * tt[h] for h in range(5))
    R1 = sum(wgt[h] * hy[h] * tt[h] for h in range(5))
    R2 = sum(wgt[h] * tt[h] for h in range(5))

    t1 = Syy * Sw - Sy * Sy
    t2 = Sxy * Sw - Sy * Sx
    t3 = Sxy * Sy - Syy * Sx
    det = Sxx * t1 - Sxy * t2 + Sx * t3
    det_scale = (jnp.abs(Sxx) * (jnp.abs(Syy * Sw) + Sy * Sy)
                 + jnp.abs(Sxy) * (jnp.abs(Sxy * Sw) + jnp.abs(Sy * Sx))
                 + jnp.abs(Sx) * (jnp.abs(Sxy * Sy) + jnp.abs(Syy * Sx)))
    valid = (Sw >= 2.5) & (jnp.abs(det) > 1e-6 * det_scale)       # relative test
    inv_det = 1.0 / jnp.where(valid, det, 1.0)
    c0 = (R0 * t1 - Sxy * (R1 * Sw - Sy * R2) + Sx * (R1 * Sy - Syy * R2)) * inv_det
    c1 = (Sxx * (R1 * Sw - Sy * R2) - R0 * t2 + Sx * (Sxy * R2 - R1 * Sx)) * inv_det
    c2 = (Sxx * (Syy * R2 - R1 * Sy) - Sxy * (Sxy * R2 - R1 * Sx) + R0 * t3) * inv_det
    radius = jnp.sqrt(jnp.maximum(c0 * c0 + c1 * c1 - 4.0 * c2, 0.0)) / 200.0
    radius = jnp.where(valid, radius, 0.0)   # use_log_recalculated_radius=False

    # track endpoints (reference argmin/argmax over 5 hits, unrolled selects)
    fx, fy, fz = hx[0], hy[0], hz[0]
    for h in (4, 3, 2, 1, 0):
        g = goodf[h] > 0.5
        fx = jnp.where(g, hx[h], fx)
        fy = jnp.where(g, hy[h], fy)
        fz = jnp.where(g, hz[h], fz)
    lx, ly, lz = hx[4], hy[4], hz[4]
    for h in (0, 1, 2, 3, 4):
        g = goodf[h] > 0.5
        lx = jnp.where(g, hx[h], lx)
        ly = jnp.where(g, hy[h], ly)
        lz = jnp.where(g, hz[h], lz)

    # predicted pz
    dz = (lz - fz) / 100.0
    chord2 = ((lx - fx) ** 2 + (ly - fy) ** 2) / 10000.0
    r2x2 = 2.0 * radius * radius
    inner = (r2x2 - chord2) / (r2x2 + 1e-8)
    lo, hi = -1.0 + 1e-6, 1.0 - 1e-6
    inner = jnp.where(inner <= lo, lo, jnp.where(inner >= hi, hi, inner))
    pred_pz = dz / _acos(inner)

    # Xp = [perturbed hits(15) | geo(13) | radius | pz], then track-mask
    xp_cols = []
    for h in range(5):
        xp_cols += [hx[h], hy[h], hz[h]]
    xp_cols += [dist(0, 1), dist(1, 2), dist(2, 3), dist(3, 4), None, dist(0, 4),
                phi[1] - phi[0], phi[2] - phi[1], phi[3] - phi[2], phi[4] - phi[3],
                None, None, None, radius, pred_pz]
    xp = place_cols(xp_cols, F) * m                               # (N, F)

    # ================= classifier (surrogate masked BA, final pooling) ========
    hc = jnp.tanh(mm(xp, "w_enc2", "b_enc2"))                     # (N, D)
    lg2 = jnp.where(mpos, mm(xp, "w_att2", "b_att2"), f32(-1e30))  # (N, 1)

    rowb = lax.broadcasted_iota(jnp.int32, (B, D), 0)
    pooled = jnp.zeros((B, D), f32)
    for b in range(B):
        att = masked_softmax_cols(lg2[b * T:(b + 1) * T], m[b * T:(b + 1) * T])
        pooled_b = jnp.sum(att * hc[b * T:(b + 1) * T], axis=0, keepdims=True)
        pooled = pooled + jnp.where(rowb == b, pooled_b, 0.0)
    hid = jnp.tanh(mm(pooled, "w_h", "b_h"))                      # (B, D)
    pred_ref[...] = mm(hid, "w_cls", "b_cls")                     # (B, 128); cols >= C are 0

    # ================= lane-dense output slab ==================================
    # lanes [0, 55)   : masked noise (noiser output)
    # lanes [64, 69)  : good-hit flags (0/1 float)
    lane128 = lax.broadcasted_iota(jnp.int32, (1, LANE), 1)
    slab = noise
    for h in range(5):
        slab = slab + jnp.where(lane128 == GOOD_COL + h, goodf[h], 0.0)
    slab_ref[...] = slab


def _make_pallas_forward():
    out_shape = (jax.ShapeDtypeStruct((N, LANE), jnp.float32),
                 jax.ShapeDtypeStruct((B, LANE), jnp.float32))
    in_specs = [
        pl.BlockSpec((N, F), lambda i: (0, 0)),
        pl.BlockSpec((N, 1), lambda i: (0, 0)),
        pl.BlockSpec((N, 15), lambda i: (0, 0)),
        pl.BlockSpec((N, 15), lambda i: (0, 0)),
        pl.BlockSpec((PACK_ROWS, LANE), lambda i: (0, 0)),
    ]
    out_specs = (pl.BlockSpec((N, LANE), lambda i: (0, 0)),
                 pl.BlockSpec((B, LANE), lambda i: (0, 0)))
    return pl.pallas_call(
        _fused_forward_kernel,
        out_shape=out_shape,
        grid=(1,),
        in_specs=in_specs,
        out_specs=out_specs,
        scratch_shapes=[pltpu.VMEM((N, D), jnp.float32)],
        compiler_params=pltpu.CompilerParams(
            dimension_semantics=("arbitrary",)),
    )


# --------------------------------------------------------------------------- #
# Full forward wrapper
# --------------------------------------------------------------------------- #
@jax.jit
def bipartite_attention_forward(X, mask, s, wpack):
    xf = X.reshape(N, F)
    mf = mask.astype(jnp.float32).reshape(N, 1)
    s0 = s[..., 0].reshape(N, 15)
    s1 = s[..., 1].reshape(N, 15)

    slab, pred_pad = _make_pallas_forward()(xf, mf, s0, s1, wpack)

    pred = pred_pad[:, :C]                                          # (B, C)
    noise = slab[:, :NOISE_DIM].reshape(B, T, NOISE_DIM)            # (B, T, 55)
    good_hits_mask = slab[:, GOOD_COL:GOOD_COL + 5].reshape(B, T, 5) > 0.5

    # sigma_v is a module output that must be materialized to HBM anyway;
    # rebuild it from the noise slab with a handful of XLA ops.
    U = noise[..., :45].reshape(B, T, 5, 3, 3)
    a = _softplus(noise[..., 45:]).reshape(B, T, 5, 2)
    I3 = jnp.eye(3, dtype=jnp.float32)
    sigma_v = (a[..., 0:1, None] * jnp.einsum('bthij,bthkj->bthik', U, U)
               + a[..., 1:2, None] * I3)                            # (B, T, 5, 3, 3)
    return pred, sigma_v, good_hits_mask


# --------------------------------------------------------------------------- #
# Deterministic parameter init + packing
# --------------------------------------------------------------------------- #
def make_params(key):
    ks = jax.random.split(key, 10)

    def lin(k, din, dout, scale=0.1):
        return jax.random.normal(k, (din, dout), jnp.float32) * scale

    z = lambda n: jnp.zeros((n,), jnp.float32)
    return {
        "w_enc": lin(ks[0], F, D), "b_enc": z(D),
        "w_att": lin(ks[1], F, K), "b_att": z(K),
        "w_out": lin(ks[2], D, D), "b_out": z(D),
        "wn1": lin(ks[3], D, D), "bn1": z(D),
        "g1": jnp.ones((D,), jnp.float32), "be1": z(D),
        "wn2": lin(ks[4], D, D), "bn2": z(D),
        "g2": jnp.ones((D,), jnp.float32), "be2": z(D),
        "wn3": lin(ks[5], D, NOISE_DIM), "bn3": z(NOISE_DIM),
        "w_enc2": lin(ks[6], F, D), "b_enc2": z(D),
        "w_att2": lin(ks[7], F, 1), "b_att2": z(1),
        "w_h": lin(ks[8], D, D), "b_h": z(D),
        "w_cls": lin(ks[9], D, C), "b_cls": z(C),
    }


def pack_params(params):
    wpack = jnp.zeros((PACK_ROWS, LANE), jnp.float32)
    for name, (r0, _, _) in LAYOUT.items():
        p = jnp.asarray(params[name], jnp.float32)
        if p.ndim == 1:
            p = p[None, :]
        wpack = wpack.at[r0:r0 + p.shape[0], 0:p.shape[1]].set(p)
    return wpack


if __name__ == "__main__":
    key = jax.random.PRNGKey(0)
    k_x, k_s, k_p = jax.random.split(key, 3)

    X = jax.random.normal(k_x, (B, T, F), jnp.float32)
    # zero some hits so n_hits varies over {3, 4, 5}
    hits = X[..., :15].reshape(B, T, 5, 3)
    tids = jnp.arange(T)
    kill4 = (tids % 2 == 1)[None, :, None]
    kill3 = (tids % 4 == 3)[None, :, None]
    hits = hits.at[:, :, 4, :].set(jnp.where(kill4, 0.0, hits[:, :, 4, :]))
    hits = hits.at[:, :, 3, :].set(jnp.where(kill3, 0.0, hits[:, :, 3, :]))
    X = X.at[..., :15].set(hits.reshape(B, T, 15))

    mask = jnp.ones((B, T), jnp.float32).at[:, -1].set(0.0)
    s = jax.random.normal(k_s, (B, T, 5, 3, 2), jnp.float32)

    wpack = pack_params(make_params(k_p))

    pred, sigma_v, good_hits_mask = bipartite_attention_forward(X, mask, s, wpack)
    jax.block_until_ready((pred, sigma_v, good_hits_mask))
    assert pred.shape == (B, C)
    assert sigma_v.shape == (B, T, 5, 3, 3)
    assert good_hits_mask.shape == (B, T, 5)
    assert bool(jnp.all(jnp.isfinite(pred)))
    print("KERNEL_OK")
</pallas_src>

<mosaic_0001>
module attributes {stable_mosaic.version = 11 : i64} {
  func.func @_fused_forward_kernel(%arg0: i32, %arg1: memref<16x30xf32, #tpu.memory_space<vmem>>, %arg2: memref<16x1xf32, #tpu.memory_space<vmem>>, %arg3: memref<16x15xf32, #tpu.memory_space<vmem>>, %arg4: memref<16x15xf32, #tpu.memory_space<vmem>>, %arg5: memref<432x128xf32, #tpu.memory_space<vmem>>, %arg6: memref<16x128xf32, #tpu.memory_space<vmem>>, %arg7: memref<2x128xf32, #tpu.memory_space<vmem>>, %arg8: memref<16x32xf32, #tpu.memory_space<vmem>>) attributes {dimension_semantics = [#tpu.dimension_semantics<arbitrary>], iteration_bounds = array<i64: 1>, scalar_prefetch = 0 : i64, scratch_operands = 1 : i64, tpu.core_type = #tpu.core_type<tc>, window_params = [{pipeline_mode = #tpu.pipeline_mode<synchronous>, transform_indices = @transform_0, window_bounds = array<i64: 16, 30>}, {pipeline_mode = #tpu.pipeline_mode<synchronous>, transform_indices = @transform_1, window_bounds = array<i64: 16, 1>}, {pipeline_mode = #tpu.pipeline_mode<synchronous>, transform_indices = @transform_2, window_bounds = array<i64: 16, 15>}, {pipeline_mode = #tpu.pipeline_mode<synchronous>, transform_indices = @transform_3, window_bounds = array<i64: 16, 15>}, {pipeline_mode = #tpu.pipeline_mode<synchronous>, transform_indices = @transform_4, window_bounds = array<i64: 432, 128>}, {pipeline_mode = #tpu.pipeline_mode<synchronous>, transform_indices = @transform_5, window_bounds = array<i64: 16, 128>}, {pipeline_mode = #tpu.pipeline_mode<synchronous>, transform_indices = @transform_6, window_bounds = array<i64: 2, 128>}]} {
    %c0 = arith.constant 0 : index
    %c0_0 = arith.constant 0 : index
    %0 = vector.load %arg1[%c0, %c0_0] : memref<16x30xf32, #tpu.memory_space<vmem>>, vector<16x30xf32>
    %c0_1 = arith.constant 0 : index
    %c0_2 = arith.constant 0 : index
    %1 = vector.load %arg2[%c0_1, %c0_2] : memref<16x1xf32, #tpu.memory_space<vmem>>, vector<16x1xf32>
    %c0_3 = arith.constant 0 : index
    %c0_4 = arith.constant 0 : index
    %2 = vector.load %arg3[%c0_3, %c0_4] : memref<16x15xf32, #tpu.memory_space<vmem>>, vector<16x15xf32>
    %c0_5 = arith.constant 0 : index
    %c0_6 = arith.constant 0 : index
    %3 = vector.load %arg4[%c0_5, %c0_6] : memref<16x15xf32, #tpu.memory_space<vmem>>, vector<16x15xf32>
    %cst = arith.constant 0.000000e+00 : f32
    %4 = vector.broadcast %cst : f32 to vector<16x1xf32>
    %5 = arith.cmpf ogt, %1, %4 : vector<16x1xf32>
    %6 = arith.truncf %0 : vector<16x30xf32> to vector<16x30xbf16>
    %c0_7 = arith.constant 0 : index
    %c0_8 = arith.constant 0 : index
    %7 = vector.load %arg5[%c0_7, %c0_8] : memref<432x128xf32, #tpu.memory_space<vmem>>, vector<30x32xf32>
    %8 = arith.truncf %7 : vector<30x32xf32> to vector<30x32xbf16>
    %cst_9 = arith.constant dense<0.000000e+00> : vector<16x32xf32>
    %9 = tpu.matmul %6, %8, %cst_9 {dimension_numbers = #tpu.dot_dimension_numbers<[1], [0], [0], [1], [0, 0, 1, 1], [], []>} : vector<16x30xbf16>, vector<30x32xbf16>, vector<16x32xf32> -> vector<16x32xf32>
    %c32 = arith.constant 32 : index
    %c0_10 = arith.constant 0 : index
    %10 = vector.load %arg5[%c32, %c0_10] : memref<432x128xf32, #tpu.memory_space<vmem>>, vector<1x32xf32>
    %11 = vector.broadcast %10 : vector<1x32xf32> to vector<16x32xf32>
    %12 = arith.addf %9, %11 : vector<16x32xf32>
    %13 = math.tanh %12 : vector<16x32xf32>
    %14 = arith.truncf %0 : vector<16x30xf32> to vector<16x30xbf16>
    %c40 = arith.constant 40 : index
    %c0_11 = arith.constant 0 : index
    %15 = vector.load %arg5[%c40, %c0_11] : memref<432x128xf32, #tpu.memory_space<vmem>>, vector<30x4xf32>
    %16 = arith.truncf %15 : vector<30x4xf32> to vector<30x4xbf16>
    %cst_12 = arith.constant dense<0.000000e+00> : vector<16x4xf32>
    %17 = tpu.matmul %14, %16, %cst_12 {dimension_numbers = #tpu.dot_dimension_numbers<[1], [0], [0], [1], [0, 0, 1, 1], [], []>} : vector<16x30xbf16>, vector<30x4xbf16>, vector<16x4xf32> -> vector<16x4xf32>
    %c72 = arith.constant 72 : index
    %c0_13 = arith.constant 0 : index
    %18 = vector.load %arg5[%c72, %c0_13] : memref<432x128xf32, #tpu.memory_space<vmem>>, vector<1x4xf32>
    %19 = vector.broadcast %18 : vector<1x4xf32> to vector<16x4xf32>
    %20 = arith.addf %17, %19 : vector<16x4xf32>
    %cst_14 = arith.constant -1.000000e+30 : f32
    %21 = vector.shape_cast %5 : vector<16x1xi1> to vector<16x1xi1>
    %22 = vector.broadcast %21 : vector<16x1xi1> to vector<16x4xi1>
    %23 = vector.broadcast %cst_14 : f32 to vector<16x4xf32>
    %24 = arith.select %22, %20, %23 : vector<16x4xi1>, vector<16x4xf32>
    %25 = vector.extract_strided_slice %13 {offsets = [0, 0], sizes = [8, 32], strides = [1, 1]} : vector<16x32xf32> to vector<8x32xf32>
    %26 = vector.extract_strided_slice %24 {offsets = [0, 0], sizes = [8, 4], strides = [1, 1]} : vector<16x4xf32> to vector<8x4xf32>
    %27 = vector.extract_strided_slice %1 {offsets = [0, 0], sizes = [8, 1], strides = [1, 1]} : vector<16x1xf32> to vector<8x1xf32>
    %cst_15 = arith.constant dense<0xFF800000> : vector<4xf32>
    %28 = vector.multi_reduction <maximumf>, %26, %cst_15 [0] : vector<8x4xf32> to vector<4xf32>
    %29 = vector.shape_cast %28 : vector<4xf32> to vector<1x4xf32>
    %30 = vector.broadcast %29 : vector<1x4xf32> to vector<8x4xf32>
    %31 = arith.subf %26, %30 : vector<8x4xf32>
    %32 = math.exp %31 : vector<8x4xf32>
    %33 = vector.broadcast %27 : vector<8x1xf32> to vector<8x4xf32>
    %34 = arith.mulf %32, %33 : vector<8x4xf32>
    %cst_16 = arith.constant dense<0.000000e+00> : vector<4xf32>
    %35 = vector.multi_reduction <add>, %34, %cst_16 [0] : vector<8x4xf32> to vector<4xf32>
    %36 = vector.shape_cast %35 : vector<4xf32> to vector<1x4xf32>
    %cst_17 = arith.constant 1.000000e-30 : f32
    %37 = vector.broadcast %cst_17 : f32 to vector<1x4xf32>
    %38 = arith.maximumf %36, %37 : vector<1x4xf32>
    %39 = tpu.reciprocal %38 {approx = true} : vector<1x4xf32> -> vector<1x4xf32>
    %40 = vector.broadcast %39 : vector<1x4xf32> to vector<8x4xf32>
    %41 = arith.mulf %34, %40 : vector<8x4xf32>
    %cst_18 = arith.constant dense<0.000000e+00> : vector<4x32xf32>
    %42 = tpu.matmul %41, %25, %cst_18 {dimension_numbers = #tpu.dot_dimension_numbers<[0], [0], [1], [1], [0, 1, 1, 1], [], []>} : vector<8x4xf32>, vector<8x32xf32>, vector<4x32xf32> -> vector<4x32xf32>
    %cst_19 = arith.constant dense<0.000000e+00> : vector<8x32xf32>
    %43 = tpu.matmul %41, %42, %cst_19 {dimension_numbers = #tpu.dot_dimension_numbers<[1], [0], [0], [1], [0, 0, 1, 1], [], []>} : vector<8x4xf32>, vector<4x32xf32>, vector<8x32xf32> -> vector<8x32xf32>
    %44 = arith.addf %25, %43 : vector<8x32xf32>
    %c0_20 = arith.constant 0 : index
    %c0_21 = arith.constant 0 : index
    %45 = vector.load %arg8[%c0_20, %c0_21] : memref<16x32xf32, #tpu.memory_space<vmem>>, vector<8x32xf32>
    tpu.vector_store %arg8[%c0_20, %c0_21], %44 {strides = array<i32>} : memref<16x32xf32, #tpu.memory_space<vmem>>, vector<8x32xf32>,
    %46 = vector.extract_strided_slice %13 {offsets = [8, 0], sizes = [8, 32], strides = [1, 1]} : vector<16x32xf32> to vector<8x32xf32>
    %47 = vector.extract_strided_slice %24 {offsets = [8, 0], sizes = [8, 4], strides = [1, 1]} : vector<16x4xf32> to vector<8x4xf32>
    %48 = vector.extract_strided_slice %1 {offsets = [8, 0], sizes = [8, 1], strides = [1, 1]} : vector<16x1xf32> to vector<8x1xf32>
    %cst_22 = arith.constant dense<0xFF800000> : vector<4xf32>
    %49 = vector.multi_reduction <maximumf>, %47, %cst_22 [0] : vector<8x4xf32> to vector<4xf32>
    %50 = vector.shape_cast %49 : vector<4xf32> to vector<1x4xf32>
    %51 = vector.broadcast %50 : vector<1x4xf32> to vector<8x4xf32>
    %52 = arith.subf %47, %51 : vector<8x4xf32>
    %53 = math.exp %52 : vector<8x4xf32>
    %54 = vector.broadcast %48 : vector<8x1xf32> to vector<8x4xf32>
    %55 = arith.mulf %53, %54 : vector<8x4xf32>
    %cst_23 = arith.constant dense<0.000000e+00> : vector<4xf32>
    %56 = vector.multi_reduction <add>, %55, %cst_23 [0] : vector<8x4xf32> to vector<4xf32>
    %57 = vector.shape_cast %56 : vector<4xf32> to vector<1x4xf32>
    %cst_24 = arith.constant 1.000000e-30 : f32
    %58 = vector.broadcast %cst_24 : f32 to vector<1x4xf32>
    %59 = arith.maximumf %57, %58 : vector<1x4xf32>
    %60 = tpu.reciprocal %59 {approx = true} : vector<1x4xf32> -> vector<1x4xf32>
    %61 = vector.broadcast %60 : vector<1x4xf32> to vector<8x4xf32>
    %62 = arith.mulf %55, %61 : vector<8x4xf32>
    %cst_25 = arith.constant dense<0.000000e+00> : vector<4x32xf32>
    %63 = tpu.matmul %62, %46, %cst_25 {dimension_numbers = #tpu.dot_dimension_numbers<[0], [0], [1], [1], [0, 1, 1, 1], [], []>} : vector<8x4xf32>, vector<8x32xf32>, vector<4x32xf32> -> vector<4x32xf32>
    %cst_26 = arith.constant dense<0.000000e+00> : vector<8x32xf32>
    %64 = tpu.matmul %62, %63, %cst_26 {dimension_numbers = #tpu.dot_dimension_numbers<[1], [0], [0], [1], [0, 0, 1, 1], [], []>} : vector<8x4xf32>, vector<4x32xf32>, vector<8x32xf32> -> vector<8x32xf32>
    %65 = arith.addf %46, %64 : vector<8x32xf32>
    %c8 = arith.constant 8 : index
    %c0_27 = arith.constant 0 : index
    %66 = vector.load %arg8[%c8, %c0_27] : memref<16x32xf32, #tpu.memory_space<vmem>>, vector<8x32xf32>
    tpu.vector_store %arg8[%c8, %c0_27], %65 {strides = array<i32>} : memref<16x32xf32, #tpu.memory_space<vmem>>, vector<8x32xf32>,
    %c0_28 = arith.constant 0 : index
    %c0_29 = arith.constant 0 : index
    %67 = vector.load %arg8[%c0_28, %c0_29] : memref<16x32xf32, #tpu.memory_space<vmem>>, vector<16x32xf32>
    %68 = arith.truncf %67 : vector<16x32xf32> to vector<16x32xbf16>
    %c80 = arith.constant 80 : index
    %c0_30 = arith.constant 0 : index
    %69 = vector.load %arg5[%c80, %c0_30] : memref<432x128xf32, #tpu.memory_space<vmem>>, vector<32x32xf32>
    %70 = arith.truncf %69 : vector<32x32xf32> to vector<32x32xbf16>
    %cst_31 = arith.constant dense<0.000000e+00> : vector<16x32xf32>
    %71 = tpu.matmul %68, %70, %cst_31 {dimension_numbers = #tpu.dot_dimension_numbers<[1], [0], [0], [1], [0, 0, 1, 1], [], []>} : vector<16x32xbf16>, vector<32x32xbf16>, vector<16x32xf32> -> vector<16x32xf32>
    %c112 = arith.constant 112 : index
    %c0_32 = arith.constant 0 : index
    %72 = vector.load %arg5[%c112, %c0_32] : memref<432x128xf32, #tpu.memory_space<vmem>>, vector<1x32xf32>
    %73 = vector.broadcast %72 : vector<1x32xf32> to vector<16x32xf32>
    %74 = arith.addf %71, %73 : vector<16x32xf32>
    %75 = math.tanh %74 : vector<16x32xf32>
    %76 = arith.truncf %75 : vector<16x32xf32> to vector<16x32xbf16>
    %c120 = arith.constant 120 : index
    %c0_33 = arith.constant 0 : index
    %77 = vector.load %arg5[%c120, %c0_33] : memref<432x128xf32, #tpu.memory_space<vmem>>, vector<32x32xf32>
    %78 = arith.truncf %77 : vector<32x32xf32> to vector<32x32xbf16>
    %cst_34 = arith.constant dense<0.000000e+00> : vector<16x32xf32>
    %79 = tpu.matmul %76, %78, %cst_34 {dimension_numbers = #tpu.dot_dimension_numbers<[1], [0], [0], [1], [0, 0, 1, 1], [], []>} : vector<16x32xbf16>, vector<32x32xbf16>, vector<16x32xf32> -> vector<16x32xf32>
    %c152 = arith.constant 152 : index
    %c0_35 = arith.constant 0 : index
    %80 = vector.load %arg5[%c152, %c0_35] : memref<432x128xf32, #tpu.memory_space<vmem>>, vector<1x32xf32>
    %81 = vector.broadcast %80 : vector<1x32xf32> to vector<16x32xf32>
    %82 = arith.addf %79, %81 : vector<16x32xf32>
    %cst_36 = arith.constant dense<0.000000e+00> : vector<16xf32>
    %83 = vector.multi_reduction <add>, %82, %cst_36 [1] : vector<16x32xf32> to vector<16xf32>
    %84 = vector.shape_cast %83 : vector<16xf32> to vector<16x1xf32>
    %cst_37 = arith.constant 3.200000e+01 : f32
    %85 = vector.broadcast %cst_37 : f32 to vector<16x1xf32>
    %86 = arith.divf %84, %85 : vector<16x1xf32>
    %87 = vector.broadcast %86 : vector<16x1xf32> to vector<16x32xf32>
    %88 = arith.subf %82, %87 : vector<16x32xf32>
    %89 = arith.mulf %88, %88 : vector<16x32xf32>
    %cst_38 = arith.constant dense<0.000000e+00> : vector<16xf32>
    %90 = vector.multi_reduction <add>, %89, %cst_38 [1] : vector<16x32xf32> to vector<16xf32>
    %91 = vector.shape_cast %90 : vector<16xf32> to vector<16x1xf32>
    %cst_39 = arith.constant 3.200000e+01 : f32
    %92 = vector.broadcast %cst_39 : f32 to vector<16x1xf32>
    %93 = arith.divf %91, %92 : vector<16x1xf32>
    %94 = vector.broadcast %86 : vector<16x1xf32> to vector<16x32xf32>
    %95 = arith.subf %82, %94 : vector<16x32xf32>
    %cst_40 = arith.constant 9.99999974E-6 : f32
    %96 = vector.broadcast %cst_40 : f32 to vector<16x1xf32>
    %97 = arith.addf %93, %96 : vector<16x1xf32>
    %98 = math.rsqrt %97 : vector<16x1xf32>
    %99 = vector.broadcast %98 : vector<16x1xf32> to vector<16x32xf32>
    %100 = arith.mulf %95, %99 : vector<16x32xf32>
    %c160 = arith.constant 160 : index
    %c0_41 = arith.constant 0 : index
    %101 = vector.load %arg5[%c160, %c0_41] : memref<432x128xf32, #tpu.memory_space<vmem>>, vector<1x32xf32>
    %102 = vector.broadcast %101 : vector<1x32xf32> to vector<16x32xf32>
    %103 = arith.mulf %100, %102 : vector<16x32xf32>
    %c168 = arith.constant 168 : index
    %c0_42 = arith.constant 0 : index
    %104 = vector.load %arg5[%c168, %c0_42] : memref<432x128xf32, #tpu.memory_space<vmem>>, vector<1x32xf32>
    %105 = vector.broadcast %104 : vector<1x32xf32> to vector<16x32xf32>
    %106 = arith.addf %103, %105 : vector<16x32xf32>
    %107 = math.tanh %106 : vector<16x32xf32>
    %108 = arith.truncf %107 : vector<16x32xf32> to vector<16x32xbf16>
    %c176 = arith.constant 176 : index
    %c0_43 = arith.constant 0 : index
    %109 = vector.load %arg5[%c176, %c0_43] : memref<432x128xf32, #tpu.memory_space<vmem>>, vector<32x32xf32>
    %110 = arith.truncf %109 : vector<32x32xf32> to vector<32x32xbf16>
    %cst_44 = arith.constant dense<0.000000e+00> : vector<16x32xf32>
    %111 = tpu.matmul %108, %110, %cst_44 {dimension_numbers = #tpu.dot_dimension_numbers<[1], [0], [0], [1], [0, 0, 1, 1], [], []>} : vector<16x32xbf16>, vector<32x32xbf16>, vector<16x32xf32> -> vector<16x32xf32>
    %c208 = arith.constant 208 : index
    %c0_45 = arith.constant 0 : index
    %112 = vector.load %arg5[%c208, %c0_45] : memref<432x128xf32, #tpu.memory_space<vmem>>, vector<1x32xf32>
    %113 = vector.broadcast %112 : vector<1x32xf32> to vector<16x32xf32>
    %114 = arith.addf %111, %113 : vector<16x32xf32>
    %cst_46 = arith.constant dense<0.000000e+00> : vector<16xf32>
    %115 = vector.multi_reduction <add>, %114, %cst_46 [1] : vector<16x32xf32> to vector<16xf32>
    %116 = vector.shape_cast %115 : vector<16xf32> to vector<16x1xf32>
    %cst_47 = arith.constant 3.200000e+01 : f32
    %117 = vector.broadcast %cst_47 : f32 to vector<16x1xf32>
    %118 = arith.divf %116, %117 : vector<16x1xf32>
    %119 = vector.broadcast %118 : vector<16x1xf32> to vector<16x32xf32>
    %120 = arith.subf %114, %119 : vector<16x32xf32>
    %121 = arith.mulf %120, %120 : vector<16x32xf32>
    %cst_48 = arith.constant dense<0.000000e+00> : vector<16xf32>
    %122 = vector.multi_reduction <add>, %121, %cst_48 [1] : vector<16x32xf32> to vector<16xf32>
    %123 = vector.shape_cast %122 : vector<16xf32> to vector<16x1xf32>
    %cst_49 = arith.constant 3.200000e+01 : f32
    %124 = vector.broadcast %cst_49 : f32 to vector<16x1xf32>
    %125 = arith.divf %123, %124 : vector<16x1xf32>
    %126 = vector.broadcast %118 : vector<16x1xf32> to vector<16x32xf32>
    %127 = arith.subf %114, %126 : vector<16x32xf32>
    %cst_50 = arith.constant 9.99999974E-6 : f32
    %128 = vector.broadcast %cst_50 : f32 to vector<16x1xf32>
    %129 = arith.addf %125, %128 : vector<16x1xf32>
    %130 = math.rsqrt %129 : vector<16x1xf32>
    %131 = vector.broadcast %130 : vector<16x1xf32> to vector<16x32xf32>
    %132 = arith.mulf %127, %131 : vector<16x32xf32>
    %c216 = arith.constant 216 : index
    %c0_51 = arith.constant 0 : index
    %133 = vector.load %arg5[%c216, %c0_51] : memref<432x128xf32, #tpu.memory_space<vmem>>, vector<1x32xf32>
    %134 = vector.broadcast %133 : vector<1x32xf32> to vector<16x32xf32>
    %135 = arith.mulf %132, %134 : vector<16x32xf32>
    %c224 = arith.constant 224 : index
    %c0_52 = arith.constant 0 : index
    %136 = vector.load %arg5[%c224, %c0_52] : memref<432x128xf32, #tpu.memory_space<vmem>>, vector<1x32xf32>
    %137 = vector.broadcast %136 : vector<1x32xf32> to vector<16x32xf32>
    %138 = arith.addf %135, %137 : vector<16x32xf32>
    %139 = math.tanh %138 : vector<16x32xf32>
    %140 = arith.truncf %139 : vector<16x32xf32> to vector<16x32xbf16>
    %c232 = arith.constant 232 : index
    %c0_53 = arith.constant 0 : index
    %141 = vector.load %arg5[%c232, %c0_53] : memref<432x128xf32, #tpu.memory_space<vmem>>, vector<32x128xf32>
    %142 = arith.truncf %141 : vector<32x128xf32> to vector<32x128xbf16>
    %cst_54 = arith.constant dense<0.000000e+00> : vector<16x128xf32>
    %143 = tpu.matmul %140, %142, %cst_54 {dimension_numbers = #tpu.dot_dimension_numbers<[1], [0], [0], [1], [0, 0, 1, 1], [], []>} : vector<16x32xbf16>, vector<32x128xbf16>, vector<16x128xf32> -> vector<16x128xf32>
    %c264 = arith.constant 264 : index
    %c0_55 = arith.constant 0 : index
    %144 = vector.load %arg5[%c264, %c0_55] : memref<432x128xf32, #tpu.memory_space<vmem>>, vector<1x128xf32>
    %145 = vector.broadcast %144 : vector<1x128xf32> to vector<16x128xf32>
    %146 = arith.addf %143, %145 : vector<16x128xf32>
    %147 = vector.broadcast %1 : vector<16x1xf32> to vector<16x128xf32>
    %148 = arith.mulf %146, %147 : vector<16x128xf32>
    %149 = tpu.iota {dimensions = array<i32: 1>} : vector<1x128xi32>
    %c45_i32 = arith.constant 45 : i32
    %150 = vector.broadcast %c45_i32 : i32 to vector<1x128xi32>
    %151 = arith.cmpi eq, %149, %150 : vector<1x128xi32>
    %cst_56 = arith.constant 0.000000e+00 : f32
    %152 = vector.shape_cast %151 : vector<1x128xi1> to vector<1x128xi1>
    %153 = vector.broadcast %152 : vector<1x128xi1> to vector<16x128xi1>
    %154 = vector.broadcast %cst_56 : f32 to vector<16x128xf32>
    %155 = arith.select %153, %148, %154 : vector<16x128xi1>, vector<16x128xf32>
    %cst_57 = arith.constant dense<0.000000e+00> : vector<16xf32>
    %156 = vector.multi_reduction <add>, %155, %cst_57 [1] : vector<16x128xf32> to vector<16xf32>
    %157 = vector.shape_cast %156 : vector<16xf32> to vector<16x1xf32>
    %cst_58 = arith.constant 0.000000e+00 : f32
    %158 = vector.broadcast %cst_58 : f32 to vector<16x1xf32>
    %159 = arith.maximumf %157, %158 : vector<16x1xf32>
    %160 = math.absf %157 : vector<16x1xf32>
    %cst_59 = arith.constant 0.000000e+00 : f32
    %161 = vector.broadcast %cst_59 : f32 to vector<16x1xf32>
    %162 = arith.subf %161, %160 : vector<16x1xf32>
    %163 = math.exp %162 : vector<16x1xf32>
    %cst_60 = arith.constant 1.000000e+00 : f32
    %164 = vector.broadcast %cst_60 : f32 to vector<16x1xf32>
    %165 = arith.addf %164, %163 : vector<16x1xf32>
    %166 = math.log %165 : vector<16x1xf32>
    %167 = arith.addf %159, %166 : vector<16x1xf32>
    %168 = tpu.iota {dimensions = array<i32: 1>} : vector<1x128xi32>
    %c46_i32 = arith.constant 46 : i32
    %169 = vector.broadcast %c46_i32 : i32 to vector<1x128xi32>
    %170 = arith.cmpi eq, %168, %169 : vector<1x128xi32>
    %cst_61 = arith.constant 0.000000e+00 : f32
    %171 = vector.shape_cast %170 : vector<1x128xi1> to vector<1x128xi1>
    %172 = vector.broadcast %171 : vector<1x128xi1> to vector<16x128xi1>
    %173 = vector.broadcast %cst_61 : f32 to vector<16x128xf32>
    %174 = arith.select %172, %148, %173 : vector<16x128xi1>, vector<16x128xf32>
    %cst_62 = arith.constant dense<0.000000e+00> : vector<16xf32>
    %175 = vector.multi_reduction <add>, %174, %cst_62 [1] : vector<16x128xf32> to vector<16xf32>
    %176 = vector.shape_cast %175 : vector<16xf32> to vector<16x1xf32>
    %cst_63 = arith.constant 0.000000e+00 : f32
    %177 = vector.broadcast %cst_63 : f32 to vector<16x1xf32>
    %178 = arith.maximumf %176, %177 : vector<16x1xf32>
    %179 = math.absf %176 : vector<16x1xf32>
    %cst_64 = arith.constant 0.000000e+00 : f32
    %180 = vector.broadcast %cst_64 : f32 to vector<16x1xf32>
    %181 = arith.subf %180, %179 : vector<16x1xf32>
    %182 = math.exp %181 : vector<16x1xf32>
    %cst_65 = arith.constant 1.000000e+00 : f32
    %183 = vector.broadcast %cst_65 : f32 to vector<16x1xf32>
    %184 = arith.addf %183, %182 : vector<16x1xf32>
    %185 = math.log %184 : vector<16x1xf32>
    %186 = arith.addf %178, %185 : vector<16x1xf32>
    %187 = math.sqrt %167 : vector<16x1xf32>
    %188 = math.sqrt %186 : vector<16x1xf32>
    %189 = tpu.iota {dimensions = array<i32: 1>} : vector<1x15xi32>
    %c0_i32 = arith.constant 0 : i32
    %190 = vector.broadcast %c0_i32 : i32 to vector<1x15xi32>
    %191 = arith.cmpi eq, %189, %190 : vector<1x15xi32>
    %cst_66 = arith.constant 0.000000e+00 : f32
    %192 = vector.shape_cast %191 : vector<1x15xi1> to vector<1x15xi1>
    %193 = vector.broadcast %192 : vector<1x15xi1> to vector<16x15xi1>
    %194 = vector.broadcast %cst_66 : f32 to vector<16x15xf32>
    %195 = arith.select %193, %2, %194 : vector<16x15xi1>, vector<16x15xf32>
    %cst_67 = arith.constant dense<0.000000e+00> : vector<16xf32>
    %196 = vector.multi_reduction <add>, %195, %cst_67 [1] : vector<16x15xf32> to vector<16xf32>
    %197 = vector.shape_cast %196 : vector<16xf32> to vector<16x1xf32>
    %198 = tpu.iota {dimensions = array<i32: 1>} : vector<1x15xi32>
    %c1_i32 = arith.constant 1 : i32
    %199 = vector.broadcast %c1_i32 : i32 to vector<1x15xi32>
    %200 = arith.cmpi eq, %198, %199 : vector<1x15xi32>
    %cst_68 = arith.constant 0.000000e+00 : f32
    %201 = vector.shape_cast %200 : vector<1x15xi1> to vector<1x15xi1>
    %202 = vector.broadcast %201 : vector<1x15xi1> to vector<16x15xi1>
    %203 = vector.broadcast %cst_68 : f32 to vector<16x15xf32>
    %204 = arith.select %202, %2, %203 : vector<16x15xi1>, vector<16x15xf32>
    %cst_69 = arith.constant dense<0.000000e+00> : vector<16xf32>
    %205 = vector.multi_reduction <add>, %204, %cst_69 [1] : vector<16x15xf32> to vector<16xf32>
    %206 = vector.shape_cast %205 : vector<16xf32> to vector<16x1xf32>
    %207 = tpu.iota {dimensions = array<i32: 1>} : vector<1x15xi32>
    %c2_i32 = arith.constant 2 : i32
    %208 = vector.broadcast %c2_i32 : i32 to vector<1x15xi32>
    %209 = arith.cmpi eq, %207, %208 : vector<1x15xi32>
    %cst_70 = arith.constant 0.000000e+00 : f32
    %210 = vector.shape_cast %209 : vector<1x15xi1> to vector<1x15xi1>
    %211 = vector.broadcast %210 : vector<1x15xi1> to vector<16x15xi1>
    %212 = vector.broadcast %cst_70 : f32 to vector<16x15xf32>
    %213 = arith.select %211, %2, %212 : vector<16x15xi1>, vector<16x15xf32>
    %cst_71 = arith.constant dense<0.000000e+00> : vector<16xf32>
    %214 = vector.multi_reduction <add>, %213, %cst_71 [1] : vector<16x15xf32> to vector<16xf32>
    %215 = vector.shape_cast %214 : vector<16xf32> to vector<16x1xf32>
    %216 = tpu.iota {dimensions = array<i32: 1>} : vector<1x128xi32>
    %c0_i32_72 = arith.constant 0 : i32
    %217 = vector.broadcast %c0_i32_72 : i32 to vector<1x128xi32>
    %218 = arith.cmpi eq, %216, %217 : vector<1x128xi32>
    %cst_73 = arith.constant 0.000000e+00 : f32
    %219 = vector.shape_cast %218 : vector<1x128xi1> to vector<1x128xi1>
    %220 = vector.broadcast %219 : vector<1x128xi1> to vector<16x128xi1>
    %221 = vector.broadcast %cst_73 : f32 to vector<16x128xf32>
    %222 = arith.select %220, %148, %221 : vector<16x128xi1>, vector<16x128xf32>
    %cst_74 = arith.constant dense<0.000000e+00> : vector<16xf32>
    %223 = vector.multi_reduction <add>, %222, %cst_74 [1] : vector<16x128xf32> to vector<16xf32>
    %224 = vector.shape_cast %223 : vector<16xf32> to vector<16x1xf32>
    %225 = arith.mulf %224, %197 : vector<16x1xf32>
    %226 = tpu.iota {dimensions = array<i32: 1>} : vector<1x128xi32>
    %c1_i32_75 = arith.constant 1 : i32
    %227 = vector.broadcast %c1_i32_75 : i32 to vector<1x128xi32>
    %228 = arith.cmpi eq, %226, %227 : vector<1x128xi32>
    %cst_76 = arith.constant 0.000000e+00 : f32
    %229 = vector.shape_cast %228 : vector<1x128xi1> to vector<1x128xi1>
    %230 = vector.broadcast %229 : vector<1x128xi1> to vector<16x128xi1>
    %231 = vector.broadcast %cst_76 : f32 to vector<16x128xf32>
    %232 = arith.select %230, %148, %231 : vector<16x128xi1>, vector<16x128xf32>
    %cst_77 = arith.constant dense<0.000000e+00> : vector<16xf32>
    %233 = vector.multi_reduction <add>, %232, %cst_77 [1] : vector<16x128xf32> to vector<16xf32>
    %234 = vector.shape_cast %233 : vector<16xf32> to vector<16x1xf32>
    %235 = arith.mulf %234, %206 : vector<16x1xf32>
    %236 = arith.addf %225, %235 : vector<16x1xf32>
    %237 = tpu.iota {dimensions = array<i32: 1>} : vector<1x128xi32>
    %c2_i32_78 = arith.constant 2 : i32
    %238 = vector.broadcast %c2_i32_78 : i32 to vector<1x128xi32>
    %239 = arith.cmpi eq, %237, %238 : vector<1x128xi32>
    %cst_79 = arith.constant 0.000000e+00 : f32
    %240 = vector.shape_cast %239 : vector<1x128xi1> to vector<1x128xi1>
    %241 = vector.broadcast %240 : vector<1x128xi1> to vector<16x128xi1>
    %242 = vector.broadcast %cst_79 : f32 to vector<16x128xf32>
    %243 = arith.select %241, %148, %242 : vector<16x128xi1>, vector<16x128xf32>
    %cst_80 = arith.constant dense<0.000000e+00> : vector<16xf32>
    %244 = vector.multi_reduction <add>, %243, %cst_80 [1] : vector<16x128xf32> to vector<16xf32>
    %245 = vector.shape_cast %244 : vector<16xf32> to vector<16x1xf32>
    %246 = arith.mulf %245, %215 : vector<16x1xf32>
    %247 = arith.addf %236, %246 : vector<16x1xf32>
    %248 = arith.mulf %187, %247 : vector<16x1xf32>
    %249 = tpu.iota {dimensions = array<i32: 1>} : vector<1x15xi32>
    %c0_i32_81 = arith.constant 0 : i32
    %250 = vector.broadcast %c0_i32_81 : i32 to vector<1x15xi32>
    %251 = arith.cmpi eq, %249, %250 : vector<1x15xi32>
    %cst_82 = arith.constant 0.000000e+00 : f32
    %252 = vector.shape_cast %251 : vector<1x15xi1> to vector<1x15xi1>
    %253 = vector.broadcast %252 : vector<1x15xi1> to vector<16x15xi1>
    %254 = vector.broadcast %cst_82 : f32 to vector<16x15xf32>
    %255 = arith.select %253, %3, %254 : vector<16x15xi1>, vector<16x15xf32>
    %cst_83 = arith.constant dense<0.000000e+00> : vector<16xf32>
    %256 = vector.multi_reduction <add>, %255, %cst_83 [1] : vector<16x15xf32> to vector<16xf32>
    %257 = vector.shape_cast %256 : vector<16xf32> to vector<16x1xf32>
    %258 = arith.mulf %188, %257 : vector<16x1xf32>
    %259 = arith.addf %248, %258 : vector<16x1xf32>
    %260 = tpu.iota {dimensions = array<i32: 1>} : vector<1x128xi32>
    %c3_i32 = arith.constant 3 : i32
    %261 = vector.broadcast %c3_i32 : i32 to vector<1x128xi32>
    %262 = arith.cmpi eq, %260, %261 : vector<1x128xi32>
    %cst_84 = arith.constant 0.000000e+00 : f32
    %263 = vector.shape_cast %262 : vector<1x128xi1> to vector<1x128xi1>
    %264 = vector.broadcast %263 : vector<1x128xi1> to vector<16x128xi1>
    %265 = vector.broadcast %cst_84 : f32 to vector<16x128xf32>
    %266 = arith.select %264, %148, %265 : vector<16x128xi1>, vector<16x128xf32>
    %cst_85 = arith.constant dense<0.000000e+00> : vector<16xf32>
    %267 = vector.multi_reduction <add>, %266, %cst_85 [1] : vector<16x128xf32> to vector<16xf32>
    %268 = vector.shape_cast %267 : vector<16xf32> to vector<16x1xf32>
    %269 = arith.mulf %268, %197 : vector<16x1xf32>
    %270 = tpu.iota {dimensions = array<i32: 1>} : vector<1x128xi32>
    %c4_i32 = arith.constant 4 : i32
    %271 = vector.broadcast %c4_i32 : i32 to vector<1x128xi32>
    %272 = arith.cmpi eq, %270, %271 : vector<1x128xi32>
    %cst_86 = arith.constant 0.000000e+00 : f32
    %273 = vector.shape_cast %272 : vector<1x128xi1> to vector<1x128xi1>
    %274 = vector.broadcast %273 : vector<1x128xi1> to vector<16x128xi1>
    %275 = vector.broadcast %cst_86 : f32 to vector<16x128xf32>
    %276 = arith.select %274, %148, %275 : vector<16x128xi1>, vector<16x128xf32>
    %cst_87 = arith.constant dense<0.000000e+00> : vector<16xf32>
    %277 = vector.multi_reduction <add>, %276, %cst_87 [1] : vector<16x128xf32> to vector<16xf32>
    %278 = vector.shape_cast %277 : vector<16xf32> to vector<16x1xf32>
    %279 = arith.mulf %278, %206 : vector<16x1xf32>
    %280 = arith.addf %269, %279 : vector<16x1xf32>
    %281 = tpu.iota {dimensions = array<i32: 1>} : vector<1x128xi32>
    %c5_i32 = arith.constant 5 : i32
    %282 = vector.broadcast %c5_i32 : i32 to vector<1x128xi32>
    %283 = arith.cmpi eq, %281, %282 : vector<1x128xi32>
    %cst_88 = arith.constant 0.000000e+00 : f32
    %284 = vector.shape_cast %283 : vector<1x128xi1> to vector<1x128xi1>
    %285 = vector.broadcast %284 : vector<1x128xi1> to vector<16x128xi1>
    %286 = vector.broadcast %cst_88 : f32 to vector<16x128xf32>
    %287 = arith.select %285, %148, %286 : vector<16x128xi1>, vector<16x128xf32>
    %cst_89 = arith.constant dense<0.000000e+00> : vector<16xf32>
    %288 = vector.multi_reduction <add>, %287, %cst_89 [1] : vector<16x128xf32> to vector<16xf32>
    %289 = vector.shape_cast %288 : vector<16xf32> to vector<16x1xf32>
    %290 = arith.mulf %289, %215 : vector<16x1xf32>
    %291 = arith.addf %280, %290 : vector<16x1xf32>
    %292 = arith.mulf %187, %291 : vector<16x1xf32>
    %293 = tpu.iota {dimensions = array<i32: 1>} : vector<1x15xi32>
    %c1_i32_90 = arith.constant 1 : i32
    %294 = vector.broadcast %c1_i32_90 : i32 to vector<1x15xi32>
    %295 = arith.cmpi eq, %293, %294 : vector<1x15xi32>
    %cst_91 = arith.constant 0.000000e+00 : f32
    %296 = vector.shape_cast %295 : vector<1x15xi1> to vector<1x15xi1>
    %297 = vector.broadcast %296 : vector<1x15xi1> to vector<16x15xi1>
    %298 = vector.broadcast %cst_91 : f32 to vector<16x15xf32>
    %299 = arith.select %297, %3, %298 : vector<16x15xi1>, vector<16x15xf32>
    %cst_92 = arith.constant dense<0.000000e+00> : vector<16xf32>
    %300 = vector.multi_reduction <add>, %299, %cst_92 [1] : vector<16x15xf32> to vector<16xf32>
    %301 = vector.shape_cast %300 : vector<16xf32> to vector<16x1xf32>
    %302 = arith.mulf %188, %301 : vector<16x1xf32>
    %303 = arith.addf %292, %302 : vector<16x1xf32>
    %304 = tpu.iota {dimensions = array<i32: 1>} : vector<1x128xi32>
    %c6_i32 = arith.constant 6 : i32
    %305 = vector.broadcast %c6_i32 : i32 to vector<1x128xi32>
    %306 = arith.cmpi eq, %304, %305 : vector<1x128xi32>
    %cst_93 = arith.constant 0.000000e+00 : f32
    %307 = vector.shape_cast %306 : vector<1x128xi1> to vector<1x128xi1>
    %308 = vector.broadcast %307 : vector<1x128xi1> to vector<16x128xi1>
    %309 = vector.broadcast %cst_93 : f32 to vector<16x128xf32>
    %310 = arith.select %308, %148, %309 : vector<16x128xi1>, vector<16x128xf32>
    %cst_94 = arith.constant dense<0.000000e+00> : vector<16xf32>
    %311 = vector.multi_reduction <add>, %310, %cst_94 [1] : vector<16x128xf32> to vector<16xf32>
    %312 = vector.shape_cast %311 : vector<16xf32> to vector<16x1xf32>
    %313 = arith.mulf %312, %197 : vector<16x1xf32>
    %314 = tpu.iota {dimensions = array<i32: 1>} : vector<1x128xi32>
    %c7_i32 = arith.constant 7 : i32
    %315 = vector.broadcast %c7_i32 : i32 to vector<1x128xi32>
    %316 = arith.cmpi eq, %314, %315 : vector<1x128xi32>
    %cst_95 = arith.constant 0.000000e+00 : f32
    %317 = vector.shape_cast %316 : vector<1x128xi1> to vector<1x128xi1>
    %318 = vector.broadcast %317 : vector<1x128xi1> to vector<16x128xi1>
    %319 = vector.broadcast %cst_95 : f32 to vector<16x128xf32>
    %320 = arith.select %318, %148, %319 : vector<16x128xi1>, vector<16x128xf32>
    %cst_96 = arith.constant dense<0.000000e+00> : vector<16xf32>
    %321 = vector.multi_reduction <add>, %320, %cst_96 [1] : vector<16x128xf32> to vector<16xf32>
    %322 = vector.shape_cast %321 : vector<16xf32> to vector<16x1xf32>
    %323 = arith.mulf %322, %206 : vector<16x1xf32>
    %324 = arith.addf %313, %323 : vector<16x1xf32>
    %325 = tpu.iota {dimensions = array<i32: 1>} : vector<1x128xi32>
    %c8_i32 = arith.constant 8 : i32
    %326 = vector.broadcast %c8_i32 : i32 to vector<1x128xi32>
    %327 = arith.cmpi eq, %325, %326 : vector<1x128xi32>
    %cst_97 = arith.constant 0.000000e+00 : f32
    %328 = vector.shape_cast %327 : vector<1x128xi1> to vector<1x128xi1>
    %329 = vector.broadcast %328 : vector<1x128xi1> to vector<16x128xi1>
    %330 = vector.broadcast %cst_97 : f32 to vector<16x128xf32>
    %331 = arith.select %329, %148, %330 : vector<16x128xi1>, vector<16x128xf32>
    %cst_98 = arith.constant dense<0.000000e+00> : vector<16xf32>
    %332 = vector.multi_reduction <add>, %331, %cst_98 [1] : vector<16x128xf32> to vector<16xf32>
    %333 = vector.shape_cast %332 : vector<16xf32> to vector<16x1xf32>
    %334 = arith.mulf %333, %215 : vector<16x1xf32>
    %335 = arith.addf %324, %334 : vector<16x1xf32>
    %336 = arith.mulf %187, %335 : vector<16x1xf32>
    %337 = tpu.iota {dimensions = array<i32: 1>} : vector<1x15xi32>
    %c2_i32_99 = arith.constant 2 : i32
    %338 = vector.broadcast %c2_i32_99 : i32 to vector<1x15xi32>
    %339 = arith.cmpi eq, %337, %338 : vector<1x15xi32>
    %cst_100 = arith.constant 0.000000e+00 : f32
    %340 = vector.shape_cast %339 : vector<1x15xi1> to vector<1x15xi1>
    %341 = vector.broadcast %340 : vector<1x15xi1> to vector<16x15xi1>
    %342 = vector.broadcast %cst_100 : f32 to vector<16x15xf32>
    %343 = arith.select %341, %3, %342 : vector<16x15xi1>, vector<16x15xf32>
    %cst_101 = arith.constant dense<0.000000e+00> : vector<16xf32>
    %344 = vector.multi_reduction <add>, %343, %cst_101 [1] : vector<16x15xf32> to vector<16xf32>
    %345 = vector.shape_cast %344 : vector<16xf32> to vector<16x1xf32>
    %346 = arith.mulf %188, %345 : vector<16x1xf32>
    %347 = arith.addf %336, %346 : vector<16x1xf32>
    %348 = tpu.iota {dimensions = array<i32: 1>} : vector<1x128xi32>
    %c47_i32 = arith.constant 47 : i32
    %349 = vector.broadcast %c47_i32 : i32 to vector<1x128xi32>
    %350 = arith.cmpi eq, %348, %349 : vector<1x128xi32>
    %cst_102 = arith.constant 0.000000e+00 : f32
    %351 = vector.shape_cast %350 : vector<1x128xi1> to vector<1x128xi1>
    %352 = vector.broadcast %351 : vector<1x128xi1> to vector<16x128xi1>
    %353 = vector.broadcast %cst_102 : f32 to vector<16x128xf32>
    %354 = arith.select %352, %148, %353 : vector<16x128xi1>, vector<16x128xf32>
    %cst_103 = arith.constant dense<0.000000e+00> : vector<16xf32>
    %355 = vector.multi_reduction <add>, %354, %cst_103 [1] : vector<16x128xf32> to vector<16xf32>
    %356 = vector.shape_cast %355 : vector<16xf32> to vector<16x1xf32>
    %cst_104 = arith.constant 0.000000e+00 : f32
    %357 = vector.broadcast %cst_104 : f32 to vector<16x1xf32>
    %358 = arith.maximumf %356, %357 : vector<16x1xf32>
    %359 = math.absf %356 : vector<16x1xf32>
    %cst_105 = arith.constant 0.000000e+00 : f32
    %360 = vector.broadcast %cst_105 : f32 to vector<16x1xf32>
    %361 = arith.subf %360, %359 : vector<16x1xf32>
    %362 = math.exp %361 : vector<16x1xf32>
    %cst_106 = arith.constant 1.000000e+00 : f32
    %363 = vector.broadcast %cst_106 : f32 to vector<16x1xf32>
    %364 = arith.addf %363, %362 : vector<16x1xf32>
    %365 = math.log %364 : vector<16x1xf32>
    %366 = arith.addf %358, %365 : vector<16x1xf32>
    %367 = tpu.iota {dimensions = array<i32: 1>} : vector<1x128xi32>
    %c48_i32 = arith.constant 48 : i32
    %368 = vector.broadcast %c48_i32 : i32 to vector<1x128xi32>
    %369 = arith.cmpi eq, %367, %368 : vector<1x128xi32>
    %cst_107 = arith.constant 0.000000e+00 : f32
    %370 = vector.shape_cast %369 : vector<1x128xi1> to vector<1x128xi1>
    %371 = vector.broadcast %370 : vector<1x128xi1> to vector<16x128xi1>
    %372 = vector.broadcast %cst_107 : f32 to vector<16x128xf32>
    %373 = arith.select %371, %148, %372 : vector<16x128xi1>, vector<16x128xf32>
    %cst_108 = arith.constant dense<0.000000e+00> : vector<16xf32>
    %374 = vector.multi_reduction <add>, %373, %cst_108 [1] : vector<16x128xf32> to vector<16xf32>
    %375 = vector.shape_cast %374 : vector<16xf32> to vector<16x1xf32>
    %cst_109 = arith.constant 0.000000e+00 : f32
    %376 = vector.broadcast %cst_109 : f32 to vector<16x1xf32>
    %377 = arith.maximumf %375, %376 : vector<16x1xf32>
    %378 = math.absf %375 : vector<16x1xf32>
    %cst_110 = arith.constant 0.000000e+00 : f32
    %379 = vector.broadcast %cst_110 : f32 to vector<16x1xf32>
    %380 = arith.subf %379, %378 : vector<16x1xf32>
    %381 = math.exp %380 : vector<16x1xf32>
    %cst_111 = arith.constant 1.000000e+00 : f32
    %382 = vector.broadcast %cst_111 : f32 to vector<16x1xf32>
    %383 = arith.addf %382, %381 : vector<16x1xf32>
    %384 = math.log %383 : vector<16x1xf32>
    %385 = arith.addf %377, %384 : vector<16x1xf32>
    %386 = math.sqrt %366 : vector<16x1xf32>
    %387 = math.sqrt %385 : vector<16x1xf32>
    %388 = tpu.iota {dimensions = array<i32: 1>} : vector<1x15xi32>
    %c3_i32_112 = arith.constant 3 : i32
    %389 = vector.broadcast %c3_i32_112 : i32 to vector<1x15xi32>
    %390 = arith.cmpi eq, %388, %389 : vector<1x15xi32>
    %cst_113 = arith.constant 0.000000e+00 : f32
    %391 = vector.shape_cast %390 : vector<1x15xi1> to vector<1x15xi1>
    %392 = vector.broadcast %391 : vector<1x15xi1> to vector<16x15xi1>
    %393 = vector.broadcast %cst_113 : f32 to vector<16x15xf32>
    %394 = arith.select %392, %2, %393 : vector<16x15xi1>, vector<16x15xf32>
    %cst_114 = arith.constant dense<0.000000e+00> : vector<16xf32>
    %395 = vector.multi_reduction <add>, %394, %cst_114 [1] : vector<16x15xf32> to vector<16xf32>
    %396 = vector.shape_cast %395 : vector<16xf32> to vector<16x1xf32>
    %397 = tpu.iota {dimensions = array<i32: 1>} : vector<1x15xi32>
    %c4_i32_115 = arith.constant 4 : i32
    %398 = vector.broadcast %c4_i32_115 : i32 to vector<1x15xi32>
    %399 = arith.cmpi eq, %397, %398 : vector<1x15xi32>
    %cst_116 = arith.constant 0.000000e+00 : f32
    %400 = vector.shape_cast %399 : vector<1x15xi1> to vector<1x15xi1>
    %401 = vector.broadcast %400 : vector<1x15xi1> to vector<16x15xi1>
    %402 = vector.broadcast %cst_116 : f32 to vector<16x15xf32>
    %403 = arith.select %401, %2, %402 : vector<16x15xi1>, vector<16x15xf32>
    %cst_117 = arith.constant dense<0.000000e+00> : vector<16xf32>
    %404 = vector.multi_reduction <add>, %403, %cst_117 [1] : vector<16x15xf32> to vector<16xf32>
    %405 = vector.shape_cast %404 : vector<16xf32> to vector<16x1xf32>
    %406 = tpu.iota {dimensions = array<i32: 1>} : vector<1x15xi32>
    %c5_i32_118 = arith.constant 5 : i32
    %407 = vector.broadcast %c5_i32_118 : i32 to vector<1x15xi32>
    %408 = arith.cmpi eq, %406, %407 : vector<1x15xi32>
    %cst_119 = arith.constant 0.000000e+00 : f32
    %409 = vector.shape_cast %408 : vector<1x15xi1> to vector<1x15xi1>
    %410 = vector.broadcast %409 : vector<1x15xi1> to vector<16x15xi1>
    %411 = vector.broadcast %cst_119 : f32 to vector<16x15xf32>
    %412 = arith.select %410, %2, %411 : vector<16x15xi1>, vector<16x15xf32>
    %cst_120 = arith.constant dense<0.000000e+00> : vector<16xf32>
    %413 = vector.multi_reduction <add>, %412, %cst_120 [1] : vector<16x15xf32> to vector<16xf32>
    %414 = vector.shape_cast %413 : vector<16xf32> to vector<16x1xf32>
    %415 = tpu.iota {dimensions = array<i32: 1>} : vector<1x128xi32>
    %c9_i32 = arith.constant 9 : i32
    %416 = vector.broadcast %c9_i32 : i32 to vector<1x128xi32>
    %417 = arith.cmpi eq, %415, %416 : vector<1x128xi32>
    %cst_121 = arith.constant 0.000000e+00 : f32
    %418 = vector.shape_cast %417 : vector<1x128xi1> to vector<1x128xi1>
    %419 = vector.broadcast %418 : vector<1x128xi1> to vector<16x128xi1>
    %420 = vector.broadcast %cst_121 : f32 to vector<16x128xf32>
    %421 = arith.select %419, %148, %420 : vector<16x128xi1>, vector<16x128xf32>
    %cst_122 = arith.constant dense<0.000000e+00> : vector<16xf32>
    %422 = vector.multi_reduction <add>, %421, %cst_122 [1] : vector<16x128xf32> to vector<16xf32>
    %423 = vector.shape_cast %422 : vector<16xf32> to vector<16x1xf32>
    %424 = arith.mulf %423, %396 : vector<16x1xf32>
    %425 = tpu.iota {dimensions = array<i32: 1>} : vector<1x128xi32>
    %c10_i32 = arith.constant 10 : i32
    %426 = vector.broadcast %c10_i32 : i32 to vector<1x128xi32>
    %427 = arith.cmpi eq, %425, %426 : vector<1x128xi32>
    %cst_123 = arith.constant 0.000000e+00 : f32
    %428 = vector.shape_cast %427 : vector<1x128xi1> to vector<1x128xi1>
    %429 = vector.broadcast %428 : vector<1x128xi1> to vector<16x128xi1>
    %430 = vector.broadcast %cst_123 : f32 to vector<16x128xf32>
    %431 = arith.select %429, %148, %430 : vector<16x128xi1>, vector<16x128xf32>
    %cst_124 = arith.constant dense<0.000000e+00> : vector<16xf32>
    %432 = vector.multi_reduction <add>, %431, %cst_124 [1] : vector<16x128xf32> to vector<16xf32>
    %433 = vector.shape_cast %432 : vector<16xf32> to vector<16x1xf32>
    %434 = arith.mulf %433, %405 : vector<16x1xf32>
    %435 = arith.addf %424, %434 : vector<16x1xf32>
    %436 = tpu.iota {dimensions = array<i32: 1>} : vector<1x128xi32>
    %c11_i32 = arith.constant 11 : i32
    %437 = vector.broadcast %c11_i32 : i32 to vector<1x128xi32>
    %438 = arith.cmpi eq, %436, %437 : vector<1x128xi32>
    %cst_125 = arith.constant 0.000000e+00 : f32
    %439 = vector.shape_cast %438 : vector<1x128xi1> to vector<1x128xi1>
    %440 = vector.broadcast %439 : vector<1x128xi1> to vector<16x128xi1>
    %441 = vector.broadcast %cst_125 : f32 to vector<16x128xf32>
    %442 = arith.select %440, %148, %441 : vector<16x128xi1>, vector<16x128xf32>
    %cst_126 = arith.constant dense<0.000000e+00> : vector<16xf32>
    %443 = vector.multi_reduction <add>, %442, %cst_126 [1] : vector<16x128xf32> to vector<16xf32>
    %444 = vector.shape_cast %443 : vector<16xf32> to vector<16x1xf32>
    %445 = arith.mulf %444, %414 : vector<16x1xf32>
    %446 = arith.addf %435, %445 : vector<16x1xf32>
    %447 = arith.mulf %386, %446 : vector<16x1xf32>
    %448 = tpu.iota {dimensions = array<i32: 1>} : vector<1x15xi32>
    %c3_i32_127 = arith.constant 3 : i32
    %449 = vector.broadcast %c3_i32_127 : i32 to vector<1x15xi32>
    %450 = arith.cmpi eq, %448, %449 : vector<1x15xi32>
    %cst_128 = arith.constant 0.000000e+00 : f32
    %451 = vector.shape_cast %450 : vector<1x15xi1> to vector<1x15xi1>
    %452 = vector.broadcast %451 : vector<1x15xi1> to vector<16x15xi1>
    %453 = vector.broadcast %cst_128 : f32 to vector<16x15xf32>
    %454 = arith.select %452, %3, %453 : vector<16x15xi1>, vector<16x15xf32>
    %cst_129 = arith.constant dense<0.000000e+00> : vector<16xf32>
    %455 = vector.multi_reduction <add>, %454, %cst_129 [1] : vector<16x15xf32> to vector<16xf32>
    %456 = vector.shape_cast %455 : vector<16xf32> to vector<16x1xf32>
    %457 = arith.mulf %387, %456 : vector<16x1xf32>
    %458 = arith.addf %447, %457 : vector<16x1xf32>
    %459 = tpu.iota {dimensions = array<i32: 1>} : vector<1x128xi32>
    %c12_i32 = arith.constant 12 : i32
    %460 = vector.broadcast %c12_i32 : i32 to vector<1x128xi32>
    %461 = arith.cmpi eq, %459, %460 : vector<1x128xi32>
    %cst_130 = arith.constant 0.000000e+00 : f32
    %462 = vector.shape_cast %461 : vector<1x128xi1> to vector<1x128xi1>
    %463 = vector.broadcast %462 : vector<1x128xi1> to vector<16x128xi1>
    %464 = vector.broadcast %cst_130 : f32 to vector<16x128xf32>
    %465 = arith.select %463, %148, %464 : vector<16x128xi1>, vector<16x128xf32>
    %cst_131 = arith.constant dense<0.000000e+00> : vector<16xf32>
    %466 = vector.multi_reduction <add>, %465, %cst_131 [1] : vector<16x128xf32> to vector<16xf32>
    %467 = vector.shape_cast %466 : vector<16xf32> to vector<16x1xf32>
    %468 = arith.mulf %467, %396 : vector<16x1xf32>
    %469 = tpu.iota {dimensions = array<i32: 1>} : vector<1x128xi32>
    %c13_i32 = arith.constant 13 : i32
    %470 = vector.broadcast %c13_i32 : i32 to vector<1x128xi32>
    %471 = arith.cmpi eq, %469, %470 : vector<1x128xi32>
    %cst_132 = arith.constant 0.000000e+00 : f32
    %472 = vector.shape_cast %471 : vector<1x128xi1> to vector<1x128xi1>
    %473 = vector.broadcast %472 : vector<1x128xi1> to vector<16x128xi1>
    %474 = vector.broadcast %cst_132 : f32 to vector<16x128xf32>
    %475 = arith.select %473, %148, %474 : vector<16x128xi1>, vector<16x128xf32>
    %cst_133 = arith.constant dense<0.000000e+00> : vector<16xf32>
    %476 = vector.multi_reduction <add>, %475, %cst_133 [1] : vector<16x128xf32> to vector<16xf32>
    %477 = vector.shape_cast %476 : vector<16xf32> to vector<16x1xf32>
    %478 = arith.mulf %477, %405 : vector<16x1xf32>
    %479 = arith.addf %468, %478 : vector<16x1xf32>
    %480 = tpu.iota {dimensions = array<i32: 1>} : vector<1x128xi32>
    %c14_i32 = arith.constant 14 : i32
    %481 = vector.broadcast %c14_i32 : i32 to vector<1x128xi32>
    %482 = arith.cmpi eq, %480, %481 : vector<1x128xi32>
    %cst_134 = arith.constant 0.000000e+00 : f32
    %483 = vector.shape_cast %482 : vector<1x128xi1> to vector<1x128xi1>
    %484 = vector.broadcast %483 : vector<1x128xi1> to vector<16x128xi1>
    %485 = vector.broadcast %cst_134 : f32 to vector<16x128xf32>
    %486 = arith.select %484, %148, %485 : vector<16x128xi1>, vector<16x128xf32>
    %cst_135 = arith.constant dense<0.000000e+00> : vector<16xf32>
    %487 = vector.multi_reduction <add>, %486, %cst_135 [1] : vector<16x128xf32> to vector<16xf32>
    %488 = vector.shape_cast %487 : vector<16xf32> to vector<16x1xf32>
    %489 = arith.mulf %488, %414 : vector<16x1xf32>
    %490 = arith.addf %479, %489 : vector<16x1xf32>
    %491 = arith.mulf %386, %490 : vector<16x1xf32>
    %492 = tpu.iota {dimensions = array<i32: 1>} : vector<1x15xi32>
    %c4_i32_136 = arith.constant 4 : i32
    %493 = vector.broadcast %c4_i32_136 : i32 to vector<1x15xi32>
    %494 = arith.cmpi eq, %492, %493 : vector<1x15xi32>
    %cst_137 = arith.constant 0.000000e+00 : f32
    %495 = vector.shape_cast %494 : vector<1x15xi1> to vector<1x15xi1>
    %496 = vector.broadcast %495 : vector<1x15xi1> to vector<16x15xi1>
    %497 = vector.broadcast %cst_137 : f32 to vector<16x15xf32>
    %498 = arith.select %496, %3, %497 : vector<16x15xi1>, vector<16x15xf32>
    %cst_138 = arith.constant dense<0.000000e+00> : vector<16xf32>
    %499 = vector.multi_reduction <add>, %498, %cst_138 [1] : vector<16x15xf32> to vector<16xf32>
    %500 = vector.shape_cast %499 : vector<16xf32> to vector<16x1xf32>
    %501 = arith.mulf %387, %500 : vector<16x1xf32>
    %502 = arith.addf %491, %501 : vector<16x1xf32>
    %503 = tpu.iota {dimensions = array<i32: 1>} : vector<1x128xi32>
    %c15_i32 = arith.constant 15 : i32
    %504 = vector.broadcast %c15_i32 : i32 to vector<1x128xi32>
    %505 = arith.cmpi eq, %503, %504 : vector<1x128xi32>
    %cst_139 = arith.constant 0.000000e+00 : f32
    %506 = vector.shape_cast %505 : vector<1x128xi1> to vector<1x128xi1>
    %507 = vector.broadcast %506 : vector<1x128xi1> to vector<16x128xi1>
    %508 = vector.broadcast %cst_139 : f32 to vector<16x128xf32>
    %509 = arith.select %507, %148, %508 : vector<16x128xi1>, vector<16x128xf32>
    %cst_140 = arith.constant dense<0.000000e+00> : vector<16xf32>
    %510 = vector.multi_reduction <add>, %509, %cst_140 [1] : vector<16x128xf32> to vector<16xf32>
    %511 = vector.shape_cast %510 : vector<16xf32> to vector<16x1xf32>
    %512 = arith.mulf %511, %396 : vector<16x1xf32>
    %513 = tpu.iota {dimensions = array<i32: 1>} : vector<1x128xi32>
    %c16_i32 = arith.constant 16 : i32
    %514 = vector.broadcast %c16_i32 : i32 to vector<1x128xi32>
    %515 = arith.cmpi eq, %513, %514 : vector<1x128xi32>
    %cst_141 = arith.constant 0.000000e+00 : f32
    %516 = vector.shape_cast %515 : vector<1x128xi1> to vector<1x128xi1>
    %517 = vector.broadcast %516 : vector<1x128xi1> to vector<16x128xi1>
    %518 = vector.broadcast %cst_141 : f32 to vector<16x128xf32>
    %519 = arith.select %517, %148, %518 : vector<16x128xi1>, vector<16x128xf32>
    %cst_142 = arith.constant dense<0.000000e+00> : vector<16xf32>
    %520 = vector.multi_reduction <add>, %519, %cst_142 [1] : vector<16x128xf32> to vector<16xf32>
    %521 = vector.shape_cast %520 : vector<16xf32> to vector<16x1xf32>
    %522 = arith.mulf %521, %405 : vector<16x1xf32>
    %523 = arith.addf %512, %522 : vector<16x1xf32>
    %524 = tpu.iota {dimensions = array<i32: 1>} : vector<1x128xi32>
    %c17_i32 = arith.constant 17 : i32
    %525 = vector.broadcast %c17_i32 : i32 to vector<1x128xi32>
    %526 = arith.cmpi eq, %524, %525 : vector<1x128xi32>
    %cst_143 = arith.constant 0.000000e+00 : f32
    %527 = vector.shape_cast %526 : vector<1x128xi1> to vector<1x128xi1>
    %528 = vector.broadcast %527 : vector<1x128xi1> to vector<16x128xi1>
    %529 = vector.broadcast %cst_143 : f32 to vector<16x128xf32>
    %530 = arith.select %528, %148, %529 : vector<16x128xi1>, vector<16x128xf32>
    %cst_144 = arith.constant dense<0.000000e+00> : vector<16xf32>
    %531 = vector.multi_reduction <add>, %530, %cst_144 [1] : vector<16x128xf32> to vector<16xf32>
    %532 = vector.shape_cast %531 : vector<16xf32> to vector<16x1xf32>
    %533 = arith.mulf %532, %414 : vector<16x1xf32>
    %534 = arith.addf %523, %533 : vector<16x1xf32>
    %535 = arith.mulf %386, %534 : vector<16x1xf32>
    %536 = tpu.iota {dimensions = array<i32: 1>} : vector<1x15xi32>
    %c5_i32_145 = arith.constant 5 : i32
    %537 = vector.broadcast %c5_i32_145 : i32 to vector<1x15xi32>
    %538 = arith.cmpi eq, %536, %537 : vector<1x15xi32>
    %cst_146 = arith.constant 0.000000e+00 : f32
    %539 = vector.shape_cast %538 : vector<1x15xi1> to vector<1x15xi1>
    %540 = vector.broadcast %539 : vector<1x15xi1> to vector<16x15xi1>
    %541 = vector.broadcast %cst_146 : f32 to vector<16x15xf32>
    %542 = arith.select %540, %3, %541 : vector<16x15xi1>, vector<16x15xf32>
    %cst_147 = arith.constant dense<0.000000e+00> : vector<16xf32>
    %543 = vector.multi_reduction <add>, %542, %cst_147 [1] : vector<16x15xf32> to vector<16xf32>
    %544 = vector.shape_cast %543 : vector<16xf32> to vector<16x1xf32>
    %545 = arith.mulf %387, %544 : vector<16x1xf32>
    %546 = arith.addf %535, %545 : vector<16x1xf32>
    %547 = tpu.iota {dimensions = array<i32: 1>} : vector<1x128xi32>
    %c49_i32 = arith.constant 49 : i32
    %548 = vector.broadcast %c49_i32 : i32 to vector<1x128xi32>
    %549 = arith.cmpi eq, %547, %548 : vector<1x128xi32>
    %cst_148 = arith.constant 0.000000e+00 : f32
    %550 = vector.shape_cast %549 : vector<1x128xi1> to vector<1x128xi1>
    %551 = vector.broadcast %550 : vector<1x128xi1> to vector<16x128xi1>
    %552 = vector.broadcast %cst_148 : f32 to vector<16x128xf32>
    %553 = arith.select %551, %148, %552 : vector<16x128xi1>, vector<16x128xf32>
    %cst_149 = arith.constant dense<0.000000e+00> : vector<16xf32>
    %554 = vector.multi_reduction <add>, %553, %cst_149 [1] : vector<16x128xf32> to vector<16xf32>
    %555 = vector.shape_cast %554 : vector<16xf32> to vector<16x1xf32>
    %cst_150 = arith.constant 0.000000e+00 : f32
    %556 = vector.broadcast %cst_150 : f32 to vector<16x1xf32>
    %557 = arith.maximumf %555, %556 : vector<16x1xf32>
    %558 = math.absf %555 : vector<16x1xf32>
    %cst_151 = arith.constant 0.000000e+00 : f32
    %559 = vector.broadcast %cst_151 : f32 to vector<16x1xf32>
    %560 = arith.subf %559, %558 : vector<16x1xf32>
    %561 = math.exp %560 : vector<16x1xf32>
    %cst_152 = arith.constant 1.000000e+00 : f32
    %562 = vector.broadcast %cst_152 : f32 to vector<16x1xf32>
    %563 = arith.addf %562, %561 : vector<16x1xf32>
    %564 = math.log %563 : vector<16x1xf32>
    %565 = arith.addf %557, %564 : vector<16x1xf32>
    %566 = tpu.iota {dimensions = array<i32: 1>} : vector<1x128xi32>
    %c50_i32 = arith.constant 50 : i32
    %567 = vector.broadcast %c50_i32 : i32 to vector<1x128xi32>
    %568 = arith.cmpi eq, %566, %567 : vector<1x128xi32>
    %cst_153 = arith.constant 0.000000e+00 : f32
    %569 = vector.shape_cast %568 : vector<1x128xi1> to vector<1x128xi1>
    %570 = vector.broadcast %569 : vector<1x128xi1> to vector<16x128xi1>
    %571 = vector.broadcast %cst_153 : f32 to vector<16x128xf32>
    %572 = arith.select %570, %148, %571 : vector<16x128xi1>, vector<16x128xf32>
    %cst_154 = arith.constant dense<0.000000e+00> : vector<16xf32>
    %573 = vector.multi_reduction <add>, %572, %cst_154 [1] : vector<16x128xf32> to vector<16xf32>
    %574 = vector.shape_cast %573 : vector<16xf32> to vector<16x1xf32>
    %cst_155 = arith.constant 0.000000e+00 : f32
    %575 = vector.broadcast %cst_155 : f32 to vector<16x1xf32>
    %576 = arith.maximumf %574, %575 : vector<16x1xf32>
    %577 = math.absf %574 : vector<16x1xf32>
    %cst_156 = arith.constant 0.000000e+00 : f32
    %578 = vector.broadcast %cst_156 : f32 to vector<16x1xf32>
    %579 = arith.subf %578, %577 : vector<16x1xf32>
    %580 = math.exp %579 : vector<16x1xf32>
    %cst_157 = arith.constant 1.000000e+00 : f32
    %581 = vector.broadcast %cst_157 : f32 to vector<16x1xf32>
    %582 = arith.addf %581, %580 : vector<16x1xf32>
    %583 = math.log %582 : vector<16x1xf32>
    %584 = arith.addf %576, %583 : vector<16x1xf32>
    %585 = math.sqrt %565 : vector<16x1xf32>
    %586 = math.sqrt %584 : vector<16x1xf32>
    %587 = tpu.iota {dimensions = array<i32: 1>} : vector<1x15xi32>
    %c6_i32_158 = arith.constant 6 : i32
    %588 = vector.broadcast %c6_i32_158 : i32 to vector<1x15xi32>
    %589 = arith.cmpi eq, %587, %588 : vector<1x15xi32>
    %cst_159 = arith.constant 0.000000e+00 : f32
    %590 = vector.shape_cast %589 : vector<1x15xi1> to vector<1x15xi1>
    %591 = vector.broadcast %590 : vector<1x15xi1> to vector<16x15xi1>
    %592 = vector.broadcast %cst_159 : f32 to vector<16x15xf32>
    %593 = arith.select %591, %2, %592 : vector<16x15xi1>, vector<16x15xf32>
    %cst_160 = arith.constant dense<0.000000e+00> : vector<16xf32>
    %594 = vector.multi_reduction <add>, %593, %cst_160 [1] : vector<16x15xf32> to vector<16xf32>
    %595 = vector.shape_cast %594 : vector<16xf32> to vector<16x1xf32>
    %596 = tpu.iota {dimensions = array<i32: 1>} : vector<1x15xi32>
    %c7_i32_161 = arith.constant 7 : i32
    %597 = vector.broadcast %c7_i32_161 : i32 to vector<1x15xi32>
    %598 = arith.cmpi eq, %596, %597 : vector<1x15xi32>
    %cst_162 = arith.constant 0.000000e+00 : f32
    %599 = vector.shape_cast %598 : vector<1x15xi1> to vector<1x15xi1>
    %600 = vector.broadcast %599 : vector<1x15xi1> to vector<16x15xi1>
    %601 = vector.broadcast %cst_162 : f32 to vector<16x15xf32>
    %602 = arith.select %600, %2, %601 : vector<16x15xi1>, vector<16x15xf32>
    %cst_163 = arith.constant dense<0.000000e+00> : vector<16xf32>
    %603 = vector.multi_reduction <add>, %602, %cst_163 [1] : vector<16x15xf32> to vector<16xf32>
    %604 = vector.shape_cast %603 : vector<16xf32> to vector<16x1xf32>
    %605 = tpu.iota {dimensions = array<i32: 1>} : vector<1x15xi32>
    %c8_i32_164 = arith.constant 8 : i32
    %606 = vector.broadcast %c8_i32_164 : i32 to vector<1x15xi32>
    %607 = arith.cmpi eq, %605, %606 : vector<1x15xi32>
    %cst_165 = arith.constant 0.000000e+00 : f32
    %608 = vector.shape_cast %607 : vector<1x15xi1> to vector<1x15xi1>
    %609 = vector.broadcast %608 : vector<1x15xi1> to vector<16x15xi1>
    %610 = vector.broadcast %cst_165 : f32 to vector<16x15xf32>
    %611 = arith.select %609, %2, %610 : vector<16x15xi1>, vector<16x15xf32>
    %cst_166 = arith.constant dense<0.000000e+00> : vector<16xf32>
    %612 = vector.multi_reduction <add>, %611, %cst_166 [1] : vector<16x15xf32> to vector<16xf32>
    %613 = vector.shape_cast %612 : vector<16xf32> to vector<16x1xf32>
    %614 = tpu.iota {dimensions = array<i32: 1>} : vector<1x128xi32>
    %c18_i32 = arith.constant 18 : i32
    %615 = vector.broadcast %c18_i32 : i32 to vector<1x128xi32>
    %616 = arith.cmpi eq, %614, %615 : vector<1x128xi32>
    %cst_167 = arith.constant 0.000000e+00 : f32
    %617 = vector.shape_cast %616 : vector<1x128xi1> to vector<1x128xi1>
    %618 = vector.broadcast %617 : vector<1x128xi1> to vector<16x128xi1>
    %619 = vector.broadcast %cst_167 : f32 to vector<16x128xf32>
    %620 = arith.select %618, %148, %619 : vector<16x128xi1>, vector<16x128xf32>
    %cst_168 = arith.constant dense<0.000000e+00> : vector<16xf32>
    %621 = vector.multi_reduction <add>, %620, %cst_168 [1] : vector<16x128xf32> to vector<16xf32>
    %622 = vector.shape_cast %621 : vector<16xf32> to vector<16x1xf32>
    %623 = arith.mulf %622, %595 : vector<16x1xf32>
    %624 = tpu.iota {dimensions = array<i32: 1>} : vector<1x128xi32>
    %c19_i32 = arith.constant 19 : i32
    %625 = vector.broadcast %c19_i32 : i32 to vector<1x128xi32>
    %626 = arith.cmpi eq, %624, %625 : vector<1x128xi32>
    %cst_169 = arith.constant 0.000000e+00 : f32
    %627 = vector.shape_cast %626 : vector<1x128xi1> to vector<1x128xi1>
    %628 = vector.broadcast %627 : vector<1x128xi1> to vector<16x128xi1>
    %629 = vector.broadcast %cst_169 : f32 to vector<16x128xf32>
    %630 = arith.select %628, %148, %629 : vector<16x128xi1>, vector<16x128xf32>
    %cst_170 = arith.constant dense<0.000000e+00> : vector<16xf32>
    %631 = vector.multi_reduction <add>, %630, %cst_170 [1] : vector<16x128xf32> to vector<16xf32>
    %632 = vector.shape_cast %631 : vector<16xf32> to vector<16x1xf32>
    %633 = arith.mulf %632, %604 : vector<16x1xf32>
    %634 = arith.addf %623, %633 : vector<16x1xf32>
    %635 = tpu.iota {dimensions = array<i32: 1>} : vector<1x128xi32>
    %c20_i32 = arith.constant 20 : i32
    %636 = vector.broadcast %c20_i32 : i32 to vector<1x128xi32>
    %637 = arith.cmpi eq, %635, %636 : vector<1x128xi32>
    %cst_171 = arith.constant 0.000000e+00 : f32
    %638 = vector.shape_cast %637 : vector<1x128xi1> to vector<1x128xi1>
    %639 = vector.broadcast %638 : vector<1x128xi1> to vector<16x128xi1>
    %640 = vector.broadcast %cst_171 : f32 to vector<16x128xf32>
    %641 = arith.select %639, %148, %640 : vector<16x128xi1>, vector<16x128xf32>
    %cst_172 = arith.constant dense<0.000000e+00> : vector<16xf32>
    %642 = vector.multi_reduction <add>, %641, %cst_172 [1] : vector<16x128xf32> to vector<16xf32>
    %643 = vector.shape_cast %642 : vector<16xf32> to vector<16x1xf32>
    %644 = arith.mulf %643, %613 : vector<16x1xf32>
    %645 = arith.addf %634, %644 : vector<16x1xf32>
    %646 = arith.mulf %585, %645 : vector<16x1xf32>
    %647 = tpu.iota {dimensions = array<i32: 1>} : vector<1x15xi32>
    %c6_i32_173 = arith.constant 6 : i32
    %648 = vector.broadcast %c6_i32_173 : i32 to vector<1x15xi32>
    %649 = arith.cmpi eq, %647, %648 : vector<1x15xi32>
    %cst_174 = arith.constant 0.000000e+00 : f32
    %650 = vector.shape_cast %649 : vector<1x15xi1> to vector<1x15xi1>
    %651 = vector.broadcast %650 : vector<1x15xi1> to vector<16x15xi1>
    %652 = vector.broadcast %cst_174 : f32 to vector<16x15xf32>
    %653 = arith.select %651, %3, %652 : vector<16x15xi1>, vector<16x15xf32>
    %cst_175 = arith.constant dense<0.000000e+00> : vector<16xf32>
    %654 = vector.multi_reduction <add>, %653, %cst_175 [1] : vector<16x15xf32> to vector<16xf32>
    %655 = vector.shape_cast %654 : vector<16xf32> to vector<16x1xf32>
    %656 = arith.mulf %586, %655 : vector<16x1xf32>
    %657 = arith.addf %646, %656 : vector<16x1xf32>
    %658 = tpu.iota {dimensions = array<i32: 1>} : vector<1x128xi32>
    %c21_i32 = arith.constant 21 : i32
    %659 = vector.broadcast %c21_i32 : i32 to vector<1x128xi32>
    %660 = arith.cmpi eq, %658, %659 : vector<1x128xi32>
    %cst_176 = arith.constant 0.000000e+00 : f32
    %661 = vector.shape_cast %660 : vector<1x128xi1> to vector<1x128xi1>
    %662 = vector.broadcast %661 : vector<1x128xi1> to vector<16x128xi1>
    %663 = vector.broadcast %cst_176 : f32 to vector<16x128xf32>
    %664 = arith.select %662, %148, %663 : vector<16x128xi1>, vector<16x128xf32>
    %cst_177 = arith.constant dense<0.000000e+00> : vector<16xf32>
    %665 = vector.multi_reduction <add>, %664, %cst_177 [1] : vector<16x128xf32> to vector<16xf32>
    %666 = vector.shape_cast %665 : vector<16xf32> to vector<16x1xf32>
    %667 = arith.mulf %666, %595 : vector<16x1xf32>
    %668 = tpu.iota {dimensions = array<i32: 1>} : vector<1x128xi32>
    %c22_i32 = arith.constant 22 : i32
    %669 = vector.broadcast %c22_i32 : i32 to vector<1x128xi32>
    %670 = arith.cmpi eq, %668, %669 : vector<1x128xi32>
    %cst_178 = arith.constant 0.000000e+00 : f32
    %671 = vector.shape_cast %670 : vector<1x128xi1> to vector<1x128xi1>
    %672 = vector.broadcast %671 : vector<1x128xi1> to vector<16x128xi1>
    %673 = vector.broadcast %cst_178 : f32 to vector<16x128xf32>
    %674 = arith.select %672, %148, %673 : vector<16x128xi1>, vector<16x128xf32>
    %cst_179 = arith.constant dense<0.000000e+00> : vector<16xf32>
    %675 = vector.multi_reduction <add>, %674, %cst_179 [1] : vector<16x128xf32> to vector<16xf32>
    %676 = vector.shape_cast %675 : vector<16xf32> to vector<16x1xf32>
    %677 = arith.mulf %676, %604 : vector<16x1xf32>
    %678 = arith.addf %667, %677 : vector<16x1xf32>
    %679 = tpu.iota {dimensions = array<i32: 1>} : vector<1x128xi32>
    %c23_i32 = arith.constant 23 : i32
    %680 = vector.broadcast %c23_i32 : i32 to vector<1x128xi32>
    %681 = arith.cmpi eq, %679, %680 : vector<1x128xi32>
    %cst_180 = arith.constant 0.000000e+00 : f32
    %682 = vector.shape_cast %681 : vector<1x128xi1> to vector<1x128xi1>
    %683 = vector.broadcast %682 : vector<1x128xi1> to vector<16x128xi1>
    %684 = vector.broadcast %cst_180 : f32 to vector<16x128xf32>
    %685 = arith.select %683, %148, %684 : vector<16x128xi1>, vector<16x128xf32>
    %cst_181 = arith.constant dense<0.000000e+00> : vector<16xf32>
    %686 = vector.multi_reduction <add>, %685, %cst_181 [1] : vector<16x128xf32> to vector<16xf32>
    %687 = vector.shape_cast %686 : vector<16xf32> to vector<16x1xf32>
    %688 = arith.mulf %687, %613 : vector<16x1xf32>
    %689 = arith.addf %678, %688 : vector<16x1xf32>
    %690 = arith.mulf %585, %689 : vector<16x1xf32>
    %691 = tpu.iota {dimensions = array<i32: 1>} : vector<1x15xi32>
    %c7_i32_182 = arith.constant 7 : i32
    %692 = vector.broadcast %c7_i32_182 : i32 to vector<1x15xi32>
    %693 = arith.cmpi eq, %691, %692 : vector<1x15xi32>
    %cst_183 = arith.constant 0.000000e+00 : f32
    %694 = vector.shape_cast %693 : vector<1x15xi1> to vector<1x15xi1>
    %695 = vector.broadcast %694 : vector<1x15xi1> to vector<16x15xi1>
    %696 = vector.broadcast %cst_183 : f32 to vector<16x15xf32>
    %697 = arith.select %695, %3, %696 : vector<16x15xi1>, vector<16x15xf32>
    %cst_184 = arith.constant dense<0.000000e+00> : vector<16xf32>
    %698 = vector.multi_reduction <add>, %697, %cst_184 [1] : vector<16x15xf32> to vector<16xf32>
    %699 = vector.shape_cast %698 : vector<16xf32> to vector<16x1xf32>
    %700 = arith.mulf %586, %699 : vector<16x1xf32>
    %701 = arith.addf %690, %700 : vector<16x1xf32>
    %702 = tpu.iota {dimensions = array<i32: 1>} : vector<1x128xi32>
    %c24_i32 = arith.constant 24 : i32
    %703 = vector.broadcast %c24_i32 : i32 to vector<1x128xi32>
    %704 = arith.cmpi eq, %702, %703 : vector<1x128xi32>
    %cst_185 = arith.constant 0.000000e+00 : f32
    %705 = vector.shape_cast %704 : vector<1x128xi1> to vector<1x128xi1>
    %706 = vector.broadcast %705 : vector<1x128xi1> to vector<16x128xi1>
    %707 = vector.broadcast %cst_185 : f32 to vector<16x128xf32>
    %708 = arith.select %706, %148, %707 : vector<16x128xi1>, vector<16x128xf32>
    %cst_186 = arith.constant dense<0.000000e+00> : vector<16xf32>
    %709 = vector.multi_reduction <add>, %708, %cst_186 [1] : vector<16x128xf32> to vector<16xf32>
    %710 = vector.shape_cast %709 : vector<16xf32> to vector<16x1xf32>
    %711 = arith.mulf %710, %595 : vector<16x1xf32>
    %712 = tpu.iota {dimensions = array<i32: 1>} : vector<1x128xi32>
    %c25_i32 = arith.constant 25 : i32
    %713 = vector.broadcast %c25_i32 : i32 to vector<1x128xi32>
    %714 = arith.cmpi eq, %712, %713 : vector<1x128xi32>
    %cst_187 = arith.constant 0.000000e+00 : f32
    %715 = vector.shape_cast %714 : vector<1x128xi1> to vector<1x128xi1>
    %716 = vector.broadcast %715 : vector<1x128xi1> to vector<16x128xi1>
    %717 = vector.broadcast %cst_187 : f32 to vector<16x128xf32>
    %718 = arith.select %716, %148, %717 : vector<16x128xi1>, vector<16x128xf32>
    %cst_188 = arith.constant dense<0.000000e+00> : vector<16xf32>
    %719 = vector.multi_reduction <add>, %718, %cst_188 [1] : vector<16x128xf32> to vector<16xf32>
    %720 = vector.shape_cast %719 : vector<16xf32> to vector<16x1xf32>
    %721 = arith.mulf %720, %604 : vector<16x1xf32>
    %722 = arith.addf %711, %721 : vector<16x1xf32>
    %723 = tpu.iota {dimensions = array<i32: 1>} : vector<1x128xi32>
    %c26_i32 = arith.constant 26 : i32
    %724 = vector.broadcast %c26_i32 : i32 to vector<1x128xi32>
    %725 = arith.cmpi eq, %723, %724 : vector<1x128xi32>
    %cst_189 = arith.constant 0.000000e+00 : f32
    %726 = vector.shape_cast %725 : vector<1x128xi1> to vector<1x128xi1>
    %727 = vector.broadcast %726 : vector<1x128xi1> to vector<16x128xi1>
    %728 = vector.broadcast %cst_189 : f32 to vector<16x128xf32>
    %729 = arith.select %727, %148, %728 : vector<16x128xi1>, vector<16x128xf32>
    %cst_190 = arith.constant dense<0.000000e+00> : vector<16xf32>
    %730 = vector.multi_reduction <add>, %729, %cst_190 [1] : vector<16x128xf32> to vector<16xf32>
    %731 = vector.shape_cast %730 : vector<16xf32> to vector<16x1xf32>
    %732 = arith.mulf %731, %613 : vector<16x1xf32>
    %733 = arith.addf %722, %732 : vector<16x1xf32>
    %734 = arith.mulf %585, %733 : vector<16x1xf32>
    %735 = tpu.iota {dimensions = array<i32: 1>} : vector<1x15xi32>
    %c8_i32_191 = arith.constant 8 : i32
    %736 = vector.broadcast %c8_i32_191 : i32 to vector<1x15xi32>
    %737 = arith.cmpi eq, %735, %736 : vector<1x15xi32>
    %cst_192 = arith.constant 0.000000e+00 : f32
    %738 = vector.shape_cast %737 : vector<1x15xi1> to vector<1x15xi1>
    %739 = vector.broadcast %738 : vector<1x15xi1> to vector<16x15xi1>
    %740 = vector.broadcast %cst_192 : f32 to vector<16x15xf32>
    %741 = arith.select %739, %3, %740 : vector<16x15xi1>, vector<16x15xf32>
    %cst_193 = arith.constant dense<0.000000e+00> : vector<16xf32>
    %742 = vector.multi_reduction <add>, %741, %cst_193 [1] : vector<16x15xf32> to vector<16xf32>
    %743 = vector.shape_cast %742 : vector<16xf32> to vector<16x1xf32>
    %744 = arith.mulf %586, %743 : vector<16x1xf32>
    %745 = arith.addf %734, %744 : vector<16x1xf32>
    %746 = tpu.iota {dimensions = array<i32: 1>} : vector<1x128xi32>
    %c51_i32 = arith.constant 51 : i32
    %747 = vector.broadcast %c51_i32 : i32 to vector<1x128xi32>
    %748 = arith.cmpi eq, %746, %747 : vector<1x128xi32>
    %cst_194 = arith.constant 0.000000e+00 : f32
    %749 = vector.shape_cast %748 : vector<1x128xi1> to vector<1x128xi1>
    %750 = vector.broadcast %749 : vector<1x128xi1> to vector<16x128xi1>
    %751 = vector.broadcast %cst_194 : f32 to vector<16x128xf32>
    %752 = arith.select %750, %148, %751 : vector<16x128xi1>, vector<16x128xf32>
    %cst_195 = arith.constant dense<0.000000e+00> : vector<16xf32>
    %753 = vector.multi_reduction <add>, %752, %cst_195 [1] : vector<16x128xf32> to vector<16xf32>
    %754 = vector.shape_cast %753 : vector<16xf32> to vector<16x1xf32>
    %cst_196 = arith.constant 0.000000e+00 : f32
    %755 = vector.broadcast %cst_196 : f32 to vector<16x1xf32>
    %756 = arith.maximumf %754, %755 : vector<16x1xf32>
    %757 = math.absf %754 : vector<16x1xf32>
    %cst_197 = arith.constant 0.000000e+00 : f32
    %758 = vector.broadcast %cst_197 : f32 to vector<16x1xf32>
    %759 = arith.subf %758, %757 : vector<16x1xf32>
    %760 = math.exp %759 : vector<16x1xf32>
    %cst_198 = arith.constant 1.000000e+00 : f32
    %761 = vector.broadcast %cst_198 : f32 to vector<16x1xf32>
    %762 = arith.addf %761, %760 : vector<16x1xf32>
    %763 = math.log %762 : vector<16x1xf32>
    %764 = arith.addf %756, %763 : vector<16x1xf32>
    %765 = tpu.iota {dimensions = array<i32: 1>} : vector<1x128xi32>
    %c52_i32 = arith.constant 52 : i32
    %766 = vector.broadcast %c52_i32 : i32 to vector<1x128xi32>
    %767 = arith.cmpi eq, %765, %766 : vector<1x128xi32>
    %cst_199 = arith.constant 0.000000e+00 : f32
    %768 = vector.shape_cast %767 : vector<1x128xi1> to vector<1x128xi1>
    %769 = vector.broadcast %768 : vector<1x128xi1> to vector<16x128xi1>
    %770 = vector.broadcast %cst_199 : f32 to vector<16x128xf32>
    %771 = arith.select %769, %148, %770 : vector<16x128xi1>, vector<16x128xf32>
    %cst_200 = arith.constant dense<0.000000e+00> : vector<16xf32>
    %772 = vector.multi_reduction <add>, %771, %cst_200 [1] : vector<16x128xf32> to vector<16xf32>
    %773 = vector.shape_cast %772 : vector<16xf32> to vector<16x1xf32>
    %cst_201 = arith.constant 0.000000e+00 : f32
    %774 = vector.broadcast %cst_201 : f32 to vector<16x1xf32>
    %775 = arith.maximumf %773, %774 : vector<16x1xf32>
    %776 = math.absf %773 : vector<16x1xf32>
    %cst_202 = arith.constant 0.000000e+00 : f32
    %777 = vector.broadcast %cst_202 : f32 to vector<16x1xf32>
    %778 = arith.subf %777, %776 : vector<16x1xf32>
    %779 = math.exp %778 : vector<16x1xf32>
    %cst_203 = arith.constant 1.000000e+00 : f32
    %780 = vector.broadcast %cst_203 : f32 to vector<16x1xf32>
    %781 = arith.addf %780, %779 : vector<16x1xf32>
    %782 = math.log %781 : vector<16x1xf32>
    %783 = arith.addf %775, %782 : vector<16x1xf32>
    %784 = math.sqrt %764 : vector<16x1xf32>
    %785 = math.sqrt %783 : vector<16x1xf32>
    %786 = tpu.iota {dimensions = array<i32: 1>} : vector<1x15xi32>
    %c9_i32_204 = arith.constant 9 : i32
    %787 = vector.broadcast %c9_i32_204 : i32 to vector<1x15xi32>
    %788 = arith.cmpi eq, %786, %787 : vector<1x15xi32>
    %cst_205 = arith.constant 0.000000e+00 : f32
    %789 = vector.shape_cast %788 : vector<1x15xi1> to vector<1x15xi1>
    %790 = vector.broadcast %789 : vector<1x15xi1> to vector<16x15xi1>
    %791 = vector.broadcast %cst_205 : f32 to vector<16x15xf32>
    %792 = arith.select %790, %2, %791 : vector<16x15xi1>, vector<16x15xf32>
    %cst_206 = arith.constant dense<0.000000e+00> : vector<16xf32>
    %793 = vector.multi_reduction <add>, %792, %cst_206 [1] : vector<16x15xf32> to vector<16xf32>
    %794 = vector.shape_cast %793 : vector<16xf32> to vector<16x1xf32>
    %795 = tpu.iota {dimensions = array<i32: 1>} : vector<1x15xi32>
    %c10_i32_207 = arith.constant 10 : i32
    %796 = vector.broadcast %c10_i32_207 : i32 to vector<1x15xi32>
    %797 = arith.cmpi eq, %795, %796 : vector<1x15xi32>
    %cst_208 = arith.constant 0.000000e+00 : f32
    %798 = vector.shape_cast %797 : vector<1x15xi1> to vector<1x15xi1>
    %799 = vector.broadcast %798 : vector<1x15xi1> to vector<16x15xi1>
    %800 = vector.broadcast %cst_208 : f32 to vector<16x15xf32>
    %801 = arith.select %799, %2, %800 : vector<16x15xi1>, vector<16x15xf32>
    %cst_209 = arith.constant dense<0.000000e+00> : vector<16xf32>
    %802 = vector.multi_reduction <add>, %801, %cst_209 [1] : vector<16x15xf32> to vector<16xf32>
    %803 = vector.shape_cast %802 : vector<16xf32> to vector<16x1xf32>
    %804 = tpu.iota {dimensions = array<i32: 1>} : vector<1x15xi32>
    %c11_i32_210 = arith.constant 11 : i32
    %805 = vector.broadcast %c11_i32_210 : i32 to vector<1x15xi32>
    %806 = arith.cmpi eq, %804, %805 : vector<1x15xi32>
    %cst_211 = arith.constant 0.000000e+00 : f32
    %807 = vector.shape_cast %806 : vector<1x15xi1> to vector<1x15xi1>
    %808 = vector.broadcast %807 : vector<1x15xi1> to vector<16x15xi1>
    %809 = vector.broadcast %cst_211 : f32 to vector<16x15xf32>
    %810 = arith.select %808, %2, %809 : vector<16x15xi1>, vector<16x15xf32>
    %cst_212 = arith.constant dense<0.000000e+00> : vector<16xf32>
    %811 = vector.multi_reduction <add>, %810, %cst_212 [1] : vector<16x15xf32> to vector<16xf32>
    %812 = vector.shape_cast %811 : vector<16xf32> to vector<16x1xf32>
    %813 = tpu.iota {dimensions = array<i32: 1>} : vector<1x128xi32>
    %c27_i32 = arith.constant 27 : i32
    %814 = vector.broadcast %c27_i32 : i32 to vector<1x128xi32>
    %815 = arith.cmpi eq, %813, %814 : vector<1x128xi32>
    %cst_213 = arith.constant 0.000000e+00 : f32
    %816 = vector.shape_cast %815 : vector<1x128xi1> to vector<1x128xi1>
    %817 = vector.broadcast %816 : vector<1x128xi1> to vector<16x128xi1>
    %818 = vector.broadcast %cst_213 : f32 to vector<16x128xf32>
    %819 = arith.select %817, %148, %818 : vector<16x128xi1>, vector<16x128xf32>
    %cst_214 = arith.constant dense<0.000000e+00> : vector<16xf32>
    %820 = vector.multi_reduction <add>, %819, %cst_214 [1] : vector<16x128xf32> to vector<16xf32>
    %821 = vector.shape_cast %820 : vector<16xf32> to vector<16x1xf32>
    %822 = arith.mulf %821, %794 : vector<16x1xf32>
    %823 = tpu.iota {dimensions = array<i32: 1>} : vector<1x128xi32>
    %c28_i32 = arith.constant 28 : i32
    %824 = vector.broadcast %c28_i32 : i32 to vector<1x128xi32>
    %825 = arith.cmpi eq, %823, %824 : vector<1x128xi32>
    %cst_215 = arith.constant 0.000000e+00 : f32
    %826 = vector.shape_cast %825 : vector<1x128xi1> to vector<1x128xi1>
    %827 = vector.broadcast %826 : vector<1x128xi1> to vector<16x128xi1>
    %828 = vector.broadcast %cst_215 : f32 to vector<16x128xf32>
    %829 = arith.select %827, %148, %828 : vector<16x128xi1>, vector<16x128xf32>
    %cst_216 = arith.constant dense<0.000000e+00> : vector<16xf32>
    %830 = vector.multi_reduction <add>, %829, %cst_216 [1] : vector<16x128xf32> to vector<16xf32>
    %831 = vector.shape_cast %830 : vector<16xf32> to vector<16x1xf32>
    %832 = arith.mulf %831, %803 : vector<16x1xf32>
    %833 = arith.addf %822, %832 : vector<16x1xf32>
    %834 = tpu.iota {dimensions = array<i32: 1>} : vector<1x128xi32>
    %c29_i32 = arith.constant 29 : i32
    %835 = vector.broadcast %c29_i32 : i32 to vector<1x128xi32>
    %836 = arith.cmpi eq, %834, %835 : vector<1x128xi32>
    %cst_217 = arith.constant 0.000000e+00 : f32
    %837 = vector.shape_cast %836 : vector<1x128xi1> to vector<1x128xi1>
    %838 = vector.broadcast %837 : vector<1x128xi1> to vector<16x128xi1>
    %839 = vector.broadcast %cst_217 : f32 to vector<16x128xf32>
    %840 = arith.select %838, %148, %839 : vector<16x128xi1>, vector<16x128xf32>
    %cst_218 = arith.constant dense<0.000000e+00> : vector<16xf32>
    %841 = vector.multi_reduction <add>, %840, %cst_218 [1] : vector<16x128xf32> to vector<16xf32>
    %842 = vector.shape_cast %841 : vector<16xf32> to vector<16x1xf32>
    %843 = arith.mulf %842, %812 : vector<16x1xf32>
    %844 = arith.addf %833, %843 : vector<16x1xf32>
    %845 = arith.mulf %784, %844 : vector<16x1xf32>
    %846 = tpu.iota {dimensions = array<i32: 1>} : vector<1x15xi32>
    %c9_i32_219 = arith.constant 9 : i32
    %847 = vector.broadcast %c9_i32_219 : i32 to vector<1x15xi32>
    %848 = arith.cmpi eq, %846, %847 : vector<1x15xi32>
    %cst_220 = arith.constant 0.000000e+00 : f32
    %849 = vector.shape_cast %848 : vector<1x15xi1> to vector<1x15xi1>
    %850 = vector.broadcast %849 : vector<1x15xi1> to vector<16x15xi1>
    %851 = vector.broadcast %cst_220 : f32 to vector<16x15xf32>
    %852 = arith.select %850, %3, %851 : vector<16x15xi1>, vector<16x15xf32>
    %cst_221 = arith.constant dense<0.000000e+00> : vector<16xf32>
    %853 = vector.multi_reduction <add>, %852, %cst_221 [1] : vector<16x15xf32> to vector<16xf32>
    %854 = vector.shape_cast %853 : vector<16xf32> to vector<16x1xf32>
    %855 = arith.mulf %785, %854 : vector<16x1xf32>
    %856 = arith.addf %845, %855 : vector<16x1xf32>
    %857 = tpu.iota {dimensions = array<i32: 1>} : vector<1x128xi32>
    %c30_i32 = arith.constant 30 : i32
    %858 = vector.broadcast %c30_i32 : i32 to vector<1x128xi32>
    %859 = arith.cmpi eq, %857, %858 : vector<1x128xi32>
    %cst_222 = arith.constant 0.000000e+00 : f32
    %860 = vector.shape_cast %859 : vector<1x128xi1> to vector<1x128xi1>
    %861 = vector.broadcast %860 : vector<1x128xi1> to vector<16x128xi1>
    %862 = vector.broadcast %cst_222 : f32 to vector<16x128xf32>
    %863 = arith.select %861, %148, %862 : vector<16x128xi1>, vector<16x128xf32>
    %cst_223 = arith.constant dense<0.000000e+00> : vector<16xf32>
    %864 = vector.multi_reduction <add>, %863, %cst_223 [1] : vector<16x128xf32> to vector<16xf32>
    %865 = vector.shape_cast %864 : vector<16xf32> to vector<16x1xf32>
    %866 = arith.mulf %865, %794 : vector<16x1xf32>
    %867 = tpu.iota {dimensions = array<i32: 1>} : vector<1x128xi32>
    %c31_i32 = arith.constant 31 : i32
    %868 = vector.broadcast %c31_i32 : i32 to vector<1x128xi32>
    %869 = arith.cmpi eq, %867, %868 : vector<1x128xi32>
    %cst_224 = arith.constant 0.000000e+00 : f32
    %870 = vector.shape_cast %869 : vector<1x128xi1> to vector<1x128xi1>
    %871 = vector.broadcast %870 : vector<1x128xi1> to vector<16x128xi1>
    %872 = vector.broadcast %cst_224 : f32 to vector<16x128xf32>
    %873 = arith.select %871, %148, %872 : vector<16x128xi1>, vector<16x128xf32>
    %cst_225 = arith.constant dense<0.000000e+00> : vector<16xf32>
    %874 = vector.multi_reduction <add>, %873, %cst_225 [1] : vector<16x128xf32> to vector<16xf32>
    %875 = vector.shape_cast %874 : vector<16xf32> to vector<16x1xf32>
    %876 = arith.mulf %875, %803 : vector<16x1xf32>
    %877 = arith.addf %866, %876 : vector<16x1xf32>
    %878 = tpu.iota {dimensions = array<i32: 1>} : vector<1x128xi32>
    %c32_i32 = arith.constant 32 : i32
    %879 = vector.broadcast %c32_i32 : i32 to vector<1x128xi32>
    %880 = arith.cmpi eq, %878, %879 : vector<1x128xi32>
    %cst_226 = arith.constant 0.000000e+00 : f32
    %881 = vector.shape_cast %880 : vector<1x128xi1> to vector<1x128xi1>
    %882 = vector.broadcast %881 : vector<1x128xi1> to vector<16x128xi1>
    %883 = vector.broadcast %cst_226 : f32 to vector<16x128xf32>
    %884 = arith.select %882, %148, %883 : vector<16x128xi1>, vector<16x128xf32>
    %cst_227 = arith.constant dense<0.000000e+00> : vector<16xf32>
    %885 = vector.multi_reduction <add>, %884, %cst_227 [1] : vector<16x128xf32> to vector<16xf32>
    %886 = vector.shape_cast %885 : vector<16xf32> to vector<16x1xf32>
    %887 = arith.mulf %886, %812 : vector<16x1xf32>
    %888 = arith.addf %877, %887 : vector<16x1xf32>
    %889 = arith.mulf %784, %888 : vector<16x1xf32>
    %890 = tpu.iota {dimensions = array<i32: 1>} : vector<1x15xi32>
    %c10_i32_228 = arith.constant 10 : i32
    %891 = vector.broadcast %c10_i32_228 : i32 to vector<1x15xi32>
    %892 = arith.cmpi eq, %890, %891 : vector<1x15xi32>
    %cst_229 = arith.constant 0.000000e+00 : f32
    %893 = vector.shape_cast %892 : vector<1x15xi1> to vector<1x15xi1>
    %894 = vector.broadcast %893 : vector<1x15xi1> to vector<16x15xi1>
    %895 = vector.broadcast %cst_229 : f32 to vector<16x15xf32>
    %896 = arith.select %894, %3, %895 : vector<16x15xi1>, vector<16x15xf32>
    %cst_230 = arith.constant dense<0.000000e+00> : vector<16xf32>
    %897 = vector.multi_reduction <add>, %896, %cst_230 [1] : vector<16x15xf32> to vector<16xf32>
    %898 = vector.shape_cast %897 : vector<16xf32> to vector<16x1xf32>
    %899 = arith.mulf %785, %898 : vector<16x1xf32>
    %900 = arith.addf %889, %899 : vector<16x1xf32>
    %901 = tpu.iota {dimensions = array<i32: 1>} : vector<1x128xi32>
    %c33_i32 = arith.constant 33 : i32
    %902 = vector.broadcast %c33_i32 : i32 to vector<1x128xi32>
    %903 = arith.cmpi eq, %901, %902 : vector<1x128xi32>
    %cst_231 = arith.constant 0.000000e+00 : f32
    %904 = vector.shape_cast %903 : vector<1x128xi1> to vector<1x128xi1>
    %905 = vector.broadcast %904 : vector<1x128xi1> to vector<16x128xi1>
    %906 = vector.broadcast %cst_231 : f32 to vector<16x128xf32>
    %907 = arith.select %905, %148, %906 : vector<16x128xi1>, vector<16x128xf32>
    %cst_232 = arith.constant dense<0.000000e+00> : vector<16xf32>
    %908 = vector.multi_reduction <add>, %907, %cst_232 [1] : vector<16x128xf32> to vector<16xf32>
    %909 = vector.shape_cast %908 : vector<16xf32> to vector<16x1xf32>
    %910 = arith.mulf %909, %794 : vector<16x1xf32>
    %911 = tpu.iota {dimensions = array<i32: 1>} : vector<1x128xi32>
    %c34_i32 = arith.constant 34 : i32
    %912 = vector.broadcast %c34_i32 : i32 to vector<1x128xi32>
    %913 = arith.cmpi eq, %911, %912 : vector<1x128xi32>
    %cst_233 = arith.constant 0.000000e+00 : f32
    %914 = vector.shape_cast %913 : vector<1x128xi1> to vector<1x128xi1>
    %915 = vector.broadcast %914 : vector<1x128xi1> to vector<16x128xi1>
    %916 = vector.broadcast %cst_233 : f32 to vector<16x128xf32>
    %917 = arith.select %915, %148, %916 : vector<16x128xi1>, vector<16x128xf32>
    %cst_234 = arith.constant dense<0.000000e+00> : vector<16xf32>
    %918 = vector.multi_reduction <add>, %917, %cst_234 [1] : vector<16x128xf32> to vector<16xf32>
    %919 = vector.shape_cast %918 : vector<16xf32> to vector<16x1xf32>
    %920 = arith.mulf %919, %803 : vector<16x1xf32>
    %921 = arith.addf %910, %920 : vector<16x1xf32>
    %922 = tpu.iota {dimensions = array<i32: 1>} : vector<1x128xi32>
    %c35_i32 = arith.constant 35 : i32
    %923 = vector.broadcast %c35_i32 : i32 to vector<1x128xi32>
    %924 = arith.cmpi eq, %922, %923 : vector<1x128xi32>
    %cst_235 = arith.constant 0.000000e+00 : f32
    %925 = vector.shape_cast %924 : vector<1x128xi1> to vector<1x128xi1>
    %926 = vector.broadcast %925 : vector<1x128xi1> to vector<16x128xi1>
    %927 = vector.broadcast %cst_235 : f32 to vector<16x128xf32>
    %928 = arith.select %926, %148, %927 : vector<16x128xi1>, vector<16x128xf32>
    %cst_236 = arith.constant dense<0.000000e+00> : vector<16xf32>
    %929 = vector.multi_reduction <add>, %928, %cst_236 [1] : vector<16x128xf32> to vector<16xf32>
    %930 = vector.shape_cast %929 : vector<16xf32> to vector<16x1xf32>
    %931 = arith.mulf %930, %812 : vector<16x1xf32>
    %932 = arith.addf %921, %931 : vector<16x1xf32>
    %933 = arith.mulf %784, %932 : vector<16x1xf32>
    %934 = tpu.iota {dimensions = array<i32: 1>} : vector<1x15xi32>
    %c11_i32_237 = arith.constant 11 : i32
    %935 = vector.broadcast %c11_i32_237 : i32 to vector<1x15xi32>
    %936 = arith.cmpi eq, %934, %935 : vector<1x15xi32>
    %cst_238 = arith.constant 0.000000e+00 : f32
    %937 = vector.shape_cast %936 : vector<1x15xi1> to vector<1x15xi1>
    %938 = vector.broadcast %937 : vector<1x15xi1> to vector<16x15xi1>
    %939 = vector.broadcast %cst_238 : f32 to vector<16x15xf32>
    %940 = arith.select %938, %3, %939 : vector<16x15xi1>, vector<16x15xf32>
    %cst_239 = arith.constant dense<0.000000e+00> : vector<16xf32>
    %941 = vector.multi_reduction <add>, %940, %cst_239 [1] : vector<16x15xf32> to vector<16xf32>
    %942 = vector.shape_cast %941 : vector<16xf32> to vector<16x1xf32>
    %943 = arith.mulf %785, %942 : vector<16x1xf32>
    %944 = arith.addf %933, %943 : vector<16x1xf32>
    %945 = tpu.iota {dimensions = array<i32: 1>} : vector<1x128xi32>
    %c53_i32 = arith.constant 53 : i32
    %946 = vector.broadcast %c53_i32 : i32 to vector<1x128xi32>
    %947 = arith.cmpi eq, %945, %946 : vector<1x128xi32>
    %cst_240 = arith.constant 0.000000e+00 : f32
    %948 = vector.shape_cast %947 : vector<1x128xi1> to vector<1x128xi1>
    %949 = vector.broadcast %948 : vector<1x128xi1> to vector<16x128xi1>
    %950 = vector.broadcast %cst_240 : f32 to vector<16x128xf32>
    %951 = arith.select %949, %148, %950 : vector<16x128xi1>, vector<16x128xf32>
    %cst_241 = arith.constant dense<0.000000e+00> : vector<16xf32>
    %952 = vector.multi_reduction <add>, %951, %cst_241 [1] : vector<16x128xf32> to vector<16xf32>
    %953 = vector.shape_cast %952 : vector<16xf32> to vector<16x1xf32>
    %cst_242 = arith.constant 0.000000e+00 : f32
    %954 = vector.broadcast %cst_242 : f32 to vector<16x1xf32>
    %955 = arith.maximumf %953, %954 : vector<16x1xf32>
    %956 = math.absf %953 : vector<16x1xf32>
    %cst_243 = arith.constant 0.000000e+00 : f32
    %957 = vector.broadcast %cst_243 : f32 to vector<16x1xf32>
    %958 = arith.subf %957, %956 : vector<16x1xf32>
    %959 = math.exp %958 : vector<16x1xf32>
    %cst_244 = arith.constant 1.000000e+00 : f32
    %960 = vector.broadcast %cst_244 : f32 to vector<16x1xf32>
    %961 = arith.addf %960, %959 : vector<16x1xf32>
    %962 = math.log %961 : vector<16x1xf32>
    %963 = arith.addf %955, %962 : vector<16x1xf32>
    %964 = tpu.iota {dimensions = array<i32: 1>} : vector<1x128xi32>
    %c54_i32 = arith.constant 54 : i32
    %965 = vector.broadcast %c54_i32 : i32 to vector<1x128xi32>
    %966 = arith.cmpi eq, %964, %965 : vector<1x128xi32>
    %cst_245 = arith.constant 0.000000e+00 : f32
    %967 = vector.shape_cast %966 : vector<1x128xi1> to vector<1x128xi1>
    %968 = vector.broadcast %967 : vector<1x128xi1> to vector<16x128xi1>
    %969 = vector.broadcast %cst_245 : f32 to vector<16x128xf32>
    %970 = arith.select %968, %148, %969 : vector<16x128xi1>, vector<16x128xf32>
    %cst_246 = arith.constant dense<0.000000e+00> : vector<16xf32>
    %971 = vector.multi_reduction <add>, %970, %cst_246 [1] : vector<16x128xf32> to vector<16xf32>
    %972 = vector.shape_cast %971 : vector<16xf32> to vector<16x1xf32>
    %cst_247 = arith.constant 0.000000e+00 : f32
    %973 = vector.broadcast %cst_247 : f32 to vector<16x1xf32>
    %974 = arith.maximumf %972, %973 : vector<16x1xf32>
    %975 = math.absf %972 : vector<16x1xf32>
    %cst_248 = arith.constant 0.000000e+00 : f32
    %976 = vector.broadcast %cst_248 : f32 to vector<16x1xf32>
    %977 = arith.subf %976, %975 : vector<16x1xf32>
    %978 = math.exp %977 : vector<16x1xf32>
    %cst_249 = arith.constant 1.000000e+00 : f32
    %979 = vector.broadcast %cst_249 : f32 to vector<16x1xf32>
    %980 = arith.addf %979, %978 : vector<16x1xf32>
    %981 = math.log %980 : vector<16x1xf32>
    %982 = arith.addf %974, %981 : vector<16x1xf32>
    %983 = math.sqrt %963 : vector<16x1xf32>
    %984 = math.sqrt %982 : vector<16x1xf32>
    %985 = tpu.iota {dimensions = array<i32: 1>} : vector<1x15xi32>
    %c12_i32_250 = arith.constant 12 : i32
    %986 = vector.broadcast %c12_i32_250 : i32 to vector<1x15xi32>
    %987 = arith.cmpi eq, %985, %986 : vector<1x15xi32>
    %cst_251 = arith.constant 0.000000e+00 : f32
    %988 = vector.shape_cast %987 : vector<1x15xi1> to vector<1x15xi1>
    %989 = vector.broadcast %988 : vector<1x15xi1> to vector<16x15xi1>
    %990 = vector.broadcast %cst_251 : f32 to vector<16x15xf32>
    %991 = arith.select %989, %2, %990 : vector<16x15xi1>, vector<16x15xf32>
    %cst_252 = arith.constant dense<0.000000e+00> : vector<16xf32>
    %992 = vector.multi_reduction <add>, %991, %cst_252 [1] : vector<16x15xf32> to vector<16xf32>
    %993 = vector.shape_cast %992 : vector<16xf32> to vector<16x1xf32>
    %994 = tpu.iota {dimensions = array<i32: 1>} : vector<1x15xi32>
    %c13_i32_253 = arith.constant 13 : i32
    %995 = vector.broadcast %c13_i32_253 : i32 to vector<1x15xi32>
    %996 = arith.cmpi eq, %994, %995 : vector<1x15xi32>
    %cst_254 = arith.constant 0.000000e+00 : f32
    %997 = vector.shape_cast %996 : vector<1x15xi1> to vector<1x15xi1>
    %998 = vector.broadcast %997 : vector<1x15xi1> to vector<16x15xi1>
    %999 = vector.broadcast %cst_254 : f32 to vector<16x15xf32>
    %1000 = arith.select %998, %2, %999 : vector<16x15xi1>, vector<16x15xf32>
    %cst_255 = arith.constant dense<0.000000e+00> : vector<16xf32>
    %1001 = vector.multi_reduction <add>, %1000, %cst_255 [1] : vector<16x15xf32> to vector<16xf32>
    %1002 = vector.shape_cast %1001 : vector<16xf32> to vector<16x1xf32>
    %1003 = tpu.iota {dimensions = array<i32: 1>} : vector<1x15xi32>
    %c14_i32_256 = arith.constant 14 : i32
    %1004 = vector.broadcast %c14_i32_256 : i32 to vector<1x15xi32>
    %1005 = arith.cmpi eq, %1003, %1004 : vector<1x15xi32>
    %cst_257 = arith.constant 0.000000e+00 : f32
    %1006 = vector.shape_cast %1005 : vector<1x15xi1> to vector<1x15xi1>
    %1007 = vector.broadcast %1006 : vector<1x15xi1> to vector<16x15xi1>
    %1008 = vector.broadcast %cst_257 : f32 to vector<16x15xf32>
    %1009 = arith.select %1007, %2, %1008 : vector<16x15xi1>, vector<16x15xf32>
    %cst_258 = arith.constant dense<0.000000e+00> : vector<16xf32>
    %1010 = vector.multi_reduction <add>, %1009, %cst_258 [1] : vector<16x15xf32> to vector<16xf32>
    %1011 = vector.shape_cast %1010 : vector<16xf32> to vector<16x1xf32>
    %1012 = tpu.iota {dimensions = array<i32: 1>} : vector<1x128xi32>
    %c36_i32 = arith.constant 36 : i32
    %1013 = vector.broadcast %c36_i32 : i32 to vector<1x128xi32>
    %1014 = arith.cmpi eq, %1012, %1013 : vector<1x128xi32>
    %cst_259 = arith.constant 0.000000e+00 : f32
    %1015 = vector.shape_cast %1014 : vector<1x128xi1> to vector<1x128xi1>
    %1016 = vector.broadcast %1015 : vector<1x128xi1> to vector<16x128xi1>
    %1017 = vector.broadcast %cst_259 : f32 to vector<16x128xf32>
    %1018 = arith.select %1016, %148, %1017 : vector<16x128xi1>, vector<16x128xf32>
    %cst_260 = arith.constant dense<0.000000e+00> : vector<16xf32>
    %1019 = vector.multi_reduction <add>, %1018, %cst_260 [1] : vector<16x128xf32> to vector<16xf32>
    %1020 = vector.shape_cast %1019 : vector<16xf32> to vector<16x1xf32>
    %1021 = arith.mulf %1020, %993 : vector<16x1xf32>
    %1022 = tpu.iota {dimensions = array<i32: 1>} : vector<1x128xi32>
    %c37_i32 = arith.constant 37 : i32
    %1023 = vector.broadcast %c37_i32 : i32 to vector<1x128xi32>
    %1024 = arith.cmpi eq, %1022, %1023 : vector<1x128xi32>
    %cst_261 = arith.constant 0.000000e+00 : f32
    %1025 = vector.shape_cast %1024 : vector<1x128xi1> to vector<1x128xi1>
    %1026 = vector.broadcast %1025 : vector<1x128xi1> to vector<16x128xi1>
    %1027 = vector.broadcast %cst_261 : f32 to vector<16x128xf32>
    %1028 = arith.select %1026, %148, %1027 : vector<16x128xi1>, vector<16x128xf32>
    %cst_262 = arith.constant dense<0.000000e+00> : vector<16xf32>
    %1029 = vector.multi_reduction <add>, %1028, %cst_262 [1] : vector<16x128xf32> to vector<16xf32>
    %1030 = vector.shape_cast %1029 : vector<16xf32> to vector<16x1xf32>
    %1031 = arith.mulf %1030, %1002 : vector<16x1xf32>
    %1032 = arith.addf %1021, %1031 : vector<16x1xf32>
    %1033 = tpu.iota {dimensions = array<i32: 1>} : vector<1x128xi32>
    %c38_i32 = arith.constant 38 : i32
    %1034 = vector.broadcast %c38_i32 : i32 to vector<1x128xi32>
    %1035 = arith.cmpi eq, %1033, %1034 : vector<1x128xi32>
    %cst_263 = arith.constant 0.000000e+00 : f32
    %1036 = vector.shape_cast %1035 : vector<1x128xi1> to vector<1x128xi1>
    %1037 = vector.broadcast %1036 : vector<1x128xi1> to vector<16x128xi1>
    %1038 = vector.broadcast %cst_263 : f32 to vector<16x128xf32>
    %1039 = arith.select %1037, %148, %1038 : vector<16x128xi1>, vector<16x128xf32>
    %cst_264 = arith.constant dense<0.000000e+00> : vector<16xf32>
    %1040 = vector.multi_reduction <add>, %1039, %cst_264 [1] : vector<16x128xf32> to vector<16xf32>
    %1041 = vector.shape_cast %1040 : vector<16xf32> to vector<16x1xf32>
    %1042 = arith.mulf %1041, %1011 : vector<16x1xf32>
    %1043 = arith.addf %1032, %1042 : vector<16x1xf32>
    %1044 = arith.mulf %983, %1043 : vector<16x1xf32>
    %1045 = tpu.iota {dimensions = array<i32: 1>} : vector<1x15xi32>
    %c12_i32_265 = arith.constant 12 : i32
    %1046 = vector.broadcast %c12_i32_265 : i32 to vector<1x15xi32>
    %1047 = arith.cmpi eq, %1045, %1046 : vector<1x15xi32>
    %cst_266 = arith.constant 0.000000e+00 : f32
    %1048 = vector.shape_cast %1047 : vector<1x15xi1> to vector<1x15xi1>
    %1049 = vector.broadcast %1048 : vector<1x15xi1> to vector<16x15xi1>
    %1050 = vector.broadcast %cst_266 : f32 to vector<16x15xf32>
    %1051 = arith.select %1049, %3, %1050 : vector<16x15xi1>, vector<16x15xf32>
    %cst_267 = arith.constant dense<0.000000e+00> : vector<16xf32>
    %1052 = vector.multi_reduction <add>, %1051, %cst_267 [1] : vector<16x15xf32> to vector<16xf32>
    %1053 = vector.shape_cast %1052 : vector<16xf32> to vector<16x1xf32>
    %1054 = arith.mulf %984, %1053 : vector<16x1xf32>
    %1055 = arith.addf %1044, %1054 : vector<16x1xf32>
    %1056 = tpu.iota {dimensions = array<i32: 1>} : vector<1x128xi32>
    %c39_i32 = arith.constant 39 : i32
    %1057 = vector.broadcast %c39_i32 : i32 to vector<1x128xi32>
    %1058 = arith.cmpi eq, %1056, %1057 : vector<1x128xi32>
    %cst_268 = arith.constant 0.000000e+00 : f32
    %1059 = vector.shape_cast %1058 : vector<1x128xi1> to vector<1x128xi1>
    %1060 = vector.broadcast %1059 : vector<1x128xi1> to vector<16x128xi1>
    %1061 = vector.broadcast %cst_268 : f32 to vector<16x128xf32>
    %1062 = arith.select %1060, %148, %1061 : vector<16x128xi1>, vector<16x128xf32>
    %cst_269 = arith.constant dense<0.000000e+00> : vector<16xf32>
    %1063 = vector.multi_reduction <add>, %1062, %cst_269 [1] : vector<16x128xf32> to vector<16xf32>
    %1064 = vector.shape_cast %1063 : vector<16xf32> to vector<16x1xf32>
    %1065 = arith.mulf %1064, %993 : vector<16x1xf32>
    %1066 = tpu.iota {dimensions = array<i32: 1>} : vector<1x128xi32>
    %c40_i32 = arith.constant 40 : i32
    %1067 = vector.broadcast %c40_i32 : i32 to vector<1x128xi32>
    %1068 = arith.cmpi eq, %1066, %1067 : vector<1x128xi32>
    %cst_270 = arith.constant 0.000000e+00 : f32
    %1069 = vector.shape_cast %1068 : vector<1x128xi1> to vector<1x128xi1>
    %1070 = vector.broadcast %1069 : vector<1x128xi1> to vector<16x128xi1>
    %1071 = vector.broadcast %cst_270 : f32 to vector<16x128xf32>
    %1072 = arith.select %1070, %148, %1071 : vector<16x128xi1>, vector<16x128xf32>
    %cst_271 = arith.constant dense<0.000000e+00> : vector<16xf32>
    %1073 = vector.multi_reduction <add>, %1072, %cst_271 [1] : vector<16x128xf32> to vector<16xf32>
    %1074 = vector.shape_cast %1073 : vector<16xf32> to vector<16x1xf32>
    %1075 = arith.mulf %1074, %1002 : vector<16x1xf32>
    %1076 = arith.addf %1065, %1075 : vector<16x1xf32>
    %1077 = tpu.iota {dimensions = array<i32: 1>} : vector<1x128xi32>
    %c41_i32 = arith.constant 41 : i32
    %1078 = vector.broadcast %c41_i32 : i32 to vector<1x128xi32>
    %1079 = arith.cmpi eq, %1077, %1078 : vector<1x128xi32>
    %cst_272 = arith.constant 0.000000e+00 : f32
    %1080 = vector.shape_cast %1079 : vector<1x128xi1> to vector<1x128xi1>
    %1081 = vector.broadcast %1080 : vector<1x128xi1> to vector<16x128xi1>
    %1082 = vector.broadcast %cst_272 : f32 to vector<16x128xf32>
    %1083 = arith.select %1081, %148, %1082 : vector<16x128xi1>, vector<16x128xf32>
    %cst_273 = arith.constant dense<0.000000e+00> : vector<16xf32>
    %1084 = vector.multi_reduction <add>, %1083, %cst_273 [1] : vector<16x128xf32> to vector<16xf32>
    %1085 = vector.shape_cast %1084 : vector<16xf32> to vector<16x1xf32>
    %1086 = arith.mulf %1085, %1011 : vector<16x1xf32>
    %1087 = arith.addf %1076, %1086 : vector<16x1xf32>
    %1088 = arith.mulf %983, %1087 : vector<16x1xf32>
    %1089 = tpu.iota {dimensions = array<i32: 1>} : vector<1x15xi32>
    %c13_i32_274 = arith.constant 13 : i32
    %1090 = vector.broadcast %c13_i32_274 : i32 to vector<1x15xi32>
    %1091 = arith.cmpi eq, %1089, %1090 : vector<1x15xi32>
    %cst_275 = arith.constant 0.000000e+00 : f32
    %1092 = vector.shape_cast %1091 : vector<1x15xi1> to vector<1x15xi1>
    %1093 = vector.broadcast %1092 : vector<1x15xi1> to vector<16x15xi1>
    %1094 = vector.broadcast %cst_275 : f32 to vector<16x15xf32>
    %1095 = arith.select %1093, %3, %1094 : vector<16x15xi1>, vector<16x15xf32>
    %cst_276 = arith.constant dense<0.000000e+00> : vector<16xf32>
    %1096 = vector.multi_reduction <add>, %1095, %cst_276 [1] : vector<16x15xf32> to vector<16xf32>
    %1097 = vector.shape_cast %1096 : vector<16xf32> to vector<16x1xf32>
    %1098 = arith.mulf %984, %1097 : vector<16x1xf32>
    %1099 = arith.addf %1088, %1098 : vector<16x1xf32>
    %1100 = tpu.iota {dimensions = array<i32: 1>} : vector<1x128xi32>
    %c42_i32 = arith.constant 42 : i32
    %1101 = vector.broadcast %c42_i32 : i32 to vector<1x128xi32>
    %1102 = arith.cmpi eq, %1100, %1101 : vector<1x128xi32>
    %cst_277 = arith.constant 0.000000e+00 : f32
    %1103 = vector.shape_cast %1102 : vector<1x128xi1> to vector<1x128xi1>
    %1104 = vector.broadcast %1103 : vector<1x128xi1> to vector<16x128xi1>
    %1105 = vector.broadcast %cst_277 : f32 to vector<16x128xf32>
    %1106 = arith.select %1104, %148, %1105 : vector<16x128xi1>, vector<16x128xf32>
    %cst_278 = arith.constant dense<0.000000e+00> : vector<16xf32>
    %1107 = vector.multi_reduction <add>, %1106, %cst_278 [1] : vector<16x128xf32> to vector<16xf32>
    %1108 = vector.shape_cast %1107 : vector<16xf32> to vector<16x1xf32>
    %1109 = arith.mulf %1108, %993 : vector<16x1xf32>
    %1110 = tpu.iota {dimensions = array<i32: 1>} : vector<1x128xi32>
    %c43_i32 = arith.constant 43 : i32
    %1111 = vector.broadcast %c43_i32 : i32 to vector<1x128xi32>
    %1112 = arith.cmpi eq, %1110, %1111 : vector<1x128xi32>
    %cst_279 = arith.constant 0.000000e+00 : f32
    %1113 = vector.shape_cast %1112 : vector<1x128xi1> to vector<1x128xi1>
    %1114 = vector.broadcast %1113 : vector<1x128xi1> to vector<16x128xi1>
    %1115 = vector.broadcast %cst_279 : f32 to vector<16x128xf32>
    %1116 = arith.select %1114, %148, %1115 : vector<16x128xi1>, vector<16x128xf32>
    %cst_280 = arith.constant dense<0.000000e+00> : vector<16xf32>
    %1117 = vector.multi_reduction <add>, %1116, %cst_280 [1] : vector<16x128xf32> to vector<16xf32>
    %1118 = vector.shape_cast %1117 : vector<16xf32> to vector<16x1xf32>
    %1119 = arith.mulf %1118, %1002 : vector<16x1xf32>
    %1120 = arith.addf %1109, %1119 : vector<16x1xf32>
    %1121 = tpu.iota {dimensions = array<i32: 1>} : vector<1x128xi32>
    %c44_i32 = arith.constant 44 : i32
    %1122 = vector.broadcast %c44_i32 : i32 to vector<1x128xi32>
    %1123 = arith.cmpi eq, %1121, %1122 : vector<1x128xi32>
    %cst_281 = arith.constant 0.000000e+00 : f32
    %1124 = vector.shape_cast %1123 : vector<1x128xi1> to vector<1x128xi1>
    %1125 = vector.broadcast %1124 : vector<1x128xi1> to vector<16x128xi1>
    %1126 = vector.broadcast %cst_281 : f32 to vector<16x128xf32>
    %1127 = arith.select %1125, %148, %1126 : vector<16x128xi1>, vector<16x128xf32>
    %cst_282 = arith.constant dense<0.000000e+00> : vector<16xf32>
    %1128 = vector.multi_reduction <add>, %1127, %cst_282 [1] : vector<16x128xf32> to vector<16xf32>
    %1129 = vector.shape_cast %1128 : vector<16xf32> to vector<16x1xf32>
    %1130 = arith.mulf %1129, %1011 : vector<16x1xf32>
    %1131 = arith.addf %1120, %1130 : vector<16x1xf32>
    %1132 = arith.mulf %983, %1131 : vector<16x1xf32>
    %1133 = tpu.iota {dimensions = array<i32: 1>} : vector<1x15xi32>
    %c14_i32_283 = arith.constant 14 : i32
    %1134 = vector.broadcast %c14_i32_283 : i32 to vector<1x15xi32>
    %1135 = arith.cmpi eq, %1133, %1134 : vector<1x15xi32>
    %cst_284 = arith.constant 0.000000e+00 : f32
    %1136 = vector.shape_cast %1135 : vector<1x15xi1> to vector<1x15xi1>
    %1137 = vector.broadcast %1136 : vector<1x15xi1> to vector<16x15xi1>
    %1138 = vector.broadcast %cst_284 : f32 to vector<16x15xf32>
    %1139 = arith.select %1137, %3, %1138 : vector<16x15xi1>, vector<16x15xf32>
    %cst_285 = arith.constant dense<0.000000e+00> : vector<16xf32>
    %1140 = vector.multi_reduction <add>, %1139, %cst_285 [1] : vector<16x15xf32> to vector<16xf32>
    %1141 = vector.shape_cast %1140 : vector<16xf32> to vector<16x1xf32>
    %1142 = arith.mulf %984, %1141 : vector<16x1xf32>
    %1143 = arith.addf %1132, %1142 : vector<16x1xf32>
    %1144 = tpu.iota {dimensions = array<i32: 1>} : vector<1x30xi32>
    %c0_i32_286 = arith.constant 0 : i32
    %1145 = vector.broadcast %c0_i32_286 : i32 to vector<1x30xi32>
    %1146 = arith.cmpi eq, %1144, %1145 : vector<1x30xi32>
    %cst_287 = arith.constant 0.000000e+00 : f32
    %1147 = vector.shape_cast %1146 : vector<1x30xi1> to vector<1x30xi1>
    %1148 = vector.broadcast %1147 : vector<1x30xi1> to vector<16x30xi1>
    %1149 = vector.broadcast %cst_287 : f32 to vector<16x30xf32>
    %1150 = arith.select %1148, %0, %1149 : vector<16x30xi1>, vector<16x30xf32>
    %cst_288 = arith.constant dense<0.000000e+00> : vector<16xf32>
    %1151 = vector.multi_reduction <add>, %1150, %cst_288 [1] : vector<16x30xf32> to vector<16xf32>
    %1152 = vector.shape_cast %1151 : vector<16xf32> to vector<16x1xf32>
    %1153 = tpu.iota {dimensions = array<i32: 1>} : vector<1x30xi32>
    %c1_i32_289 = arith.constant 1 : i32
    %1154 = vector.broadcast %c1_i32_289 : i32 to vector<1x30xi32>
    %1155 = arith.cmpi eq, %1153, %1154 : vector<1x30xi32>
    %cst_290 = arith.constant 0.000000e+00 : f32
    %1156 = vector.shape_cast %1155 : vector<1x30xi1> to vector<1x30xi1>
    %1157 = vector.broadcast %1156 : vector<1x30xi1> to vector<16x30xi1>
    %1158 = vector.broadcast %cst_290 : f32 to vector<16x30xf32>
    %1159 = arith.select %1157, %0, %1158 : vector<16x30xi1>, vector<16x30xf32>
    %cst_291 = arith.constant dense<0.000000e+00> : vector<16xf32>
    %1160 = vector.multi_reduction <add>, %1159, %cst_291 [1] : vector<16x30xf32> to vector<16xf32>
    %1161 = vector.shape_cast %1160 : vector<16xf32> to vector<16x1xf32>
    %1162 = tpu.iota {dimensions = array<i32: 1>} : vector<1x30xi32>
    %c2_i32_292 = arith.constant 2 : i32
    %1163 = vector.broadcast %c2_i32_292 : i32 to vector<1x30xi32>
    %1164 = arith.cmpi eq, %1162, %1163 : vector<1x30xi32>
    %cst_293 = arith.constant 0.000000e+00 : f32
    %1165 = vector.shape_cast %1164 : vector<1x30xi1> to vector<1x30xi1>
    %1166 = vector.broadcast %1165 : vector<1x30xi1> to vector<16x30xi1>
    %1167 = vector.broadcast %cst_293 : f32 to vector<16x30xf32>
    %1168 = arith.select %1166, %0, %1167 : vector<16x30xi1>, vector<16x30xf32>
    %cst_294 = arith.constant dense<0.000000e+00> : vector<16xf32>
    %1169 = vector.multi_reduction <add>, %1168, %cst_294 [1] : vector<16x30xf32> to vector<16xf32>
    %1170 = vector.shape_cast %1169 : vector<16xf32> to vector<16x1xf32>
    %1171 = tpu.iota {dimensions = array<i32: 1>} : vector<1x30xi32>
    %c3_i32_295 = arith.constant 3 : i32
    %1172 = vector.broadcast %c3_i32_295 : i32 to vector<1x30xi32>
    %1173 = arith.cmpi eq, %1171, %1172 : vector<1x30xi32>
    %cst_296 = arith.constant 0.000000e+00 : f32
    %1174 = vector.shape_cast %1173 : vector<1x30xi1> to vector<1x30xi1>
    %1175 = vector.broadcast %1174 : vector<1x30xi1> to vector<16x30xi1>
    %1176 = vector.broadcast %cst_296 : f32 to vector<16x30xf32>
    %1177 = arith.select %1175, %0, %1176 : vector<16x30xi1>, vector<16x30xf32>
    %cst_297 = arith.constant dense<0.000000e+00> : vector<16xf32>
    %1178 = vector.multi_reduction <add>, %1177, %cst_297 [1] : vector<16x30xf32> to vector<16xf32>
    %1179 = vector.shape_cast %1178 : vector<16xf32> to vector<16x1xf32>
    %1180 = tpu.iota {dimensions = array<i32: 1>} : vector<1x30xi32>
    %c4_i32_298 = arith.constant 4 : i32
    %1181 = vector.broadcast %c4_i32_298 : i32 to vector<1x30xi32>
    %1182 = arith.cmpi eq, %1180, %1181 : vector<1x30xi32>
    %cst_299 = arith.constant 0.000000e+00 : f32
    %1183 = vector.shape_cast %1182 : vector<1x30xi1> to vector<1x30xi1>
    %1184 = vector.broadcast %1183 : vector<1x30xi1> to vector<16x30xi1>
    %1185 = vector.broadcast %cst_299 : f32 to vector<16x30xf32>
    %1186 = arith.select %1184, %0, %1185 : vector<16x30xi1>, vector<16x30xf32>
    %cst_300 = arith.constant dense<0.000000e+00> : vector<16xf32>
    %1187 = vector.multi_reduction <add>, %1186, %cst_300 [1] : vector<16x30xf32> to vector<16xf32>
    %1188 = vector.shape_cast %1187 : vector<16xf32> to vector<16x1xf32>
    %1189 = tpu.iota {dimensions = array<i32: 1>} : vector<1x30xi32>
    %c5_i32_301 = arith.constant 5 : i32
    %1190 = vector.broadcast %c5_i32_301 : i32 to vector<1x30xi32>
    %1191 = arith.cmpi eq, %1189, %1190 : vector<1x30xi32>
    %cst_302 = arith.constant 0.000000e+00 : f32
    %1192 = vector.shape_cast %1191 : vector<1x30xi1> to vector<1x30xi1>
    %1193 = vector.broadcast %1192 : vector<1x30xi1> to vector<16x30xi1>
    %1194 = vector.broadcast %cst_302 : f32 to vector<16x30xf32>
    %1195 = arith.select %1193, %0, %1194 : vector<16x30xi1>, vector<16x30xf32>
    %cst_303 = arith.constant dense<0.000000e+00> : vector<16xf32>
    %1196 = vector.multi_reduction <add>, %1195, %cst_303 [1] : vector<16x30xf32> to vector<16xf32>
    %1197 = vector.shape_cast %1196 : vector<16xf32> to vector<16x1xf32>
    %1198 = tpu.iota {dimensions = array<i32: 1>} : vector<1x30xi32>
    %c6_i32_304 = arith.constant 6 : i32
    %1199 = vector.broadcast %c6_i32_304 : i32 to vector<1x30xi32>
    %1200 = arith.cmpi eq, %1198, %1199 : vector<1x30xi32>
    %cst_305 = arith.constant 0.000000e+00 : f32
    %1201 = vector.shape_cast %1200 : vector<1x30xi1> to vector<1x30xi1>
    %1202 = vector.broadcast %1201 : vector<1x30xi1> to vector<16x30xi1>
    %1203 = vector.broadcast %cst_305 : f32 to vector<16x30xf32>
    %1204 = arith.select %1202, %0, %1203 : vector<16x30xi1>, vector<16x30xf32>
    %cst_306 = arith.constant dense<0.000000e+00> : vector<16xf32>
    %1205 = vector.multi_reduction <add>, %1204, %cst_306 [1] : vector<16x30xf32> to vector<16xf32>
    %1206 = vector.shape_cast %1205 : vector<16xf32> to vector<16x1xf32>
    %1207 = tpu.iota {dimensions = array<i32: 1>} : vector<1x30xi32>
    %c7_i32_307 = arith.constant 7 : i32
    %1208 = vector.broadcast %c7_i32_307 : i32 to vector<1x30xi32>
    %1209 = arith.cmpi eq, %1207, %1208 : vector<1x30xi32>
    %cst_308 = arith.constant 0.000000e+00 : f32
    %1210 = vector.shape_cast %1209 : vector<1x30xi1> to vector<1x30xi1>
    %1211 = vector.broadcast %1210 : vector<1x30xi1> to vector<16x30xi1>
    %1212 = vector.broadcast %cst_308 : f32 to vector<16x30xf32>
    %1213 = arith.select %1211, %0, %1212 : vector<16x30xi1>, vector<16x30xf32>
    %cst_309 = arith.constant dense<0.000000e+00> : vector<16xf32>
    %1214 = vector.multi_reduction <add>, %1213, %cst_309 [1] : vector<16x30xf32> to vector<16xf32>
    %1215 = vector.shape_cast %1214 : vector<16xf32> to vector<16x1xf32>
    %1216 = tpu.iota {dimensions = array<i32: 1>} : vector<1x30xi32>
    %c8_i32_310 = arith.constant 8 : i32
    %1217 = vector.broadcast %c8_i32_310 : i32 to vector<1x30xi32>
    %1218 = arith.cmpi eq, %1216, %1217 : vector<1x30xi32>
    %cst_311 = arith.constant 0.000000e+00 : f32
    %1219 = vector.shape_cast %1218 : vector<1x30xi1> to vector<1x30xi1>
    %1220 = vector.broadcast %1219 : vector<1x30xi1> to vector<16x30xi1>
    %1221 = vector.broadcast %cst_311 : f32 to vector<16x30xf32>
    %1222 = arith.select %1220, %0, %1221 : vector<16x30xi1>, vector<16x30xf32>
    %cst_312 = arith.constant dense<0.000000e+00> : vector<16xf32>
    %1223 = vector.multi_reduction <add>, %1222, %cst_312 [1] : vector<16x30xf32> to vector<16xf32>
    %1224 = vector.shape_cast %1223 : vector<16xf32> to vector<16x1xf32>
    %1225 = tpu.iota {dimensions = array<i32: 1>} : vector<1x30xi32>
    %c9_i32_313 = arith.constant 9 : i32
    %1226 = vector.broadcast %c9_i32_313 : i32 to vector<1x30xi32>
    %1227 = arith.cmpi eq, %1225, %1226 : vector<1x30xi32>
    %cst_314 = arith.constant 0.000000e+00 : f32
    %1228 = vector.shape_cast %1227 : vector<1x30xi1> to vector<1x30xi1>
    %1229 = vector.broadcast %1228 : vector<1x30xi1> to vector<16x30xi1>
    %1230 = vector.broadcast %cst_314 : f32 to vector<16x30xf32>
    %1231 = arith.select %1229, %0, %1230 : vector<16x30xi1>, vector<16x30xf32>
    %cst_315 = arith.constant dense<0.000000e+00> : vector<16xf32>
    %1232 = vector.multi_reduction <add>, %1231, %cst_315 [1] : vector<16x30xf32> to vector<16xf32>
    %1233 = vector.shape_cast %1232 : vector<16xf32> to vector<16x1xf32>
    %1234 = tpu.iota {dimensions = array<i32: 1>} : vector<1x30xi32>
    %c10_i32_316 = arith.constant 10 : i32
    %1235 = vector.broadcast %c10_i32_316 : i32 to vector<1x30xi32>
    %1236 = arith.cmpi eq, %1234, %1235 : vector<1x30xi32>
    %cst_317 = arith.constant 0.000000e+00 : f32
    %1237 = vector.shape_cast %1236 : vector<1x30xi1> to vector<1x30xi1>
    %1238 = vector.broadcast %1237 : vector<1x30xi1> to vector<16x30xi1>
    %1239 = vector.broadcast %cst_317 : f32 to vector<16x30xf32>
    %1240 = arith.select %1238, %0, %1239 : vector<16x30xi1>, vector<16x30xf32>
    %cst_318 = arith.constant dense<0.000000e+00> : vector<16xf32>
    %1241 = vector.multi_reduction <add>, %1240, %cst_318 [1] : vector<16x30xf32> to vector<16xf32>
    %1242 = vector.shape_cast %1241 : vector<16xf32> to vector<16x1xf32>
    %1243 = tpu.iota {dimensions = array<i32: 1>} : vector<1x30xi32>
    %c11_i32_319 = arith.constant 11 : i32
    %1244 = vector.broadcast %c11_i32_319 : i32 to vector<1x30xi32>
    %1245 = arith.cmpi eq, %1243, %1244 : vector<1x30xi32>
    %cst_320 = arith.constant 0.000000e+00 : f32
    %1246 = vector.shape_cast %1245 : vector<1x30xi1> to vector<1x30xi1>
    %1247 = vector.broadcast %1246 : vector<1x30xi1> to vector<16x30xi1>
    %1248 = vector.broadcast %cst_320 : f32 to vector<16x30xf32>
    %1249 = arith.select %1247, %0, %1248 : vector<16x30xi1>, vector<16x30xf32>
    %cst_321 = arith.constant dense<0.000000e+00> : vector<16xf32>
    %1250 = vector.multi_reduction <add>, %1249, %cst_321 [1] : vector<16x30xf32> to vector<16xf32>
    %1251 = vector.shape_cast %1250 : vector<16xf32> to vector<16x1xf32>
    %1252 = tpu.iota {dimensions = array<i32: 1>} : vector<1x30xi32>
    %c12_i32_322 = arith.constant 12 : i32
    %1253 = vector.broadcast %c12_i32_322 : i32 to vector<1x30xi32>
    %1254 = arith.cmpi eq, %1252, %1253 : vector<1x30xi32>
    %cst_323 = arith.constant 0.000000e+00 : f32
    %1255 = vector.shape_cast %1254 : vector<1x30xi1> to vector<1x30xi1>
    %1256 = vector.broadcast %1255 : vector<1x30xi1> to vector<16x30xi1>
    %1257 = vector.broadcast %cst_323 : f32 to vector<16x30xf32>
    %1258 = arith.select %1256, %0, %1257 : vector<16x30xi1>, vector<16x30xf32>
    %cst_324 = arith.constant dense<0.000000e+00> : vector<16xf32>
    %1259 = vector.multi_reduction <add>, %1258, %cst_324 [1] : vector<16x30xf32> to vector<16xf32>
    %1260 = vector.shape_cast %1259 : vector<16xf32> to vector<16x1xf32>
    %1261 = tpu.iota {dimensions = array<i32: 1>} : vector<1x30xi32>
    %c13_i32_325 = arith.constant 13 : i32
    %1262 = vector.broadcast %c13_i32_325 : i32 to vector<1x30xi32>
    %1263 = arith.cmpi eq, %1261, %1262 : vector<1x30xi32>
    %cst_326 = arith.constant 0.000000e+00 : f32
    %1264 = vector.shape_cast %1263 : vector<1x30xi1> to vector<1x30xi1>
    %1265 = vector.broadcast %1264 : vector<1x30xi1> to vector<16x30xi1>
    %1266 = vector.broadcast %cst_326 : f32 to vector<16x30xf32>
    %1267 = arith.select %1265, %0, %1266 : vector<16x30xi1>, vector<16x30xf32>
    %cst_327 = arith.constant dense<0.000000e+00> : vector<16xf32>
    %1268 = vector.multi_reduction <add>, %1267, %cst_327 [1] : vector<16x30xf32> to vector<16xf32>
    %1269 = vector.shape_cast %1268 : vector<16xf32> to vector<16x1xf32>
    %1270 = tpu.iota {dimensions = array<i32: 1>} : vector<1x30xi32>
    %c14_i32_328 = arith.constant 14 : i32
    %1271 = vector.broadcast %c14_i32_328 : i32 to vector<1x30xi32>
    %1272 = arith.cmpi eq, %1270, %1271 : vector<1x30xi32>
    %cst_329 = arith.constant 0.000000e+00 : f32
    %1273 = vector.shape_cast %1272 : vector<1x30xi1> to vector<1x30xi1>
    %1274 = vector.broadcast %1273 : vector<1x30xi1> to vector<16x30xi1>
    %1275 = vector.broadcast %cst_329 : f32 to vector<16x30xf32>
    %1276 = arith.select %1274, %0, %1275 : vector<16x30xi1>, vector<16x30xf32>
    %cst_330 = arith.constant dense<0.000000e+00> : vector<16xf32>
    %1277 = vector.multi_reduction <add>, %1276, %cst_330 [1] : vector<16x30xf32> to vector<16xf32>
    %1278 = vector.shape_cast %1277 : vector<16xf32> to vector<16x1xf32>
    %cst_331 = arith.constant 0.000000e+00 : f32
    %1279 = vector.broadcast %cst_331 : f32 to vector<16x1xf32>
    %1280 = arith.cmpf one, %1152, %1279 : vector<16x1xf32>
    %cst_332 = arith.constant 0.000000e+00 : f32
    %1281 = vector.broadcast %cst_332 : f32 to vector<16x1xf32>
    %1282 = arith.cmpf one, %1161, %1281 : vector<16x1xf32>
    %1283 = arith.ori %1280, %1282 : vector<16x1xi1>
    %cst_333 = arith.constant 0.000000e+00 : f32
    %1284 = vector.broadcast %cst_333 : f32 to vector<16x1xf32>
    %1285 = arith.cmpf one, %1170, %1284 : vector<16x1xf32>
    %1286 = arith.ori %1283, %1285 : vector<16x1xi1>
    %1287 = arith.extui %1286 : vector<16x1xi1> to vector<16x1xi32>
    %1288 = arith.sitofp %1287 : vector<16x1xi32> to vector<16x1xf32>
    %cst_334 = arith.constant 0.000000e+00 : f32
    %1289 = vector.broadcast %cst_334 : f32 to vector<16x1xf32>
    %1290 = arith.cmpf one, %1179, %1289 : vector<16x1xf32>
    %cst_335 = arith.constant 0.000000e+00 : f32
    %1291 = vector.broadcast %cst_335 : f32 to vector<16x1xf32>
    %1292 = arith.cmpf one, %1188, %1291 : vector<16x1xf32>
    %1293 = arith.ori %1290, %1292 : vector<16x1xi1>
    %cst_336 = arith.constant 0.000000e+00 : f32
    %1294 = vector.broadcast %cst_336 : f32 to vector<16x1xf32>
    %1295 = arith.cmpf one, %1197, %1294 : vector<16x1xf32>
    %1296 = arith.ori %1293, %1295 : vector<16x1xi1>
    %1297 = arith.extui %1296 : vector<16x1xi1> to vector<16x1xi32>
    %1298 = arith.sitofp %1297 : vector<16x1xi32> to vector<16x1xf32>
    %cst_337 = arith.constant 0.000000e+00 : f32
    %1299 = vector.broadcast %cst_337 : f32 to vector<16x1xf32>
    %1300 = arith.cmpf one, %1206, %1299 : vector<16x1xf32>
    %cst_338 = arith.constant 0.000000e+00 : f32
    %1301 = vector.broadcast %cst_338 : f32 to vector<16x1xf32>
    %1302 = arith.cmpf one, %1215, %1301 : vector<16x1xf32>
    %1303 = arith.ori %1300, %1302 : vector<16x1xi1>
    %cst_339 = arith.constant 0.000000e+00 : f32
    %1304 = vector.broadcast %cst_339 : f32 to vector<16x1xf32>
    %1305 = arith.cmpf one, %1224, %1304 : vector<16x1xf32>
    %1306 = arith.ori %1303, %1305 : vector<16x1xi1>
    %1307 = arith.extui %1306 : vector<16x1xi1> to vector<16x1xi32>
    %1308 = arith.sitofp %1307 : vector<16x1xi32> to vector<16x1xf32>
    %cst_340 = arith.constant 0.000000e+00 : f32
    %1309 = vector.broadcast %cst_340 : f32 to vector<16x1xf32>
    %1310 = arith.cmpf one, %1233, %1309 : vector<16x1xf32>
    %cst_341 = arith.constant 0.000000e+00 : f32
    %1311 = vector.broadcast %cst_341 : f32 to vector<16x1xf32>
    %1312 = arith.cmpf one, %1242, %1311 : vector<16x1xf32>
    %1313 = arith.ori %1310, %1312 : vector<16x1xi1>
    %cst_342 = arith.constant 0.000000e+00 : f32
    %1314 = vector.broadcast %cst_342 : f32 to vector<16x1xf32>
    %1315 = arith.cmpf one, %1251, %1314 : vector<16x1xf32>
    %1316 = arith.ori %1313, %1315 : vector<16x1xi1>
    %1317 = arith.extui %1316 : vector<16x1xi1> to vector<16x1xi32>
    %1318 = arith.sitofp %1317 : vector<16x1xi32> to vector<16x1xf32>
    %cst_343 = arith.constant 0.000000e+00 : f32
    %1319 = vector.broadcast %cst_343 : f32 to vector<16x1xf32>
    %1320 = arith.cmpf one, %1260, %1319 : vector<16x1xf32>
    %cst_344 = arith.constant 0.000000e+00 : f32
    %1321 = vector.broadcast %cst_344 : f32 to vector<16x1xf32>
    %1322 = arith.cmpf one, %1269, %1321 : vector<16x1xf32>
    %1323 = arith.ori %1320, %1322 : vector<16x1xi1>
    %cst_345 = arith.constant 0.000000e+00 : f32
    %1324 = vector.broadcast %cst_345 : f32 to vector<16x1xf32>
    %1325 = arith.cmpf one, %1278, %1324 : vector<16x1xf32>
    %1326 = arith.ori %1323, %1325 : vector<16x1xi1>
    %1327 = arith.extui %1326 : vector<16x1xi1> to vector<16x1xi32>
    %1328 = arith.sitofp %1327 : vector<16x1xi32> to vector<16x1xf32>
    %1329 = arith.addf %1152, %259 : vector<16x1xf32>
    %1330 = arith.mulf %1329, %1288 : vector<16x1xf32>
    %1331 = arith.addf %1179, %458 : vector<16x1xf32>
    %1332 = arith.mulf %1331, %1298 : vector<16x1xf32>
    %1333 = arith.addf %1206, %657 : vector<16x1xf32>
    %1334 = arith.mulf %1333, %1308 : vector<16x1xf32>
    %1335 = arith.addf %1233, %856 : vector<16x1xf32>
    %1336 = arith.mulf %1335, %1318 : vector<16x1xf32>
    %1337 = arith.addf %1260, %1055 : vector<16x1xf32>
    %1338 = arith.mulf %1337, %1328 : vector<16x1xf32>
    %1339 = arith.addf %1161, %303 : vector<16x1xf32>
    %1340 = arith.mulf %1339, %1288 : vector<16x1xf32>
    %1341 = arith.addf %1188, %502 : vector<16x1xf32>
    %1342 = arith.mulf %1341, %1298 : vector<16x1xf32>
    %1343 = arith.addf %1215, %701 : vector<16x1xf32>
    %1344 = arith.mulf %1343, %1308 : vector<16x1xf32>
    %1345 = arith.addf %1242, %900 : vector<16x1xf32>
    %1346 = arith.mulf %1345, %1318 : vector<16x1xf32>
    %1347 = arith.addf %1269, %1099 : vector<16x1xf32>
    %1348 = arith.mulf %1347, %1328 : vector<16x1xf32>
    %1349 = arith.addf %1170, %347 : vector<16x1xf32>
    %1350 = arith.mulf %1349, %1288 : vector<16x1xf32>
    %1351 = arith.addf %1197, %546 : vector<16x1xf32>
    %1352 = arith.mulf %1351, %1298 : vector<16x1xf32>
    %1353 = arith.addf %1224, %745 : vector<16x1xf32>
    %1354 = arith.mulf %1353, %1308 : vector<16x1xf32>
    %1355 = arith.addf %1251, %944 : vector<16x1xf32>
    %1356 = arith.mulf %1355, %1318 : vector<16x1xf32>
    %1357 = arith.addf %1278, %1143 : vector<16x1xf32>
    %1358 = arith.mulf %1357, %1328 : vector<16x1xf32>
    %1359 = arith.addf %1330, %1330 : vector<16x1xf32>
    %cst_346 = arith.constant 0.000000e+00 : f32
    %1360 = vector.broadcast %cst_346 : f32 to vector<16x1xf32>
    %1361 = arith.cmpf oeq, %1359, %1360 : vector<16x1xf32>
    %1362 = math.absf %1340 : vector<16x1xf32>
    %cst_347 = arith.constant 0.000000e+00 : f32
    %1363 = vector.broadcast %cst_347 : f32 to vector<16x1xf32>
    %1364 = arith.cmpf ogt, %1340, %1363 : vector<16x1xf32>
    %cst_348 = arith.constant 0.000000e+00 : f32
    %1365 = vector.broadcast %cst_348 : f32 to vector<16x1xf32>
    %1366 = arith.cmpf olt, %1340, %1365 : vector<16x1xf32>
    %cst_349 = arith.constant -1.000000e+00 : f32
    %cst_350 = arith.constant 0.000000e+00 : f32
    %1367 = vector.broadcast %cst_349 : f32 to vector<16x1xf32>
    %1368 = vector.broadcast %cst_350 : f32 to vector<16x1xf32>
    %1369 = arith.select %1366, %1367, %1368 : vector<16x1xi1>, vector<16x1xf32>
    %cst_351 = arith.constant 1.000000e+00 : f32
    %1370 = vector.broadcast %cst_351 : f32 to vector<16x1xf32>
    %1371 = arith.select %1364, %1370, %1369 : vector<16x1xi1>, vector<16x1xf32>
    %cst_352 = arith.constant 2.41421366 : f32
    %1372 = vector.broadcast %cst_352 : f32 to vector<16x1xf32>
    %1373 = arith.cmpf ogt, %1362, %1372 : vector<16x1xf32>
    %cst_353 = arith.constant 0.414213568 : f32
    %1374 = vector.broadcast %cst_353 : f32 to vector<16x1xf32>
    %1375 = arith.cmpf ogt, %1362, %1374 : vector<16x1xf32>
    %cst_354 = arith.constant 0.785398185 : f32
    %cst_355 = arith.constant 0.000000e+00 : f32
    %1376 = vector.broadcast %cst_354 : f32 to vector<16x1xf32>
    %1377 = vector.broadcast %cst_355 : f32 to vector<16x1xf32>
    %1378 = arith.select %1375, %1376, %1377 : vector<16x1xi1>, vector<16x1xf32>
    %cst_356 = arith.constant 1.57079637 : f32
    %1379 = vector.broadcast %cst_356 : f32 to vector<16x1xf32>
    %1380 = arith.select %1373, %1379, %1378 : vector<16x1xi1>, vector<16x1xf32>
    %cst_357 = arith.constant 1.000000e-30 : f32
    %1381 = vector.broadcast %cst_357 : f32 to vector<16x1xf32>
    %1382 = arith.maximumf %1362, %1381 : vector<16x1xf32>
    %cst_358 = arith.constant -1.000000e+00 : f32
    %1383 = vector.broadcast %cst_358 : f32 to vector<16x1xf32>
    %1384 = arith.divf %1383, %1382 : vector<16x1xf32>
    %cst_359 = arith.constant 1.000000e+00 : f32
    %1385 = vector.broadcast %cst_359 : f32 to vector<16x1xf32>
    %1386 = arith.subf %1362, %1385 : vector<16x1xf32>
    %cst_360 = arith.constant 1.000000e+00 : f32
    %1387 = vector.broadcast %cst_360 : f32 to vector<16x1xf32>
    %1388 = arith.addf %1362, %1387 : vector<16x1xf32>
    %1389 = arith.divf %1386, %1388 : vector<16x1xf32>
    %1390 = arith.select %1375, %1389, %1362 : vector<16x1xi1>, vector<16x1xf32>
    %1391 = arith.select %1373, %1384, %1390 : vector<16x1xi1>, vector<16x1xf32>
    %1392 = arith.mulf %1391, %1391 : vector<16x1xf32>
    %cst_361 = arith.constant 0.0805374458 : f32
    %1393 = vector.broadcast %cst_361 : f32 to vector<16x1xf32>
    %1394 = arith.mulf %1393, %1392 : vector<16x1xf32>
    %cst_362 = arith.constant 0.138776854 : f32
    %1395 = vector.broadcast %cst_362 : f32 to vector<16x1xf32>
    %1396 = arith.subf %1394, %1395 : vector<16x1xf32>
    %1397 = arith.mulf %1396, %1392 : vector<16x1xf32>
    %cst_363 = arith.constant 0.199777111 : f32
    %1398 = vector.broadcast %cst_363 : f32 to vector<16x1xf32>
    %1399 = arith.addf %1397, %1398 : vector<16x1xf32>
    %1400 = arith.mulf %1399, %1392 : vector<16x1xf32>
    %cst_364 = arith.constant 0.333329499 : f32
    %1401 = vector.broadcast %cst_364 : f32 to vector<16x1xf32>
    %1402 = arith.subf %1400, %1401 : vector<16x1xf32>
    %1403 = arith.mulf %1402, %1392 : vector<16x1xf32>
    %1404 = arith.mulf %1403, %1391 : vector<16x1xf32>
    %1405 = arith.addf %1404, %1391 : vector<16x1xf32>
    %1406 = arith.addf %1380, %1405 : vector<16x1xf32>
    %1407 = arith.mulf %1371, %1406 : vector<16x1xf32>
    %cst_365 = arith.constant 0.000000e+00 : f32
    %1408 = vector.broadcast %cst_365 : f32 to vector<16x1xf32>
    %1409 = arith.cmpf ogt, %1340, %1408 : vector<16x1xf32>
    %cst_366 = arith.constant 0.000000e+00 : f32
    %1410 = vector.broadcast %cst_366 : f32 to vector<16x1xf32>
    %1411 = arith.cmpf olt, %1340, %1410 : vector<16x1xf32>
    %cst_367 = arith.constant -1.57079637 : f32
    %cst_368 = arith.constant 0.000000e+00 : f32
    %1412 = vector.broadcast %cst_367 : f32 to vector<16x1xf32>
    %1413 = vector.broadcast %cst_368 : f32 to vector<16x1xf32>
    %1414 = arith.select %1411, %1412, %1413 : vector<16x1xi1>, vector<16x1xf32>
    %cst_369 = arith.constant 1.57079637 : f32
    %1415 = vector.broadcast %cst_369 : f32 to vector<16x1xf32>
    %1416 = arith.select %1409, %1415, %1414 : vector<16x1xi1>, vector<16x1xf32>
    %1417 = arith.select %1361, %1407, %1416 : vector<16x1xi1>, vector<16x1xf32>
    %1418 = arith.addf %1332, %1332 : vector<16x1xf32>
    %cst_370 = arith.constant 0.000000e+00 : f32
    %1419 = vector.broadcast %cst_370 : f32 to vector<16x1xf32>
    %1420 = arith.cmpf oeq, %1418, %1419 : vector<16x1xf32>
    %1421 = math.absf %1342 : vector<16x1xf32>
    %cst_371 = arith.constant 0.000000e+00 : f32
    %1422 = vector.broadcast %cst_371 : f32 to vector<16x1xf32>
    %1423 = arith.cmpf ogt, %1342, %1422 : vector<16x1xf32>
    %cst_372 = arith.constant 0.000000e+00 : f32
    %1424 = vector.broadcast %cst_372 : f32 to vector<16x1xf32>
    %1425 = arith.cmpf olt, %1342, %1424 : vector<16x1xf32>
    %cst_373 = arith.constant -1.000000e+00 : f32
    %cst_374 = arith.constant 0.000000e+00 : f32
    %1426 = vector.broadcast %cst_373 : f32 to vector<16x1xf32>
    %1427 = vector.broadcast %cst_374 : f32 to vector<16x1xf32>
    %1428 = arith.select %1425, %1426, %1427 : vector<16x1xi1>, vector<16x1xf32>
    %cst_375 = arith.constant 1.000000e+00 : f32
    %1429 = vector.broadcast %cst_375 : f32 to vector<16x1xf32>
    %1430 = arith.select %1423, %1429, %1428 : vector<16x1xi1>, vector<16x1xf32>
    %cst_376 = arith.constant 2.41421366 : f32
    %1431 = vector.broadcast %cst_376 : f32 to vector<16x1xf32>
    %1432 = arith.cmpf ogt, %1421, %1431 : vector<16x1xf32>
    %cst_377 = arith.constant 0.414213568 : f32
    %1433 = vector.broadcast %cst_377 : f32 to vector<16x1xf32>
    %1434 = arith.cmpf ogt, %1421, %1433 : vector<16x1xf32>
    %cst_378 = arith.constant 0.785398185 : f32
    %cst_379 = arith.constant 0.000000e+00 : f32
    %1435 = vector.broadcast %cst_378 : f32 to vector<16x1xf32>
    %1436 = vector.broadcast %cst_379 : f32 to vector<16x1xf32>
    %1437 = arith.select %1434, %1435, %1436 : vector<16x1xi1>, vector<16x1xf32>
    %cst_380 = arith.constant 1.57079637 : f32
    %1438 = vector.broadcast %cst_380 : f32 to vector<16x1xf32>
    %1439 = arith.select %1432, %1438, %1437 : vector<16x1xi1>, vector<16x1xf32>
    %cst_381 = arith.constant 1.000000e-30 : f32
    %1440 = vector.broadcast %cst_381 : f32 to vector<16x1xf32>
    %1441 = arith.maximumf %1421, %1440 : vector<16x1xf32>
    %cst_382 = arith.constant -1.000000e+00 : f32
    %1442 = vector.broadcast %cst_382 : f32 to vector<16x1xf32>
    %1443 = arith.divf %1442, %1441 : vector<16x1xf32>
    %cst_383 = arith.constant 1.000000e+00 : f32
    %1444 = vector.broadcast %cst_383 : f32 to vector<16x1xf32>
    %1445 = arith.subf %1421, %1444 : vector<16x1xf32>
    %cst_384 = arith.constant 1.000000e+00 : f32
    %1446 = vector.broadcast %cst_384 : f32 to vector<16x1xf32>
    %1447 = arith.addf %1421, %1446 : vector<16x1xf32>
    %1448 = arith.divf %1445, %1447 : vector<16x1xf32>
    %1449 = arith.select %1434, %1448, %1421 : vector<16x1xi1>, vector<16x1xf32>
    %1450 = arith.select %1432, %1443, %1449 : vector<16x1xi1>, vector<16x1xf32>
    %1451 = arith.mulf %1450, %1450 : vector<16x1xf32>
    %cst_385 = arith.constant 0.0805374458 : f32
    %1452 = vector.broadcast %cst_385 : f32 to vector<16x1xf32>
    %1453 = arith.mulf %1452, %1451 : vector<16x1xf32>
    %cst_386 = arith.constant 0.138776854 : f32
    %1454 = vector.broadcast %cst_386 : f32 to vector<16x1xf32>
    %1455 = arith.subf %1453, %1454 : vector<16x1xf32>
    %1456 = arith.mulf %1455, %1451 : vector<16x1xf32>
    %cst_387 = arith.constant 0.199777111 : f32
    %1457 = vector.broadcast %cst_387 : f32 to vector<16x1xf32>
    %1458 = arith.addf %1456, %1457 : vector<16x1xf32>
    %1459 = arith.mulf %1458, %1451 : vector<16x1xf32>
    %cst_388 = arith.constant 0.333329499 : f32
    %1460 = vector.broadcast %cst_388 : f32 to vector<16x1xf32>
    %1461 = arith.subf %1459, %1460 : vector<16x1xf32>
    %1462 = arith.mulf %1461, %1451 : vector<16x1xf32>
    %1463 = arith.mulf %1462, %1450 : vector<16x1xf32>
    %1464 = arith.addf %1463, %1450 : vector<16x1xf32>
    %1465 = arith.addf %1439, %1464 : vector<16x1xf32>
    %1466 = arith.mulf %1430, %1465 : vector<16x1xf32>
    %cst_389 = arith.constant 0.000000e+00 : f32
    %1467 = vector.broadcast %cst_389 : f32 to vector<16x1xf32>
    %1468 = arith.cmpf ogt, %1342, %1467 : vector<16x1xf32>
    %cst_390 = arith.constant 0.000000e+00 : f32
    %1469 = vector.broadcast %cst_390 : f32 to vector<16x1xf32>
    %1470 = arith.cmpf olt, %1342, %1469 : vector<16x1xf32>
    %cst_391 = arith.constant -1.57079637 : f32
    %cst_392 = arith.constant 0.000000e+00 : f32
    %1471 = vector.broadcast %cst_391 : f32 to vector<16x1xf32>
    %1472 = vector.broadcast %cst_392 : f32 to vector<16x1xf32>
    %1473 = arith.select %1470, %1471, %1472 : vector<16x1xi1>, vector<16x1xf32>
    %cst_393 = arith.constant 1.57079637 : f32
    %1474 = vector.broadcast %cst_393 : f32 to vector<16x1xf32>
    %1475 = arith.select %1468, %1474, %1473 : vector<16x1xi1>, vector<16x1xf32>
    %1476 = arith.select %1420, %1466, %1475 : vector<16x1xi1>, vector<16x1xf32>
    %1477 = arith.addf %1334, %1334 : vector<16x1xf32>
    %cst_394 = arith.constant 0.000000e+00 : f32
    %1478 = vector.broadcast %cst_394 : f32 to vector<16x1xf32>
    %1479 = arith.cmpf oeq, %1477, %1478 : vector<16x1xf32>
    %1480 = math.absf %1344 : vector<16x1xf32>
    %cst_395 = arith.constant 0.000000e+00 : f32
    %1481 = vector.broadcast %cst_395 : f32 to vector<16x1xf32>
    %1482 = arith.cmpf ogt, %1344, %1481 : vector<16x1xf32>
    %cst_396 = arith.constant 0.000000e+00 : f32
    %1483 = vector.broadcast %cst_396 : f32 to vector<16x1xf32>
    %1484 = arith.cmpf olt, %1344, %1483 : vector<16x1xf32>
    %cst_397 = arith.constant -1.000000e+00 : f32
    %cst_398 = arith.constant 0.000000e+00 : f32
    %1485 = vector.broadcast %cst_397 : f32 to vector<16x1xf32>
    %1486 = vector.broadcast %cst_398 : f32 to vector<16x1xf32>
    %1487 = arith.select %1484, %1485, %1486 : vector<16x1xi1>, vector<16x1xf32>
    %cst_399 = arith.constant 1.000000e+00 : f32
    %1488 = vector.broadcast %cst_399 : f32 to vector<16x1xf32>
    %1489 = arith.select %1482, %1488, %1487 : vector<16x1xi1>, vector<16x1xf32>
    %cst_400 = arith.constant 2.41421366 : f32
    %1490 = vector.broadcast %cst_400 : f32 to vector<16x1xf32>
    %1491 = arith.cmpf ogt, %1480, %1490 : vector<16x1xf32>
    %cst_401 = arith.constant 0.414213568 : f32
    %1492 = vector.broadcast %cst_401 : f32 to vector<16x1xf32>
    %1493 = arith.cmpf ogt, %1480, %1492 : vector<16x1xf32>
    %cst_402 = arith.constant 0.785398185 : f32
    %cst_403 = arith.constant 0.000000e+00 : f32
    %1494 = vector.broadcast %cst_402 : f32 to vector<16x1xf32>
    %1495 = vector.broadcast %cst_403 : f32 to vector<16x1xf32>
    %1496 = arith.select %1493, %1494, %1495 : vector<16x1xi1>, vector<16x1xf32>
    %cst_404 = arith.constant 1.57079637 : f32
    %1497 = vector.broadcast %cst_404 : f32 to vector<16x1xf32>
    %1498 = arith.select %1491, %1497, %1496 : vector<16x1xi1>, vector<16x1xf32>
    %cst_405 = arith.constant 1.000000e-30 : f32
    %1499 = vector.broadcast %cst_405 : f32 to vector<16x1xf32>
    %1500 = arith.maximumf %1480, %1499 : vector<16x1xf32>
    %cst_406 = arith.constant -1.000000e+00 : f32
    %1501 = vector.broadcast %cst_406 : f32 to vector<16x1xf32>
    %1502 = arith.divf %1501, %1500 : vector<16x1xf32>
    %cst_407 = arith.constant 1.000000e+00 : f32
    %1503 = vector.broadcast %cst_407 : f32 to vector<16x1xf32>
    %1504 = arith.subf %1480, %1503 : vector<16x1xf32>
    %cst_408 = arith.constant 1.000000e+00 : f32
    %1505 = vector.broadcast %cst_408 : f32 to vector<16x1xf32>
    %1506 = arith.addf %1480, %1505 : vector<16x1xf32>
    %1507 = arith.divf %1504, %1506 : vector<16x1xf32>
    %1508 = arith.select %1493, %1507, %1480 : vector<16x1xi1>, vector<16x1xf32>
    %1509 = arith.select %1491, %1502, %1508 : vector<16x1xi1>, vector<16x1xf32>
    %1510 = arith.mulf %1509, %1509 : vector<16x1xf32>
    %cst_409 = arith.constant 0.0805374458 : f32
    %1511 = vector.broadcast %cst_409 : f32 to vector<16x1xf32>
    %1512 = arith.mulf %1511, %1510 : vector<16x1xf32>
    %cst_410 = arith.constant 0.138776854 : f32
    %1513 = vector.broadcast %cst_410 : f32 to vector<16x1xf32>
    %1514 = arith.subf %1512, %1513 : vector<16x1xf32>
    %1515 = arith.mulf %1514, %1510 : vector<16x1xf32>
    %cst_411 = arith.constant 0.199777111 : f32
    %1516 = vector.broadcast %cst_411 : f32 to vector<16x1xf32>
    %1517 = arith.addf %1515, %1516 : vector<16x1xf32>
    %1518 = arith.mulf %1517, %1510 : vector<16x1xf32>
    %cst_412 = arith.constant 0.333329499 : f32
    %1519 = vector.broadcast %cst_412 : f32 to vector<16x1xf32>
    %1520 = arith.subf %1518, %1519 : vector<16x1xf32>
    %1521 = arith.mulf %1520, %1510 : vector<16x1xf32>
    %1522 = arith.mulf %1521, %1509 : vector<16x1xf32>
    %1523 = arith.addf %1522, %1509 : vector<16x1xf32>
    %1524 = arith.addf %1498, %1523 : vector<16x1xf32>
    %1525 = arith.mulf %1489, %1524 : vector<16x1xf32>
    %cst_413 = arith.constant 0.000000e+00 : f32
    %1526 = vector.broadcast %cst_413 : f32 to vector<16x1xf32>
    %1527 = arith.cmpf ogt, %1344, %1526 : vector<16x1xf32>
    %cst_414 = arith.constant 0.000000e+00 : f32
    %1528 = vector.broadcast %cst_414 : f32 to vector<16x1xf32>
    %1529 = arith.cmpf olt, %1344, %1528 : vector<16x1xf32>
    %cst_415 = arith.constant -1.57079637 : f32
    %cst_416 = arith.constant 0.000000e+00 : f32
    %1530 = vector.broadcast %cst_415 : f32 to vector<16x1xf32>
    %1531 = vector.broadcast %cst_416 : f32 to vector<16x1xf32>
    %1532 = arith.select %1529, %1530, %1531 : vector<16x1xi1>, vector<16x1xf32>
    %cst_417 = arith.constant 1.57079637 : f32
    %1533 = vector.broadcast %cst_417 : f32 to vector<16x1xf32>
    %1534 = arith.select %1527, %1533, %1532 : vector<16x1xi1>, vector<16x1xf32>
    %1535 = arith.select %1479, %1525, %1534 : vector<16x1xi1>, vector<16x1xf32>
    %1536 = arith.addf %1336, %1336 : vector<16x1xf32>
    %cst_418 = arith.constant 0.000000e+00 : f32
    %1537 = vector.broadcast %cst_418 : f32 to vector<16x1xf32>
    %1538 = arith.cmpf oeq, %1536, %1537 : vector<16x1xf32>
    %1539 = math.absf %1346 : vector<16x1xf32>
    %cst_419 = arith.constant 0.000000e+00 : f32
    %1540 = vector.broadcast %cst_419 : f32 to vector<16x1xf32>
    %1541 = arith.cmpf ogt, %1346, %1540 : vector<16x1xf32>
    %cst_420 = arith.constant 0.000000e+00 : f32
    %1542 = vector.broadcast %cst_420 : f32 to vector<16x1xf32>
    %1543 = arith.cmpf olt, %1346, %1542 : vector<16x1xf32>
    %cst_421 = arith.constant -1.000000e+00 : f32
    %cst_422 = arith.constant 0.000000e+00 : f32
    %1544 = vector.broadcast %cst_421 : f32 to vector<16x1xf32>
    %1545 = vector.broadcast %cst_422 : f32 to vector<16x1xf32>
    %1546 = arith.select %1543, %1544, %1545 : vector<16x1xi1>, vector<16x1xf32>
    %cst_423 = arith.constant 1.000000e+00 : f32
    %1547 = vector.broadcast %cst_423 : f32 to vector<16x1xf32>
    %1548 = arith.select %1541, %1547, %1546 : vector<16x1xi1>, vector<16x1xf32>
    %cst_424 = arith.constant 2.41421366 : f32
    %1549 = vector.broadcast %cst_424 : f32 to vector<16x1xf32>
    %1550 = arith.cmpf ogt, %1539, %1549 : vector<16x1xf32>
    %cst_425 = arith.constant 0.414213568 : f32
    %1551 = vector.broadcast %cst_425 : f32 to vector<16x1xf32>
    %1552 = arith.cmpf ogt, %1539, %1551 : vector<16x1xf32>
    %cst_426 = arith.constant 0.785398185 : f32
    %cst_427 = arith.constant 0.000000e+00 : f32
    %1553 = vector.broadcast %cst_426 : f32 to vector<16x1xf32>
    %1554 = vector.broadcast %cst_427 : f32 to vector<16x1xf32>
    %1555 = arith.select %1552, %1553, %1554 : vector<16x1xi1>, vector<16x1xf32>
    %cst_428 = arith.constant 1.57079637 : f32
    %1556 = vector.broadcast %cst_428 : f32 to vector<16x1xf32>
    %1557 = arith.select %1550, %1556, %1555 : vector<16x1xi1>, vector<16x1xf32>
    %cst_429 = arith.constant 1.000000e-30 : f32
    %1558 = vector.broadcast %cst_429 : f32 to vector<16x1xf32>
    %1559 = arith.maximumf %1539, %1558 : vector<16x1xf32>
    %cst_430 = arith.constant -1.000000e+00 : f32
    %1560 = vector.broadcast %cst_430 : f32 to vector<16x1xf32>
    %1561 = arith.divf %1560, %1559 : vector<16x1xf32>
    %cst_431 = arith.constant 1.000000e+00 : f32
    %1562 = vector.broadcast %cst_431 : f32 to vector<16x1xf32>
    %1563 = arith.subf %1539, %1562 : vector<16x1xf32>
    %cst_432 = arith.constant 1.000000e+00 : f32
    %1564 = vector.broadcast %cst_432 : f32 to vector<16x1xf32>
    %1565 = arith.addf %1539, %1564 : vector<16x1xf32>
    %1566 = arith.divf %1563, %1565 : vector<16x1xf32>
    %1567 = arith.select %1552, %1566, %1539 : vector<16x1xi1>, vector<16x1xf32>
    %1568 = arith.select %1550, %1561, %1567 : vector<16x1xi1>, vector<16x1xf32>
    %1569 = arith.mulf %1568, %1568 : vector<16x1xf32>
    %cst_433 = arith.constant 0.0805374458 : f32
    %1570 = vector.broadcast %cst_433 : f32 to vector<16x1xf32>
    %1571 = arith.mulf %1570, %1569 : vector<16x1xf32>
    %cst_434 = arith.constant 0.138776854 : f32
    %1572 = vector.broadcast %cst_434 : f32 to vector<16x1xf32>
    %1573 = arith.subf %1571, %1572 : vector<16x1xf32>
    %1574 = arith.mulf %1573, %1569 : vector<16x1xf32>
    %cst_435 = arith.constant 0.199777111 : f32
    %1575 = vector.broadcast %cst_435 : f32 to vector<16x1xf32>
    %1576 = arith.addf %1574, %1575 : vector<16x1xf32>
    %1577 = arith.mulf %1576, %1569 : vector<16x1xf32>
    %cst_436 = arith.constant 0.333329499 : f32
    %1578 = vector.broadcast %cst_436 : f32 to vector<16x1xf32>
    %1579 = arith.subf %1577, %1578 : vector<16x1xf32>
    %1580 = arith.mulf %1579, %1569 : vector<16x1xf32>
    %1581 = arith.mulf %1580, %1568 : vector<16x1xf32>
    %1582 = arith.addf %1581, %1568 : vector<16x1xf32>
    %1583 = arith.addf %1557, %1582 : vector<16x1xf32>
    %1584 = arith.mulf %1548, %1583 : vector<16x1xf32>
    %cst_437 = arith.constant 0.000000e+00 : f32
    %1585 = vector.broadcast %cst_437 : f32 to vector<16x1xf32>
    %1586 = arith.cmpf ogt, %1346, %1585 : vector<16x1xf32>
    %cst_438 = arith.constant 0.000000e+00 : f32
    %1587 = vector.broadcast %cst_438 : f32 to vector<16x1xf32>
    %1588 = arith.cmpf olt, %1346, %1587 : vector<16x1xf32>
    %cst_439 = arith.constant -1.57079637 : f32
    %cst_440 = arith.constant 0.000000e+00 : f32
    %1589 = vector.broadcast %cst_439 : f32 to vector<16x1xf32>
    %1590 = vector.broadcast %cst_440 : f32 to vector<16x1xf32>
    %1591 = arith.select %1588, %1589, %1590 : vector<16x1xi1>, vector<16x1xf32>
    %cst_441 = arith.constant 1.57079637 : f32
    %1592 = vector.broadcast %cst_441 : f32 to vector<16x1xf32>
    %1593 = arith.select %1586, %1592, %1591 : vector<16x1xi1>, vector<16x1xf32>
    %1594 = arith.select %1538, %1584, %1593 : vector<16x1xi1>, vector<16x1xf32>
    %1595 = arith.addf %1338, %1338 : vector<16x1xf32>
    %cst_442 = arith.constant 0.000000e+00 : f32
    %1596 = vector.broadcast %cst_442 : f32 to vector<16x1xf32>
    %1597 = arith.cmpf oeq, %1595, %1596 : vector<16x1xf32>
    %1598 = math.absf %1348 : vector<16x1xf32>
    %cst_443 = arith.constant 0.000000e+00 : f32
    %1599 = vector.broadcast %cst_443 : f32 to vector<16x1xf32>
    %1600 = arith.cmpf ogt, %1348, %1599 : vector<16x1xf32>
    %cst_444 = arith.constant 0.000000e+00 : f32
    %1601 = vector.broadcast %cst_444 : f32 to vector<16x1xf32>
    %1602 = arith.cmpf olt, %1348, %1601 : vector<16x1xf32>
    %cst_445 = arith.constant -1.000000e+00 : f32
    %cst_446 = arith.constant 0.000000e+00 : f32
    %1603 = vector.broadcast %cst_445 : f32 to vector<16x1xf32>
    %1604 = vector.broadcast %cst_446 : f32 to vector<16x1xf32>
    %1605 = arith.select %1602, %1603, %1604 : vector<16x1xi1>, vector<16x1xf32>
    %cst_447 = arith.constant 1.000000e+00 : f32
    %1606 = vector.broadcast %cst_447 : f32 to vector<16x1xf32>
    %1607 = arith.select %1600, %1606, %1605 : vector<16x1xi1>, vector<16x1xf32>
    %cst_448 = arith.constant 2.41421366 : f32
    %1608 = vector.broadcast %cst_448 : f32 to vector<16x1xf32>
    %1609 = arith.cmpf ogt, %1598, %1608 : vector<16x1xf32>
    %cst_449 = arith.constant 0.414213568 : f32
    %1610 = vector.broadcast %cst_449 : f32 to vector<16x1xf32>
    %1611 = arith.cmpf ogt, %1598, %1610 : vector<16x1xf32>
    %cst_450 = arith.constant 0.785398185 : f32
    %cst_451 = arith.constant 0.000000e+00 : f32
    %1612 = vector.broadcast %cst_450 : f32 to vector<16x1xf32>
    %1613 = vector.broadcast %cst_451 : f32 to vector<16x1xf32>
    %1614 = arith.select %1611, %1612, %1613 : vector<16x1xi1>, vector<16x1xf32>
    %cst_452 = arith.constant 1.57079637 : f32
    %1615 = vector.broadcast %cst_452 : f32 to vector<16x1xf32>
    %1616 = arith.select %1609, %1615, %1614 : vector<16x1xi1>, vector<16x1xf32>
    %cst_453 = arith.constant 1.000000e-30 : f32
    %1617 = vector.broadcast %cst_453 : f32 to vector<16x1xf32>
    %1618 = arith.maximumf %1598, %1617 : vector<16x1xf32>
    %cst_454 = arith.constant -1.000000e+00 : f32
    %1619 = vector.broadcast %cst_454 : f32 to vector<16x1xf32>
    %1620 = arith.divf %1619, %1618 : vector<16x1xf32>
    %cst_455 = arith.constant 1.000000e+00 : f32
    %1621 = vector.broadcast %cst_455 : f32 to vector<16x1xf32>
    %1622 = arith.subf %1598, %1621 : vector<16x1xf32>
    %cst_456 = arith.constant 1.000000e+00 : f32
    %1623 = vector.broadcast %cst_456 : f32 to vector<16x1xf32>
    %1624 = arith.addf %1598, %1623 : vector<16x1xf32>
    %1625 = arith.divf %1622, %1624 : vector<16x1xf32>
    %1626 = arith.select %1611, %1625, %1598 : vector<16x1xi1>, vector<16x1xf32>
    %1627 = arith.select %1609, %1620, %1626 : vector<16x1xi1>, vector<16x1xf32>
    %1628 = arith.mulf %1627, %1627 : vector<16x1xf32>
    %cst_457 = arith.constant 0.0805374458 : f32
    %1629 = vector.broadcast %cst_457 : f32 to vector<16x1xf32>
    %1630 = arith.mulf %1629, %1628 : vector<16x1xf32>
    %cst_458 = arith.constant 0.138776854 : f32
    %1631 = vector.broadcast %cst_458 : f32 to vector<16x1xf32>
    %1632 = arith.subf %1630, %1631 : vector<16x1xf32>
    %1633 = arith.mulf %1632, %1628 : vector<16x1xf32>
    %cst_459 = arith.constant 0.199777111 : f32
    %1634 = vector.broadcast %cst_459 : f32 to vector<16x1xf32>
    %1635 = arith.addf %1633, %1634 : vector<16x1xf32>
    %1636 = arith.mulf %1635, %1628 : vector<16x1xf32>
    %cst_460 = arith.constant 0.333329499 : f32
    %1637 = vector.broadcast %cst_460 : f32 to vector<16x1xf32>
    %1638 = arith.subf %1636, %1637 : vector<16x1xf32>
    %1639 = arith.mulf %1638, %1628 : vector<16x1xf32>
    %1640 = arith.mulf %1639, %1627 : vector<16x1xf32>
    %1641 = arith.addf %1640, %1627 : vector<16x1xf32>
    %1642 = arith.addf %1616, %1641 : vector<16x1xf32>
    %1643 = arith.mulf %1607, %1642 : vector<16x1xf32>
    %cst_461 = arith.constant 0.000000e+00 : f32
    %1644 = vector.broadcast %cst_461 : f32 to vector<16x1xf32>
    %1645 = arith.cmpf ogt, %1348, %1644 : vector<16x1xf32>
    %cst_462 = arith.constant 0.000000e+00 : f32
    %1646 = vector.broadcast %cst_462 : f32 to vector<16x1xf32>
    %1647 = arith.cmpf olt, %1348, %1646 : vector<16x1xf32>
    %cst_463 = arith.constant -1.57079637 : f32
    %cst_464 = arith.constant 0.000000e+00 : f32
    %1648 = vector.broadcast %cst_463 : f32 to vector<16x1xf32>
    %1649 = vector.broadcast %cst_464 : f32 to vector<16x1xf32>
    %1650 = arith.select %1647, %1648, %1649 : vector<16x1xi1>, vector<16x1xf32>
    %cst_465 = arith.constant 1.57079637 : f32
    %1651 = vector.broadcast %cst_465 : f32 to vector<16x1xf32>
    %1652 = arith.select %1645, %1651, %1650 : vector<16x1xi1>, vector<16x1xf32>
    %1653 = arith.select %1597, %1643, %1652 : vector<16x1xi1>, vector<16x1xf32>
    %1654 = arith.mulf %1288, %1330 : vector<16x1xf32>
    %1655 = arith.mulf %1654, %1330 : vector<16x1xf32>
    %cst_466 = arith.constant 0.000000e+00 : f32
    %1656 = vector.broadcast %cst_466 : f32 to vector<16x1xf32>
    %1657 = arith.addf %1656, %1655 : vector<16x1xf32>
    %1658 = arith.mulf %1298, %1332 : vector<16x1xf32>
    %1659 = arith.mulf %1658, %1332 : vector<16x1xf32>
    %1660 = arith.addf %1657, %1659 : vector<16x1xf32>
    %1661 = arith.mulf %1308, %1334 : vector<16x1xf32>
    %1662 = arith.mulf %1661, %1334 : vector<16x1xf32>
    %1663 = arith.addf %1660, %1662 : vector<16x1xf32>
    %1664 = arith.mulf %1318, %1336 : vector<16x1xf32>
    %1665 = arith.mulf %1664, %1336 : vector<16x1xf32>
    %1666 = arith.addf %1663, %1665 : vector<16x1xf32>
    %1667 = arith.mulf %1328, %1338 : vector<16x1xf32>
    %1668 = arith.mulf %1667, %1338 : vector<16x1xf32>
    %1669 = arith.addf %1666, %1668 : vector<16x1xf32>
    %1670 = arith.mulf %1288, %1330 : vector<16x1xf32>
    %1671 = arith.mulf %1670, %1340 : vector<16x1xf32>
    %cst_467 = arith.constant 0.000000e+00 : f32
    %1672 = vector.broadcast %cst_467 : f32 to vector<16x1xf32>
    %1673 = arith.addf %1672, %1671 : vector<16x1xf32>
    %1674 = arith.mulf %1298, %1332 : vector<16x1xf32>
    %1675 = arith.mulf %1674, %1342 : vector<16x1xf32>
    %1676 = arith.addf %1673, %1675 : vector<16x1xf32>
    %1677 = arith.mulf %1308, %1334 : vector<16x1xf32>
    %1678 = arith.mulf %1677, %1344 : vector<16x1xf32>
    %1679 = arith.addf %1676, %1678 : vector<16x1xf32>
    %1680 = arith.mulf %1318, %1336 : vector<16x1xf32>
    %1681 = arith.mulf %1680, %1346 : vector<16x1xf32>
    %1682 = arith.addf %1679, %1681 : vector<16x1xf32>
    %1683 = arith.mulf %1328, %1338 : vector<16x1xf32>
    %1684 = arith.mulf %1683, %1348 : vector<16x1xf32>
    %1685 = arith.addf %1682, %1684 : vector<16x1xf32>
    %1686 = arith.mulf %1288, %1330 : vector<16x1xf32>
    %cst_468 = arith.constant 0.000000e+00 : f32
    %1687 = vector.broadcast %cst_468 : f32 to vector<16x1xf32>
    %1688 = arith.addf %1687, %1686 : vector<16x1xf32>
    %1689 = arith.mulf %1298, %1332 : vector<16x1xf32>
    %1690 = arith.addf %1688, %1689 : vector<16x1xf32>
    %1691 = arith.mulf %1308, %1334 : vector<16x1xf32>
    %1692 = arith.addf %1690, %1691 : vector<16x1xf32>
    %1693 = arith.mulf %1318, %1336 : vector<16x1xf32>
    %1694 = arith.addf %1692, %1693 : vector<16x1xf32>
    %1695 = arith.mulf %1328, %1338 : vector<16x1xf32>
    %1696 = arith.addf %1694, %1695 : vector<16x1xf32>
    %1697 = arith.mulf %1288, %1340 : vector<16x1xf32>
    %1698 = arith.mulf %1697, %1340 : vector<16x1xf32>
    %cst_469 = arith.constant 0.000000e+00 : f32
    %1699 = vector.broadcast %cst_469 : f32 to vector<16x1xf32>
    %1700 = arith.addf %1699, %1698 : vector<16x1xf32>
    %1701 = arith.mulf %1298, %1342 : vector<16x1xf32>
    %1702 = arith.mulf %1701, %1342 : vector<16x1xf32>
    %1703 = arith.addf %1700, %1702 : vector<16x1xf32>
    %1704 = arith.mulf %1308, %1344 : vector<16x1xf32>
    %1705 = arith.mulf %1704, %1344 : vector<16x1xf32>
    %1706 = arith.addf %1703, %1705 : vector<16x1xf32>
    %1707 = arith.mulf %1318, %1346 : vector<16x1xf32>
    %1708 = arith.mulf %1707, %1346 : vector<16x1xf32>
    %1709 = arith.addf %1706, %1708 : vector<16x1xf32>
    %1710 = arith.mulf %1328, %1348 : vector<16x1xf32>
    %1711 = arith.mulf %1710, %1348 : vector<16x1xf32>
    %1712 = arith.addf %1709, %1711 : vector<16x1xf32>
    %1713 = arith.mulf %1288, %1340 : vector<16x1xf32>
    %cst_470 = arith.constant 0.000000e+00 : f32
    %1714 = vector.broadcast %cst_470 : f32 to vector<16x1xf32>
    %1715 = arith.addf %1714, %1713 : vector<16x1xf32>
    %1716 = arith.mulf %1298, %1342 : vector<16x1xf32>
    %1717 = arith.addf %1715, %1716 : vector<16x1xf32>
    %1718 = arith.mulf %1308, %1344 : vector<16x1xf32>
    %1719 = arith.addf %1717, %1718 : vector<16x1xf32>
    %1720 = arith.mulf %1318, %1346 : vector<16x1xf32>
    %1721 = arith.addf %1719, %1720 : vector<16x1xf32>
    %1722 = arith.mulf %1328, %1348 : vector<16x1xf32>
    %1723 = arith.addf %1721, %1722 : vector<16x1xf32>
    %cst_471 = arith.constant 0.000000e+00 : f32
    %1724 = vector.broadcast %cst_471 : f32 to vector<16x1xf32>
    %1725 = arith.addf %1724, %1288 : vector<16x1xf32>
    %1726 = arith.addf %1725, %1298 : vector<16x1xf32>
    %1727 = arith.addf %1726, %1308 : vector<16x1xf32>
    %1728 = arith.addf %1727, %1318 : vector<16x1xf32>
    %1729 = arith.addf %1728, %1328 : vector<16x1xf32>
    %1730 = arith.mulf %1330, %1330 : vector<16x1xf32>
    %1731 = arith.mulf %1340, %1340 : vector<16x1xf32>
    %1732 = arith.addf %1730, %1731 : vector<16x1xf32>
    %cst_472 = arith.constant 0.000000e+00 : f32
    %1733 = vector.broadcast %cst_472 : f32 to vector<16x1xf32>
    %1734 = arith.subf %1733, %1732 : vector<16x1xf32>
    %1735 = arith.mulf %1332, %1332 : vector<16x1xf32>
    %1736 = arith.mulf %1342, %1342 : vector<16x1xf32>
    %1737 = arith.addf %1735, %1736 : vector<16x1xf32>
    %cst_473 = arith.constant 0.000000e+00 : f32
    %1738 = vector.broadcast %cst_473 : f32 to vector<16x1xf32>
    %1739 = arith.subf %1738, %1737 : vector<16x1xf32>
    %1740 = arith.mulf %1334, %1334 : vector<16x1xf32>
    %1741 = arith.mulf %1344, %1344 : vector<16x1xf32>
    %1742 = arith.addf %1740, %1741 : vector<16x1xf32>
    %cst_474 = arith.constant 0.000000e+00 : f32
    %1743 = vector.broadcast %cst_474 : f32 to vector<16x1xf32>
    %1744 = arith.subf %1743, %1742 : vector<16x1xf32>
    %1745 = arith.mulf %1336, %1336 : vector<16x1xf32>
    %1746 = arith.mulf %1346, %1346 : vector<16x1xf32>
    %1747 = arith.addf %1745, %1746 : vector<16x1xf32>
    %cst_475 = arith.constant 0.000000e+00 : f32
    %1748 = vector.broadcast %cst_475 : f32 to vector<16x1xf32>
    %1749 = arith.subf %1748, %1747 : vector<16x1xf32>
    %1750 = arith.mulf %1338, %1338 : vector<16x1xf32>
    %1751 = arith.mulf %1348, %1348 : vector<16x1xf32>
    %1752 = arith.addf %1750, %1751 : vector<16x1xf32>
    %cst_476 = arith.constant 0.000000e+00 : f32
    %1753 = vector.broadcast %cst_476 : f32 to vector<16x1xf32>
    %1754 = arith.subf %1753, %1752 : vector<16x1xf32>
    %1755 = arith.mulf %1288, %1330 : vector<16x1xf32>
    %1756 = arith.mulf %1755, %1734 : vector<16x1xf32>
    %cst_477 = arith.constant 0.000000e+00 : f32
    %1757 = vector.broadcast %cst_477 : f32 to vector<16x1xf32>
    %1758 = arith.addf %1757, %1756 : vector<16x1xf32>
    %1759 = arith.mulf %1298, %1332 : vector<16x1xf32>
    %1760 = arith.mulf %1759, %1739 : vector<16x1xf32>
    %1761 = arith.addf %1758, %1760 : vector<16x1xf32>
    %1762 = arith.mulf %1308, %1334 : vector<16x1xf32>
    %1763 = arith.mulf %1762, %1744 : vector<16x1xf32>
    %1764 = arith.addf %1761, %1763 : vector<16x1xf32>
    %1765 = arith.mulf %1318, %1336 : vector<16x1xf32>
    %1766 = arith.mulf %1765, %1749 : vector<16x1xf32>
    %1767 = arith.addf %1764, %1766 : vector<16x1xf32>
    %1768 = arith.mulf %1328, %1338 : vector<16x1xf32>
    %1769 = arith.mulf %1768, %1754 : vector<16x1xf32>
    %1770 = arith.addf %1767, %1769 : vector<16x1xf32>
    %1771 = arith.mulf %1288, %1340 : vector<16x1xf32>
    %1772 = arith.mulf %1771, %1734 : vector<16x1xf32>
    %cst_478 = arith.constant 0.000000e+00 : f32
    %1773 = vector.broadcast %cst_478 : f32 to vector<16x1xf32>
    %1774 = arith.addf %1773, %1772 : vector<16x1xf32>
    %1775 = arith.mulf %1298, %1342 : vector<16x1xf32>
    %1776 = arith.mulf %1775, %1739 : vector<16x1xf32>
    %1777 = arith.addf %1774, %1776 : vector<16x1xf32>
    %1778 = arith.mulf %1308, %1344 : vector<16x1xf32>
    %1779 = arith.mulf %1778, %1744 : vector<16x1xf32>
    %1780 = arith.addf %1777, %1779 : vector<16x1xf32>
    %1781 = arith.mulf %1318, %1346 : vector<16x1xf32>
    %1782 = arith.mulf %1781, %1749 : vector<16x1xf32>
    %1783 = arith.addf %1780, %1782 : vector<16x1xf32>
    %1784 = arith.mulf %1328, %1348 : vector<16x1xf32>
    %1785 = arith.mulf %1784, %1754 : vector<16x1xf32>
    %1786 = arith.addf %1783, %1785 : vector<16x1xf32>
    %1787 = arith.mulf %1288, %1734 : vector<16x1xf32>
    %cst_479 = arith.constant 0.000000e+00 : f32
    %1788 = vector.broadcast %cst_479 : f32 to vector<16x1xf32>
    %1789 = arith.addf %1788, %1787 : vector<16x1xf32>
    %1790 = arith.mulf %1298, %1739 : vector<16x1xf32>
    %1791 = arith.addf %1789, %1790 : vector<16x1xf32>
    %1792 = arith.mulf %1308, %1744 : vector<16x1xf32>
    %1793 = arith.addf %1791, %1792 : vector<16x1xf32>
    %1794 = arith.mulf %1318, %1749 : vector<16x1xf32>
    %1795 = arith.addf %1793, %1794 : vector<16x1xf32>
    %1796 = arith.mulf %1328, %1754 : vector<16x1xf32>
    %1797 = arith.addf %1795, %1796 : vector<16x1xf32>
    %1798 = arith.mulf %1712, %1729 : vector<16x1xf32>
    %1799 = arith.mulf %1723, %1723 : vector<16x1xf32>
    %1800 = arith.subf %1798, %1799 : vector<16x1xf32>
    %1801 = arith.mulf %1685, %1729 : vector<16x1xf32>
    %1802 = arith.mulf %1723, %1696 : vector<16x1xf32>
    %1803 = arith.subf %1801, %1802 : vector<16x1xf32>
    %1804 = arith.mulf %1685, %1723 : vector<16x1xf32>
    %1805 = arith.mulf %1712, %1696 : vector<16x1xf32>
    %1806 = arith.subf %1804, %1805 : vector<16x1xf32>
    %1807 = arith.mulf %1669, %1800 : vector<16x1xf32>
    %1808 = arith.mulf %1685, %1803 : vector<16x1xf32>
    %1809 = arith.subf %1807, %1808 : vector<16x1xf32>
    %1810 = arith.mulf %1696, %1806 : vector<16x1xf32>
    %1811 = arith.addf %1809, %1810 : vector<16x1xf32>
    %1812 = math.absf %1669 : vector<16x1xf32>
    %1813 = arith.mulf %1712, %1729 : vector<16x1xf32>
    %1814 = math.absf %1813 : vector<16x1xf32>
    %1815 = arith.mulf %1723, %1723 : vector<16x1xf32>
    %1816 = arith.addf %1814, %1815 : vector<16x1xf32>
    %1817 = arith.mulf %1812, %1816 : vector<16x1xf32>
    %1818 = math.absf %1685 : vector<16x1xf32>
    %1819 = arith.mulf %1685, %1729 : vector<16x1xf32>
    %1820 = math.absf %1819 : vector<16x1xf32>
    %1821 = arith.mulf %1723, %1696 : vector<16x1xf32>
    %1822 = math.absf %1821 : vector<16x1xf32>
    %1823 = arith.addf %1820, %1822 : vector<16x1xf32>
    %1824 = arith.mulf %1818, %1823 : vector<16x1xf32>
    %1825 = arith.addf %1817, %1824 : vector<16x1xf32>
    %1826 = math.absf %1696 : vector<16x1xf32>
    %1827 = arith.mulf %1685, %1723 : vector<16x1xf32>
    %1828 = math.absf %1827 : vector<16x1xf32>
    %1829 = arith.mulf %1712, %1696 : vector<16x1xf32>
    %1830 = math.absf %1829 : vector<16x1xf32>
    %1831 = arith.addf %1828, %1830 : vector<16x1xf32>
    %1832 = arith.mulf %1826, %1831 : vector<16x1xf32>
    %1833 = arith.addf %1825, %1832 : vector<16x1xf32>
    %cst_480 = arith.constant 2.500000e+00 : f32
    %1834 = vector.broadcast %cst_480 : f32 to vector<16x1xf32>
    %1835 = arith.cmpf oge, %1729, %1834 : vector<16x1xf32>
    %1836 = math.absf %1811 : vector<16x1xf32>
    %cst_481 = arith.constant 9.99999997E-7 : f32
    %1837 = vector.broadcast %cst_481 : f32 to vector<16x1xf32>
    %1838 = arith.mulf %1837, %1833 : vector<16x1xf32>
    %1839 = arith.cmpf ogt, %1836, %1838 : vector<16x1xf32>
    %1840 = arith.andi %1835, %1839 : vector<16x1xi1>
    %cst_482 = arith.constant 1.000000e+00 : f32
    %1841 = vector.broadcast %cst_482 : f32 to vector<16x1xf32>
    %1842 = arith.select %1840, %1811, %1841 : vector<16x1xi1>, vector<16x1xf32>
    %cst_483 = arith.constant 1.000000e+00 : f32
    %1843 = vector.broadcast %cst_483 : f32 to vector<16x1xf32>
    %1844 = arith.divf %1843, %1842 : vector<16x1xf32>
    %1845 = arith.mulf %1770, %1800 : vector<16x1xf32>
    %1846 = arith.mulf %1786, %1729 : vector<16x1xf32>
    %1847 = arith.mulf %1723, %1797 : vector<16x1xf32>
    %1848 = arith.subf %1846, %1847 : vector<16x1xf32>
    %1849 = arith.mulf %1685, %1848 : vector<16x1xf32>
    %1850 = arith.subf %1845, %1849 : vector<16x1xf32>
    %1851 = arith.mulf %1786, %1723 : vector<16x1xf32>
    %1852 = arith.mulf %1712, %1797 : vector<16x1xf32>
    %1853 = arith.subf %1851, %1852 : vector<16x1xf32>
    %1854 = arith.mulf %1696, %1853 : vector<16x1xf32>
    %1855 = arith.addf %1850, %1854 : vector<16x1xf32>
    %1856 = arith.mulf %1855, %1844 : vector<16x1xf32>
    %1857 = arith.mulf %1786, %1729 : vector<16x1xf32>
    %1858 = arith.mulf %1723, %1797 : vector<16x1xf32>
    %1859 = arith.subf %1857, %1858 : vector<16x1xf32>
    %1860 = arith.mulf %1669, %1859 : vector<16x1xf32>
    %1861 = arith.mulf %1770, %1803 : vector<16x1xf32>
    %1862 = arith.subf %1860, %1861 : vector<16x1xf32>
    %1863 = arith.mulf %1685, %1797 : vector<16x1xf32>
    %1864 = arith.mulf %1786, %1696 : vector<16x1xf32>
    %1865 = arith.subf %1863, %1864 : vector<16x1xf32>
    %1866 = arith.mulf %1696, %1865 : vector<16x1xf32>
    %1867 = arith.addf %1862, %1866 : vector<16x1xf32>
    %1868 = arith.mulf %1867, %1844 : vector<16x1xf32>
    %1869 = arith.mulf %1712, %1797 : vector<16x1xf32>
    %1870 = arith.mulf %1786, %1723 : vector<16x1xf32>
    %1871 = arith.subf %1869, %1870 : vector<16x1xf32>
    %1872 = arith.mulf %1669, %1871 : vector<16x1xf32>
    %1873 = arith.mulf %1685, %1797 : vector<16x1xf32>
    %1874 = arith.mulf %1786, %1696 : vector<16x1xf32>
    %1875 = arith.subf %1873, %1874 : vector<16x1xf32>
    %1876 = arith.mulf %1685, %1875 : vector<16x1xf32>
    %1877 = arith.subf %1872, %1876 : vector<16x1xf32>
    %1878 = arith.mulf %1770, %1806 : vector<16x1xf32>
    %1879 = arith.addf %1877, %1878 : vector<16x1xf32>
    %1880 = arith.mulf %1879, %1844 : vector<16x1xf32>
    %1881 = arith.mulf %1856, %1856 : vector<16x1xf32>
    %1882 = arith.mulf %1868, %1868 : vector<16x1xf32>
    %1883 = arith.addf %1881, %1882 : vector<16x1xf32>
    %cst_484 = arith.constant 4.000000e+00 : f32
    %1884 = vector.broadcast %cst_484 : f32 to vector<16x1xf32>
    %1885 = arith.mulf %1884, %1880 : vector<16x1xf32>
    %1886 = arith.subf %1883, %1885 : vector<16x1xf32>
    %cst_485 = arith.constant 0.000000e+00 : f32
    %1887 = vector.broadcast %cst_485 : f32 to vector<16x1xf32>
    %1888 = arith.maximumf %1886, %1887 : vector<16x1xf32>
    %1889 = math.sqrt %1888 : vector<16x1xf32>
    %cst_486 = arith.constant 2.000000e+02 : f32
    %1890 = vector.broadcast %cst_486 : f32 to vector<16x1xf32>
    %1891 = arith.divf %1889, %1890 : vector<16x1xf32>
    %cst_487 = arith.constant 0.000000e+00 : f32
    %1892 = vector.broadcast %cst_487 : f32 to vector<16x1xf32>
    %1893 = arith.select %1840, %1891, %1892 : vector<16x1xi1>, vector<16x1xf32>
    %cst_488 = arith.constant 5.000000e-01 : f32
    %1894 = vector.broadcast %cst_488 : f32 to vector<16x1xf32>
    %1895 = arith.cmpf ogt, %1328, %1894 : vector<16x1xf32>
    %1896 = arith.select %1895, %1338, %1330 : vector<16x1xi1>, vector<16x1xf32>
    %1897 = arith.select %1895, %1348, %1340 : vector<16x1xi1>, vector<16x1xf32>
    %1898 = arith.select %1895, %1358, %1350 : vector<16x1xi1>, vector<16x1xf32>
    %cst_489 = arith.constant 5.000000e-01 : f32
    %1899 = vector.broadcast %cst_489 : f32 to vector<16x1xf32>
    %1900 = arith.cmpf ogt, %1318, %1899 : vector<16x1xf32>
    %1901 = arith.select %1900, %1336, %1896 : vector<16x1xi1>, vector<16x1xf32>
    %1902 = arith.select %1900, %1346, %1897 : vector<16x1xi1>, vector<16x1xf32>
    %1903 = arith.select %1900, %1356, %1898 : vector<16x1xi1>, vector<16x1xf32>
    %cst_490 = arith.constant 5.000000e-01 : f32
    %1904 = vector.broadcast %cst_490 : f32 to vector<16x1xf32>
    %1905 = arith.cmpf ogt, %1308, %1904 : vector<16x1xf32>
    %1906 = arith.select %1905, %1334, %1901 : vector<16x1xi1>, vector<16x1xf32>
    %1907 = arith.select %1905, %1344, %1902 : vector<16x1xi1>, vector<16x1xf32>
    %1908 = arith.select %1905, %1354, %1903 : vector<16x1xi1>, vector<16x1xf32>
    %cst_491 = arith.constant 5.000000e-01 : f32
    %1909 = vector.broadcast %cst_491 : f32 to vector<16x1xf32>
    %1910 = arith.cmpf ogt, %1298, %1909 : vector<16x1xf32>
    %1911 = arith.select %1910, %1332, %1906 : vector<16x1xi1>, vector<16x1xf32>
    %1912 = arith.select %1910, %1342, %1907 : vector<16x1xi1>, vector<16x1xf32>
    %1913 = arith.select %1910, %1352, %1908 : vector<16x1xi1>, vector<16x1xf32>
    %cst_492 = arith.constant 5.000000e-01 : f32
    %1914 = vector.broadcast %cst_492 : f32 to vector<16x1xf32>
    %1915 = arith.cmpf ogt, %1288, %1914 : vector<16x1xf32>
    %1916 = arith.select %1915, %1330, %1911 : vector<16x1xi1>, vector<16x1xf32>
    %1917 = arith.select %1915, %1340, %1912 : vector<16x1xi1>, vector<16x1xf32>
    %1918 = arith.select %1915, %1350, %1913 : vector<16x1xi1>, vector<16x1xf32>
    %cst_493 = arith.constant 5.000000e-01 : f32
    %1919 = vector.broadcast %cst_493 : f32 to vector<16x1xf32>
    %1920 = arith.cmpf ogt, %1288, %1919 : vector<16x1xf32>
    %1921 = arith.select %1920, %1330, %1338 : vector<16x1xi1>, vector<16x1xf32>
    %1922 = arith.select %1920, %1340, %1348 : vector<16x1xi1>, vector<16x1xf32>
    %1923 = arith.select %1920, %1350, %1358 : vector<16x1xi1>, vector<16x1xf32>
    %cst_494 = arith.constant 5.000000e-01 : f32
    %1924 = vector.broadcast %cst_494 : f32 to vector<16x1xf32>
    %1925 = arith.cmpf ogt, %1298, %1924 : vector<16x1xf32>
    %1926 = arith.select %1925, %1332, %1921 : vector<16x1xi1>, vector<16x1xf32>
    %1927 = arith.select %1925, %1342, %1922 : vector<16x1xi1>, vector<16x1xf32>
    %1928 = arith.select %1925, %1352, %1923 : vector<16x1xi1>, vector<16x1xf32>
    %cst_495 = arith.constant 5.000000e-01 : f32
    %1929 = vector.broadcast %cst_495 : f32 to vector<16x1xf32>
    %1930 = arith.cmpf ogt, %1308, %1929 : vector<16x1xf32>
    %1931 = arith.select %1930, %1334, %1926 : vector<16x1xi1>, vector<16x1xf32>
    %1932 = arith.select %1930, %1344, %1927 : vector<16x1xi1>, vector<16x1xf32>
    %1933 = arith.select %1930, %1354, %1928 : vector<16x1xi1>, vector<16x1xf32>
    %cst_496 = arith.constant 5.000000e-01 : f32
    %1934 = vector.broadcast %cst_496 : f32 to vector<16x1xf32>
    %1935 = arith.cmpf ogt, %1318, %1934 : vector<16x1xf32>
    %1936 = arith.select %1935, %1336, %1931 : vector<16x1xi1>, vector<16x1xf32>
    %1937 = arith.select %1935, %1346, %1932 : vector<16x1xi1>, vector<16x1xf32>
    %1938 = arith.select %1935, %1356, %1933 : vector<16x1xi1>, vector<16x1xf32>
    %cst_497 = arith.constant 5.000000e-01 : f32
    %1939 = vector.broadcast %cst_497 : f32 to vector<16x1xf32>
    %1940 = arith.cmpf ogt, %1328, %1939 : vector<16x1xf32>
    %1941 = arith.select %1940, %1338, %1936 : vector<16x1xi1>, vector<16x1xf32>
    %1942 = arith.select %1940, %1348, %1937 : vector<16x1xi1>, vector<16x1xf32>
    %1943 = arith.select %1940, %1358, %1938 : vector<16x1xi1>, vector<16x1xf32>
    %1944 = arith.subf %1943, %1918 : vector<16x1xf32>
    %cst_498 = arith.constant 1.000000e+02 : f32
    %1945 = vector.broadcast %cst_498 : f32 to vector<16x1xf32>
    %1946 = arith.divf %1944, %1945 : vector<16x1xf32>
    %1947 = arith.subf %1941, %1916 : vector<16x1xf32>
    %1948 = arith.mulf %1947, %1947 : vector<16x1xf32>
    %1949 = arith.subf %1942, %1917 : vector<16x1xf32>
    %1950 = arith.mulf %1949, %1949 : vector<16x1xf32>
    %1951 = arith.addf %1948, %1950 : vector<16x1xf32>
    %cst_499 = arith.constant 1.000000e+04 : f32
    %1952 = vector.broadcast %cst_499 : f32 to vector<16x1xf32>
    %1953 = arith.divf %1951, %1952 : vector<16x1xf32>
    %cst_500 = arith.constant 2.000000e+00 : f32
    %1954 = vector.broadcast %cst_500 : f32 to vector<16x1xf32>
    %1955 = arith.mulf %1954, %1893 : vector<16x1xf32>
    %1956 = arith.mulf %1955, %1893 : vector<16x1xf32>
    %1957 = arith.subf %1956, %1953 : vector<16x1xf32>
    %cst_501 = arith.constant 9.99999993E-9 : f32
    %1958 = vector.broadcast %cst_501 : f32 to vector<16x1xf32>
    %1959 = arith.addf %1956, %1958 : vector<16x1xf32>
    %1960 = arith.divf %1957, %1959 : vector<16x1xf32>
    %cst_502 = arith.constant -0.999998986 : f32
    %1961 = vector.broadcast %cst_502 : f32 to vector<16x1xf32>
    %1962 = arith.cmpf ole, %1960, %1961 : vector<16x1xf32>
    %cst_503 = arith.constant 0.999998986 : f32
    %1963 = vector.broadcast %cst_503 : f32 to vector<16x1xf32>
    %1964 = arith.cmpf oge, %1960, %1963 : vector<16x1xf32>
    %cst_504 = arith.constant 0.999998986 : f32
    %1965 = vector.broadcast %cst_504 : f32 to vector<16x1xf32>
    %1966 = arith.select %1964, %1965, %1960 : vector<16x1xi1>, vector<16x1xf32>
    %cst_505 = arith.constant -0.999998986 : f32
    %1967 = vector.broadcast %cst_505 : f32 to vector<16x1xf32>
    %1968 = arith.select %1962, %1967, %1966 : vector<16x1xi1>, vector<16x1xf32>
    %1969 = arith.mulf %1968, %1968 : vector<16x1xf32>
    %cst_506 = arith.constant 1.000000e+00 : f32
    %1970 = vector.broadcast %cst_506 : f32 to vector<16x1xf32>
    %1971 = arith.subf %1970, %1969 : vector<16x1xf32>
    %cst_507 = arith.constant 9.99999996E-13 : f32
    %1972 = vector.broadcast %cst_507 : f32 to vector<16x1xf32>
    %1973 = arith.maximumf %1971, %1972 : vector<16x1xf32>
    %1974 = math.sqrt %1973 : vector<16x1xf32>
    %1975 = arith.divf %1968, %1974 : vector<16x1xf32>
    %1976 = math.absf %1975 : vector<16x1xf32>
    %cst_508 = arith.constant 0.000000e+00 : f32
    %1977 = vector.broadcast %cst_508 : f32 to vector<16x1xf32>
    %1978 = arith.cmpf ogt, %1975, %1977 : vector<16x1xf32>
    %cst_509 = arith.constant 0.000000e+00 : f32
    %1979 = vector.broadcast %cst_509 : f32 to vector<16x1xf32>
    %1980 = arith.cmpf olt, %1975, %1979 : vector<16x1xf32>
    %cst_510 = arith.constant -1.000000e+00 : f32
    %cst_511 = arith.constant 0.000000e+00 : f32
    %1981 = vector.broadcast %cst_510 : f32 to vector<16x1xf32>
    %1982 = vector.broadcast %cst_511 : f32 to vector<16x1xf32>
    %1983 = arith.select %1980, %1981, %1982 : vector<16x1xi1>, vector<16x1xf32>
    %cst_512 = arith.constant 1.000000e+00 : f32
    %1984 = vector.broadcast %cst_512 : f32 to vector<16x1xf32>
    %1985 = arith.select %1978, %1984, %1983 : vector<16x1xi1>, vector<16x1xf32>
    %cst_513 = arith.constant 2.41421366 : f32
    %1986 = vector.broadcast %cst_513 : f32 to vector<16x1xf32>
    %1987 = arith.cmpf ogt, %1976, %1986 : vector<16x1xf32>
    %cst_514 = arith.constant 0.414213568 : f32
    %1988 = vector.broadcast %cst_514 : f32 to vector<16x1xf32>
    %1989 = arith.cmpf ogt, %1976, %1988 : vector<16x1xf32>
    %cst_515 = arith.constant 0.785398185 : f32
    %cst_516 = arith.constant 0.000000e+00 : f32
    %1990 = vector.broadcast %cst_515 : f32 to vector<16x1xf32>
    %1991 = vector.broadcast %cst_516 : f32 to vector<16x1xf32>
    %1992 = arith.select %1989, %1990, %1991 : vector<16x1xi1>, vector<16x1xf32>
    %cst_517 = arith.constant 1.57079637 : f32
    %1993 = vector.broadcast %cst_517 : f32 to vector<16x1xf32>
    %1994 = arith.select %1987, %1993, %1992 : vector<16x1xi1>, vector<16x1xf32>
    %cst_518 = arith.constant 1.000000e-30 : f32
    %1995 = vector.broadcast %cst_518 : f32 to vector<16x1xf32>
    %1996 = arith.maximumf %1976, %1995 : vector<16x1xf32>
    %cst_519 = arith.constant -1.000000e+00 : f32
    %1997 = vector.broadcast %cst_519 : f32 to vector<16x1xf32>
    %1998 = arith.divf %1997, %1996 : vector<16x1xf32>
    %cst_520 = arith.constant 1.000000e+00 : f32
    %1999 = vector.broadcast %cst_520 : f32 to vector<16x1xf32>
    %2000 = arith.subf %1976, %1999 : vector<16x1xf32>
    %cst_521 = arith.constant 1.000000e+00 : f32
    %2001 = vector.broadcast %cst_521 : f32 to vector<16x1xf32>
    %2002 = arith.addf %1976, %2001 : vector<16x1xf32>
    %2003 = arith.divf %2000, %2002 : vector<16x1xf32>
    %2004 = arith.select %1989, %2003, %1976 : vector<16x1xi1>, vector<16x1xf32>
    %2005 = arith.select %1987, %1998, %2004 : vector<16x1xi1>, vector<16x1xf32>
    %2006 = arith.mulf %2005, %2005 : vector<16x1xf32>
    %cst_522 = arith.constant 0.0805374458 : f32
    %2007 = vector.broadcast %cst_522 : f32 to vector<16x1xf32>
    %2008 = arith.mulf %2007, %2006 : vector<16x1xf32>
    %cst_523 = arith.constant 0.138776854 : f32
    %2009 = vector.broadcast %cst_523 : f32 to vector<16x1xf32>
    %2010 = arith.subf %2008, %2009 : vector<16x1xf32>
    %2011 = arith.mulf %2010, %2006 : vector<16x1xf32>
    %cst_524 = arith.constant 0.199777111 : f32
    %2012 = vector.broadcast %cst_524 : f32 to vector<16x1xf32>
    %2013 = arith.addf %2011, %2012 : vector<16x1xf32>
    %2014 = arith.mulf %2013, %2006 : vector<16x1xf32>
    %cst_525 = arith.constant 0.333329499 : f32
    %2015 = vector.broadcast %cst_525 : f32 to vector<16x1xf32>
    %2016 = arith.subf %2014, %2015 : vector<16x1xf32>
    %2017 = arith.mulf %2016, %2006 : vector<16x1xf32>
    %2018 = arith.mulf %2017, %2005 : vector<16x1xf32>
    %2019 = arith.addf %2018, %2005 : vector<16x1xf32>
    %2020 = arith.addf %1994, %2019 : vector<16x1xf32>
    %2021 = arith.mulf %1985, %2020 : vector<16x1xf32>
    %cst_526 = arith.constant 1.57079637 : f32
    %2022 = vector.broadcast %cst_526 : f32 to vector<16x1xf32>
    %2023 = arith.subf %2022, %2021 : vector<16x1xf32>
    %2024 = arith.divf %1946, %2023 : vector<16x1xf32>
    %2025 = arith.subf %1332, %1330 : vector<16x1xf32>
    %2026 = arith.mulf %2025, %2025 : vector<16x1xf32>
    %2027 = arith.subf %1342, %1340 : vector<16x1xf32>
    %2028 = arith.mulf %2027, %2027 : vector<16x1xf32>
    %2029 = arith.addf %2026, %2028 : vector<16x1xf32>
    %2030 = arith.subf %1352, %1350 : vector<16x1xf32>
    %2031 = arith.mulf %2030, %2030 : vector<16x1xf32>
    %2032 = arith.addf %2029, %2031 : vector<16x1xf32>
    %2033 = math.sqrt %2032 : vector<16x1xf32>
    %2034 = arith.subf %1334, %1332 : vector<16x1xf32>
    %2035 = arith.mulf %2034, %2034 : vector<16x1xf32>
    %2036 = arith.subf %1344, %1342 : vector<16x1xf32>
    %2037 = arith.mulf %2036, %2036 : vector<16x1xf32>
    %2038 = arith.addf %2035, %2037 : vector<16x1xf32>
    %2039 = arith.subf %1354, %1352 : vector<16x1xf32>
    %2040 = arith.mulf %2039, %2039 : vector<16x1xf32>
    %2041 = arith.addf %2038, %2040 : vector<16x1xf32>
    %2042 = math.sqrt %2041 : vector<16x1xf32>
    %2043 = arith.subf %1336, %1334 : vector<16x1xf32>
    %2044 = arith.mulf %2043, %2043 : vector<16x1xf32>
    %2045 = arith.subf %1346, %1344 : vector<16x1xf32>
    %2046 = arith.mulf %2045, %2045 : vector<16x1xf32>
    %2047 = arith.addf %2044, %2046 : vector<16x1xf32>
    %2048 = arith.subf %1356, %1354 : vector<16x1xf32>
    %2049 = arith.mulf %2048, %2048 : vector<16x1xf32>
    %2050 = arith.addf %2047, %2049 : vector<16x1xf32>
    %2051 = math.sqrt %2050 : vector<16x1xf32>
    %2052 = arith.subf %1338, %1336 : vector<16x1xf32>
    %2053 = arith.mulf %2052, %2052 : vector<16x1xf32>
    %2054 = arith.subf %1348, %1346 : vector<16x1xf32>
    %2055 = arith.mulf %2054, %2054 : vector<16x1xf32>
    %2056 = arith.addf %2053, %2055 : vector<16x1xf32>
    %2057 = arith.subf %1358, %1356 : vector<16x1xf32>
    %2058 = arith.mulf %2057, %2057 : vector<16x1xf32>
    %2059 = arith.addf %2056, %2058 : vector<16x1xf32>
    %2060 = math.sqrt %2059 : vector<16x1xf32>
    %2061 = arith.subf %1338, %1330 : vector<16x1xf32>
    %2062 = arith.mulf %2061, %2061 : vector<16x1xf32>
    %2063 = arith.subf %1348, %1340 : vector<16x1xf32>
    %2064 = arith.mulf %2063, %2063 : vector<16x1xf32>
    %2065 = arith.addf %2062, %2064 : vector<16x1xf32>
    %2066 = arith.subf %1358, %1350 : vector<16x1xf32>
    %2067 = arith.mulf %2066, %2066 : vector<16x1xf32>
    %2068 = arith.addf %2065, %2067 : vector<16x1xf32>
    %2069 = math.sqrt %2068 : vector<16x1xf32>
    %2070 = arith.subf %1476, %1417 : vector<16x1xf32>
    %2071 = arith.subf %1535, %1476 : vector<16x1xf32>
    %2072 = arith.subf %1594, %1535 : vector<16x1xf32>
    %2073 = arith.subf %1653, %1594 : vector<16x1xf32>
    %2074 = tpu.iota {dimensions = array<i32: 1>} : vector<1x30xi32>
    %cst_527 = arith.constant 0.000000e+00 : f32
    %2075 = vector.broadcast %cst_527 : f32 to vector<16x30xf32>
    %c0_i32_528 = arith.constant 0 : i32
    %2076 = vector.broadcast %c0_i32_528 : i32 to vector<1x30xi32>
    %2077 = arith.cmpi eq, %2074, %2076 : vector<1x30xi32>
    %cst_529 = arith.constant 0.000000e+00 : f32
    %2078 = vector.shape_cast %2077 : vector<1x30xi1> to vector<1x30xi1>
    %2079 = vector.broadcast %2078 : vector<1x30xi1> to vector<16x30xi1>
    %2080 = vector.shape_cast %1330 : vector<16x1xf32> to vector<16x1xf32>
    %2081 = vector.broadcast %2080 : vector<16x1xf32> to vector<16x30xf32>
    %2082 = vector.broadcast %cst_529 : f32 to vector<16x30xf32>
    %2083 = arith.select %2079, %2081, %2082 : vector<16x30xi1>, vector<16x30xf32>
    %2084 = arith.addf %2075, %2083 : vector<16x30xf32>
    %c1_i32_530 = arith.constant 1 : i32
    %2085 = vector.broadcast %c1_i32_530 : i32 to vector<1x30xi32>
    %2086 = arith.cmpi eq, %2074, %2085 : vector<1x30xi32>
    %cst_531 = arith.constant 0.000000e+00 : f32
    %2087 = vector.shape_cast %2086 : vector<1x30xi1> to vector<1x30xi1>
    %2088 = vector.broadcast %2087 : vector<1x30xi1> to vector<16x30xi1>
    %2089 = vector.shape_cast %1340 : vector<16x1xf32> to vector<16x1xf32>
    %2090 = vector.broadcast %2089 : vector<16x1xf32> to vector<16x30xf32>
    %2091 = vector.broadcast %cst_531 : f32 to vector<16x30xf32>
    %2092 = arith.select %2088, %2090, %2091 : vector<16x30xi1>, vector<16x30xf32>
    %2093 = arith.addf %2084, %2092 : vector<16x30xf32>
    %c2_i32_532 = arith.constant 2 : i32
    %2094 = vector.broadcast %c2_i32_532 : i32 to vector<1x30xi32>
    %2095 = arith.cmpi eq, %2074, %2094 : vector<1x30xi32>
    %cst_533 = arith.constant 0.000000e+00 : f32
    %2096 = vector.shape_cast %2095 : vector<1x30xi1> to vector<1x30xi1>
    %2097 = vector.broadcast %2096 : vector<1x30xi1> to vector<16x30xi1>
    %2098 = vector.shape_cast %1350 : vector<16x1xf32> to vector<16x1xf32>
    %2099 = vector.broadcast %2098 : vector<16x1xf32> to vector<16x30xf32>
    %2100 = vector.broadcast %cst_533 : f32 to vector<16x30xf32>
    %2101 = arith.select %2097, %2099, %2100 : vector<16x30xi1>, vector<16x30xf32>
    %2102 = arith.addf %2093, %2101 : vector<16x30xf32>
    %c3_i32_534 = arith.constant 3 : i32
    %2103 = vector.broadcast %c3_i32_534 : i32 to vector<1x30xi32>
    %2104 = arith.cmpi eq, %2074, %2103 : vector<1x30xi32>
    %cst_535 = arith.constant 0.000000e+00 : f32
    %2105 = vector.shape_cast %2104 : vector<1x30xi1> to vector<1x30xi1>
    %2106 = vector.broadcast %2105 : vector<1x30xi1> to vector<16x30xi1>
    %2107 = vector.shape_cast %1332 : vector<16x1xf32> to vector<16x1xf32>
    %2108 = vector.broadcast %2107 : vector<16x1xf32> to vector<16x30xf32>
    %2109 = vector.broadcast %cst_535 : f32 to vector<16x30xf32>
    %2110 = arith.select %2106, %2108, %2109 : vector<16x30xi1>, vector<16x30xf32>
    %2111 = arith.addf %2102, %2110 : vector<16x30xf32>
    %c4_i32_536 = arith.constant 4 : i32
    %2112 = vector.broadcast %c4_i32_536 : i32 to vector<1x30xi32>
    %2113 = arith.cmpi eq, %2074, %2112 : vector<1x30xi32>
    %cst_537 = arith.constant 0.000000e+00 : f32
    %2114 = vector.shape_cast %2113 : vector<1x30xi1> to vector<1x30xi1>
    %2115 = vector.broadcast %2114 : vector<1x30xi1> to vector<16x30xi1>
    %2116 = vector.shape_cast %1342 : vector<16x1xf32> to vector<16x1xf32>
    %2117 = vector.broadcast %2116 : vector<16x1xf32> to vector<16x30xf32>
    %2118 = vector.broadcast %cst_537 : f32 to vector<16x30xf32>
    %2119 = arith.select %2115, %2117, %2118 : vector<16x30xi1>, vector<16x30xf32>
    %2120 = arith.addf %2111, %2119 : vector<16x30xf32>
    %c5_i32_538 = arith.constant 5 : i32
    %2121 = vector.broadcast %c5_i32_538 : i32 to vector<1x30xi32>
    %2122 = arith.cmpi eq, %2074, %2121 : vector<1x30xi32>
    %cst_539 = arith.constant 0.000000e+00 : f32
    %2123 = vector.shape_cast %2122 : vector<1x30xi1> to vector<1x30xi1>
    %2124 = vector.broadcast %2123 : vector<1x30xi1> to vector<16x30xi1>
    %2125 = vector.shape_cast %1352 : vector<16x1xf32> to vector<16x1xf32>
    %2126 = vector.broadcast %2125 : vector<16x1xf32> to vector<16x30xf32>
    %2127 = vector.broadcast %cst_539 : f32 to vector<16x30xf32>
    %2128 = arith.select %2124, %2126, %2127 : vector<16x30xi1>, vector<16x30xf32>
    %2129 = arith.addf %2120, %2128 : vector<16x30xf32>
    %c6_i32_540 = arith.constant 6 : i32
    %2130 = vector.broadcast %c6_i32_540 : i32 to vector<1x30xi32>
    %2131 = arith.cmpi eq, %2074, %2130 : vector<1x30xi32>
    %cst_541 = arith.constant 0.000000e+00 : f32
    %2132 = vector.shape_cast %2131 : vector<1x30xi1> to vector<1x30xi1>
    %2133 = vector.broadcast %2132 : vector<1x30xi1> to vector<16x30xi1>
    %2134 = vector.shape_cast %1334 : vector<16x1xf32> to vector<16x1xf32>
    %2135 = vector.broadcast %2134 : vector<16x1xf32> to vector<16x30xf32>
    %2136 = vector.broadcast %cst_541 : f32 to vector<16x30xf32>
    %2137 = arith.select %2133, %2135, %2136 : vector<16x30xi1>, vector<16x30xf32>
    %2138 = arith.addf %2129, %2137 : vector<16x30xf32>
    %c7_i32_542 = arith.constant 7 : i32
    %2139 = vector.broadcast %c7_i32_542 : i32 to vector<1x30xi32>
    %2140 = arith.cmpi eq, %2074, %2139 : vector<1x30xi32>
    %cst_543 = arith.constant 0.000000e+00 : f32
    %2141 = vector.shape_cast %2140 : vector<1x30xi1> to vector<1x30xi1>
    %2142 = vector.broadcast %2141 : vector<1x30xi1> to vector<16x30xi1>
    %2143 = vector.shape_cast %1344 : vector<16x1xf32> to vector<16x1xf32>
    %2144 = vector.broadcast %2143 : vector<16x1xf32> to vector<16x30xf32>
    %2145 = vector.broadcast %cst_543 : f32 to vector<16x30xf32>
    %2146 = arith.select %2142, %2144, %2145 : vector<16x30xi1>, vector<16x30xf32>
    %2147 = arith.addf %2138, %2146 : vector<16x30xf32>
    %c8_i32_544 = arith.constant 8 : i32
    %2148 = vector.broadcast %c8_i32_544 : i32 to vector<1x30xi32>
    %2149 = arith.cmpi eq, %2074, %2148 : vector<1x30xi32>
    %cst_545 = arith.constant 0.000000e+00 : f32
    %2150 = vector.shape_cast %2149 : vector<1x30xi1> to vector<1x30xi1>
    %2151 = vector.broadcast %2150 : vector<1x30xi1> to vector<16x30xi1>
    %2152 = vector.shape_cast %1354 : vector<16x1xf32> to vector<16x1xf32>
    %2153 = vector.broadcast %2152 : vector<16x1xf32> to vector<16x30xf32>
    %2154 = vector.broadcast %cst_545 : f32 to vector<16x30xf32>
    %2155 = arith.select %2151, %2153, %2154 : vector<16x30xi1>, vector<16x30xf32>
    %2156 = arith.addf %2147, %2155 : vector<16x30xf32>
    %c9_i32_546 = arith.constant 9 : i32
    %2157 = vector.broadcast %c9_i32_546 : i32 to vector<1x30xi32>
    %2158 = arith.cmpi eq, %2074, %2157 : vector<1x30xi32>
    %cst_547 = arith.constant 0.000000e+00 : f32
    %2159 = vector.shape_cast %2158 : vector<1x30xi1> to vector<1x30xi1>
    %2160 = vector.broadcast %2159 : vector<1x30xi1> to vector<16x30xi1>
    %2161 = vector.shape_cast %1336 : vector<16x1xf32> to vector<16x1xf32>
    %2162 = vector.broadcast %2161 : vector<16x1xf32> to vector<16x30xf32>
    %2163 = vector.broadcast %cst_547 : f32 to vector<16x30xf32>
    %2164 = arith.select %2160, %2162, %2163 : vector<16x30xi1>, vector<16x30xf32>
    %2165 = arith.addf %2156, %2164 : vector<16x30xf32>
    %c10_i32_548 = arith.constant 10 : i32
    %2166 = vector.broadcast %c10_i32_548 : i32 to vector<1x30xi32>
    %2167 = arith.cmpi eq, %2074, %2166 : vector<1x30xi32>
    %cst_549 = arith.constant 0.000000e+00 : f32
    %2168 = vector.shape_cast %2167 : vector<1x30xi1> to vector<1x30xi1>
    %2169 = vector.broadcast %2168 : vector<1x30xi1> to vector<16x30xi1>
    %2170 = vector.shape_cast %1346 : vector<16x1xf32> to vector<16x1xf32>
    %2171 = vector.broadcast %2170 : vector<16x1xf32> to vector<16x30xf32>
    %2172 = vector.broadcast %cst_549 : f32 to vector<16x30xf32>
    %2173 = arith.select %2169, %2171, %2172 : vector<16x30xi1>, vector<16x30xf32>
    %2174 = arith.addf %2165, %2173 : vector<16x30xf32>
    %c11_i32_550 = arith.constant 11 : i32
    %2175 = vector.broadcast %c11_i32_550 : i32 to vector<1x30xi32>
    %2176 = arith.cmpi eq, %2074, %2175 : vector<1x30xi32>
    %cst_551 = arith.constant 0.000000e+00 : f32
    %2177 = vector.shape_cast %2176 : vector<1x30xi1> to vector<1x30xi1>
    %2178 = vector.broadcast %2177 : vector<1x30xi1> to vector<16x30xi1>
    %2179 = vector.shape_cast %1356 : vector<16x1xf32> to vector<16x1xf32>
    %2180 = vector.broadcast %2179 : vector<16x1xf32> to vector<16x30xf32>
    %2181 = vector.broadcast %cst_551 : f32 to vector<16x30xf32>
    %2182 = arith.select %2178, %2180, %2181 : vector<16x30xi1>, vector<16x30xf32>
    %2183 = arith.addf %2174, %2182 : vector<16x30xf32>
    %c12_i32_552 = arith.constant 12 : i32
    %2184 = vector.broadcast %c12_i32_552 : i32 to vector<1x30xi32>
    %2185 = arith.cmpi eq, %2074, %2184 : vector<1x30xi32>
    %cst_553 = arith.constant 0.000000e+00 : f32
    %2186 = vector.shape_cast %2185 : vector<1x30xi1> to vector<1x30xi1>
    %2187 = vector.broadcast %2186 : vector<1x30xi1> to vector<16x30xi1>
    %2188 = vector.shape_cast %1338 : vector<16x1xf32> to vector<16x1xf32>
    %2189 = vector.broadcast %2188 : vector<16x1xf32> to vector<16x30xf32>
    %2190 = vector.broadcast %cst_553 : f32 to vector<16x30xf32>
    %2191 = arith.select %2187, %2189, %2190 : vector<16x30xi1>, vector<16x30xf32>
    %2192 = arith.addf %2183, %2191 : vector<16x30xf32>
    %c13_i32_554 = arith.constant 13 : i32
    %2193 = vector.broadcast %c13_i32_554 : i32 to vector<1x30xi32>
    %2194 = arith.cmpi eq, %2074, %2193 : vector<1x30xi32>
    %cst_555 = arith.constant 0.000000e+00 : f32
    %2195 = vector.shape_cast %2194 : vector<1x30xi1> to vector<1x30xi1>
    %2196 = vector.broadcast %2195 : vector<1x30xi1> to vector<16x30xi1>
    %2197 = vector.shape_cast %1348 : vector<16x1xf32> to vector<16x1xf32>
    %2198 = vector.broadcast %2197 : vector<16x1xf32> to vector<16x30xf32>
    %2199 = vector.broadcast %cst_555 : f32 to vector<16x30xf32>
    %2200 = arith.select %2196, %2198, %2199 : vector<16x30xi1>, vector<16x30xf32>
    %2201 = arith.addf %2192, %2200 : vector<16x30xf32>
    %c14_i32_556 = arith.constant 14 : i32
    %2202 = vector.broadcast %c14_i32_556 : i32 to vector<1x30xi32>
    %2203 = arith.cmpi eq, %2074, %2202 : vector<1x30xi32>
    %cst_557 = arith.constant 0.000000e+00 : f32
    %2204 = vector.shape_cast %2203 : vector<1x30xi1> to vector<1x30xi1>
    %2205 = vector.broadcast %2204 : vector<1x30xi1> to vector<16x30xi1>
    %2206 = vector.shape_cast %1358 : vector<16x1xf32> to vector<16x1xf32>
    %2207 = vector.broadcast %2206 : vector<16x1xf32> to vector<16x30xf32>
    %2208 = vector.broadcast %cst_557 : f32 to vector<16x30xf32>
    %2209 = arith.select %2205, %2207, %2208 : vector<16x30xi1>, vector<16x30xf32>
    %2210 = arith.addf %2201, %2209 : vector<16x30xf32>
    %c15_i32_558 = arith.constant 15 : i32
    %2211 = vector.broadcast %c15_i32_558 : i32 to vector<1x30xi32>
    %2212 = arith.cmpi eq, %2074, %2211 : vector<1x30xi32>
    %cst_559 = arith.constant 0.000000e+00 : f32
    %2213 = vector.shape_cast %2212 : vector<1x30xi1> to vector<1x30xi1>
    %2214 = vector.broadcast %2213 : vector<1x30xi1> to vector<16x30xi1>
    %2215 = vector.shape_cast %2033 : vector<16x1xf32> to vector<16x1xf32>
    %2216 = vector.broadcast %2215 : vector<16x1xf32> to vector<16x30xf32>
    %2217 = vector.broadcast %cst_559 : f32 to vector<16x30xf32>
    %2218 = arith.select %2214, %2216, %2217 : vector<16x30xi1>, vector<16x30xf32>
    %2219 = arith.addf %2210, %2218 : vector<16x30xf32>
    %c16_i32_560 = arith.constant 16 : i32
    %2220 = vector.broadcast %c16_i32_560 : i32 to vector<1x30xi32>
    %2221 = arith.cmpi eq, %2074, %2220 : vector<1x30xi32>
    %cst_561 = arith.constant 0.000000e+00 : f32
    %2222 = vector.shape_cast %2221 : vector<1x30xi1> to vector<1x30xi1>
    %2223 = vector.broadcast %2222 : vector<1x30xi1> to vector<16x30xi1>
    %2224 = vector.shape_cast %2042 : vector<16x1xf32> to vector<16x1xf32>
    %2225 = vector.broadcast %2224 : vector<16x1xf32> to vector<16x30xf32>
    %2226 = vector.broadcast %cst_561 : f32 to vector<16x30xf32>
    %2227 = arith.select %2223, %2225, %2226 : vector<16x30xi1>, vector<16x30xf32>
    %2228 = arith.addf %2219, %2227 : vector<16x30xf32>
    %c17_i32_562 = arith.constant 17 : i32
    %2229 = vector.broadcast %c17_i32_562 : i32 to vector<1x30xi32>
    %2230 = arith.cmpi eq, %2074, %2229 : vector<1x30xi32>
    %cst_563 = arith.constant 0.000000e+00 : f32
    %2231 = vector.shape_cast %2230 : vector<1x30xi1> to vector<1x30xi1>
    %2232 = vector.broadcast %2231 : vector<1x30xi1> to vector<16x30xi1>
    %2233 = vector.shape_cast %2051 : vector<16x1xf32> to vector<16x1xf32>
    %2234 = vector.broadcast %2233 : vector<16x1xf32> to vector<16x30xf32>
    %2235 = vector.broadcast %cst_563 : f32 to vector<16x30xf32>
    %2236 = arith.select %2232, %2234, %2235 : vector<16x30xi1>, vector<16x30xf32>
    %2237 = arith.addf %2228, %2236 : vector<16x30xf32>
    %c18_i32_564 = arith.constant 18 : i32
    %2238 = vector.broadcast %c18_i32_564 : i32 to vector<1x30xi32>
    %2239 = arith.cmpi eq, %2074, %2238 : vector<1x30xi32>
    %cst_565 = arith.constant 0.000000e+00 : f32
    %2240 = vector.shape_cast %2239 : vector<1x30xi1> to vector<1x30xi1>
    %2241 = vector.broadcast %2240 : vector<1x30xi1> to vector<16x30xi1>
    %2242 = vector.shape_cast %2060 : vector<16x1xf32> to vector<16x1xf32>
    %2243 = vector.broadcast %2242 : vector<16x1xf32> to vector<16x30xf32>
    %2244 = vector.broadcast %cst_565 : f32 to vector<16x30xf32>
    %2245 = arith.select %2241, %2243, %2244 : vector<16x30xi1>, vector<16x30xf32>
    %2246 = arith.addf %2237, %2245 : vector<16x30xf32>
    %c20_i32_566 = arith.constant 20 : i32
    %2247 = vector.broadcast %c20_i32_566 : i32 to vector<1x30xi32>
    %2248 = arith.cmpi eq, %2074, %2247 : vector<1x30xi32>
    %cst_567 = arith.constant 0.000000e+00 : f32
    %2249 = vector.shape_cast %2248 : vector<1x30xi1> to vector<1x30xi1>
    %2250 = vector.broadcast %2249 : vector<1x30xi1> to vector<16x30xi1>
    %2251 = vector.shape_cast %2069 : vector<16x1xf32> to vector<16x1xf32>
    %2252 = vector.broadcast %2251 : vector<16x1xf32> to vector<16x30xf32>
    %2253 = vector.broadcast %cst_567 : f32 to vector<16x30xf32>
    %2254 = arith.select %2250, %2252, %2253 : vector<16x30xi1>, vector<16x30xf32>
    %2255 = arith.addf %2246, %2254 : vector<16x30xf32>
    %c21_i32_568 = arith.constant 21 : i32
    %2256 = vector.broadcast %c21_i32_568 : i32 to vector<1x30xi32>
    %2257 = arith.cmpi eq, %2074, %2256 : vector<1x30xi32>
    %cst_569 = arith.constant 0.000000e+00 : f32
    %2258 = vector.shape_cast %2257 : vector<1x30xi1> to vector<1x30xi1>
    %2259 = vector.broadcast %2258 : vector<1x30xi1> to vector<16x30xi1>
    %2260 = vector.shape_cast %2070 : vector<16x1xf32> to vector<16x1xf32>
    %2261 = vector.broadcast %2260 : vector<16x1xf32> to vector<16x30xf32>
    %2262 = vector.broadcast %cst_569 : f32 to vector<16x30xf32>
    %2263 = arith.select %2259, %2261, %2262 : vector<16x30xi1>, vector<16x30xf32>
    %2264 = arith.addf %2255, %2263 : vector<16x30xf32>
    %c22_i32_570 = arith.constant 22 : i32
    %2265 = vector.broadcast %c22_i32_570 : i32 to vector<1x30xi32>
    %2266 = arith.cmpi eq, %2074, %2265 : vector<1x30xi32>
    %cst_571 = arith.constant 0.000000e+00 : f32
    %2267 = vector.shape_cast %2266 : vector<1x30xi1> to vector<1x30xi1>
    %2268 = vector.broadcast %2267 : vector<1x30xi1> to vector<16x30xi1>
    %2269 = vector.shape_cast %2071 : vector<16x1xf32> to vector<16x1xf32>
    %2270 = vector.broadcast %2269 : vector<16x1xf32> to vector<16x30xf32>
    %2271 = vector.broadcast %cst_571 : f32 to vector<16x30xf32>
    %2272 = arith.select %2268, %2270, %2271 : vector<16x30xi1>, vector<16x30xf32>
    %2273 = arith.addf %2264, %2272 : vector<16x30xf32>
    %c23_i32_572 = arith.constant 23 : i32
    %2274 = vector.broadcast %c23_i32_572 : i32 to vector<1x30xi32>
    %2275 = arith.cmpi eq, %2074, %2274 : vector<1x30xi32>
    %cst_573 = arith.constant 0.000000e+00 : f32
    %2276 = vector.shape_cast %2275 : vector<1x30xi1> to vector<1x30xi1>
    %2277 = vector.broadcast %2276 : vector<1x30xi1> to vector<16x30xi1>
    %2278 = vector.shape_cast %2072 : vector<16x1xf32> to vector<16x1xf32>
    %2279 = vector.broadcast %2278 : vector<16x1xf32> to vector<16x30xf32>
    %2280 = vector.broadcast %cst_573 : f32 to vector<16x30xf32>
    %2281 = arith.select %2277, %2279, %2280 : vector<16x30xi1>, vector<16x30xf32>
    %2282 = arith.addf %2273, %2281 : vector<16x30xf32>
    %c24_i32_574 = arith.constant 24 : i32
    %2283 = vector.broadcast %c24_i32_574 : i32 to vector<1x30xi32>
    %2284 = arith.cmpi eq, %2074, %2283 : vector<1x30xi32>
    %cst_575 = arith.constant 0.000000e+00 : f32
    %2285 = vector.shape_cast %2284 : vector<1x30xi1> to vector<1x30xi1>
    %2286 = vector.broadcast %2285 : vector<1x30xi1> to vector<16x30xi1>
    %2287 = vector.shape_cast %2073 : vector<16x1xf32> to vector<16x1xf32>
    %2288 = vector.broadcast %2287 : vector<16x1xf32> to vector<16x30xf32>
    %2289 = vector.broadcast %cst_575 : f32 to vector<16x30xf32>
    %2290 = arith.select %2286, %2288, %2289 : vector<16x30xi1>, vector<16x30xf32>
    %2291 = arith.addf %2282, %2290 : vector<16x30xf32>
    %c28_i32_576 = arith.constant 28 : i32
    %2292 = vector.broadcast %c28_i32_576 : i32 to vector<1x30xi32>
    %2293 = arith.cmpi eq, %2074, %2292 : vector<1x30xi32>
    %cst_577 = arith.constant 0.000000e+00 : f32
    %2294 = vector.shape_cast %2293 : vector<1x30xi1> to vector<1x30xi1>
    %2295 = vector.broadcast %2294 : vector<1x30xi1> to vector<16x30xi1>
    %2296 = vector.shape_cast %1893 : vector<16x1xf32> to vector<16x1xf32>
    %2297 = vector.broadcast %2296 : vector<16x1xf32> to vector<16x30xf32>
    %2298 = vector.broadcast %cst_577 : f32 to vector<16x30xf32>
    %2299 = arith.select %2295, %2297, %2298 : vector<16x30xi1>, vector<16x30xf32>
    %2300 = arith.addf %2291, %2299 : vector<16x30xf32>
    %c29_i32_578 = arith.constant 29 : i32
    %2301 = vector.broadcast %c29_i32_578 : i32 to vector<1x30xi32>
    %2302 = arith.cmpi eq, %2074, %2301 : vector<1x30xi32>
    %cst_579 = arith.constant 0.000000e+00 : f32
    %2303 = vector.shape_cast %2302 : vector<1x30xi1> to vector<1x30xi1>
    %2304 = vector.broadcast %2303 : vector<1x30xi1> to vector<16x30xi1>
    %2305 = vector.shape_cast %2024 : vector<16x1xf32> to vector<16x1xf32>
    %2306 = vector.broadcast %2305 : vector<16x1xf32> to vector<16x30xf32>
    %2307 = vector.broadcast %cst_579 : f32 to vector<16x30xf32>
    %2308 = arith.select %2304, %2306, %2307 : vector<16x30xi1>, vector<16x30xf32>
    %2309 = arith.addf %2300, %2308 : vector<16x30xf32>
    %2310 = vector.broadcast %1 : vector<16x1xf32> to vector<16x30xf32>
    %2311 = arith.mulf %2309, %2310 : vector<16x30xf32>
    %2312 = arith.truncf %2311 : vector<16x30xf32> to vector<16x30xbf16>
    %c272 = arith.constant 272 : index
    %c0_580 = arith.constant 0 : index
    %2313 = vector.load %arg5[%c272, %c0_580] : memref<432x128xf32, #tpu.memory_space<vmem>>, vector<30x32xf32>
    %2314 = arith.truncf %2313 : vector<30x32xf32> to vector<30x32xbf16>
    %cst_581 = arith.constant dense<0.000000e+00> : vector<16x32xf32>
    %2315 = tpu.matmul %2312, %2314, %cst_581 {dimension_numbers = #tpu.dot_dimension_numbers<[1], [0], [0], [1], [0, 0, 1, 1], [], []>} : vector<16x30xbf16>, vector<30x32xbf16>, vector<16x32xf32> -> vector<16x32xf32>
    %c304 = arith.constant 304 : index
    %c0_582 = arith.constant 0 : index
    %2316 = vector.load %arg5[%c304, %c0_582] : memref<432x128xf32, #tpu.memory_space<vmem>>, vector<1x32xf32>
    %2317 = vector.broadcast %2316 : vector<1x32xf32> to vector<16x32xf32>
    %2318 = arith.addf %2315, %2317 : vector<16x32xf32>
    %2319 = math.tanh %2318 : vector<16x32xf32>
    %2320 = arith.truncf %2311 : vector<16x30xf32> to vector<16x30xbf16>
    %c312 = arith.constant 312 : index
    %c0_583 = arith.constant 0 : index
    %2321 = vector.load %arg5[%c312, %c0_583] : memref<432x128xf32, #tpu.memory_space<vmem>>, vector<30x1xf32>
    %2322 = arith.truncf %2321 : vector<30x1xf32> to vector<30x1xbf16>
    %cst_584 = arith.constant dense<0.000000e+00> : vector<16x1xf32>
    %2323 = tpu.matmul %2320, %2322, %cst_584 {dimension_numbers = #tpu.dot_dimension_numbers<[1], [0], [0], [1], [0, 0, 1, 1], [], []>} : vector<16x30xbf16>, vector<30x1xbf16>, vector<16x1xf32> -> vector<16x1xf32>
    %c344 = arith.constant 344 : index
    %c0_585 = arith.constant 0 : index
    %2324 = vector.load %arg5[%c344, %c0_585] : memref<432x128xf32, #tpu.memory_space<vmem>>, vector<1x1xf32>
    %2325 = vector.broadcast %2324 : vector<1x1xf32> to vector<16x1xf32>
    %2326 = arith.addf %2323, %2325 : vector<16x1xf32>
    %cst_586 = arith.constant -1.000000e+30 : f32
    %2327 = vector.broadcast %cst_586 : f32 to vector<16x1xf32>
    %2328 = arith.select %5, %2326, %2327 : vector<16x1xi1>, vector<16x1xf32>
    %2329 = tpu.iota {dimensions = array<i32: 0>} : vector<2x32xi32>
    %cst_587 = arith.constant 0.000000e+00 : f32
    %2330 = vector.broadcast %cst_587 : f32 to vector<2x32xf32>
    %2331 = vector.extract_strided_slice %2328 {offsets = [0, 0], sizes = [8, 1], strides = [1, 1]} : vector<16x1xf32> to vector<8x1xf32>
    %2332 = vector.extract_strided_slice %1 {offsets = [0, 0], sizes = [8, 1], strides = [1, 1]} : vector<16x1xf32> to vector<8x1xf32>
    %cst_588 = arith.constant dense<0xFF800000> : vector<1xf32>
    %2333 = vector.multi_reduction <maximumf>, %2331, %cst_588 [0] : vector<8x1xf32> to vector<1xf32>
    %2334 = vector.shape_cast %2333 : vector<1xf32> to vector<1x1xf32>
    %2335 = vector.broadcast %2334 : vector<1x1xf32> to vector<8x1xf32>
    %2336 = arith.subf %2331, %2335 : vector<8x1xf32>
    %2337 = math.exp %2336 : vector<8x1xf32>
    %2338 = arith.mulf %2337, %2332 : vector<8x1xf32>
    %cst_589 = arith.constant dense<0.000000e+00> : vector<1xf32>
    %2339 = vector.multi_reduction <add>, %2338, %cst_589 [0] : vector<8x1xf32> to vector<1xf32>
    %2340 = vector.shape_cast %2339 : vector<1xf32> to vector<1x1xf32>
    %cst_590 = arith.constant 1.000000e-30 : f32
    %2341 = vector.broadcast %cst_590 : f32 to vector<1x1xf32>
    %2342 = arith.maximumf %2340, %2341 : vector<1x1xf32>
    %2343 = tpu.reciprocal %2342 {approx = true} : vector<1x1xf32> -> vector<1x1xf32>
    %2344 = vector.broadcast %2343 : vector<1x1xf32> to vector<8x1xf32>
    %2345 = arith.mulf %2338, %2344 : vector<8x1xf32>
    %2346 = vector.extract_strided_slice %2319 {offsets = [0, 0], sizes = [8, 32], strides = [1, 1]} : vector<16x32xf32> to vector<8x32xf32>
    %2347 = vector.broadcast %2345 : vector<8x1xf32> to vector<8x32xf32>
    %2348 = arith.mulf %2347, %2346 : vector<8x32xf32>
    %cst_591 = arith.constant dense<0.000000e+00> : vector<32xf32>
    %2349 = vector.multi_reduction <add>, %2348, %cst_591 [0] : vector<8x32xf32> to vector<32xf32>
    %2350 = vector.shape_cast %2349 : vector<32xf32> to vector<1x32xf32>
    %c0_i32_592 = arith.constant 0 : i32
    %2351 = vector.broadcast %c0_i32_592 : i32 to vector<2x32xi32>
    %2352 = arith.cmpi eq, %2329, %2351 : vector<2x32xi32>
    %cst_593 = arith.constant 0.000000e+00 : f32
    %2353 = vector.shape_cast %2350 : vector<1x32xf32> to vector<1x32xf32>
    %2354 = vector.broadcast %2353 : vector<1x32xf32> to vector<2x32xf32>
    %2355 = vector.broadcast %cst_593 : f32 to vector<2x32xf32>
    %2356 = arith.select %2352, %2354, %2355 : vector<2x32xi1>, vector<2x32xf32>
    %2357 = arith.addf %2330, %2356 : vector<2x32xf32>
    %2358 = vector.extract_strided_slice %2328 {offsets = [8, 0], sizes = [8, 1], strides = [1, 1]} : vector<16x1xf32> to vector<8x1xf32>
    %2359 = vector.extract_strided_slice %1 {offsets = [8, 0], sizes = [8, 1], strides = [1, 1]} : vector<16x1xf32> to vector<8x1xf32>
    %cst_594 = arith.constant dense<0xFF800000> : vector<1xf32>
    %2360 = vector.multi_reduction <maximumf>, %2358, %cst_594 [0] : vector<8x1xf32> to vector<1xf32>
    %2361 = vector.shape_cast %2360 : vector<1xf32> to vector<1x1xf32>
    %2362 = vector.broadcast %2361 : vector<1x1xf32> to vector<8x1xf32>
    %2363 = arith.subf %2358, %2362 : vector<8x1xf32>
    %2364 = math.exp %2363 : vector<8x1xf32>
    %2365 = arith.mulf %2364, %2359 : vector<8x1xf32>
    %cst_595 = arith.constant dense<0.000000e+00> : vector<1xf32>
    %2366 = vector.multi_reduction <add>, %2365, %cst_595 [0] : vector<8x1xf32> to vector<1xf32>
    %2367 = vector.shape_cast %2366 : vector<1xf32> to vector<1x1xf32>
    %cst_596 = arith.constant 1.000000e-30 : f32
    %2368 = vector.broadcast %cst_596 : f32 to vector<1x1xf32>
    %2369 = arith.maximumf %2367, %2368 : vector<1x1xf32>
    %2370 = tpu.reciprocal %2369 {approx = true} : vector<1x1xf32> -> vector<1x1xf32>
    %2371 = vector.broadcast %2370 : vector<1x1xf32> to vector<8x1xf32>
    %2372 = arith.mulf %2365, %2371 : vector<8x1xf32>
    %2373 = vector.extract_strided_slice %2319 {offsets = [8, 0], sizes = [8, 32], strides = [1, 1]} : vector<16x32xf32> to vector<8x32xf32>
    %2374 = vector.broadcast %2372 : vector<8x1xf32> to vector<8x32xf32>
    %2375 = arith.mulf %2374, %2373 : vector<8x32xf32>
    %cst_597 = arith.constant dense<0.000000e+00> : vector<32xf32>
    %2376 = vector.multi_reduction <add>, %2375, %cst_597 [0] : vector<8x32xf32> to vector<32xf32>
    %2377 = vector.shape_cast %2376 : vector<32xf32> to vector<1x32xf32>
    %c1_i32_598 = arith.constant 1 : i32
    %2378 = vector.broadcast %c1_i32_598 : i32 to vector<2x32xi32>
    %2379 = arith.cmpi eq, %2329, %2378 : vector<2x32xi32>
    %cst_599 = arith.constant 0.000000e+00 : f32
    %2380 = vector.shape_cast %2377 : vector<1x32xf32> to vector<1x32xf32>
    %2381 = vector.broadcast %2380 : vector<1x32xf32> to vector<2x32xf32>
    %2382 = vector.broadcast %cst_599 : f32 to vector<2x32xf32>
    %2383 = arith.select %2379, %2381, %2382 : vector<2x32xi1>, vector<2x32xf32>
    %2384 = arith.addf %2357, %2383 : vector<2x32xf32>
    %2385 = arith.truncf %2384 : vector<2x32xf32> to vector<2x32xbf16>
    %c352 = arith.constant 352 : index
    %c0_600 = arith.constant 0 : index
    %2386 = vector.load %arg5[%c352, %c0_600] : memref<432x128xf32, #tpu.memory_space<vmem>>, vector<32x32xf32>
    %2387 = arith.truncf %2386 : vector<32x32xf32> to vector<32x32xbf16>
    %cst_601 = arith.constant dense<0.000000e+00> : vector<2x32xf32>
    %2388 = tpu.matmul %2385, %2387, %cst_601 {dimension_numbers = #tpu.dot_dimension_numbers<[1], [0], [0], [1], [0, 0, 1, 1], [], []>} : vector<2x32xbf16>, vector<32x32xbf16>, vector<2x32xf32> -> vector<2x32xf32>
    %c384 = arith.constant 384 : index
    %c0_602 = arith.constant 0 : index
    %2389 = vector.load %arg5[%c384, %c0_602] : memref<432x128xf32, #tpu.memory_space<vmem>>, vector<1x32xf32>
    %2390 = vector.broadcast %2389 : vector<1x32xf32> to vector<2x32xf32>
    %2391 = arith.addf %2388, %2390 : vector<2x32xf32>
    %2392 = math.tanh %2391 : vector<2x32xf32>
    %2393 = arith.truncf %2392 : vector<2x32xf32> to vector<2x32xbf16>
    %c392 = arith.constant 392 : index
    %c0_603 = arith.constant 0 : index
    %2394 = vector.load %arg5[%c392, %c0_603] : memref<432x128xf32, #tpu.memory_space<vmem>>, vector<32x128xf32>
    %2395 = arith.truncf %2394 : vector<32x128xf32> to vector<32x128xbf16>
    %cst_604 = arith.constant dense<0.000000e+00> : vector<2x128xf32>
    %2396 = tpu.matmul %2393, %2395, %cst_604 {dimension_numbers = #tpu.dot_dimension_numbers<[1], [0], [0], [1], [0, 0, 1, 1], [], []>} : vector<2x32xbf16>, vector<32x128xbf16>, vector<2x128xf32> -> vector<2x128xf32>
    %c424 = arith.constant 424 : index
    %c0_605 = arith.constant 0 : index
    %2397 = vector.load %arg5[%c424, %c0_605] : memref<432x128xf32, #tpu.memory_space<vmem>>, vector<1x128xf32>
    %2398 = vector.broadcast %2397 : vector<1x128xf32> to vector<2x128xf32>
    %2399 = arith.addf %2396, %2398 : vector<2x128xf32>
    %c0_606 = arith.constant 0 : index
    %c0_607 = arith.constant 0 : index
    %2400 = vector.load %arg7[%c0_606, %c0_607] : memref<2x128xf32, #tpu.memory_space<vmem>>, vector<2x128xf32>
    tpu.vector_store %arg7[%c0_606, %c0_607], %2399 {strides = array<i32>} : memref<2x128xf32, #tpu.memory_space<vmem>>, vector<2x128xf32>,
    %2401 = tpu.iota {dimensions = array<i32: 1>} : vector<1x128xi32>
    %c64_i32 = arith.constant 64 : i32
    %2402 = vector.broadcast %c64_i32 : i32 to vector<1x128xi32>
    %2403 = arith.cmpi eq, %2401, %2402 : vector<1x128xi32>
    %cst_608 = arith.constant 0.000000e+00 : f32
    %2404 = vector.shape_cast %2403 : vector<1x128xi1> to vector<1x128xi1>
    %2405 = vector.broadcast %2404 : vector<1x128xi1> to vector<16x128xi1>
    %2406 = vector.shape_cast %1288 : vector<16x1xf32> to vector<16x1xf32>
    %2407 = vector.broadcast %2406 : vector<16x1xf32> to vector<16x128xf32>
    %2408 = vector.broadcast %cst_608 : f32 to vector<16x128xf32>
    %2409 = arith.select %2405, %2407, %2408 : vector<16x128xi1>, vector<16x128xf32>
    %2410 = arith.addf %148, %2409 : vector<16x128xf32>
    %c65_i32 = arith.constant 65 : i32
    %2411 = vector.broadcast %c65_i32 : i32 to vector<1x128xi32>
    %2412 = arith.cmpi eq, %2401, %2411 : vector<1x128xi32>
    %cst_609 = arith.constant 0.000000e+00 : f32
    %2413 = vector.shape_cast %2412 : vector<1x128xi1> to vector<1x128xi1>
    %2414 = vector.broadcast %2413 : vector<1x128xi1> to vector<16x128xi1>
    %2415 = vector.shape_cast %1298 : vector<16x1xf32> to vector<16x1xf32>
    %2416 = vector.broadcast %2415 : vector<16x1xf32> to vector<16x128xf32>
    %2417 = vector.broadcast %cst_609 : f32 to vector<16x128xf32>
    %2418 = arith.select %2414, %2416, %2417 : vector<16x128xi1>, vector<16x128xf32>
    %2419 = arith.addf %2410, %2418 : vector<16x128xf32>
    %c66_i32 = arith.constant 66 : i32
    %2420 = vector.broadcast %c66_i32 : i32 to vector<1x128xi32>
    %2421 = arith.cmpi eq, %2401, %2420 : vector<1x128xi32>
    %cst_610 = arith.constant 0.000000e+00 : f32
    %2422 = vector.shape_cast %2421 : vector<1x128xi1> to vector<1x128xi1>
    %2423 = vector.broadcast %2422 : vector<1x128xi1> to vector<16x128xi1>
    %2424 = vector.shape_cast %1308 : vector<16x1xf32> to vector<16x1xf32>
    %2425 = vector.broadcast %2424 : vector<16x1xf32> to vector<16x128xf32>
    %2426 = vector.broadcast %cst_610 : f32 to vector<16x128xf32>
    %2427 = arith.select %2423, %2425, %2426 : vector<16x128xi1>, vector<16x128xf32>
    %2428 = arith.addf %2419, %2427 : vector<16x128xf32>
    %c67_i32 = arith.constant 67 : i32
    %2429 = vector.broadcast %c67_i32 : i32 to vector<1x128xi32>
    %2430 = arith.cmpi eq, %2401, %2429 : vector<1x128xi32>
    %cst_611 = arith.constant 0.000000e+00 : f32
    %2431 = vector.shape_cast %2430 : vector<1x128xi1> to vector<1x128xi1>
    %2432 = vector.broadcast %2431 : vector<1x128xi1> to vector<16x128xi1>
    %2433 = vector.shape_cast %1318 : vector<16x1xf32> to vector<16x1xf32>
    %2434 = vector.broadcast %2433 : vector<16x1xf32> to vector<16x128xf32>
    %2435 = vector.broadcast %cst_611 : f32 to vector<16x128xf32>
    %2436 = arith.select %2432, %2434, %2435 : vector<16x128xi1>, vector<16x128xf32>
    %2437 = arith.addf %2428, %2436 : vector<16x128xf32>
    %c68_i32 = arith.constant 68 : i32
    %2438 = vector.broadcast %c68_i32 : i32 to vector<1x128xi32>
    %2439 = arith.cmpi eq, %2401, %2438 : vector<1x128xi32>
    %cst_612 = arith.constant 0.000000e+00 : f32
    %2440 = vector.shape_cast %2439 : vector<1x128xi1> to vector<1x128xi1>
    %2441 = vector.broadcast %2440 : vector<1x128xi1> to vector<16x128xi1>
    %2442 = vector.shape_cast %1328 : vector<16x1xf32> to vector<16x1xf32>
    %2443 = vector.broadcast %2442 : vector<16x1xf32> to vector<16x128xf32>
    %2444 = vector.broadcast %cst_612 : f32 to vector<16x128xf32>
    %2445 = arith.select %2441, %2443, %2444 : vector<16x128xi1>, vector<16x128xf32>
    %2446 = arith.addf %2437, %2445 : vector<16x128xf32>
    %c0_613 = arith.constant 0 : index
    %c0_614 = arith.constant 0 : index
    %2447 = vector.load %arg6[%c0_613, %c0_614] : memref<16x128xf32, #tpu.memory_space<vmem>>, vector<16x128xf32>
    tpu.vector_store %arg6[%c0_613, %c0_614], %2446 {strides = array<i32>} : memref<16x128xf32, #tpu.memory_space<vmem>>, vector<16x128xf32>,
    return
  }
  func.func @transform_0(%arg0: i32) -> (i32, i32) {
    %c0_i32 = arith.constant 0 : i32
    %c0_i32_0 = arith.constant 0 : i32
    %c0_i32_1 = arith.constant 0 : i32
    return %c0_i32, %c0_i32_0 : i32, i32
  }
  func.func @transform_1(%arg0: i32) -> (i32, i32) {
    %c0_i32 = arith.constant 0 : i32
    %c0_i32_0 = arith.constant 0 : i32
    %c0_i32_1 = arith.constant 0 : i32
    return %c0_i32, %c0_i32_0 : i32, i32
  }
  func.func @transform_2(%arg0: i32) -> (i32, i32) {
    %c0_i32 = arith.constant 0 : i32
    %c0_i32_0 = arith.constant 0 : i32
    %c0_i32_1 = arith.constant 0 : i32
    return %c0_i32, %c0_i32_0 : i32, i32
  }
  func.func @transform_3(%arg0: i32) -> (i32, i32) {
    %c0_i32 = arith.constant 0 : i32
    %c0_i32_0 = arith.constant 0 : i32
    %c0_i32_1 = arith.constant 0 : i32
    return %c0_i32, %c0_i32_0 : i32, i32
  }
  func.func @transform_4(%arg0: i32) -> (i32, i32) {
    %c0_i32 = arith.constant 0 : i32
    %c0_i32_0 = arith.constant 0 : i32
    %c0_i32_1 = arith.constant 0 : i32
    return %c0_i32, %c0_i32_0 : i32, i32
  }
  func.func @transform_5(%arg0: i32) -> (i32, i32) {
    %c0_i32 = arith.constant 0 : i32
    %c0_i32_0 = arith.constant 0 : i32
    %c0_i32_1 = arith.constant 0 : i32
    return %c0_i32, %c0_i32_0 : i32, i32
  }
  func.func @transform_6(%arg0: i32) -> (i32, i32) {
    %c0_i32 = arith.constant 0 : i32
    %c0_i32_0 = arith.constant 0 : i32
    %c0_i32_1 = arith.constant 0 : i32
    return %c0_i32, %c0_i32_0 : i32, i32
  }
}

</mosaic_0001>

<llo_original>
// kernel: squeeze.3
$region0: #{squeeze.3}
  %s0 = inlined_call_operand.vmem [shape: f32[2,8,5,3,1], index: 0, kind: input, shape index: {}]
  %s1 = inlined_call_operand.vmem [shape: f32[16,15], index: 1, kind: output, shape index: {}]
  $region1: #{squeeze.3} parent=0
    #allocation0 [shape = 'u8[61440]{0}', space=vmem, size = 0xf000, scoped, tag = 'scoped mem for input reshape']
    %s3 = sshllo.u32 0, 2
    %s4 = smul.addr 2, 14
    %s5 = scalar_lea.vmem %s0, %s4
    %v6 = vld [vmem:[%s5] sm:%s3]
    %s7 = scalar_lea.vmem [#allocation0], 112
    %8 = vst [vmem:[%s7] sm:%s3] %v6
    %s9 = smul.addr 2, 13
    %s10 = scalar_lea.vmem %s0, %s9
    %v11 = vld [vmem:[%s10] sm:%s3]
    %s12 = scalar_lea.vmem [#allocation0], 104
    %13 = vst [vmem:[%s12] sm:%s3] %v11
    %s14 = smul.addr 2, 12
    %s15 = scalar_lea.vmem %s0, %s14
    %v16 = vld [vmem:[%s15] sm:%s3]
    %s17 = scalar_lea.vmem [#allocation0], 96
    %18 = vst [vmem:[%s17] sm:%s3] %v16
    %s19 = smul.addr 2, 11
    %s20 = scalar_lea.vmem %s0, %s19
    %v21 = vld [vmem:[%s20] sm:%s3]
    %s22 = scalar_lea.vmem [#allocation0], 88
    %23 = vst [vmem:[%s22] sm:%s3] %v21
    %s24 = smul.addr 2, 10
    %s25 = scalar_lea.vmem %s0, %s24
    %v26 = vld [vmem:[%s25] sm:%s3]
    %s27 = scalar_lea.vmem [#allocation0], 80
    %28 = vst [vmem:[%s27] sm:%s3] %v26
    %s29 = smul.addr 2, 9
    %s30 = scalar_lea.vmem %s0, %s29
    %v31 = vld [vmem:[%s30] sm:%s3]
    %s32 = scalar_lea.vmem [#allocation0], 72
    %33 = vst [vmem:[%s32] sm:%s3] %v31
    %s34 = smul.addr 2, 8
    %s35 = scalar_lea.vmem %s0, %s34
    %v36 = vld [vmem:[%s35] sm:%s3]
    %s37 = scalar_lea.vmem [#allocation0], 64
    %38 = vst [vmem:[%s37] sm:%s3] %v36
    %s39 = smul.addr 2, 7
    %s40 = scalar_lea.vmem %s0, %s39
    %v41 = vld [vmem:[%s40] sm:%s3]
    %s42 = scalar_lea.vmem [#allocation0], 56
    %43 = vst [vmem:[%s42] sm:%s3] %v41
    %s44 = smul.addr 2, 6
    %s45 = scalar_lea.vmem %s0, %s44
    %v46 = vld [vmem:[%s45] sm:%s3]
    %s47 = scalar_lea.vmem [#allocation0], 48
    %48 = vst [vmem:[%s47] sm:%s3] %v46
    %s49 = smul.addr 2, 5
    %s50 = scalar_lea.vmem %s0, %s49
    %v51 = vld [vmem:[%s50] sm:%s3]
    %s52 = scalar_lea.vmem [#allocation0], 40
    %53 = vst [vmem:[%s52] sm:%s3] %v51
    %s54 = smul.addr 2, 4
    %s55 = scalar_lea.vmem %s0, %s54
    %v56 = vld [vmem:[%s55] sm:%s3]
    %s57 = scalar_lea.vmem [#allocation0], 32
    %58 = vst [vmem:[%s57] sm:%s3] %v56
    %s59 = smul.addr 2, 3
    %s60 = scalar_lea.vmem %s0, %s59
    %v61 = vld [vmem:[%s60] sm:%s3]
    %s62 = scalar_lea.vmem [#allocation0], 24
    %63 = vst [vmem:[%s62] sm:%s3] %v61
    %s64 = smul.addr 2, 2
    %s65 = scalar_lea.vmem %s0, %s64
    %v66 = vld [vmem:[%s65] sm:%s3]
    %s67 = scalar_lea.vmem [#allocation0], 16
    %68 = vst [vmem:[%s67] sm:%s3] %v66
    %s69 = scalar_lea.vmem %s0, 2
    %v70 = vld [vmem:[%s69] sm:%s3]
    %s71 = scalar_lea.vmem [#allocation0], 8
    %72 = vst [vmem:[%s71] sm:%s3] %v70
    %v73 = vld [vmem:[%s0] sm:%s3]
    %74 = vst [vmem:[#allocation0] sm:%s3] %v73
    %v75 = vld [vmem:[#allocation0] ss:$8 sm:$0xf]
    %v76 = vld [vmem:[#allocation0] ss:$8 sm:$0xf0]
    %vm77 = vcmask 1047556
    %v78 = vsel %vm77, %v76, %v75
    %vm79 = vcmask 64512
    %80 = vst.msk [vmem:[%s1] sm:$0xff] %vm79, %v78
    %s81 = scalar_lea.vmem [#allocation0], 64
    %v82 = vld [vmem:[%s81] ss:$8 sm:$0xf]
    %s83 = scalar_lea.vmem [#allocation0], 64
    %v84 = vld [vmem:[%s83] ss:$8 sm:$0x70]
    %vm85 = vcmask 1046532
    %v86 = vsel %vm85, %v84, %v82
    %vm87 = vcmask 64512
    %s88 = scalar_lea.vmem %s1, 8
    %89 = vst.msk [vmem:[%s88] sm:$0x7f] %vm87, %v86
    %s90 = scalar_lea.vmem [#allocation0], 1
    %v91 = vld [vmem:[%s90] ss:$8 sm:$0xf]
    %s92 = scalar_lea.vmem [#allocation0], 1
    %v93 = vld [vmem:[%s92] ss:$8 sm:$0xf0]
    %vm94 = vcmask 1047556
    %v95 = vsel %vm94, %v93, %v91
    %96 = vrot.lane.b32.xlu0 %v95, 8
    %v97 = vpop.permute.xlu0 %96
    %vm98 = vcmask 130112
    %99 = vst.msk [vmem:[%s1] sm:$0xff] %vm98, %v97
    %s100 = scalar_lea.vmem [#allocation0], 65
    %v101 = vld [vmem:[%s100] ss:$8 sm:$0xf]
    %s102 = scalar_lea.vmem [#allocation0], 65
    %v103 = vld [vmem:[%s102] ss:$8 sm:$0x70]
    %vm104 = vcmask 1046532
    %v105 = vsel %vm104, %v103, %v101
    %106 = vrot.lane.b32.xlu0 %v105, 8
    %v107 = vpop.permute.xlu0 %106
    %vm108 = vcmask 130112
    %s109 = scalar_lea.vmem %s1, 8
    %110 = vst.msk [vmem:[%s109] sm:$0x7f] %vm108, %v107

// kernel: bipartite_attention_forward.1
$region0: #{bipartite_attention_forward.1}
  #allocation0 [shape = 'u32[]', space=smem, size = 0x4, offset = 0x4, fixed_abs, tag = 'smem constant byte address 0x4 - core index']
  #allocation1 [shape = 'u32[144,128]{1,0:T(1,128)}', space=vmem, size = 0x12000, scoped, tag = 'internal scratch']
  #allocation2 [shape = 'f32[16,32]{1,0:T(8,128)}', space=vmem, size = 0x2000, scoped, tag = 'scratch operand']
  %s0 = inlined_call_operand.hbm [shape: f32[16,30], index: 0, kind: input, shape index: {}]
  %s1 = inlined_call_operand.vmem [shape: f32[16,1], index: 1, kind: input, shape index: {}]
  %s2 = inlined_call_operand.vmem [shape: f32[16,15], index: 2, kind: input, shape index: {}]
  %s3 = inlined_call_operand.vmem [shape: f32[16,15], index: 3, kind: input, shape index: {}]
  %s4 = inlined_call_operand.vmem [shape: f32[432,128], index: 4, kind: input, shape index: {}]
  %s5 = inlined_call_operand.vmem [shape: f32[16,128], index: 5, kind: output, shape index: {0}]
  %s6 = inlined_call_operand.hbm [shape: f32[2,128], index: 6, kind: output, shape index: {1}]
  %7 = xla_tuple %s5, %s6
  %s8 = sld [smem:[#allocation0]]
  $region42: #{bipartite_attention_forward.1} parent=0
    _
  %s10 = ssub.s32 1, %s8
  %s11 = scalar_select 0, %s10, %s8
  $region1: #{bipartite_attention_forward.1} parent=0
    #allocation3 [shape = 'u8[8192]{0}', space=vmem, size = 0x2000, scoped, tag = 'input window, operand 0, single buffered']
    #allocation4 [shape = 's32[1]{0}', space=sflag, size = 0x4, scoped, tag = 'scoped memory for bipartite_attention_forward.1']
    #allocation5 [shape = 's32[1]{0}', space=sflag, size = 0x4, scoped, tag = 'scoped memory for bipartite_attention_forward.1']
    #allocation6 [shape = 'u8[1024]{0}', space=vmem, size = 0x400, scoped, tag = 'output window, operand 1, single buffered']
    %12 = vsyncpa [#allocation4], 0
    %13 = vsyncpa [#allocation5], 0
    // Predicated region
    $region2: #{bipartite_attention_forward.1} parent=1 // pred_check
      _
    $region3: #{bipartite_attention_forward.1} parent=1 // pred_check_branch
      %15 = sbr.rel (0) target = $region5
    $region4: #{bipartite_attention_forward.1} parent=1 // pred_region
      %s17 = ssub.s32 256, 256
      %18 = vsyncadd [#allocation4], %s17
      %s19 = sshll.u32 [#allocation3], 4
      %s20 = int_to_ptr.vmem [resolvable:$true] %s19
      %25 = dma.hbm_to_vmem [thread:$0]  %s0, 256, %s20, [#allocation4], 128, 128, 8
    $region5: #{bipartite_attention_forward.1} parent=1 // pred_fallthru
      _
    // Predicated region
    $region6: #{bipartite_attention_forward.1} parent=1 // pred_check
      _
    $region7: #{bipartite_attention_forward.1} parent=1 // pred_check_branch
      %27 = sbr.rel (0) target = $region9
    $region8: #{bipartite_attention_forward.1} parent=1 // pred_region
      _
    $region9: #{bipartite_attention_forward.1} parent=1 // pred_fallthru
      _
    // Predicated region
    $region10: #{bipartite_attention_forward.1} parent=1 // pred_check
      _
    $region11: #{bipartite_attention_forward.1} parent=1 // pred_check_branch
      %29 = sbr.rel (0) target = $region13
    $region12: #{bipartite_attention_forward.1} parent=1 // pred_region
      _
    $region13: #{bipartite_attention_forward.1} parent=1 // pred_fallthru
      _
    // Predicated region
    $region14: #{bipartite_attention_forward.1} parent=1 // pred_check
      _
    $region15: #{bipartite_attention_forward.1} parent=1 // pred_check_branch
      %31 = sbr.rel (0) target = $region17
    $region16: #{bipartite_attention_forward.1} parent=1 // pred_region
      _
    $region17: #{bipartite_attention_forward.1} parent=1 // pred_fallthru
      _
    // Predicated region
    $region18: #{bipartite_attention_forward.1} parent=1 // pred_check
      _
    $region19: #{bipartite_attention_forward.1} parent=1 // pred_check_branch
      %33 = sbr.rel (0) target = $region21
    $region20: #{bipartite_attention_forward.1} parent=1 // pred_region
      _
    $region21: #{bipartite_attention_forward.1} parent=1 // pred_fallthru
      _
    // Predicated region
    $region22: #{bipartite_attention_forward.1} parent=1 // pred_check
      _
    $region23: #{bipartite_attention_forward.1} parent=1 // pred_check_branch
      %35 = sbr.rel (0) target = $region25
    $region24: #{bipartite_attention_forward.1} parent=1 // pred_region
      %36 = dma.done [#allocation4], 256
    $region25: #{bipartite_attention_forward.1} parent=1 // pred_fallthru
      _
    %v38 = vld [vmem:[#allocation3] sm:$0xff]
    %v39 = vld [vmem:[#allocation3 + $0x8] sm:$0xff]
    %v40 = vld [vmem:[%s1] sm:$0xff]
    %v41 = vld [vmem:[%s1 + $0x8] sm:$0xff]
    %v42 = vld [vmem:[%s2] sm:$0xff]
    %v43 = vld [vmem:[%s2 + $0x8] sm:$0xff]
    %v44 = vld [vmem:[%s3] sm:$0xff]
    %v45 = vld [vmem:[%s3 + $0x8] sm:$0xff]
    %vm46 = vcmp.gt.f32.partialorder %v40, 0.0
    %vm47 = vcmp.gt.f32.partialorder %v41, 0.0
    %v48 = vpack.c.bf16 %v39, %v38
    %v49 = vld [vmem:[%s4] sm:$0xff]
    %v50 = vld [vmem:[%s4 + $0x8] sm:$0xff]
    %v51 = vld [vmem:[%s4 + $0x10] sm:$0xff]
    %v52 = vld [vmem:[%s4 + $0x18] sm:$0x3f]
    %v53 = vpack.c.bf16 %v50, %v49
    %v54 = vpack.c.bf16 %v52, %v51
    %v55 = vld [vmem:[%s4 + $0x20] sm:$0x1]
    %v56 = vlaneseq
    %v57 = vshrl.u32 %v56, 7
    %v58 = vsub.s32 0, %v57
    %v59 = vrot.slane %v55, %v58
    %vm60 = vcmask 244736
    %v62 = vsel %vm60, %v48, 0
    %vm64 = vcmask 1046528
    %v66 = vsel %vm64, %v54, 0
    %68 = vmatprep.subr.bf16.mxu0 0
    %69 = vmatpush1.bf16.msra.mxu0 %v53
    %70 = vmatprep.subr.bf16.mxu0 0
    %71 = vmatpush1.bf16.msra.mxu0 %v66
    %72 = vmatprep.subr.bf16.mxu0 0
    %73 = vmatpush1.bf16.msra.mxu0 0
    %74 = vmatprep.subr.bf16.mxu0 0
    %75 = vmatpush1.bf16.msra.mxu0 0
    %76 = vmatprep.subr.bf16.mxu0 0
    %77 = vmatpush1.bf16.msra.mxu0 0
    %78 = vmatprep.subr.bf16.mxu0 0
    %79 = vmatpush1.bf16.msra.mxu0 0
    %80 = vmatprep.subr.bf16.mxu0 0
    %81 = vmatpush1.bf16.msra.mxu0 0
    %82 = vmatprep.subr.bf16.mxu0 0
    %83 = vmatpush1.bf16.msra.mxu0 0
    %84 = vmatprep.subr.bf16.mxu0 0
    %85 = vmatpush1.bf16.msra.mxu0 0
    %86 = vmatprep.subr.bf16.mxu0 0
    %87 = vmatpush1.bf16.msra.mxu0 0
    %88 = vmatprep.subr.bf16.mxu0 0
    %89 = vmatpush1.bf16.msra.mxu0 0
    %90 = vmatprep.subr.bf16.mxu0 0
    %91 = vmatpush1.bf16.msra.mxu0 0
    %92 = vmatprep.subr.bf16.mxu0 0
    %93 = vmatpush1.bf16.msra.mxu0 0
    %94 = vmatprep.subr.bf16.mxu0 0
    %95 = vmatpush1.bf16.msra.mxu0 0
    %96 = vmatprep.subr.bf16.mxu0 0
    %97 = vmatpush1.bf16.msra.mxu0 0
    %98 = vmatprep.subr.bf16.mxu0 0
    %99 = vmatpush1.bf16.msra.mxu0 0
    %100 = vmatprep.mubr.bf16.mxu0 0
    %101 = vmatmul.mubr.bf16.gmra.mrb[0].mxu0 %v62
    %v102 = vpop.f32.mrb[0].mxu0
    %v103 = vadd.f32 %v59, %v102
    %v104 = vpop.f32.mrb[0].mxu0
    %v105 = vpop.f32.mrb[0].mxu0
    %v106 = vadd.f32 %v59, %v105
    %v107 = vpop.f32.mrb[0].mxu0
    %108 = vdwg.mxu0
    %v109 = vtanh.pop %v103
    %v110 = vtanh.pop %v106
    %v111 = vld [vmem:[%s4 + $0x28] sm:$0xff]
    %v112 = vld [vmem:[%s4 + $0x30] sm:$0xff]
    %v113 = vld [vmem:[%s4 + $0x38] sm:$0xff]
    %v114 = vld [vmem:[%s4 + $0x40] sm:$0x3f]
    %v115 = vpack.c.bf16 %v112, %v111
    %v116 = vpack.c.bf16 %v114, %v113
    %v117 = vld [vmem:[%s4 + $0x48] sm:$0x1]
    %v118 = vlaneseq
    %v119 = vshrl.u32 %v118, 7
    %v120 = vsub.s32 0, %v119
    %v121 = vrot.slane %v117, %v120
    %v123 = vsel %vm64, %v116, 0
    %125 = vmatprep.subr.bf16.mxu0 0
    %126 = vmatpush1.bf16.msra.mxu0 %v115
    %127 = vmatprep.subr.bf16.mxu0 0
    %128 = vmatpush1.bf16.msra.mxu0 %v123
    %129 = vmatprep.subr.bf16.mxu0 0
    %130 = vmatpush1.bf16.msra.mxu0 0
    %131 = vmatprep.subr.bf16.mxu0 0
    %132 = vmatpush1.bf16.msra.mxu0 0
    %133 = vmatprep.subr.bf16.mxu0 0
    %134 = vmatpush1.bf16.msra.mxu0 0
    %135 = vmatprep.subr.bf16.mxu0 0
    %136 = vmatpush1.bf16.msra.mxu0 0
    %137 = vmatprep.subr.bf16.mxu0 0
    %138 = vmatpush1.bf16.msra.mxu0 0
    %139 = vmatprep.subr.bf16.mxu0 0
    %140 = vmatpush1.bf16.msra.mxu0 0
    %141 = vmatprep.subr.bf16.mxu0 0
    %142 = vmatpush1.bf16.msra.mxu0 0
    %143 = vmatprep.subr.bf16.mxu0 0
    %144 = vmatpush1.bf16.msra.mxu0 0
    %145 = vmatprep.subr.bf16.mxu0 0
    %146 = vmatpush1.bf16.msra.mxu0 0
    %147 = vmatprep.subr.bf16.mxu0 0
    %148 = vmatpush1.bf16.msra.mxu0 0
    %149 = vmatprep.subr.bf16.mxu0 0
    %150 = vmatpush1.bf16.msra.mxu0 0
    %151 = vmatprep.subr.bf16.mxu0 0
    %152 = vmatpush1.bf16.msra.mxu0 0
    %153 = vmatprep.subr.bf16.mxu0 0
    %154 = vmatpush1.bf16.msra.mxu0 0
    %155 = vmatprep.subr.bf16.mxu0 0
    %156 = vmatpush1.bf16.msra.mxu0 0
    %157 = vmatprep.mubr.bf16.mxu0 0
    %158 = vmatmul.mubr.bf16.gmra.mrb[0].mxu0 %v62
    %v159 = vpop.f32.mrb[0].mxu0
    %v160 = vadd.f32 %v121, %v159
    %v161 = vpop.f32.mrb[0].mxu0
    %v162 = vpop.f32.mrb[0].mxu0
    %v163 = vadd.f32 %v121, %v162
    %v164 = vpop.f32.mrb[0].mxu0
    %165 = vdwg.mxu0
    %v166 = vsel %vm46, 1, 0
    %v167 = vsel %vm47, 1, 0
    %168 = vset.pattern.permute.xlu0 0
    %169 = vperm.xlu0 %168, %v166
    %v170 = vpop.permute.xlu0 %169
    %171 = vset.pattern.permute.xlu0 0
    %172 = vperm.xlu0 %171, %v167
    %v173 = vpop.permute.xlu0 %172
    %vm174 = vcmp.eq.s32.totalorder %v170, 1
    %vm175 = vcmp.eq.s32.totalorder %v173, 1
    %v176 = vsel %vm174, %v160, -1e+30
    %v177 = vsel %vm175, %v163, -1e+30
    %vm178 = vcmask 31744
    %v179 = vsel %vm178, %v176, -inf
    %v180 = vrot.slane %v179, 4
    %v181 = vmax.f32 %v179, %v180
    %v182 = vrot.slane %v181, 2
    %v183 = vmax.f32 %v181, %v182
    %v184 = vrot.slane %v183, 1
    %v185 = vmax.f32 %v183, %v184
    %v186 = vsub.f32 %v176, %v185
    %v187 = vmul.f32 %v186, 1.442695
    %v188 = vpow.pop %v187
    %190 = vset.pattern.permute.xlu0 0
    %191 = vperm.xlu0 %190, %v40
    %v192 = vpop.permute.xlu0 %191
    %v194 = vmul.f32 %v188, %v192
    %v195 = vsel %vm178, %v194, 0.0
    %v196 = vrot.slane %v195, 4
    %v197 = vadd.f32 %v195, %v196
    %v198 = vrot.slane %v197, 2
    %v199 = vadd.f32 %v197, %v198
    %v200 = vrot.slane %v199, 1
    %v201 = vadd.f32 %v199, %v200
    %v202 = vmax.f32 %v201, 1e-30
    %v203 = vrcp.pop %v202
    %v204 = vmul.f32 %v194, %v203
    %205 = vxpose.xlu0.b32.start [1/16] %v204, 128
    %206 = vxpose.xlu0.b32.cont [2/16] 0.0, 128
    %207 = vxpose.xlu0.b32.cont [3/16] 0.0, 128
    %208 = vxpose.xlu0.b32.cont [4/16] 0.0, 128
    %209 = vxpose.xlu0.b32.cont [5/16] 0.0, 128
    %210 = vxpose.xlu0.b32.cont [6/16] 0.0, 128
    %211 = vxpose.xlu0.b32.cont [7/16] 0.0, 128
    %212 = vxpose.xlu0.b32.cont [8/16] 0.0, 128
    %213 = vxpose.xlu0.b32.cont [9/16] 0.0, 128
    %214 = vxpose.xlu0.b32.cont [10/16] 0.0, 128
    %215 = vxpose.xlu0.b32.cont [11/16] 0.0, 128
    %216 = vxpose.xlu0.b32.cont [12/16] 0.0, 128
    %217 = vxpose.xlu0.b32.cont [13/16] 0.0, 128
    %218 = vxpose.xlu0.b32.cont [14/16] 0.0, 128
    %219 = vxpose.xlu0.b32.cont [15/16] 0.0, 128
    %220 = vxpose.xlu0.b32.end [16/16] 0.0, 128
    %v221 = vpop.trf.xlu0
    %v222 = vpop.trf.xlu0
    %v223 = vpop.trf.xlu0
    %v224 = vpop.trf.xlu0
    %v225 = vpop.trf.xlu0
    %v226 = vpop.trf.xlu0
    %v227 = vpop.trf.xlu0
    %v228 = vpop.trf.xlu0
    %v229 = vpop.trf.xlu0
    %v230 = vpop.trf.xlu0
    %v231 = vpop.trf.xlu0
    %v232 = vpop.trf.xlu0
    %v233 = vpop.trf.xlu0
    %v234 = vpop.trf.xlu0
    %v235 = vpop.trf.xlu0
    %v236 = vpop.trf.xlu0
    %vm237 = vcmask 64512
    %v239 = vsel %vm237, %v221, 0
    %241 = vmatprep.subr.mxu0 0.0
    %242 = vmatpush1.msra.mxu0 %v109
    %243 = vmatprep.subr.mxu0 0.0
    %244 = vmatpush1.msra.mxu0 0.0
    %245 = vmatprep.subr.mxu0 0.0
    %246 = vmatpush1.msra.mxu0 0.0
    %247 = vmatprep.subr.mxu0 0.0
    %248 = vmatpush1.msra.mxu0 0.0
    %249 = vmatprep.subr.mxu0 0.0
    %250 = vmatpush1.msra.mxu0 0.0
    %251 = vmatprep.subr.mxu0 0.0
    %252 = vmatpush1.msra.mxu0 0.0
    %253 = vmatprep.subr.mxu0 0.0
    %254 = vmatpush1.msra.mxu0 0.0
    %255 = vmatprep.subr.mxu0 0.0
    %256 = vmatpush1.msra.mxu0 0.0
    %257 = vmatprep.subr.mxu0 0.0
    %258 = vmatpush1.msra.mxu0 0.0
    %259 = vmatprep.subr.mxu0 0.0
    %260 = vmatpush1.msra.mxu0 0.0
    %261 = vmatprep.subr.mxu0 0.0
    %262 = vmatpush1.msra.mxu0 0.0
    %263 = vmatprep.subr.mxu0 0.0
    %264 = vmatpush1.msra.mxu0 0.0
    %265 = vmatprep.subr.mxu0 0.0
    %266 = vmatpush1.msra.mxu0 0.0
    %267 = vmatprep.subr.mxu0 0.0
    %268 = vmatpush1.msra.mxu0 0.0
    %269 = vmatprep.subr.mxu0 0.0
    %270 = vmatpush1.msra.mxu0 0.0
    %271 = vmatprep.subr.mxu0 0.0
    %272 = vmatpush1.msra.mxu0 0.0
    %273 = vmatprep.subr.mxu0 0.0
    %274 = vmatpush1.msra.mxu0 0.0
    %275 = vmatprep.subr.mxu0 0.0
    %276 = vmatpush1.msra.mxu0 0.0
    %277 = vmatprep.subr.mxu0 0.0
    %278 = vmatpush1.msra.mxu0 0.0
    %279 = vmatprep.subr.mxu0 0.0
    %280 = vmatpush1.msra.mxu0 0.0
    %281 = vmatprep.subr.mxu0 0.0
    %282 = vmatpush1.msra.mxu0 0.0
    %283 = vmatprep.subr.mxu0 0.0
    %284 = vmatpush1.msra.mxu0 0.0
    %285 = vmatprep.subr.mxu0 0.0
    %286 = vmatpush1.msra.mxu0 0.0
    %287 = vmatprep.subr.mxu0 0.0
    %288 = vmatpush1.msra.mxu0 0.0
    %289 = vmatprep.subr.mxu0 0.0
    %290 = vmatpush1.msra.mxu0 0.0
    %291 = vmatprep.subr.mxu0 0.0
    %292 = vmatpush1.msra.mxu0 0.0
    %293 = vmatprep.subr.mxu0 0.0
    %294 = vmatpush1.msra.mxu0 0.0
    %295 = vmatprep.subr.mxu0 0.0
    %296 = vmatpush1.msra.mxu0 0.0
    %297 = vmatprep.subr.mxu0 0.0
    %298 = vmatpush1.msra.mxu0 0.0
    %299 = vmatprep.subr.mxu0 0.0
    %300 = vmatpush1.msra.mxu0 0.0
    %301 = vmatprep.subr.mxu0 0.0
    %302 = vmatpush1.msra.mxu0 0.0
    %303 = vmatprep.subr.mxu0 0.0
    %304 = vmatpush1.msra.mxu0 0.0
    %305 = vmatprep.mubr.f32.mxu0 0.0
    %306 = vmatmul.mubr.f32.gmra.mrb[0].mxu0 %v239
    %v307 = vpop.f32.mrb[0].mxu0
    %v308 = vadd.f32 0.0, %v307
    %v309 = vpop.f32.mrb[0].mxu0
    %310 = vdwg.mxu0
    %v312 = vsel %vm178, %v204, 0
    %vm314 = vcmask 1043456
    %v316 = vsel %vm314, %v308, 0
    %318 = vmatprep.subr.mxu0 0.0
    %319 = vmatpush1.msra.mxu0 %v316
    %320 = vmatprep.subr.mxu0 0.0
    %321 = vmatpush1.msra.mxu0 0.0
    %322 = vmatprep.subr.mxu0 0.0
    %323 = vmatpush1.msra.mxu0 0.0
    %324 = vmatprep.subr.mxu0 0.0
    %325 = vmatpush1.msra.mxu0 0.0
    %326 = vmatprep.subr.mxu0 0.0
    %327 = vmatpush1.msra.mxu0 0.0
    %328 = vmatprep.subr.mxu0 0.0
    %329 = vmatpush1.msra.mxu0 0.0
    %330 = vmatprep.subr.mxu0 0.0
    %331 = vmatpush1.msra.mxu0 0.0
    %332 = vmatprep.subr.mxu0 0.0
    %333 = vmatpush1.msra.mxu0 0.0
    %334 = vmatprep.subr.mxu0 0.0
    %335 = vmatpush1.msra.mxu0 0.0
    %336 = vmatprep.subr.mxu0 0.0
    %337 = vmatpush1.msra.mxu0 0.0
    %338 = vmatprep.subr.mxu0 0.0
    %339 = vmatpush1.msra.mxu0 0.0
    %340 = vmatprep.subr.mxu0 0.0
    %341 = vmatpush1.msra.mxu0 0.0
    %342 = vmatprep.subr.mxu0 0.0
    %343 = vmatpush1.msra.mxu0 0.0
    %344 = vmatprep.subr.mxu0 0.0
    %345 = vmatpush1.msra.mxu0 0.0
    %346 = vmatprep.subr.mxu0 0.0
    %347 = vmatpush1.msra.mxu0 0.0
    %348 = vmatprep.subr.mxu0 0.0
    %349 = vmatpush1.msra.mxu0 0.0
    %350 = vmatprep.subr.mxu0 0.0
    %351 = vmatpush1.msra.mxu0 0.0
    %352 = vmatprep.subr.mxu0 0.0
    %353 = vmatpush1.msra.mxu0 0.0
    %354 = vmatprep.subr.mxu0 0.0
    %355 = vmatpush1.msra.mxu0 0.0
    %356 = vmatprep.subr.mxu0 0.0
    %357 = vmatpush1.msra.mxu0 0.0
    %358 = vmatprep.subr.mxu0 0.0
    %359 = vmatpush1.msra.mxu0 0.0
    %360 = vmatprep.subr.mxu0 0.0
    %361 = vmatpush1.msra.mxu0 0.0
    %362 = vmatprep.subr.mxu0 0.0
    %363 = vmatpush1.msra.mxu0 0.0
    %364 = vmatprep.subr.mxu0 0.0
    %365 = vmatpush1.msra.mxu0 0.0
    %366 = vmatprep.subr.mxu0 0.0
    %367 = vmatpush1.msra.mxu0 0.0
    %368 = vmatprep.subr.mxu0 0.0
    %369 = vmatpush1.msra.mxu0 0.0
    %370 = vmatprep.subr.mxu0 0.0
    %371 = vmatpush1.msra.mxu0 0.0
    %372 = vmatprep.subr.mxu0 0.0
    %373 = vmatpush1.msra.mxu0 0.0
    %374 = vmatprep.subr.mxu0 0.0
    %375 = vmatpush1.msra.mxu0 0.0
    %376 = vmatprep.subr.mxu0 0.0
    %377 = vmatpush1.msra.mxu0 0.0
    %378 = vmatprep.subr.mxu0 0.0
    %379 = vmatpush1.msra.mxu0 0.0
    %380 = vmatprep.subr.mxu0 0.0
    %381 = vmatpush1.msra.mxu0 0.0
    %382 = vmatprep.mubr.f32.mxu0 0.0
    %383 = vmatmul.mubr.f32.gmra.mrb[0].mxu0 %v312
    %v384 = vpop.f32.mrb[0].mxu0
    %v385 = vadd.f32 0.0, %v384
    %v386 = vpop.f32.mrb[0].mxu0
    %387 = vdwg.mxu0
    %v388 = vadd.f32 %v109, %v385
    %vm389 = vcmask 261120
    %390 = vst.msk [vmem:[#allocation2] sm:$0xff] %vm389, %v388
    %v391 = vsel %vm178, %v177, -inf
    %v392 = vrot.slane %v391, 4
    %v393 = vmax.f32 %v391, %v392
    %v394 = vrot.slane %v393, 2
    %v395 = vmax.f32 %v393, %v394
    %v396 = vrot.slane %v395, 1
    %v397 = vmax.f32 %v395, %v396
    %v398 = vsub.f32 %v177, %v397
    %v399 = vmul.f32 %v398, 1.442695
    %v400 = vpow.pop %v399
    %402 = vset.pattern.permute.xlu0 0
    %403 = vperm.xlu0 %402, %v41
    %v404 = vpop.permute.xlu0 %403
    %v406 = vmul.f32 %v400, %v404
    %v407 = vsel %vm178, %v406, 0.0
    %v408 = vrot.slane %v407, 4
    %v409 = vadd.f32 %v407, %v408
    %v410 = vrot.slane %v409, 2
    %v411 = vadd.f32 %v409, %v410
    %v412 = vrot.slane %v411, 1
    %v413 = vadd.f32 %v411, %v412
    %v414 = vmax.f32 %v413, 1e-30
    %v415 = vrcp.pop %v414
    %v416 = vmul.f32 %v406, %v415
    %417 = vxpose.xlu0.b32.start [1/16] %v416, 128
    %418 = vxpose.xlu0.b32.cont [2/16] 0.0, 128
    %419 = vxpose.xlu0.b32.cont [3/16] 0.0, 128
    %420 = vxpose.xlu0.b32.cont [4/16] 0.0, 128
    %421 = vxpose.xlu0.b32.cont [5/16] 0.0, 128
    %422 = vxpose.xlu0.b32.cont [6/16] 0.0, 128
    %423 = vxpose.xlu0.b32.cont [7/16] 0.0, 128
    %424 = vxpose.xlu0.b32.cont [8/16] 0.0, 128
    %425 = vxpose.xlu0.b32.cont [9/16] 0.0, 128
    %426 = vxpose.xlu0.b32.cont [10/16] 0.0, 128
    %427 = vxpose.xlu0.b32.cont [11/16] 0.0, 128
    %428 = vxpose.xlu0.b32.cont [12/16] 0.0, 128
    %429 = vxpose.xlu0.b32.cont [13/16] 0.0, 128
    %430 = vxpose.xlu0.b32.cont [14/16] 0.0, 128
    %431 = vxpose.xlu0.b32.cont [15/16] 0.0, 128
    %432 = vxpose.xlu0.b32.end [16/16] 0.0, 128
    %v433 = vpop.trf.xlu0
    %v434 = vpop.trf.xlu0
    %v435 = vpop.trf.xlu0
    %v436 = vpop.trf.xlu0
    %v437 = vpop.trf.xlu0
    %v438 = vpop.trf.xlu0
    %v439 = vpop.trf.xlu0
    %v440 = vpop.trf.xlu0
    %v441 = vpop.trf.xlu0
    %v442 = vpop.trf.xlu0
    %v443 = vpop.trf.xlu0
    %v444 = vpop.trf.xlu0
    %v445 = vpop.trf.xlu0
    %v446 = vpop.trf.xlu0
    %v447 = vpop.trf.xlu0
    %v448 = vpop.trf.xlu0
    %v450 = vsel %vm237, %v433, 0
    %452 = vmatprep.subr.mxu0 0.0
    %453 = vmatpush1.msra.mxu0 %v110
    %454 = vmatprep.subr.mxu0 0.0
    %455 = vmatpush1.msra.mxu0 0.0
    %456 = vmatprep.subr.mxu0 0.0
    %457 = vmatpush1.msra.mxu0 0.0
    %458 = vmatprep.subr.mxu0 0.0
    %459 = vmatpush1.msra.mxu0 0.0
    %460 = vmatprep.subr.mxu0 0.0
    %461 = vmatpush1.msra.mxu0 0.0
    %462 = vmatprep.subr.mxu0 0.0
    %463 = vmatpush1.msra.mxu0 0.0
    %464 = vmatprep.subr.mxu0 0.0
    %465 = vmatpush1.msra.mxu0 0.0
    %466 = vmatprep.subr.mxu0 0.0
    %467 = vmatpush1.msra.mxu0 0.0
    %468 = vmatprep.subr.mxu0 0.0
    %469 = vmatpush1.msra.mxu0 0.0
    %470 = vmatprep.subr.mxu0 0.0
    %471 = vmatpush1.msra.mxu0 0.0
    %472 = vmatprep.subr.mxu0 0.0
    %473 = vmatpush1.msra.mxu0 0.0
    %474 = vmatprep.subr.mxu0 0.0
    %475 = vmatpush1.msra.mxu0 0.0
    %476 = vmatprep.subr.mxu0 0.0
    %477 = vmatpush1.msra.mxu0 0.0
    %478 = vmatprep.subr.mxu0 0.0
    %479 = vmatpush1.msra.mxu0 0.0
    %480 = vmatprep.subr.mxu0 0.0
    %481 = vmatpush1.msra.mxu0 0.0
    %482 = vmatprep.subr.mxu0 0.0
    %483 = vmatpush1.msra.mxu0 0.0
    %484 = vmatprep.subr.mxu0 0.0
    %485 = vmatpush1.msra.mxu0 0.0
    %486 = vmatprep.subr.mxu0 0.0
    %487 = vmatpush1.msra.mxu0 0.0
    %488 = vmatprep.subr.mxu0 0.0
    %489 = vmatpush1.msra.mxu0 0.0
    %490 = vmatprep.subr.mxu0 0.0
    %491 = vmatpush1.msra.mxu0 0.0
    %492 = vmatprep.subr.mxu0 0.0
    %493 = vmatpush1.msra.mxu0 0.0
    %494 = vmatprep.subr.mxu0 0.0
    %495 = vmatpush1.msra.mxu0 0.0
    %496 = vmatprep.subr.mxu0 0.0
    %497 = vmatpush1.msra.mxu0 0.0
    %498 = vmatprep.subr.mxu0 0.0
    %499 = vmatpush1.msra.mxu0 0.0
    %500 = vmatprep.subr.mxu0 0.0
    %501 = vmatpush1.msra.mxu0 0.0
    %502 = vmatprep.subr.mxu0 0.0
    %503 = vmatpush1.msra.mxu0 0.0
    %504 = vmatprep.subr.mxu0 0.0
    %505 = vmatpush1.msra.mxu0 0.0
    %506 = vmatprep.subr.mxu0 0.0
    %507 = vmatpush1.msra.mxu0 0.0
    %508 = vmatprep.subr.mxu0 0.0
    %509 = vmatpush1.msra.mxu0 0.0
    %510 = vmatprep.subr.mxu0 0.0
    %511 = vmatpush1.msra.mxu0 0.0
    %512 = vmatprep.subr.mxu0 0.0
    %513 = vmatpush1.msra.mxu0 0.0
    %514 = vmatprep.subr.mxu0 0.0
    %515 = vmatpush1.msra.mxu0 0.0
    %516 = vmatprep.mubr.f32.mxu0 0.0
    %517 = vmatmul.mubr.f32.gmra.mrb[0].mxu0 %v450
    %v518 = vpop.f32.mrb[0].mxu0
    %v519 = vadd.f32 0.0, %v518
    %v520 = vpop.f32.mrb[0].mxu0
    %521 = vdwg.mxu0
    %v523 = vsel %vm178, %v416, 0
    %v526 = vsel %vm314, %v519, 0
    %528 = vmatprep.subr.mxu0 0.0
    %529 = vmatpush1.msra.mxu0 %v526
    %530 = vmatprep.subr.mxu0 0.0
    %531 = vmatpush1.msra.mxu0 0.0
    %532 = vmatprep.subr.mxu0 0.0
    %533 = vmatpush1.msra.mxu0 0.0
    %534 = vmatprep.subr.mxu0 0.0
    %535 = vmatpush1.msra.mxu0 0.0
    %536 = vmatprep.subr.mxu0 0.0
    %537 = vmatpush1.msra.mxu0 0.0
    %538 = vmatprep.subr.mxu0 0.0
    %539 = vmatpush1.msra.mxu0 0.0
    %540 = vmatprep.subr.mxu0 0.0
    %541 = vmatpush1.msra.mxu0 0.0
    %542 = vmatprep.subr.mxu0 0.0
    %543 = vmatpush1.msra.mxu0 0.0
    %544 = vmatprep.subr.mxu0 0.0
    %545 = vmatpush1.msra.mxu0 0.0
    %546 = vmatprep.subr.mxu0 0.0
    %547 = vmatpush1.msra.mxu0 0.0
    %548 = vmatprep.subr.mxu0 0.0
    %549 = vmatpush1.msra.mxu0 0.0
    %550 = vmatprep.subr.mxu0 0.0
    %551 = vmatpush1.msra.mxu0 0.0
    %552 = vmatprep.subr.mxu0 0.0
    %553 = vmatpush1.msra.mxu0 0.0
    %554 = vmatprep.subr.mxu0 0.0
    %555 = vmatpush1.msra.mxu0 0.0
    %556 = vmatprep.subr.mxu0 0.0
    %557 = vmatpush1.msra.mxu0 0.0
    %558 = vmatprep.subr.mxu0 0.0
    %559 = vmatpush1.msra.mxu0 0.0
    %560 = vmatprep.subr.mxu0 0.0
    %561 = vmatpush1.msra.mxu0 0.0
    %562 = vmatprep.subr.mxu0 0.0
    %563 = vmatpush1.msra.mxu0 0.0
    %564 = vmatprep.subr.mxu0 0.0
    %565 = vmatpush1.msra.mxu0 0.0
    %566 = vmatprep.subr.mxu0 0.0
    %567 = vmatpush1.msra.mxu0 0.0
    %568 = vmatprep.subr.mxu0 0.0
    %569 = vmatpush1.msra.mxu0 0.0
    %570 = vmatprep.subr.mxu0 0.0
    %571 = vmatpush1.msra.mxu0 0.0
    %572 = vmatprep.subr.mxu0 0.0
    %573 = vmatpush1.msra.mxu0 0.0
    %574 = vmatprep.subr.mxu0 0.0
    %575 = vmatpush1.msra.mxu0 0.0
    %576 = vmatprep.subr.mxu0 0.0
    %577 = vmatpush1.msra.mxu0 0.0
    %578 = vmatprep.subr.mxu0 0.0
    %579 = vmatpush1.msra.mxu0 0.0
    %580 = vmatprep.subr.mxu0 0.0
    %581 = vmatpush1.msra.mxu0 0.0
    %582 = vmatprep.subr.mxu0 0.0
    %583 = vmatpush1.msra.mxu0 0.0
    %584 = vmatprep.subr.mxu0 0.0
    %585 = vmatpush1.msra.mxu0 0.0
    %586 = vmatprep.subr.mxu0 0.0
    %587 = vmatpush1.msra.mxu0 0.0
    %588 = vmatprep.subr.mxu0 0.0
    %589 = vmatpush1.msra.mxu0 0.0
    %590 = vmatprep.subr.mxu0 0.0
    %591 = vmatpush1.msra.mxu0 0.0
    %592 = vmatprep.mubr.f32.mxu0 0.0
    %593 = vmatmul.mubr.f32.gmra.mrb[0].mxu0 %v523
    %v594 = vpop.f32.mrb[0].mxu0
    %v595 = vadd.f32 0.0, %v594
    %v596 = vpop.f32.mrb[0].mxu0
    %597 = vdwg.mxu0
    %v598 = vadd.f32 %v110, %v595
    %599 = vst.msk [vmem:[#allocation2 + $0x8] sm:$0xff] %vm389, %v598
    %v600 = vld [vmem:[#allocation2] sm:$0xff]
    %v601 = vld [vmem:[#allocation2 + $0x8] sm:$0xff]
    %v602 = vpack.c.bf16 %v601, %v600
    %v603 = vld [vmem:[%s4 + $0x50] sm:$0xff]
    %v604 = vld [vmem:[%s4 + $0x58] sm:$0xff]
    %v605 = vld [vmem:[%s4 + $0x60] sm:$0xff]
    %v606 = vld [vmem:[%s4 + $0x68] sm:$0xff]
    %v607 = vpack.c.bf16 %v604, %v603
    %v608 = vpack.c.bf16 %v606, %v605
    %v609 = vld [vmem:[%s4 + $0x70] sm:$0x1]
    %v610 = vlaneseq
    %v611 = vshrl.u32 %v610, 7
    %v612 = vsub.s32 0, %v611
    %v613 = vrot.slane %v609, %v612
    %v615 = vsel %vm389, %v602, 0
    %617 = vmatprep.subr.bf16.mxu0 0
    %618 = vmatpush1.bf16.msra.mxu0 %v607
    %619 = vmatprep.subr.bf16.mxu0 0
    %620 = vmatpush1.bf16.msra.mxu0 %v608
    %621 = vmatprep.subr.bf16.mxu0 0
    %622 = vmatpush1.bf16.msra.mxu0 0
    %623 = vmatprep.subr.bf16.mxu0 0
    %624 = vmatpush1.bf16.msra.mxu0 0
    %625 = vmatprep.subr.bf16.mxu0 0
    %626 = vmatpush1.bf16.msra.mxu0 0
    %627 = vmatprep.subr.bf16.mxu0 0
    %628 = vmatpush1.bf16.msra.mxu0 0
    %629 = vmatprep.subr.bf16.mxu0 0
    %630 = vmatpush1.bf16.msra.mxu0 0
    %631 = vmatprep.subr.bf16.mxu0 0
    %632 = vmatpush1.bf16.msra.mxu0 0
    %633 = vmatprep.subr.bf16.mxu0 0
    %634 = vmatpush1.bf16.msra.mxu0 0
    %635 = vmatprep.subr.bf16.mxu0 0
    %636 = vmatpush1.bf16.msra.mxu0 0
    %637 = vmatprep.subr.bf16.mxu0 0
    %638 = vmatpush1.bf16.msra.mxu0 0
    %639 = vmatprep.subr.bf16.mxu0 0
    %640 = vmatpush1.bf16.msra.mxu0 0
    %641 = vmatprep.subr.bf16.mxu0 0
    %642 = vmatpush1.bf16.msra.mxu0 0
    %643 = vmatprep.subr.bf16.mxu0 0
    %644 = vmatpush1.bf16.msra.mxu0 0
    %645 = vmatprep.subr.bf16.mxu0 0
    %646 = vmatpush1.bf16.msra.mxu0 0
    %647 = vmatprep.subr.bf16.mxu0 0
    %648 = vmatpush1.bf16.msra.mxu0 0
    %649 = vmatprep.mubr.bf16.mxu0 0
    %650 = vmatmul.mubr.bf16.gmra.mrb[0].mxu0 %v615
    %v651 = vpop.f32.mrb[0].mxu0
    %v652 = vadd.f32 %v613, %v651
    %v653 = vpop.f32.mrb[0].mxu0
    %v654 = vpop.f32.mrb[0].mxu0
    %v655 = vadd.f32 %v613, %v654
    %v656 = vpop.f32.mrb[0].mxu0
    %657 = vdwg.mxu0
    %v658 = vtanh.pop %v652
    %v659 = vtanh.pop %v655
    %v660 = vpack.c.bf16 %v659, %v658
    %v661 = vld [vmem:[%s4 + $0x78] sm:$0xff]
    %v662 = vld [vmem:[%s4 + $0x80] sm:$0xff]
    %v663 = vld [vmem:[%s4 + $0x88] sm:$0xff]
    %v664 = vld [vmem:[%s4 + $0x90] sm:$0xff]
    %v665 = vpack.c.bf16 %v662, %v661
    %v666 = vpack.c.bf16 %v664, %v663
    %v667 = vld [vmem:[%s4 + $0x98] sm:$0x1]
    %v668 = vlaneseq
    %v669 = vshrl.u32 %v668, 7
    %v670 = vsub.s32 0, %v669
    %v671 = vrot.slane %v667, %v670
    %v673 = vsel %vm389, %v660, 0
    %675 = vmatprep.subr.bf16.mxu0 0
    %676 = vmatpush1.bf16.msra.mxu0 %v665
    %677 = vmatprep.subr.bf16.mxu0 0
    %678 = vmatpush1.bf16.msra.mxu0 %v666
    %679 = vmatprep.subr.bf16.mxu0 0
    %680 = vmatpush1.bf16.msra.mxu0 0
    %681 = vmatprep.subr.bf16.mxu0 0
    %682 = vmatpush1.bf16.msra.mxu0 0
    %683 = vmatprep.subr.bf16.mxu0 0
    %684 = vmatpush1.bf16.msra.mxu0 0
    %685 = vmatprep.subr.bf16.mxu0 0
    %686 = vmatpush1.bf16.msra.mxu0 0
    %687 = vmatprep.subr.bf16.mxu0 0
    %688 = vmatpush1.bf16.msra.mxu0 0
    %689 = vmatprep.subr.bf16.mxu0 0
    %690 = vmatpush1.bf16.msra.mxu0 0
    %691 = vmatprep.subr.bf16.mxu0 0
    %692 = vmatpush1.bf16.msra.mxu0 0
    %693 = vmatprep.subr.bf16.mxu0 0
    %694 = vmatpush1.bf16.msra.mxu0 0
    %695 = vmatprep.subr.bf16.mxu0 0
    %696 = vmatpush1.bf16.msra.mxu0 0
    %697 = vmatprep.subr.bf16.mxu0 0
    %698 = vmatpush1.bf16.msra.mxu0 0
    %699 = vmatprep.subr.bf16.mxu0 0
    %700 = vmatpush1.bf16.msra.mxu0 0
    %701 = vmatprep.subr.bf16.mxu0 0
    %702 = vmatpush1.bf16.msra.mxu0 0
    %703 = vmatprep.subr.bf16.mxu0 0
    %704 = vmatpush1.bf16.msra.mxu0 0
    %705 = vmatprep.subr.bf16.mxu0 0
    %706 = vmatpush1.bf16.msra.mxu0 0
    %707 = vmatprep.mubr.bf16.mxu0 0
    %708 = vmatmul.mubr.bf16.gmra.mrb[0].mxu0 %v673
    %v709 = vpop.f32.mrb[0].mxu0
    %v710 = vadd.f32 %v671, %v709
    %v711 = vpop.f32.mrb[0].mxu0
    %v712 = vpop.f32.mrb[0].mxu0
    %v713 = vadd.f32 %v671, %v712
    %v714 = vpop.f32.mrb[0].mxu0
    %715 = vdwg.mxu0
    %v716 = vsel %vm389, %v710, 0.0
    %717 = vadd.xlane.f32.xlu0 %v716
    %v718 = vpop.xlane.xlu0 %717
    %v719 = vsel %vm389, %v713, 0.0
    %720 = vadd.xlane.f32.xlu0 %v719
    %v721 = vpop.xlane.xlu0 %720
    %v722 = vrcp.pop 32.0
    %v723 = vmul.f32 %v718, %v722
    %v724 = vmul.f32 %v721, %v722
    %v725 = vsub.f32 %v710, %v723
    %v726 = vsub.f32 %v713, %v724
    %v727 = vmul.f32 %v725, %v725
    %v728 = vmul.f32 %v726, %v726
    %v729 = vsel %vm389, %v727, 0.0
    %730 = vadd.xlane.f32.xlu0 %v729
    %v731 = vpop.xlane.xlu0 %730
    %v732 = vsel %vm389, %v728, 0.0
    %733 = vadd.xlane.f32.xlu0 %v732
    %v734 = vpop.xlane.xlu0 %733
    %v735 = vmul.f32 %v731, %v722
    %v736 = vmul.f32 %v734, %v722
    %v737 = vadd.f32 %v735, 1e-05
    %v738 = vadd.f32 %v736, 1e-05
    %v739 = vrsqrt.pop %v737
    %v740 = vrsqrt.pop %v738
    %v741 = vmul.f32 %v725, %v739
    %v742 = vmul.f32 %v726, %v740
    %v743 = vld [vmem:[%s4 + $0xa0] sm:$0x1]
    %v744 = vlaneseq
    %v745 = vshrl.u32 %v744, 7
    %v746 = vsub.s32 0, %v745
    %v747 = vrot.slane %v743, %v746
    %v748 = vmul.f32 %v741, %v747
    %v749 = vmul.f32 %v742, %v747
    %v750 = vld [vmem:[%s4 + $0xa8] sm:$0x1]
    %v751 = vlaneseq
    %v752 = vshrl.u32 %v751, 7
    %v753 = vsub.s32 0, %v752
    %v754 = vrot.slane %v750, %v753
    %v755 = vadd.f32 %v748, %v754
    %v756 = vadd.f32 %v749, %v754
    %v757 = vtanh.pop %v755
    %v758 = vtanh.pop %v756
    %v759 = vpack.c.bf16 %v758, %v757
    %v760 = vld [vmem:[%s4 + $0xb0] sm:$0xff]
    %v761 = vld [vmem:[%s4 + $0xb8] sm:$0xff]
    %v762 = vld [vmem:[%s4 + $0xc0] sm:$0xff]
    %v763 = vld [vmem:[%s4 + $0xc8] sm:$0xff]
    %v764 = vpack.c.bf16 %v761, %v760
    %v765 = vpack.c.bf16 %v763, %v762
    %v766 = vld [vmem:[%s4 + $0xd0] sm:$0x1]
    %v767 = vlaneseq
    %v768 = vshrl.u32 %v767, 7
    %v769 = vsub.s32 0, %v768
    %v770 = vrot.slane %v766, %v769
    %v772 = vsel %vm389, %v759, 0
    %774 = vmatprep.subr.bf16.mxu0 0
    %775 = vmatpush1.bf16.msra.mxu0 %v764
    %776 = vmatprep.subr.bf16.mxu0 0
    %777 = vmatpush1.bf16.msra.mxu0 %v765
    %778 = vmatprep.subr.bf16.mxu0 0
    %779 = vmatpush1.bf16.msra.mxu0 0
    %780 = vmatprep.subr.bf16.mxu0 0
    %781 = vmatpush1.bf16.msra.mxu0 0
    %782 = vmatprep.subr.bf16.mxu0 0
    %783 = vmatpush1.bf16.msra.mxu0 0
    %784 = vmatprep.subr.bf16.mxu0 0
    %785 = vmatpush1.bf16.msra.mxu0 0
    %786 = vmatprep.subr.bf16.mxu0 0
    %787 = vmatpush1.bf16.msra.mxu0 0
    %788 = vmatprep.subr.bf16.mxu0 0
    %789 = vmatpush1.bf16.msra.mxu0 0
    %790 = vmatprep.subr.bf16.mxu0 0
    %791 = vmatpush1.bf16.msra.mxu0 0
    %792 = vmatprep.subr.bf16.mxu0 0
    %793 = vmatpush1.bf16.msra.mxu0 0
    %794 = vmatprep.subr.bf16.mxu0 0
    %795 = vmatpush1.bf16.msra.mxu0 0
    %796 = vmatprep.subr.bf16.mxu0 0
    %797 = vmatpush1.bf16.msra.mxu0 0
    %798 = vmatprep.subr.bf16.mxu0 0
    %799 = vmatpush1.bf16.msra.mxu0 0
    %800 = vmatprep.subr.bf16.mxu0 0
    %801 = vmatpush1.bf16.msra.mxu0 0
    %802 = vmatprep.subr.bf16.mxu0 0
    %803 = vmatpush1.bf16.msra.mxu0 0
    %804 = vmatprep.subr.bf16.mxu0 0
    %805 = vmatpush1.bf16.msra.mxu0 0
    %806 = vmatprep.mubr.bf16.mxu0 0
    %807 = vmatmul.mubr.bf16.gmra.mrb[0].mxu0 %v772
    %v808 = vpop.f32.mrb[0].mxu0
    %v809 = vadd.f32 %v770, %v808
    %v810 = vpop.f32.mrb[0].mxu0
    %v811 = vpop.f32.mrb[0].mxu0
    %v812 = vadd.f32 %v770, %v811
    %v813 = vpop.f32.mrb[0].mxu0
    %814 = vdwg.mxu0
    %v815 = vsel %vm389, %v809, 0.0
    %816 = vadd.xlane.f32.xlu0 %v815
    %v817 = vpop.xlane.xlu0 %816
    %v818 = vsel %vm389, %v812, 0.0
    %819 = vadd.xlane.f32.xlu0 %v818
    %v820 = vpop.xlane.xlu0 %819
    %v821 = vmul.f32 %v817, %v722
    %v822 = vmul.f32 %v820, %v722
    %v823 = vsub.f32 %v809, %v821
    %v824 = vsub.f32 %v812, %v822
    %v825 = vmul.f32 %v823, %v823
    %v826 = vmul.f32 %v824, %v824
    %v827 = vsel %vm389, %v825, 0.0
    %828 = vadd.xlane.f32.xlu0 %v827
    %v829 = vpop.xlane.xlu0 %828
    %v830 = vsel %vm389, %v826, 0.0
    %831 = vadd.xlane.f32.xlu0 %v830
    %v832 = vpop.xlane.xlu0 %831
    %v833 = vmul.f32 %v829, %v722
    %v834 = vmul.f32 %v832, %v722
    %v835 = vadd.f32 %v833, 1e-05
    %v836 = vadd.f32 %v834, 1e-05
    %v837 = vrsqrt.pop %v835
    %v838 = vrsqrt.pop %v836
    %v839 = vmul.f32 %v823, %v837
    %v840 = vmul.f32 %v824, %v838
    %v841 = vld [vmem:[%s4 + $0xd8] sm:$0x1]
    %v842 = vlaneseq
    %v843 = vshrl.u32 %v842, 7
    %v844 = vsub.s32 0, %v843
    %v845 = vrot.slane %v841, %v844
    %v846 = vmul.f32 %v839, %v845
    %v847 = vmul.f32 %v840, %v845
    %v848 = vld [vmem:[%s4 + $0xe0] sm:$0x1]
    %v849 = vlaneseq
    %v850 = vshrl.u32 %v849, 7
    %v851 = vsub.s32 0, %v850
    %v852 = vrot.slane %v848, %v851
    %v853 = vadd.f32 %v846, %v852
    %v854 = vadd.f32 %v847, %v852
    %v855 = vtanh.pop %v853
    %v856 = vtanh.pop %v854
    %v857 = vpack.c.bf16 %v856, %v855
    %v858 = vld [vmem:[%s4 + $0xe8] sm:$0xff]
    %v859 = vld [vmem:[%s4 + $0xf0] sm:$0xff]
    %v860 = vld [vmem:[%s4 + $0xf8] sm:$0xff]
    %v861 = vld [vmem:[%s4 + $0x100] sm:$0xff]
    %v862 = vpack.c.bf16 %v859, %v858
    %v863 = vpack.c.bf16 %v861, %v860
    %v864 = vld [vmem:[%s4 + $0x108] sm:$0x1]
    %v865 = vlaneseq
    %v866 = vshrl.u32 %v865, 7
    %v867 = vsub.s32 0, %v866
    %v868 = vrot.slane %v864, %v867
    %v870 = vsel %vm389, %v857, 0
    %872 = vmatprep.subr.bf16.mxu0 0
    %873 = vmatpush1.bf16.msra.mxu0 %v862
    %874 = vmatprep.subr.bf16.mxu0 0
    %875 = vmatpush1.bf16.msra.mxu0 %v863
    %876 = vmatprep.subr.bf16.mxu0 0
    %877 = vmatpush1.bf16.msra.mxu0 0
    %878 = vmatprep.subr.bf16.mxu0 0
    %879 = vmatpush1.bf16.msra.mxu0 0
    %880 = vmatprep.subr.bf16.mxu0 0
    %881 = vmatpush1.bf16.msra.mxu0 0
    %882 = vmatprep.subr.bf16.mxu0 0
    %883 = vmatpush1.bf16.msra.mxu0 0
    %884 = vmatprep.subr.bf16.mxu0 0
    %885 = vmatpush1.bf16.msra.mxu0 0
    %886 = vmatprep.subr.bf16.mxu0 0
    %887 = vmatpush1.bf16.msra.mxu0 0
    %888 = vmatprep.subr.bf16.mxu0 0
    %889 = vmatpush1.bf16.msra.mxu0 0
    %890 = vmatprep.subr.bf16.mxu0 0
    %891 = vmatpush1.bf16.msra.mxu0 0
    %892 = vmatprep.subr.bf16.mxu0 0
    %893 = vmatpush1.bf16.msra.mxu0 0
    %894 = vmatprep.subr.bf16.mxu0 0
    %895 = vmatpush1.bf16.msra.mxu0 0
    %896 = vmatprep.subr.bf16.mxu0 0
    %897 = vmatpush1.bf16.msra.mxu0 0
    %898 = vmatprep.subr.bf16.mxu0 0
    %899 = vmatpush1.bf16.msra.mxu0 0
    %900 = vmatprep.subr.bf16.mxu0 0
    %901 = vmatpush1.bf16.msra.mxu0 0
    %902 = vmatprep.subr.bf16.mxu0 0
    %903 = vmatpush1.bf16.msra.mxu0 0
    %904 = vmatprep.mubr.bf16.mxu0 0
    %905 = vmatmul.mubr.bf16.gmra.mrb[0].mxu0 %v870
    %v906 = vpop.f32.mrb[0].mxu0
    %v907 = vadd.f32 %v868, %v906
    %v908 = vpop.f32.mrb[0].mxu0
    %v909 = vpop.f32.mrb[0].mxu0
    %v910 = vadd.f32 %v868, %v909
    %v911 = vpop.f32.mrb[0].mxu0
    %912 = vdwg.mxu0
    %v913 = vmul.f32 %v907, %v192
    %v914 = vmul.f32 %v910, %v404
    %v915 = vlaneseq
    %v916 = vand.u32 %v915, 127
    %vm917 = vcmp.eq.s32.totalorder %v916, 45
    %v918 = vsel %vm917, 1, 0
    %vm919 = vcmp.eq.s32.totalorder %v918, 1
    %v920 = vsel %vm919, %v913, 0.0
    %v921 = vsel %vm919, %v914, 0.0
    %922 = vadd.xlane.f32.xlu0 %v920
    %v923 = vpop.xlane.xlu0 %922
    %924 = vadd.xlane.f32.xlu0 %v921
    %v925 = vpop.xlane.xlu0 %924
    %v926 = vmax.f32 %v923, 0.0
    %v927 = vmax.f32 %v925, 0.0
    %v928 = vand.u32 2147483647, %v923
    %v929 = vand.u32 2147483647, %v925
    %v930 = vsub.f32 0.0, %v928
    %v931 = vsub.f32 0.0, %v929
    %v932 = vmul.f32 %v930, 1.442695
    %v933 = vpow.pop %v932
    %v934 = vmul.f32 %v931, 1.442695
    %v935 = vpow.pop %v934
    %v936 = vadd.f32 %v933, 1.0
    %v937 = vadd.f32 %v935, 1.0
    %v938 = vlog2.pop %v936
    %v939 = vmul.f32 %v938, 0.6931472
    %v940 = vlog2.pop %v937
    %v941 = vmul.f32 %v940, 0.6931472
    %v942 = vadd.f32 %v926, %v939
    %v943 = vadd.f32 %v927, %v941
    %vm944 = vcmp.eq.s32.totalorder %v916, 46
    %v945 = vsel %vm944, 1, 0
    %vm946 = vcmp.eq.s32.totalorder %v945, 1
    %v947 = vsel %vm946, %v913, 0.0
    %v948 = vsel %vm946, %v914, 0.0
    %949 = vadd.xlane.f32.xlu0 %v947
    %v950 = vpop.xlane.xlu0 %949
    %951 = vadd.xlane.f32.xlu0 %v948
    %v952 = vpop.xlane.xlu0 %951
    %v953 = vmax.f32 %v950, 0.0
    %v954 = vmax.f32 %v952, 0.0
    %v955 = vand.u32 2147483647, %v950
    %v956 = vand.u32 2147483647, %v952
    %v957 = vsub.f32 0.0, %v955
    %v958 = vsub.f32 0.0, %v956
    %v959 = vmul.f32 %v957, 1.442695
    %v960 = vpow.pop %v959
    %v961 = vmul.f32 %v958, 1.442695
    %v962 = vpow.pop %v961
    %v963 = vadd.f32 %v960, 1.0
    %v964 = vadd.f32 %v962, 1.0
    %v965 = vlog2.pop %v963
    %v966 = vmul.f32 %v965, 0.6931472
    %v967 = vlog2.pop %v964
    %v968 = vmul.f32 %v967, 0.6931472
    %v969 = vadd.f32 %v953, %v966
    %v970 = vadd.f32 %v954, %v968
    %v971 = vrsqrt.pop %v942
    %v972 = vmul.f32 %v942, %v971
    %vm973 = vcmp.eq.f32.partialorder %v942, inf
    %v974 = vsel %vm973, %v942, %v972
    %vm975 = vcmp.eq.f32.partialorder %v942, 0.0
    %v976 = vand.u32 %v942, 2147483648
    %v977 = vsel %vm975, %v976, %v974
    %v978 = vrsqrt.pop %v943
    %v979 = vmul.f32 %v943, %v978
    %vm980 = vcmp.eq.f32.partialorder %v943, inf
    %v981 = vsel %vm980, %v943, %v979
    %vm982 = vcmp.eq.f32.partialorder %v943, 0.0
    %v983 = vand.u32 %v943, 2147483648
    %v984 = vsel %vm982, %v983, %v981
    %v985 = vrsqrt.pop %v969
    %v986 = vmul.f32 %v969, %v985
    %vm987 = vcmp.eq.f32.partialorder %v969, inf
    %v988 = vsel %vm987, %v969, %v986
    %vm989 = vcmp.eq.f32.partialorder %v969, 0.0
    %v990 = vand.u32 %v969, 2147483648
    %v991 = vsel %vm989, %v990, %v988
    %v992 = vrsqrt.pop %v970
    %v993 = vmul.f32 %v970, %v992
    %vm994 = vcmp.eq.f32.partialorder %v970, inf
    %v995 = vsel %vm994, %v970, %v993
    %vm996 = vcmp.eq.f32.partialorder %v970, 0.0
    %v997 = vand.u32 %v970, 2147483648
    %v998 = vsel %vm996, %v997, %v995
    %vm999 = vcmp.eq.s32.totalorder %v916, 0
    %v1000 = vsel %vm999, 1, 0
    %vm1001 = vcmp.eq.s32.totalorder %v1000, 1
    %v1002 = vsel %vm1001, %v42, 0.0
    %v1003 = vsel %vm1001, %v43, 0.0
    %vm1004 = vcmask 121856
    %v1005 = vsel %vm1004, %v1002, 0.0
    %1006 = vadd.xlane.f32.xlu0 %v1005
    %v1007 = vpop.xlane.xlu0 %1006
    %v1008 = vsel %vm1004, %v1003, 0.0
    %1009 = vadd.xlane.f32.xlu0 %v1008
    %v1010 = vpop.xlane.xlu0 %1009
    %vm1011 = vcmp.eq.s32.totalorder %v916, 1
    %v1012 = vsel %vm1011, 1, 0
    %vm1013 = vcmp.eq.s32.totalorder %v1012, 1
    %v1014 = vsel %vm1013, %v42, 0.0
    %v1015 = vsel %vm1013, %v43, 0.0
    %v1016 = vsel %vm1004, %v1014, 0.0
    %1017 = vadd.xlane.f32.xlu0 %v1016
    %v1018 = vpop.xlane.xlu0 %1017
    %v1019 = vsel %vm1004, %v1015, 0.0
    %1020 = vadd.xlane.f32.xlu0 %v1019
    %v1021 = vpop.xlane.xlu0 %1020
    %vm1022 = vcmp.eq.s32.totalorder %v916, 2
    %v1023 = vsel %vm1022, 1, 0
    %vm1024 = vcmp.eq.s32.totalorder %v1023, 1
    %v1025 = vsel %vm1024, %v42, 0.0
    %v1026 = vsel %vm1024, %v43, 0.0
    %v1027 = vsel %vm1004, %v1025, 0.0
    %1028 = vadd.xlane.f32.xlu0 %v1027
    %v1029 = vpop.xlane.xlu0 %1028
    %v1030 = vsel %vm1004, %v1026, 0.0
    %1031 = vadd.xlane.f32.xlu0 %v1030
    %v1032 = vpop.xlane.xlu0 %1031
    %v1033 = vsel %vm1001, %v913, 0.0
    %v1034 = vsel %vm1001, %v914, 0.0
    %1035 = vadd.xlane.f32.xlu0 %v1033
    %v1036 = vpop.xlane.xlu0 %1035
    %1037 = vadd.xlane.f32.xlu0 %v1034
    %v1038 = vpop.xlane.xlu0 %1037
    %v1039 = vmul.f32 %v1036, %v1007
    %v1040 = vmul.f32 %v1038, %v1010
    %v1041 = vsel %vm1013, %v913, 0.0
    %v1042 = vsel %vm1013, %v914, 0.0
    %1043 = vadd.xlane.f32.xlu0 %v1041
    %v1044 = vpop.xlane.xlu0 %1043
    %1045 = vadd.xlane.f32.xlu0 %v1042
    %v1046 = vpop.xlane.xlu0 %1045
    %v1047 = vmul.f32 %v1044, %v1018
    %v1048 = vmul.f32 %v1046, %v1021
    %v1049 = vadd.f32 %v1039, %v1047
    %v1050 = vadd.f32 %v1040, %v1048
    %v1051 = vsel %vm1024, %v913, 0.0
    %v1052 = vsel %vm1024, %v914, 0.0
    %1053 = vadd.xlane.f32.xlu0 %v1051
    %v1054 = vpop.xlane.xlu0 %1053
    %1055 = vadd.xlane.f32.xlu0 %v1052
    %v1056 = vpop.xlane.xlu0 %1055
    %v1057 = vmul.f32 %v1054, %v1029
    %v1058 = vmul.f32 %v1056, %v1032
    %v1059 = vadd.f32 %v1049, %v1057
    %v1060 = vadd.f32 %v1050, %v1058
    %v1061 = vmul.f32 %v977, %v1059
    %v1062 = vmul.f32 %v984, %v1060
    %v1063 = vsel %vm1001, %v44, 0.0
    %v1064 = vsel %vm1001, %v45, 0.0
    %v1065 = vsel %vm1004, %v1063, 0.0
    %1066 = vadd.xlane.f32.xlu0 %v1065
    %v1067 = vpop.xlane.xlu0 %1066
    %v1068 = vsel %vm1004, %v1064, 0.0
    %1069 = vadd.xlane.f32.xlu0 %v1068
    %v1070 = vpop.xlane.xlu0 %1069
    %v1071 = vmul.f32 %v991, %v1067
    %v1072 = vmul.f32 %v998, %v1070
    %v1073 = vadd.f32 %v1061, %v1071
    %v1074 = vadd.f32 %v1062, %v1072
    %vm1075 = vcmp.eq.s32.totalorder %v916, 3
    %v1076 = vsel %vm1075, 1, 0
    %vm1077 = vcmp.eq.s32.totalorder %v1076, 1
    %v1078 = vsel %vm1077, %v913, 0.0
    %v1079 = vsel %vm1077, %v914, 0.0
    %1080 = vadd.xlane.f32.xlu0 %v1078
    %v1081 = vpop.xlane.xlu0 %1080
    %1082 = vadd.xlane.f32.xlu0 %v1079
    %v1083 = vpop.xlane.xlu0 %1082
    %v1084 = vmul.f32 %v1081, %v1007
    %v1085 = vmul.f32 %v1083, %v1010
    %vm1086 = vcmp.eq.s32.totalorder %v916, 4
    %v1087 = vsel %vm1086, 1, 0
    %vm1088 = vcmp.eq.s32.totalorder %v1087, 1
    %v1089 = vsel %vm1088, %v913, 0.0
    %v1090 = vsel %vm1088, %v914, 0.0
    %1091 = vadd.xlane.f32.xlu0 %v1089
    %v1092 = vpop.xlane.xlu0 %1091
    %1093 = vadd.xlane.f32.xlu0 %v1090
    %v1094 = vpop.xlane.xlu0 %1093
    %v1095 = vmul.f32 %v1092, %v1018
    %v1096 = vmul.f32 %v1094, %v1021
    %v1097 = vadd.f32 %v1084, %v1095
    %v1098 = vadd.f32 %v1085, %v1096
    %vm1099 = vcmp.eq.s32.totalorder %v916, 5
    %v1100 = vsel %vm1099, 1, 0
    %vm1101 = vcmp.eq.s32.totalorder %v1100, 1
    %v1102 = vsel %vm1101, %v913, 0.0
    %v1103 = vsel %vm1101, %v914, 0.0
    %1104 = vadd.xlane.f32.xlu0 %v1102
    %v1105 = vpop.xlane.xlu0 %1104
    %1106 = vadd.xlane.f32.xlu0 %v1103
    %v1107 = vpop.xlane.xlu0 %1106
    %v1108 = vmul.f32 %v1105, %v1029
    %v1109 = vmul.f32 %v1107, %v1032
    %v1110 = vadd.f32 %v1097, %v1108
    %v1111 = vadd.f32 %v1098, %v1109
    %v1112 = vmul.f32 %v977, %v1110
    %v1113 = vmul.f32 %v984, %v1111
    %v1114 = vsel %vm1013, %v44, 0.0
    %v1115 = vsel %vm1013, %v45, 0.0
    %v1116 = vsel %vm1004, %v1114, 0.0
    %1117 = vadd.xlane.f32.xlu0 %v1116
    %v1118 = vpop.xlane.xlu0 %1117
    %v1119 = vsel %vm1004, %v1115, 0.0
    %1120 = vadd.xlane.f32.xlu0 %v1119
    %v1121 = vpop.xlane.xlu0 %1120
    %v1122 = vmul.f32 %v991, %v1118
    %v1123 = vmul.f32 %v998, %v1121
    %v1124 = vadd.f32 %v1112, %v1122
    %v1125 = vadd.f32 %v1113, %v1123
    %vm1126 = vcmp.eq.s32.totalorder %v916, 6
    %v1127 = vsel %vm1126, 1, 0
    %vm1128 = vcmp.eq.s32.totalorder %v1127, 1
    %v1129 = vsel %vm1128, %v913, 0.0
    %v1130 = vsel %vm1128, %v914, 0.0
    %1131 = vadd.xlane.f32.xlu0 %v1129
    %v1132 = vpop.xlane.xlu0 %1131
    %1133 = vadd.xlane.f32.xlu0 %v1130
    %v1134 = vpop.xlane.xlu0 %1133
    %v1135 = vmul.f32 %v1132, %v1007
    %v1136 = vmul.f32 %v1134, %v1010
    %vm1137 = vcmp.eq.s32.totalorder %v916, 7
    %v1138 = vsel %vm1137, 1, 0
    %vm1139 = vcmp.eq.s32.totalorder %v1138, 1
    %v1140 = vsel %vm1139, %v913, 0.0
    %v1141 = vsel %vm1139, %v914, 0.0
    %1142 = vadd.xlane.f32.xlu0 %v1140
    %v1143 = vpop.xlane.xlu0 %1142
    %1144 = vadd.xlane.f32.xlu0 %v1141
    %v1145 = vpop.xlane.xlu0 %1144
    %v1146 = vmul.f32 %v1143, %v1018
    %v1147 = vmul.f32 %v1145, %v1021
    %v1148 = vadd.f32 %v1135, %v1146
    %v1149 = vadd.f32 %v1136, %v1147
    %vm1150 = vcmp.eq.s32.totalorder %v916, 8
    %v1151 = vsel %vm1150, 1, 0
    %vm1152 = vcmp.eq.s32.totalorder %v1151, 1
    %v1153 = vsel %vm1152, %v913, 0.0
    %v1154 = vsel %vm1152, %v914, 0.0
    %1155 = vadd.xlane.f32.xlu0 %v1153
    %v1156 = vpop.xlane.xlu0 %1155
    %1157 = vadd.xlane.f32.xlu0 %v1154
    %v1158 = vpop.xlane.xlu0 %1157
    %v1159 = vmul.f32 %v1156, %v1029
    %v1160 = vmul.f32 %v1158, %v1032
    %v1161 = vadd.f32 %v1148, %v1159
    %v1162 = vadd.f32 %v1149, %v1160
    %v1163 = vmul.f32 %v977, %v1161
    %v1164 = vmul.f32 %v984, %v1162
    %v1165 = vsel %vm1024, %v44, 0.0
    %v1166 = vsel %vm1024, %v45, 0.0
    %v1167 = vsel %vm1004, %v1165, 0.0
    %1168 = vadd.xlane.f32.xlu0 %v1167
    %v1169 = vpop.xlane.xlu0 %1168
    %v1170 = vsel %vm1004, %v1166, 0.0
    %1171 = vadd.xlane.f32.xlu0 %v1170
    %v1172 = vpop.xlane.xlu0 %1171
    %v1173 = vmul.f32 %v991, %v1169
    %v1174 = vmul.f32 %v998, %v1172
    %v1175 = vadd.f32 %v1163, %v1173
    %v1176 = vadd.f32 %v1164, %v1174
    %vm1177 = vcmp.eq.s32.totalorder %v916, 47
    %v1178 = vsel %vm1177, 1, 0
    %vm1179 = vcmp.eq.s32.totalorder %v1178, 1
    %v1180 = vsel %vm1179, %v913, 0.0
    %v1181 = vsel %vm1179, %v914, 0.0
    %1182 = vadd.xlane.f32.xlu0 %v1180
    %v1183 = vpop.xlane.xlu0 %1182
    %1184 = vadd.xlane.f32.xlu0 %v1181
    %v1185 = vpop.xlane.xlu0 %1184
    %v1186 = vmax.f32 %v1183, 0.0
    %v1187 = vmax.f32 %v1185, 0.0
    %v1188 = vand.u32 2147483647, %v1183
    %v1189 = vand.u32 2147483647, %v1185
    %v1190 = vsub.f32 0.0, %v1188
    %v1191 = vsub.f32 0.0, %v1189
    %v1192 = vmul.f32 %v1190, 1.442695
    %v1193 = vpow.pop %v1192
    %v1194 = vmul.f32 %v1191, 1.442695
    %v1195 = vpow.pop %v1194
    %v1196 = vadd.f32 %v1193, 1.0
    %v1197 = vadd.f32 %v1195, 1.0
    %v1198 = vlog2.pop %v1196
    %v1199 = vmul.f32 %v1198, 0.6931472
    %v1200 = vlog2.pop %v1197
    %v1201 = vmul.f32 %v1200, 0.6931472
    %v1202 = vadd.f32 %v1186, %v1199
    %v1203 = vadd.f32 %v1187, %v1201
    %vm1204 = vcmp.eq.s32.totalorder %v916, 48
    %v1205 = vsel %vm1204, 1, 0
    %vm1206 = vcmp.eq.s32.totalorder %v1205, 1
    %v1207 = vsel %vm1206, %v913, 0.0
    %v1208 = vsel %vm1206, %v914, 0.0
    %1209 = vadd.xlane.f32.xlu0 %v1207
    %v1210 = vpop.xlane.xlu0 %1209
    %1211 = vadd.xlane.f32.xlu0 %v1208
    %v1212 = vpop.xlane.xlu0 %1211
    %v1213 = vmax.f32 %v1210, 0.0
    %v1214 = vmax.f32 %v1212, 0.0
    %v1215 = vand.u32 2147483647, %v1210
    %v1216 = vand.u32 2147483647, %v1212
    %v1217 = vsub.f32 0.0, %v1215
    %v1218 = vsub.f32 0.0, %v1216
    %v1219 = vmul.f32 %v1217, 1.442695
    %v1220 = vpow.pop %v1219
    %v1221 = vmul.f32 %v1218, 1.442695
    %v1222 = vpow.pop %v1221
    %v1223 = vadd.f32 %v1220, 1.0
    %v1224 = vadd.f32 %v1222, 1.0
    %v1225 = vlog2.pop %v1223
    %v1226 = vmul.f32 %v1225, 0.6931472
    %v1227 = vlog2.pop %v1224
    %v1228 = vmul.f32 %v1227, 0.6931472
    %v1229 = vadd.f32 %v1213, %v1226
    %v1230 = vadd.f32 %v1214, %v1228
    %v1231 = vrsqrt.pop %v1202
    %v1232 = vmul.f32 %v1202, %v1231
    %vm1233 = vcmp.eq.f32.partialorder %v1202, inf
    %v1234 = vsel %vm1233, %v1202, %v1232
    %vm1235 = vcmp.eq.f32.partialorder %v1202, 0.0
    %v1236 = vand.u32 %v1202, 2147483648
    %v1237 = vsel %vm1235, %v1236, %v1234
    %v1238 = vrsqrt.pop %v1203
    %v1239 = vmul.f32 %v1203, %v1238
    %vm1240 = vcmp.eq.f32.partialorder %v1203, inf
    %v1241 = vsel %vm1240, %v1203, %v1239
    %vm1242 = vcmp.eq.f32.partialorder %v1203, 0.0
    %v1243 = vand.u32 %v1203, 2147483648
    %v1244 = vsel %vm1242, %v1243, %v1241
    %v1245 = vrsqrt.pop %v1229
    %v1246 = vmul.f32 %v1229, %v1245
    %vm1247 = vcmp.eq.f32.partialorder %v1229, inf
    %v1248 = vsel %vm1247, %v1229, %v1246
    %vm1249 = vcmp.eq.f32.partialorder %v1229, 0.0
    %v1250 = vand.u32 %v1229, 2147483648
    %v1251 = vsel %vm1249, %v1250, %v1248
    %v1252 = vrsqrt.pop %v1230
    %v1253 = vmul.f32 %v1230, %v1252
    %vm1254 = vcmp.eq.f32.partialorder %v1230, inf
    %v1255 = vsel %vm1254, %v1230, %v1253
    %vm1256 = vcmp.eq.f32.partialorder %v1230, 0.0
    %v1257 = vand.u32 %v1230, 2147483648
    %v1258 = vsel %vm1256, %v1257, %v1255
    %v1259 = vsel %vm1077, %v42, 0.0
    %v1260 = vsel %vm1077, %v43, 0.0
    %v1261 = vsel %vm1004, %v1259, 0.0
    %1262 = vadd.xlane.f32.xlu0 %v1261
    %v1263 = vpop.xlane.xlu0 %1262
    %v1264 = vsel %vm1004, %v1260, 0.0
    %1265 = vadd.xlane.f32.xlu0 %v1264
    %v1266 = vpop.xlane.xlu0 %1265
    %v1267 = vsel %vm1088, %v42, 0.0
    %v1268 = vsel %vm1088, %v43, 0.0
    %v1269 = vsel %vm1004, %v1267, 0.0
    %1270 = vadd.xlane.f32.xlu0 %v1269
    %v1271 = vpop.xlane.xlu0 %1270
    %v1272 = vsel %vm1004, %v1268, 0.0
    %1273 = vadd.xlane.f32.xlu0 %v1272
    %v1274 = vpop.xlane.xlu0 %1273
    %v1275 = vsel %vm1101, %v42, 0.0
    %v1276 = vsel %vm1101, %v43, 0.0
    %v1277 = vsel %vm1004, %v1275, 0.0
    %1278 = vadd.xlane.f32.xlu0 %v1277
    %v1279 = vpop.xlane.xlu0 %1278
    %v1280 = vsel %vm1004, %v1276, 0.0
    %1281 = vadd.xlane.f32.xlu0 %v1280
    %v1282 = vpop.xlane.xlu0 %1281
    %vm1283 = vcmp.eq.s32.totalorder %v916, 9
    %v1284 = vsel %vm1283, 1, 0
    %vm1285 = vcmp.eq.s32.totalorder %v1284, 1
    %v1286 = vsel %vm1285, %v913, 0.0
    %v1287 = vsel %vm1285, %v914, 0.0
    %1288 = vadd.xlane.f32.xlu0 %v1286
    %v1289 = vpop.xlane.xlu0 %1288
    %1290 = vadd.xlane.f32.xlu0 %v1287
    %v1291 = vpop.xlane.xlu0 %1290
    %v1292 = vmul.f32 %v1289, %v1263
    %v1293 = vmul.f32 %v1291, %v1266
    %vm1294 = vcmp.eq.s32.totalorder %v916, 10
    %v1295 = vsel %vm1294, 1, 0
    %vm1296 = vcmp.eq.s32.totalorder %v1295, 1
    %v1297 = vsel %vm1296, %v913, 0.0
    %v1298 = vsel %vm1296, %v914, 0.0
    %1299 = vadd.xlane.f32.xlu0 %v1297
    %v1300 = vpop.xlane.xlu0 %1299
    %1301 = vadd.xlane.f32.xlu0 %v1298
    %v1302 = vpop.xlane.xlu0 %1301
    %v1303 = vmul.f32 %v1300, %v1271
    %v1304 = vmul.f32 %v1302, %v1274
    %v1305 = vadd.f32 %v1292, %v1303
    %v1306 = vadd.f32 %v1293, %v1304
    %vm1307 = vcmp.eq.s32.totalorder %v916, 11
    %v1308 = vsel %vm1307, 1, 0
    %vm1309 = vcmp.eq.s32.totalorder %v1308, 1
    %v1310 = vsel %vm1309, %v913, 0.0
    %v1311 = vsel %vm1309, %v914, 0.0
    %1312 = vadd.xlane.f32.xlu0 %v1310
    %v1313 = vpop.xlane.xlu0 %1312
    %1314 = vadd.xlane.f32.xlu0 %v1311
    %v1315 = vpop.xlane.xlu0 %1314
    %v1316 = vmul.f32 %v1313, %v1279
    %v1317 = vmul.f32 %v1315, %v1282
    %v1318 = vadd.f32 %v1305, %v1316
    %v1319 = vadd.f32 %v1306, %v1317
    %v1320 = vmul.f32 %v1237, %v1318
    %v1321 = vmul.f32 %v1244, %v1319
    %v1322 = vsel %vm1077, %v44, 0.0
    %v1323 = vsel %vm1077, %v45, 0.0
    %v1324 = vsel %vm1004, %v1322, 0.0
    %1325 = vadd.xlane.f32.xlu0 %v1324
    %v1326 = vpop.xlane.xlu0 %1325
    %v1327 = vsel %vm1004, %v1323, 0.0
    %1328 = vadd.xlane.f32.xlu0 %v1327
    %v1329 = vpop.xlane.xlu0 %1328
    %v1330 = vmul.f32 %v1251, %v1326
    %v1331 = vmul.f32 %v1258, %v1329
    %v1332 = vadd.f32 %v1320, %v1330
    %v1333 = vadd.f32 %v1321, %v1331
    %vm1334 = vcmp.eq.s32.totalorder %v916, 12
    %v1335 = vsel %vm1334, 1, 0
    %vm1336 = vcmp.eq.s32.totalorder %v1335, 1
    %v1337 = vsel %vm1336, %v913, 0.0
    %v1338 = vsel %vm1336, %v914, 0.0
    %1339 = vadd.xlane.f32.xlu0 %v1337
    %v1340 = vpop.xlane.xlu0 %1339
    %1341 = vadd.xlane.f32.xlu0 %v1338
    %v1342 = vpop.xlane.xlu0 %1341
    %v1343 = vmul.f32 %v1340, %v1263
    %v1344 = vmul.f32 %v1342, %v1266
    %vm1345 = vcmp.eq.s32.totalorder %v916, 13
    %v1346 = vsel %vm1345, 1, 0
    %vm1347 = vcmp.eq.s32.totalorder %v1346, 1
    %v1348 = vsel %vm1347, %v913, 0.0
    %v1349 = vsel %vm1347, %v914, 0.0
    %1350 = vadd.xlane.f32.xlu0 %v1348
    %v1351 = vpop.xlane.xlu0 %1350
    %1352 = vadd.xlane.f32.xlu0 %v1349
    %v1353 = vpop.xlane.xlu0 %1352
    %v1354 = vmul.f32 %v1351, %v1271
    %v1355 = vmul.f32 %v1353, %v1274
    %v1356 = vadd.f32 %v1343, %v1354
    %v1357 = vadd.f32 %v1344, %v1355
    %vm1358 = vcmp.eq.s32.totalorder %v916, 14
    %v1359 = vsel %vm1358, 1, 0
    %vm1360 = vcmp.eq.s32.totalorder %v1359, 1
    %v1361 = vsel %vm1360, %v913, 0.0
    %v1362 = vsel %vm1360, %v914, 0.0
    %1363 = vadd.xlane.f32.xlu0 %v1361
    %v1364 = vpop.xlane.xlu0 %1363
    %1365 = vadd.xlane.f32.xlu0 %v1362
    %v1366 = vpop.xlane.xlu0 %1365
    %v1367 = vmul.f32 %v1364, %v1279
    %v1368 = vmul.f32 %v1366, %v1282
    %v1369 = vadd.f32 %v1356, %v1367
    %v1370 = vadd.f32 %v1357, %v1368
    %v1371 = vmul.f32 %v1237, %v1369
    %v1372 = vmul.f32 %v1244, %v1370
    %v1373 = vsel %vm1088, %v44, 0.0
    %v1374 = vsel %vm1088, %v45, 0.0
    %v1375 = vsel %vm1004, %v1373, 0.0
    %1376 = vadd.xlane.f32.xlu0 %v1375
    %v1377 = vpop.xlane.xlu0 %1376
    %v1378 = vsel %vm1004, %v1374, 0.0
    %1379 = vadd.xlane.f32.xlu0 %v1378
    %v1380 = vpop.xlane.xlu0 %1379
    %v1381 = vmul.f32 %v1251, %v1377
    %v1382 = vmul.f32 %v1258, %v1380
    %v1383 = vadd.f32 %v1371, %v1381
    %v1384 = vadd.f32 %v1372, %v1382
    %vm1385 = vcmp.eq.s32.totalorder %v916, 15
    %v1386 = vsel %vm1385, 1, 0
    %vm1387 = vcmp.eq.s32.totalorder %v1386, 1
    %v1388 = vsel %vm1387, %v913, 0.0
    %v1389 = vsel %vm1387, %v914, 0.0
    %1390 = vadd.xlane.f32.xlu0 %v1388
    %v1391 = vpop.xlane.xlu0 %1390
    %1392 = vadd.xlane.f32.xlu0 %v1389
    %v1393 = vpop.xlane.xlu0 %1392
    %v1394 = vmul.f32 %v1391, %v1263
    %v1395 = vmul.f32 %v1393, %v1266
    %vm1396 = vcmp.eq.s32.totalorder %v916, 16
    %v1397 = vsel %vm1396, 1, 0
    %vm1398 = vcmp.eq.s32.totalorder %v1397, 1
    %v1399 = vsel %vm1398, %v913, 0.0
    %v1400 = vsel %vm1398, %v914, 0.0
    %1401 = vadd.xlane.f32.xlu0 %v1399
    %v1402 = vpop.xlane.xlu0 %1401
    %1403 = vadd.xlane.f32.xlu0 %v1400
    %v1404 = vpop.xlane.xlu0 %1403
    %v1405 = vmul.f32 %v1402, %v1271
    %v1406 = vmul.f32 %v1404, %v1274
    %v1407 = vadd.f32 %v1394, %v1405
    %v1408 = vadd.f32 %v1395, %v1406
    %vm1409 = vcmp.eq.s32.totalorder %v916, 17
    %v1410 = vsel %vm1409, 1, 0
    %vm1411 = vcmp.eq.s32.totalorder %v1410, 1
    %v1412 = vsel %vm1411, %v913, 0.0
    %v1413 = vsel %vm1411, %v914, 0.0
    %1414 = vadd.xlane.f32.xlu0 %v1412
    %v1415 = vpop.xlane.xlu0 %1414
    %1416 = vadd.xlane.f32.xlu0 %v1413
    %v1417 = vpop.xlane.xlu0 %1416
    %v1418 = vmul.f32 %v1415, %v1279
    %v1419 = vmul.f32 %v1417, %v1282
    %v1420 = vadd.f32 %v1407, %v1418
    %v1421 = vadd.f32 %v1408, %v1419
    %v1422 = vmul.f32 %v1237, %v1420
    %v1423 = vmul.f32 %v1244, %v1421
    %v1424 = vsel %vm1101, %v44, 0.0
    %v1425 = vsel %vm1101, %v45, 0.0
    %v1426 = vsel %vm1004, %v1424, 0.0
    %1427 = vadd.xlane.f32.xlu0 %v1426
    %v1428 = vpop.xlane.xlu0 %1427
    %v1429 = vsel %vm1004, %v1425, 0.0
    %1430 = vadd.xlane.f32.xlu0 %v1429
    %v1431 = vpop.xlane.xlu0 %1430
    %v1432 = vmul.f32 %v1251, %v1428
    %v1433 = vmul.f32 %v1258, %v1431
    %v1434 = vadd.f32 %v1422, %v1432
    %v1435 = vadd.f32 %v1423, %v1433
    %vm1436 = vcmp.eq.s32.totalorder %v916, 49
    %v1437 = vsel %vm1436, 1, 0
    %vm1438 = vcmp.eq.s32.totalorder %v1437, 1
    %v1439 = vsel %vm1438, %v913, 0.0
    %v1440 = vsel %vm1438, %v914, 0.0
    %1441 = vadd.xlane.f32.xlu0 %v1439
    %v1442 = vpop.xlane.xlu0 %1441
    %1443 = vadd.xlane.f32.xlu0 %v1440
    %v1444 = vpop.xlane.xlu0 %1443
    %v1445 = vmax.f32 %v1442, 0.0
    %v1446 = vmax.f32 %v1444, 0.0
    %v1447 = vand.u32 2147483647, %v1442
    %v1448 = vand.u32 2147483647, %v1444
    %v1449 = vsub.f32 0.0, %v1447
    %v1450 = vsub.f32 0.0, %v1448
    %v1451 = vmul.f32 %v1449, 1.442695
    %v1452 = vpow.pop %v1451
    %v1453 = vmul.f32 %v1450, 1.442695
    %v1454 = vpow.pop %v1453
    %v1455 = vadd.f32 %v1452, 1.0
    %v1456 = vadd.f32 %v1454, 1.0
    %v1457 = vlog2.pop %v1455
    %v1458 = vmul.f32 %v1457, 0.6931472
    %v1459 = vlog2.pop %v1456
    %v1460 = vmul.f32 %v1459, 0.6931472
    %v1461 = vadd.f32 %v1445, %v1458
    %v1462 = vadd.f32 %v1446, %v1460
    %vm1463 = vcmp.eq.s32.totalorder %v916, 50
    %v1464 = vsel %vm1463, 1, 0
    %vm1465 = vcmp.eq.s32.totalorder %v1464, 1
    %v1466 = vsel %vm1465, %v913, 0.0
    %v1467 = vsel %vm1465, %v914, 0.0
    %1468 = vadd.xlane.f32.xlu0 %v1466
    %v1469 = vpop.xlane.xlu0 %1468
    %1470 = vadd.xlane.f32.xlu0 %v1467
    %v1471 = vpop.xlane.xlu0 %1470
    %v1472 = vmax.f32 %v1469, 0.0
    %v1473 = vmax.f32 %v1471, 0.0
    %v1474 = vand.u32 2147483647, %v1469
    %v1475 = vand.u32 2147483647, %v1471
    %v1476 = vsub.f32 0.0, %v1474
    %v1477 = vsub.f32 0.0, %v1475
    %v1478 = vmul.f32 %v1476, 1.442695
    %v1479 = vpow.pop %v1478
    %v1480 = vmul.f32 %v1477, 1.442695
    %v1481 = vpow.pop %v1480
    %v1482 = vadd.f32 %v1479, 1.0
    %v1483 = vadd.f32 %v1481, 1.0
    %v1484 = vlog2.pop %v1482
    %v1485 = vmul.f32 %v1484, 0.6931472
    %v1486 = vlog2.pop %v1483
    %v1487 = vmul.f32 %v1486, 0.6931472
    %v1488 = vadd.f32 %v1472, %v1485
    %v1489 = vadd.f32 %v1473, %v1487
    %v1490 = vrsqrt.pop %v1461
    %v1491 = vmul.f32 %v1461, %v1490
    %vm1492 = vcmp.eq.f32.partialorder %v1461, inf
    %v1493 = vsel %vm1492, %v1461, %v1491
    %vm1494 = vcmp.eq.f32.partialorder %v1461, 0.0
    %v1495 = vand.u32 %v1461, 2147483648
    %v1496 = vsel %vm1494, %v1495, %v1493
    %v1497 = vrsqrt.pop %v1462
    %v1498 = vmul.f32 %v1462, %v1497
    %vm1499 = vcmp.eq.f32.partialorder %v1462, inf
    %v1500 = vsel %vm1499, %v1462, %v1498
    %vm1501 = vcmp.eq.f32.partialorder %v1462, 0.0
    %v1502 = vand.u32 %v1462, 2147483648
    %v1503 = vsel %vm1501, %v1502, %v1500
    %v1504 = vrsqrt.pop %v1488
    %v1505 = vmul.f32 %v1488, %v1504
    %vm1506 = vcmp.eq.f32.partialorder %v1488, inf
    %v1507 = vsel %vm1506, %v1488, %v1505
    %vm1508 = vcmp.eq.f32.partialorder %v1488, 0.0
    %v1509 = vand.u32 %v1488, 2147483648
    %v1510 = vsel %vm1508, %v1509, %v1507
    %v1511 = vrsqrt.pop %v1489
    %v1512 = vmul.f32 %v1489, %v1511
    %vm1513 = vcmp.eq.f32.partialorder %v1489, inf
    %v1514 = vsel %vm1513, %v1489, %v1512
    %vm1515 = vcmp.eq.f32.partialorder %v1489, 0.0
    %v1516 = vand.u32 %v1489, 2147483648
    %v1517 = vsel %vm1515, %v1516, %v1514
    %v1518 = vsel %vm1128, %v42, 0.0
    %v1519 = vsel %vm1128, %v43, 0.0
    %v1520 = vsel %vm1004, %v1518, 0.0
    %1521 = vadd.xlane.f32.xlu0 %v1520
    %v1522 = vpop.xlane.xlu0 %1521
    %v1523 = vsel %vm1004, %v1519, 0.0
    %1524 = vadd.xlane.f32.xlu0 %v1523
    %v1525 = vpop.xlane.xlu0 %1524
    %v1526 = vsel %vm1139, %v42, 0.0
    %v1527 = vsel %vm1139, %v43, 0.0
    %v1528 = vsel %vm1004, %v1526, 0.0
    %1529 = vadd.xlane.f32.xlu0 %v1528
    %v1530 = vpop.xlane.xlu0 %1529
    %v1531 = vsel %vm1004, %v1527, 0.0
    %1532 = vadd.xlane.f32.xlu0 %v1531
    %v1533 = vpop.xlane.xlu0 %1532
    %v1534 = vsel %vm1152, %v42, 0.0
    %v1535 = vsel %vm1152, %v43, 0.0
    %v1536 = vsel %vm1004, %v1534, 0.0
    %1537 = vadd.xlane.f32.xlu0 %v1536
    %v1538 = vpop.xlane.xlu0 %1537
    %v1539 = vsel %vm1004, %v1535, 0.0
    %1540 = vadd.xlane.f32.xlu0 %v1539
    %v1541 = vpop.xlane.xlu0 %1540
    %vm1542 = vcmp.eq.s32.totalorder %v916, 18
    %v1543 = vsel %vm1542, 1, 0
    %vm1544 = vcmp.eq.s32.totalorder %v1543, 1
    %v1545 = vsel %vm1544, %v913, 0.0
    %v1546 = vsel %vm1544, %v914, 0.0
    %1547 = vadd.xlane.f32.xlu0 %v1545
    %v1548 = vpop.xlane.xlu0 %1547
    %1549 = vadd.xlane.f32.xlu0 %v1546
    %v1550 = vpop.xlane.xlu0 %1549
    %v1551 = vmul.f32 %v1548, %v1522
    %v1552 = vmul.f32 %v1550, %v1525
    %vm1553 = vcmp.eq.s32.totalorder %v916, 19
    %v1554 = vsel %vm1553, 1, 0
    %vm1555 = vcmp.eq.s32.totalorder %v1554, 1
    %v1556 = vsel %vm1555, %v913, 0.0
    %v1557 = vsel %vm1555, %v914, 0.0
    %1558 = vadd.xlane.f32.xlu0 %v1556
    %v1559 = vpop.xlane.xlu0 %1558
    %1560 = vadd.xlane.f32.xlu0 %v1557
    %v1561 = vpop.xlane.xlu0 %1560
    %v1562 = vmul.f32 %v1559, %v1530
    %v1563 = vmul.f32 %v1561, %v1533
    %v1564 = vadd.f32 %v1551, %v1562
    %v1565 = vadd.f32 %v1552, %v1563
    %vm1566 = vcmp.eq.s32.totalorder %v916, 20
    %v1567 = vsel %vm1566, 1, 0
    %vm1568 = vcmp.eq.s32.totalorder %v1567, 1
    %v1569 = vsel %vm1568, %v913, 0.0
    %v1570 = vsel %vm1568, %v914, 0.0
    %1571 = vadd.xlane.f32.xlu0 %v1569
    %v1572 = vpop.xlane.xlu0 %1571
    %1573 = vadd.xlane.f32.xlu0 %v1570
    %v1574 = vpop.xlane.xlu0 %1573
    %v1575 = vmul.f32 %v1572, %v1538
    %v1576 = vmul.f32 %v1574, %v1541
    %v1577 = vadd.f32 %v1564, %v1575
    %v1578 = vadd.f32 %v1565, %v1576
    %v1579 = vmul.f32 %v1496, %v1577
    %v1580 = vmul.f32 %v1503, %v1578
    %v1581 = vsel %vm1128, %v44, 0.0
    %v1582 = vsel %vm1128, %v45, 0.0
    %v1583 = vsel %vm1004, %v1581, 0.0
    %1584 = vadd.xlane.f32.xlu0 %v1583
    %v1585 = vpop.xlane.xlu0 %1584
    %v1586 = vsel %vm1004, %v1582, 0.0
    %1587 = vadd.xlane.f32.xlu0 %v1586
    %v1588 = vpop.xlane.xlu0 %1587
    %v1589 = vmul.f32 %v1510, %v1585
    %v1590 = vmul.f32 %v1517, %v1588
    %v1591 = vadd.f32 %v1579, %v1589
    %v1592 = vadd.f32 %v1580, %v1590
    %vm1593 = vcmp.eq.s32.totalorder %v916, 21
    %v1594 = vsel %vm1593, 1, 0
    %vm1595 = vcmp.eq.s32.totalorder %v1594, 1
    %v1596 = vsel %vm1595, %v913, 0.0
    %v1597 = vsel %vm1595, %v914, 0.0
    %1598 = vadd.xlane.f32.xlu0 %v1596
    %v1599 = vpop.xlane.xlu0 %1598
    %1600 = vadd.xlane.f32.xlu0 %v1597
    %v1601 = vpop.xlane.xlu0 %1600
    %v1602 = vmul.f32 %v1599, %v1522
    %v1603 = vmul.f32 %v1601, %v1525
    %vm1604 = vcmp.eq.s32.totalorder %v916, 22
    %v1605 = vsel %vm1604, 1, 0
    %vm1606 = vcmp.eq.s32.totalorder %v1605, 1
    %v1607 = vsel %vm1606, %v913, 0.0
    %v1608 = vsel %vm1606, %v914, 0.0
    %1609 = vadd.xlane.f32.xlu0 %v1607
    %v1610 = vpop.xlane.xlu0 %1609
    %1611 = vadd.xlane.f32.xlu0 %v1608
    %v1612 = vpop.xlane.xlu0 %1611
    %v1613 = vmul.f32 %v1610, %v1530
    %v1614 = vmul.f32 %v1612, %v1533
    %v1615 = vadd.f32 %v1602, %v1613
    %v1616 = vadd.f32 %v1603, %v1614
    %vm1617 = vcmp.eq.s32.totalorder %v916, 23
    %v1618 = vsel %vm1617, 1, 0
    %vm1619 = vcmp.eq.s32.totalorder %v1618, 1
    %v1620 = vsel %vm1619, %v913, 0.0
    %v1621 = vsel %vm1619, %v914, 0.0
    %1622 = vadd.xlane.f32.xlu0 %v1620
    %v1623 = vpop.xlane.xlu0 %1622
    %1624 = vadd.xlane.f32.xlu0 %v1621
    %v1625 = vpop.xlane.xlu0 %1624
    %v1626 = vmul.f32 %v1623, %v1538
    %v1627 = vmul.f32 %v1625, %v1541
    %v1628 = vadd.f32 %v1615, %v1626
    %v1629 = vadd.f32 %v1616, %v1627
    %v1630 = vmul.f32 %v1496, %v1628
    %v1631 = vmul.f32 %v1503, %v1629
    %v1632 = vsel %vm1139, %v44, 0.0
    %v1633 = vsel %vm1139, %v45, 0.0
    %v1634 = vsel %vm1004, %v1632, 0.0
    %1635 = vadd.xlane.f32.xlu0 %v1634
    %v1636 = vpop.xlane.xlu0 %1635
    %v1637 = vsel %vm1004, %v1633, 0.0
    %1638 = vadd.xlane.f32.xlu0 %v1637
    %v1639 = vpop.xlane.xlu0 %1638
    %v1640 = vmul.f32 %v1510, %v1636
    %v1641 = vmul.f32 %v1517, %v1639
    %v1642 = vadd.f32 %v1630, %v1640
    %v1643 = vadd.f32 %v1631, %v1641
    %vm1644 = vcmp.eq.s32.totalorder %v916, 24
    %v1645 = vsel %vm1644, 1, 0
    %vm1646 = vcmp.eq.s32.totalorder %v1645, 1
    %v1647 = vsel %vm1646, %v913, 0.0
    %v1648 = vsel %vm1646, %v914, 0.0
    %1649 = vadd.xlane.f32.xlu0 %v1647
    %v1650 = vpop.xlane.xlu0 %1649
    %1651 = vadd.xlane.f32.xlu0 %v1648
    %v1652 = vpop.xlane.xlu0 %1651
    %v1653 = vmul.f32 %v1650, %v1522
    %v1654 = vmul.f32 %v1652, %v1525
    %vm1655 = vcmp.eq.s32.totalorder %v916, 25
    %v1656 = vsel %vm1655, 1, 0
    %vm1657 = vcmp.eq.s32.totalorder %v1656, 1
    %v1658 = vsel %vm1657, %v913, 0.0
    %v1659 = vsel %vm1657, %v914, 0.0
    %1660 = vadd.xlane.f32.xlu0 %v1658
    %v1661 = vpop.xlane.xlu0 %1660
    %1662 = vadd.xlane.f32.xlu0 %v1659
    %v1663 = vpop.xlane.xlu0 %1662
    %v1664 = vmul.f32 %v1661, %v1530
    %v1665 = vmul.f32 %v1663, %v1533
    %v1666 = vadd.f32 %v1653, %v1664
    %v1667 = vadd.f32 %v1654, %v1665
    %vm1668 = vcmp.eq.s32.totalorder %v916, 26
    %v1669 = vsel %vm1668, 1, 0
    %vm1670 = vcmp.eq.s32.totalorder %v1669, 1
    %v1671 = vsel %vm1670, %v913, 0.0
    %v1672 = vsel %vm1670, %v914, 0.0
    %1673 = vadd.xlane.f32.xlu0 %v1671
    %v1674 = vpop.xlane.xlu0 %1673
    %1675 = vadd.xlane.f32.xlu0 %v1672
    %v1676 = vpop.xlane.xlu0 %1675
    %v1677 = vmul.f32 %v1674, %v1538
    %v1678 = vmul.f32 %v1676, %v1541
    %v1679 = vadd.f32 %v1666, %v1677
    %v1680 = vadd.f32 %v1667, %v1678
    %v1681 = vmul.f32 %v1496, %v1679
    %v1682 = vmul.f32 %v1503, %v1680
    %v1683 = vsel %vm1152, %v44, 0.0
    %v1684 = vsel %vm1152, %v45, 0.0
    %v1685 = vsel %vm1004, %v1683, 0.0
    %1686 = vadd.xlane.f32.xlu0 %v1685
    %v1687 = vpop.xlane.xlu0 %1686
    %v1688 = vsel %vm1004, %v1684, 0.0
    %1689 = vadd.xlane.f32.xlu0 %v1688
    %v1690 = vpop.xlane.xlu0 %1689
    %v1691 = vmul.f32 %v1510, %v1687
    %v1692 = vmul.f32 %v1517, %v1690
    %v1693 = vadd.f32 %v1681, %v1691
    %v1694 = vadd.f32 %v1682, %v1692
    %vm1695 = vcmp.eq.s32.totalorder %v916, 51
    %v1696 = vsel %vm1695, 1, 0
    %vm1697 = vcmp.eq.s32.totalorder %v1696, 1
    %v1698 = vsel %vm1697, %v913, 0.0
    %v1699 = vsel %vm1697, %v914, 0.0
    %1700 = vadd.xlane.f32.xlu0 %v1698
    %v1701 = vpop.xlane.xlu0 %1700
    %1702 = vadd.xlane.f32.xlu0 %v1699
    %v1703 = vpop.xlane.xlu0 %1702
    %v1704 = vmax.f32 %v1701, 0.0
    %v1705 = vmax.f32 %v1703, 0.0
    %v1706 = vand.u32 2147483647, %v1701
    %v1707 = vand.u32 2147483647, %v1703
    %v1708 = vsub.f32 0.0, %v1706
    %v1709 = vsub.f32 0.0, %v1707
    %v1710 = vmul.f32 %v1708, 1.442695
    %v1711 = vpow.pop %v1710
    %v1712 = vmul.f32 %v1709, 1.442695
    %v1713 = vpow.pop %v1712
    %v1714 = vadd.f32 %v1711, 1.0
    %v1715 = vadd.f32 %v1713, 1.0
    %v1716 = vlog2.pop %v1714
    %v1717 = vmul.f32 %v1716, 0.6931472
    %v1718 = vlog2.pop %v1715
    %v1719 = vmul.f32 %v1718, 0.6931472
    %v1720 = vadd.f32 %v1704, %v1717
    %v1721 = vadd.f32 %v1705, %v1719
    %vm1722 = vcmp.eq.s32.totalorder %v916, 52
    %v1723 = vsel %vm1722, 1, 0
    %vm1724 = vcmp.eq.s32.totalorder %v1723, 1
    %v1725 = vsel %vm1724, %v913, 0.0
    %v1726 = vsel %vm1724, %v914, 0.0
    %1727 = vadd.xlane.f32.xlu0 %v1725
    %v1728 = vpop.xlane.xlu0 %1727
    %1729 = vadd.xlane.f32.xlu0 %v1726
    %v1730 = vpop.xlane.xlu0 %1729
    %v1731 = vmax.f32 %v1728, 0.0
    %v1732 = vmax.f32 %v1730, 0.0
    %v1733 = vand.u32 2147483647, %v1728
    %v1734 = vand.u32 2147483647, %v1730
    %v1735 = vsub.f32 0.0, %v1733
    %v1736 = vsub.f32 0.0, %v1734
    %v1737 = vmul.f32 %v1735, 1.442695
    %v1738 = vpow.pop %v1737
    %v1739 = vmul.f32 %v1736, 1.442695
    %v1740 = vpow.pop %v1739
    %v1741 = vadd.f32 %v1738, 1.0
    %v1742 = vadd.f32 %v1740, 1.0
    %v1743 = vlog2.pop %v1741
    %v1744 = vmul.f32 %v1743, 0.6931472
    %v1745 = vlog2.pop %v1742
    %v1746 = vmul.f32 %v1745, 0.6931472
    %v1747 = vadd.f32 %v1731, %v1744
    %v1748 = vadd.f32 %v1732, %v1746
    %v1749 = vrsqrt.pop %v1720
    %v1750 = vmul.f32 %v1720, %v1749
    %vm1751 = vcmp.eq.f32.partialorder %v1720, inf
    %v1752 = vsel %vm1751, %v1720, %v1750
    %vm1753 = vcmp.eq.f32.partialorder %v1720, 0.0
    %v1754 = vand.u32 %v1720, 2147483648
    %v1755 = vsel %vm1753, %v1754, %v1752
    %v1756 = vrsqrt.pop %v1721
    %v1757 = vmul.f32 %v1721, %v1756
    %vm1758 = vcmp.eq.f32.partialorder %v1721, inf
    %v1759 = vsel %vm1758, %v1721, %v1757
    %vm1760 = vcmp.eq.f32.partialorder %v1721, 0.0
    %v1761 = vand.u32 %v1721, 2147483648
    %v1762 = vsel %vm1760, %v1761, %v1759
    %v1763 = vrsqrt.pop %v1747
    %v1764 = vmul.f32 %v1747, %v1763
    %vm1765 = vcmp.eq.f32.partialorder %v1747, inf
    %v1766 = vsel %vm1765, %v1747, %v1764
    %vm1767 = vcmp.eq.f32.partialorder %v1747, 0.0
    %v1768 = vand.u32 %v1747, 2147483648
    %v1769 = vsel %vm1767, %v1768, %v1766
    %v1770 = vrsqrt.pop %v1748
    %v1771 = vmul.f32 %v1748, %v1770
    %vm1772 = vcmp.eq.f32.partialorder %v1748, inf
    %v1773 = vsel %vm1772, %v1748, %v1771
    %vm1774 = vcmp.eq.f32.partialorder %v1748, 0.0
    %v1775 = vand.u32 %v1748, 2147483648
    %v1776 = vsel %vm1774, %v1775, %v1773
    %v1777 = vsel %vm1285, %v42, 0.0
    %v1778 = vsel %vm1285, %v43, 0.0
    %v1779 = vsel %vm1004, %v1777, 0.0
    %1780 = vadd.xlane.f32.xlu0 %v1779
    %v1781 = vpop.xlane.xlu0 %1780
    %v1782 = vsel %vm1004, %v1778, 0.0
    %1783 = vadd.xlane.f32.xlu0 %v1782
    %v1784 = vpop.xlane.xlu0 %1783
    %v1785 = vsel %vm1296, %v42, 0.0
    %v1786 = vsel %vm1296, %v43, 0.0
    %v1787 = vsel %vm1004, %v1785, 0.0
    %1788 = vadd.xlane.f32.xlu0 %v1787
    %v1789 = vpop.xlane.xlu0 %1788
    %v1790 = vsel %vm1004, %v1786, 0.0
    %1791 = vadd.xlane.f32.xlu0 %v1790
    %v1792 = vpop.xlane.xlu0 %1791
    %v1793 = vsel %vm1309, %v42, 0.0
    %v1794 = vsel %vm1309, %v43, 0.0
    %v1795 = vsel %vm1004, %v1793, 0.0
    %1796 = vadd.xlane.f32.xlu0 %v1795
    %v1797 = vpop.xlane.xlu0 %1796
    %v1798 = vsel %vm1004, %v1794, 0.0
    %1799 = vadd.xlane.f32.xlu0 %v1798
    %v1800 = vpop.xlane.xlu0 %1799
    %vm1801 = vcmp.eq.s32.totalorder %v916, 27
    %v1802 = vsel %vm1801, 1, 0
    %vm1803 = vcmp.eq.s32.totalorder %v1802, 1
    %v1804 = vsel %vm1803, %v913, 0.0
    %v1805 = vsel %vm1803, %v914, 0.0
    %1806 = vadd.xlane.f32.xlu0 %v1804
    %v1807 = vpop.xlane.xlu0 %1806
    %1808 = vadd.xlane.f32.xlu0 %v1805
    %v1809 = vpop.xlane.xlu0 %1808
    %v1810 = vmul.f32 %v1807, %v1781
    %v1811 = vmul.f32 %v1809, %v1784
    %vm1812 = vcmp.eq.s32.totalorder %v916, 28
    %v1813 = vsel %vm1812, 1, 0
    %vm1814 = vcmp.eq.s32.totalorder %v1813, 1
    %v1815 = vsel %vm1814, %v913, 0.0
    %v1816 = vsel %vm1814, %v914, 0.0
    %1817 = vadd.xlane.f32.xlu0 %v1815
    %v1818 = vpop.xlane.xlu0 %1817
    %1819 = vadd.xlane.f32.xlu0 %v1816
    %v1820 = vpop.xlane.xlu0 %1819
    %v1821 = vmul.f32 %v1818, %v1789
    %v1822 = vmul.f32 %v1820, %v1792
    %v1823 = vadd.f32 %v1810, %v1821
    %v1824 = vadd.f32 %v1811, %v1822
    %vm1825 = vcmp.eq.s32.totalorder %v916, 29
    %v1826 = vsel %vm1825, 1, 0
    %vm1827 = vcmp.eq.s32.totalorder %v1826, 1
    %v1828 = vsel %vm1827, %v913, 0.0
    %v1829 = vsel %vm1827, %v914, 0.0
    %1830 = vadd.xlane.f32.xlu0 %v1828
    %v1831 = vpop.xlane.xlu0 %1830
    %1832 = vadd.xlane.f32.xlu0 %v1829
    %v1833 = vpop.xlane.xlu0 %1832
    %v1834 = vmul.f32 %v1831, %v1797
    %v1835 = vmul.f32 %v1833, %v1800
    %v1836 = vadd.f32 %v1823, %v1834
    %v1837 = vadd.f32 %v1824, %v1835
    %v1838 = vmul.f32 %v1755, %v1836
    %v1839 = vmul.f32 %v1762, %v1837
    %v1840 = vsel %vm1285, %v44, 0.0
    %v1841 = vsel %vm1285, %v45, 0.0
    %v1842 = vsel %vm1004, %v1840, 0.0
    %1843 = vadd.xlane.f32.xlu0 %v1842
    %v1844 = vpop.xlane.xlu0 %1843
    %v1845 = vsel %vm1004, %v1841, 0.0
    %1846 = vadd.xlane.f32.xlu0 %v1845
    %v1847 = vpop.xlane.xlu0 %1846
    %v1848 = vmul.f32 %v1769, %v1844
    %v1849 = vmul.f32 %v1776, %v1847
    %v1850 = vadd.f32 %v1838, %v1848
    %v1851 = vadd.f32 %v1839, %v1849
    %vm1852 = vcmp.eq.s32.totalorder %v916, 30
    %v1853 = vsel %vm1852, 1, 0
    %vm1854 = vcmp.eq.s32.totalorder %v1853, 1
    %v1855 = vsel %vm1854, %v913, 0.0
    %v1856 = vsel %vm1854, %v914, 0.0
    %1857 = vadd.xlane.f32.xlu0 %v1855
    %v1858 = vpop.xlane.xlu0 %1857
    %1859 = vadd.xlane.f32.xlu0 %v1856
    %v1860 = vpop.xlane.xlu0 %1859
    %v1861 = vmul.f32 %v1858, %v1781
    %v1862 = vmul.f32 %v1860, %v1784
    %vm1863 = vcmp.eq.s32.totalorder %v916, 31
    %v1864 = vsel %vm1863, 1, 0
    %vm1865 = vcmp.eq.s32.totalorder %v1864, 1
    %v1866 = vsel %vm1865, %v913, 0.0
    %v1867 = vsel %vm1865, %v914, 0.0
    %1868 = vadd.xlane.f32.xlu0 %v1866
    %v1869 = vpop.xlane.xlu0 %1868
    %1870 = vadd.xlane.f32.xlu0 %v1867
    %v1871 = vpop.xlane.xlu0 %1870
    %v1872 = vmul.f32 %v1869, %v1789
    %v1873 = vmul.f32 %v1871, %v1792
    %v1874 = vadd.f32 %v1861, %v1872
    %v1875 = vadd.f32 %v1862, %v1873
    %vm1876 = vcmp.eq.s32.totalorder %v916, 32
    %v1877 = vsel %vm1876, 1, 0
    %vm1878 = vcmp.eq.s32.totalorder %v1877, 1
    %v1879 = vsel %vm1878, %v913, 0.0
    %v1880 = vsel %vm1878, %v914, 0.0
    %1881 = vadd.xlane.f32.xlu0 %v1879
    %v1882 = vpop.xlane.xlu0 %1881
    %1883 = vadd.xlane.f32.xlu0 %v1880
    %v1884 = vpop.xlane.xlu0 %1883
    %v1885 = vmul.f32 %v1882, %v1797
    %v1886 = vmul.f32 %v1884, %v1800
    %v1887 = vadd.f32 %v1874, %v1885
    %v1888 = vadd.f32 %v1875, %v1886
    %v1889 = vmul.f32 %v1755, %v1887
    %v1890 = vmul.f32 %v1762, %v1888
    %v1891 = vsel %vm1296, %v44, 0.0
    %v1892 = vsel %vm1296, %v45, 0.0
    %v1893 = vsel %vm1004, %v1891, 0.0
    %1894 = vadd.xlane.f32.xlu0 %v1893
    %v1895 = vpop.xlane.xlu0 %1894
    %v1896 = vsel %vm1004, %v1892, 0.0
    %1897 = vadd.xlane.f32.xlu0 %v1896
    %v1898 = vpop.xlane.xlu0 %1897
    %v1899 = vmul.f32 %v1769, %v1895
    %v1900 = vmul.f32 %v1776, %v1898
    %v1901 = vadd.f32 %v1889, %v1899
    %v1902 = vadd.f32 %v1890, %v1900
    %vm1903 = vcmp.eq.s32.totalorder %v916, 33
    %v1904 = vsel %vm1903, 1, 0
    %vm1905 = vcmp.eq.s32.totalorder %v1904, 1
    %v1906 = vsel %vm1905, %v913, 0.0
    %v1907 = vsel %vm1905, %v914, 0.0
    %1908 = vadd.xlane.f32.xlu0 %v1906
    %v1909 = vpop.xlane.xlu0 %1908
    %1910 = vadd.xlane.f32.xlu0 %v1907
    %v1911 = vpop.xlane.xlu0 %1910
    %v1912 = vmul.f32 %v1909, %v1781
    %v1913 = vmul.f32 %v1911, %v1784
    %vm1914 = vcmp.eq.s32.totalorder %v916, 34
    %v1915 = vsel %vm1914, 1, 0
    %vm1916 = vcmp.eq.s32.totalorder %v1915, 1
    %v1917 = vsel %vm1916, %v913, 0.0
    %v1918 = vsel %vm1916, %v914, 0.0
    %1919 = vadd.xlane.f32.xlu0 %v1917
    %v1920 = vpop.xlane.xlu0 %1919
    %1921 = vadd.xlane.f32.xlu0 %v1918
    %v1922 = vpop.xlane.xlu0 %1921
    %v1923 = vmul.f32 %v1920, %v1789
    %v1924 = vmul.f32 %v1922, %v1792
    %v1925 = vadd.f32 %v1912, %v1923
    %v1926 = vadd.f32 %v1913, %v1924
    %vm1927 = vcmp.eq.s32.totalorder %v916, 35
    %v1928 = vsel %vm1927, 1, 0
    %vm1929 = vcmp.eq.s32.totalorder %v1928, 1
    %v1930 = vsel %vm1929, %v913, 0.0
    %v1931 = vsel %vm1929, %v914, 0.0
    %1932 = vadd.xlane.f32.xlu0 %v1930
    %v1933 = vpop.xlane.xlu0 %1932
    %1934 = vadd.xlane.f32.xlu0 %v1931
    %v1935 = vpop.xlane.xlu0 %1934
    %v1936 = vmul.f32 %v1933, %v1797
    %v1937 = vmul.f32 %v1935, %v1800
    %v1938 = vadd.f32 %v1925, %v1936
    %v1939 = vadd.f32 %v1926, %v1937
    %v1940 = vmul.f32 %v1755, %v1938
    %v1941 = vmul.f32 %v1762, %v1939
    %v1942 = vsel %vm1309, %v44, 0.0
    %v1943 = vsel %vm1309, %v45, 0.0
    %v1944 = vsel %vm1004, %v1942, 0.0
    %1945 = vadd.xlane.f32.xlu0 %v1944
    %v1946 = vpop.xlane.xlu0 %1945
    %v1947 = vsel %vm1004, %v1943, 0.0
    %1948 = vadd.xlane.f32.xlu0 %v1947
    %v1949 = vpop.xlane.xlu0 %1948
    %v1950 = vmul.f32 %v1769, %v1946
    %v1951 = vmul.f32 %v1776, %v1949
    %v1952 = vadd.f32 %v1940, %v1950
    %v1953 = vadd.f32 %v1941, %v1951
    %vm1954 = vcmp.eq.s32.totalorder %v916, 53
    %v1955 = vsel %vm1954, 1, 0
    %vm1956 = vcmp.eq.s32.totalorder %v1955, 1
    %v1957 = vsel %vm1956, %v913, 0.0
    %v1958 = vsel %vm1956, %v914, 0.0
    %1959 = vadd.xlane.f32.xlu0 %v1957
    %v1960 = vpop.xlane.xlu0 %1959
    %1961 = vadd.xlane.f32.xlu0 %v1958
    %v1962 = vpop.xlane.xlu0 %1961
    %v1963 = vmax.f32 %v1960, 0.0
    %v1964 = vmax.f32 %v1962, 0.0
    %v1965 = vand.u32 2147483647, %v1960
    %v1966 = vand.u32 2147483647, %v1962
    %v1967 = vsub.f32 0.0, %v1965
    %v1968 = vsub.f32 0.0, %v1966
    %v1969 = vmul.f32 %v1967, 1.442695
    %v1970 = vpow.pop %v1969
    %v1971 = vmul.f32 %v1968, 1.442695
    %v1972 = vpow.pop %v1971
    %v1973 = vadd.f32 %v1970, 1.0
    %v1974 = vadd.f32 %v1972, 1.0
    %v1975 = vlog2.pop %v1973
    %v1976 = vmul.f32 %v1975, 0.6931472
    %v1977 = vlog2.pop %v1974
    %v1978 = vmul.f32 %v1977, 0.6931472
    %v1979 = vadd.f32 %v1963, %v1976
    %v1980 = vadd.f32 %v1964, %v1978
    %vm1981 = vcmp.eq.s32.totalorder %v916, 54
    %v1982 = vsel %vm1981, 1, 0
    %vm1983 = vcmp.eq.s32.totalorder %v1982, 1
    %v1984 = vsel %vm1983, %v913, 0.0
    %v1985 = vsel %vm1983, %v914, 0.0
    %1986 = vadd.xlane.f32.xlu0 %v1984
    %v1987 = vpop.xlane.xlu0 %1986
    %1988 = vadd.xlane.f32.xlu0 %v1985
    %v1989 = vpop.xlane.xlu0 %1988
    %v1990 = vmax.f32 %v1987, 0.0
    %v1991 = vmax.f32 %v1989, 0.0
    %v1992 = vand.u32 2147483647, %v1987
    %v1993 = vand.u32 2147483647, %v1989
    %v1994 = vsub.f32 0.0, %v1992
    %v1995 = vsub.f32 0.0, %v1993
    %v1996 = vmul.f32 %v1994, 1.442695
    %v1997 = vpow.pop %v1996
    %v1998 = vmul.f32 %v1995, 1.442695
    %v1999 = vpow.pop %v1998
    %v2000 = vadd.f32 %v1997, 1.0
    %v2001 = vadd.f32 %v1999, 1.0
    %v2002 = vlog2.pop %v2000
    %v2003 = vmul.f32 %v2002, 0.6931472
    %v2004 = vlog2.pop %v2001
    %v2005 = vmul.f32 %v2004, 0.6931472
    %v2006 = vadd.f32 %v1990, %v2003
    %v2007 = vadd.f32 %v1991, %v2005
    %v2008 = vrsqrt.pop %v1979
    %v2009 = vmul.f32 %v1979, %v2008
    %vm2010 = vcmp.eq.f32.partialorder %v1979, inf
    %v2011 = vsel %vm2010, %v1979, %v2009
    %vm2012 = vcmp.eq.f32.partialorder %v1979, 0.0
    %v2013 = vand.u32 %v1979, 2147483648
    %v2014 = vsel %vm2012, %v2013, %v2011
    %v2015 = vrsqrt.pop %v1980
    %v2016 = vmul.f32 %v1980, %v2015
    %vm2017 = vcmp.eq.f32.partialorder %v1980, inf
    %v2018 = vsel %vm2017, %v1980, %v2016
    %vm2019 = vcmp.eq.f32.partialorder %v1980, 0.0
    %v2020 = vand.u32 %v1980, 2147483648
    %v2021 = vsel %vm2019, %v2020, %v2018
    %v2022 = vrsqrt.pop %v2006
    %v2023 = vmul.f32 %v2006, %v2022
    %vm2024 = vcmp.eq.f32.partialorder %v2006, inf
    %v2025 = vsel %vm2024, %v2006, %v2023
    %vm2026 = vcmp.eq.f32.partialorder %v2006, 0.0
    %v2027 = vand.u32 %v2006, 2147483648
    %v2028 = vsel %vm2026, %v2027, %v2025
    %v2029 = vrsqrt.pop %v2007
    %v2030 = vmul.f32 %v2007, %v2029
    %vm2031 = vcmp.eq.f32.partialorder %v2007, inf
    %v2032 = vsel %vm2031, %v2007, %v2030
    %vm2033 = vcmp.eq.f32.partialorder %v2007, 0.0
    %v2034 = vand.u32 %v2007, 2147483648
    %v2035 = vsel %vm2033, %v2034, %v2032
    %v2036 = vsel %vm1336, %v42, 0.0
    %v2037 = vsel %vm1336, %v43, 0.0
    %v2038 = vsel %vm1004, %v2036, 0.0
    %2039 = vadd.xlane.f32.xlu0 %v2038
    %v2040 = vpop.xlane.xlu0 %2039
    %v2041 = vsel %vm1004, %v2037, 0.0
    %2042 = vadd.xlane.f32.xlu0 %v2041
    %v2043 = vpop.xlane.xlu0 %2042
    %v2044 = vsel %vm1347, %v42, 0.0
    %v2045 = vsel %vm1347, %v43, 0.0
    %v2046 = vsel %vm1004, %v2044, 0.0
    %2047 = vadd.xlane.f32.xlu0 %v2046
    %v2048 = vpop.xlane.xlu0 %2047
    %v2049 = vsel %vm1004, %v2045, 0.0
    %2050 = vadd.xlane.f32.xlu0 %v2049
    %v2051 = vpop.xlane.xlu0 %2050
    %v2052 = vsel %vm1360, %v42, 0.0
    %v2053 = vsel %vm1360, %v43, 0.0
    %v2054 = vsel %vm1004, %v2052, 0.0
    %2055 = vadd.xlane.f32.xlu0 %v2054
    %v2056 = vpop.xlane.xlu0 %2055
    %v2057 = vsel %vm1004, %v2053, 0.0
    %2058 = vadd.xlane.f32.xlu0 %v2057
    %v2059 = vpop.xlane.xlu0 %2058
    %vm2060 = vcmp.eq.s32.totalorder %v916, 36
    %v2061 = vsel %vm2060, 1, 0
    %vm2062 = vcmp.eq.s32.totalorder %v2061, 1
    %v2063 = vsel %vm2062, %v913, 0.0
    %v2064 = vsel %vm2062, %v914, 0.0
    %2065 = vadd.xlane.f32.xlu0 %v2063
    %v2066 = vpop.xlane.xlu0 %2065
    %2067 = vadd.xlane.f32.xlu0 %v2064
    %v2068 = vpop.xlane.xlu0 %2067
    %v2069 = vmul.f32 %v2066, %v2040
    %v2070 = vmul.f32 %v2068, %v2043
    %vm2071 = vcmp.eq.s32.totalorder %v916, 37
    %v2072 = vsel %vm2071, 1, 0
    %vm2073 = vcmp.eq.s32.totalorder %v2072, 1
    %v2074 = vsel %vm2073, %v913, 0.0
    %v2075 = vsel %vm2073, %v914, 0.0
    %2076 = vadd.xlane.f32.xlu0 %v2074
    %v2077 = vpop.xlane.xlu0 %2076
    %2078 = vadd.xlane.f32.xlu0 %v2075
    %v2079 = vpop.xlane.xlu0 %2078
    %v2080 = vmul.f32 %v2077, %v2048
    %v2081 = vmul.f32 %v2079, %v2051
    %v2082 = vadd.f32 %v2069, %v2080
    %v2083 = vadd.f32 %v2070, %v2081
    %vm2084 = vcmp.eq.s32.totalorder %v916, 38
    %v2085 = vsel %vm2084, 1, 0
    %vm2086 = vcmp.eq.s32.totalorder %v2085, 1
    %v2087 = vsel %vm2086, %v913, 0.0
    %v2088 = vsel %vm2086, %v914, 0.0
    %2089 = vadd.xlane.f32.xlu0 %v2087
    %v2090 = vpop.xlane.xlu0 %2089
    %2091 = vadd.xlane.f32.xlu0 %v2088
    %v2092 = vpop.xlane.xlu0 %2091
    %v2093 = vmul.f32 %v2090, %v2056
    %v2094 = vmul.f32 %v2092, %v2059
    %v2095 = vadd.f32 %v2082, %v2093
    %v2096 = vadd.f32 %v2083, %v2094
    %v2097 = vmul.f32 %v2014, %v2095
    %v2098 = vmul.f32 %v2021, %v2096
    %v2099 = vsel %vm1336, %v44, 0.0
    %v2100 = vsel %vm1336, %v45, 0.0
    %v2101 = vsel %vm1004, %v2099, 0.0
    %2102 = vadd.xlane.f32.xlu0 %v2101
    %v2103 = vpop.xlane.xlu0 %2102
    %v2104 = vsel %vm1004, %v2100, 0.0
    %2105 = vadd.xlane.f32.xlu0 %v2104
    %v2106 = vpop.xlane.xlu0 %2105
    %v2107 = vmul.f32 %v2028, %v2103
    %v2108 = vmul.f32 %v2035, %v2106
    %v2109 = vadd.f32 %v2097, %v2107
    %v2110 = vadd.f32 %v2098, %v2108
    %vm2111 = vcmp.eq.s32.totalorder %v916, 39
    %v2112 = vsel %vm2111, 1, 0
    %vm2113 = vcmp.eq.s32.totalorder %v2112, 1
    %v2114 = vsel %vm2113, %v913, 0.0
    %v2115 = vsel %vm2113, %v914, 0.0
    %2116 = vadd.xlane.f32.xlu0 %v2114
    %v2117 = vpop.xlane.xlu0 %2116
    %2118 = vadd.xlane.f32.xlu0 %v2115
    %v2119 = vpop.xlane.xlu0 %2118
    %v2120 = vmul.f32 %v2117, %v2040
    %v2121 = vmul.f32 %v2119, %v2043
    %vm2122 = vcmp.eq.s32.totalorder %v916, 40
    %v2123 = vsel %vm2122, 1, 0
    %vm2124 = vcmp.eq.s32.totalorder %v2123, 1
    %v2125 = vsel %vm2124, %v913, 0.0
    %v2126 = vsel %vm2124, %v914, 0.0
    %2127 = vadd.xlane.f32.xlu0 %v2125
    %v2128 = vpop.xlane.xlu0 %2127
    %2129 = vadd.xlane.f32.xlu0 %v2126
    %v2130 = vpop.xlane.xlu0 %2129
    %v2131 = vmul.f32 %v2128, %v2048
    %v2132 = vmul.f32 %v2130, %v2051
    %v2133 = vadd.f32 %v2120, %v2131
    %v2134 = vadd.f32 %v2121, %v2132
    %vm2135 = vcmp.eq.s32.totalorder %v916, 41
    %v2136 = vsel %vm2135, 1, 0
    %vm2137 = vcmp.eq.s32.totalorder %v2136, 1
    %v2138 = vsel %vm2137, %v913, 0.0
    %v2139 = vsel %vm2137, %v914, 0.0
    %2140 = vadd.xlane.f32.xlu0 %v2138
    %v2141 = vpop.xlane.xlu0 %2140
    %2142 = vadd.xlane.f32.xlu0 %v2139
    %v2143 = vpop.xlane.xlu0 %2142
    %v2144 = vmul.f32 %v2141, %v2056
    %v2145 = vmul.f32 %v2143, %v2059
    %v2146 = vadd.f32 %v2133, %v2144
    %v2147 = vadd.f32 %v2134, %v2145
    %v2148 = vmul.f32 %v2014, %v2146
    %v2149 = vmul.f32 %v2021, %v2147
    %v2150 = vsel %vm1347, %v44, 0.0
    %v2151 = vsel %vm1347, %v45, 0.0
    %v2152 = vsel %vm1004, %v2150, 0.0
    %2153 = vadd.xlane.f32.xlu0 %v2152
    %v2154 = vpop.xlane.xlu0 %2153
    %v2155 = vsel %vm1004, %v2151, 0.0
    %2156 = vadd.xlane.f32.xlu0 %v2155
    %v2157 = vpop.xlane.xlu0 %2156
    %v2158 = vmul.f32 %v2028, %v2154
    %v2159 = vmul.f32 %v2035, %v2157
    %v2160 = vadd.f32 %v2148, %v2158
    %v2161 = vadd.f32 %v2149, %v2159
    %vm2162 = vcmp.eq.s32.totalorder %v916, 42
    %v2163 = vsel %vm2162, 1, 0
    %vm2164 = vcmp.eq.s32.totalorder %v2163, 1
    %v2165 = vsel %vm2164, %v913, 0.0
    %v2166 = vsel %vm2164, %v914, 0.0
    %2167 = vadd.xlane.f32.xlu0 %v2165
    %v2168 = vpop.xlane.xlu0 %2167
    %2169 = vadd.xlane.f32.xlu0 %v2166
    %v2170 = vpop.xlane.xlu0 %2169
    %v2171 = vmul.f32 %v2168, %v2040
    %v2172 = vmul.f32 %v2170, %v2043
    %vm2173 = vcmp.eq.s32.totalorder %v916, 43
    %v2174 = vsel %vm2173, 1, 0
    %vm2175 = vcmp.eq.s32.totalorder %v2174, 1
    %v2176 = vsel %vm2175, %v913, 0.0
    %v2177 = vsel %vm2175, %v914, 0.0
    %2178 = vadd.xlane.f32.xlu0 %v2176
    %v2179 = vpop.xlane.xlu0 %2178
    %2180 = vadd.xlane.f32.xlu0 %v2177
    %v2181 = vpop.xlane.xlu0 %2180
    %v2182 = vmul.f32 %v2179, %v2048
    %v2183 = vmul.f32 %v2181, %v2051
    %v2184 = vadd.f32 %v2171, %v2182
    %v2185 = vadd.f32 %v2172, %v2183
    %vm2186 = vcmp.eq.s32.totalorder %v916, 44
    %v2187 = vsel %vm2186, 1, 0
    %vm2188 = vcmp.eq.s32.totalorder %v2187, 1
    %v2189 = vsel %vm2188, %v913, 0.0
    %v2190 = vsel %vm2188, %v914, 0.0
    %2191 = vadd.xlane.f32.xlu0 %v2189
    %v2192 = vpop.xlane.xlu0 %2191
    %2193 = vadd.xlane.f32.xlu0 %v2190
    %v2194 = vpop.xlane.xlu0 %2193
    %v2195 = vmul.f32 %v2192, %v2056
    %v2196 = vmul.f32 %v2194, %v2059
    %v2197 = vadd.f32 %v2184, %v2195
    %v2198 = vadd.f32 %v2185, %v2196
    %v2199 = vmul.f32 %v2014, %v2197
    %v2200 = vmul.f32 %v2021, %v2198
    %v2201 = vsel %vm1360, %v44, 0.0
    %v2202 = vsel %vm1360, %v45, 0.0
    %v2203 = vsel %vm1004, %v2201, 0.0
    %2204 = vadd.xlane.f32.xlu0 %v2203
    %v2205 = vpop.xlane.xlu0 %2204
    %v2206 = vsel %vm1004, %v2202, 0.0
    %2207 = vadd.xlane.f32.xlu0 %v2206
    %v2208 = vpop.xlane.xlu0 %2207
    %v2209 = vmul.f32 %v2028, %v2205
    %v2210 = vmul.f32 %v2035, %v2208
    %v2211 = vadd.f32 %v2199, %v2209
    %v2212 = vadd.f32 %v2200, %v2210
    %v2213 = vsel %vm1001, %v38, 0.0
    %v2214 = vsel %vm1001, %v39, 0.0
    %v2215 = vsel %vm60, %v2213, 0.0
    %2216 = vadd.xlane.f32.xlu0 %v2215
    %v2217 = vpop.xlane.xlu0 %2216
    %v2218 = vsel %vm60, %v2214, 0.0
    %2219 = vadd.xlane.f32.xlu0 %v2218
    %v2220 = vpop.xlane.xlu0 %2219
    %v2221 = vsel %vm1013, %v38, 0.0
    %v2222 = vsel %vm1013, %v39, 0.0
    %v2223 = vsel %vm60, %v2221, 0.0
    %2224 = vadd.xlane.f32.xlu0 %v2223
    %v2225 = vpop.xlane.xlu0 %2224
    %v2226 = vsel %vm60, %v2222, 0.0
    %2227 = vadd.xlane.f32.xlu0 %v2226
    %v2228 = vpop.xlane.xlu0 %2227
    %v2229 = vsel %vm1024, %v38, 0.0
    %v2230 = vsel %vm1024, %v39, 0.0
    %v2231 = vsel %vm60, %v2229, 0.0
    %2232 = vadd.xlane.f32.xlu0 %v2231
    %v2233 = vpop.xlane.xlu0 %2232
    %v2234 = vsel %vm60, %v2230, 0.0
    %2235 = vadd.xlane.f32.xlu0 %v2234
    %v2236 = vpop.xlane.xlu0 %2235
    %v2237 = vsel %vm1077, %v38, 0.0
    %v2238 = vsel %vm1077, %v39, 0.0
    %v2239 = vsel %vm60, %v2237, 0.0
    %2240 = vadd.xlane.f32.xlu0 %v2239
    %v2241 = vpop.xlane.xlu0 %2240
    %v2242 = vsel %vm60, %v2238, 0.0
    %2243 = vadd.xlane.f32.xlu0 %v2242
    %v2244 = vpop.xlane.xlu0 %2243
    %v2245 = vsel %vm1088, %v38, 0.0
    %v2246 = vsel %vm1088, %v39, 0.0
    %v2247 = vsel %vm60, %v2245, 0.0
    %2248 = vadd.xlane.f32.xlu0 %v2247
    %v2249 = vpop.xlane.xlu0 %2248
    %v2250 = vsel %vm60, %v2246, 0.0
    %2251 = vadd.xlane.f32.xlu0 %v2250
    %v2252 = vpop.xlane.xlu0 %2251
    %v2253 = vsel %vm1101, %v38, 0.0
    %v2254 = vsel %vm1101, %v39, 0.0
    %v2255 = vsel %vm60, %v2253, 0.0
    %2256 = vadd.xlane.f32.xlu0 %v2255
    %v2257 = vpop.xlane.xlu0 %2256
    %v2258 = vsel %vm60, %v2254, 0.0
    %2259 = vadd.xlane.f32.xlu0 %v2258
    %v2260 = vpop.xlane.xlu0 %2259
    %v2261 = vsel %vm1128, %v38, 0.0
    %v2262 = vsel %vm1128, %v39, 0.0
    %v2263 = vsel %vm60, %v2261, 0.0
    %2264 = vadd.xlane.f32.xlu0 %v2263
    %v2265 = vpop.xlane.xlu0 %2264
    %v2266 = vsel %vm60, %v2262, 0.0
    %2267 = vadd.xlane.f32.xlu0 %v2266
    %v2268 = vpop.xlane.xlu0 %2267
    %v2269 = vsel %vm1139, %v38, 0.0
    %v2270 = vsel %vm1139, %v39, 0.0
    %v2271 = vsel %vm60, %v2269, 0.0
    %2272 = vadd.xlane.f32.xlu0 %v2271
    %v2273 = vpop.xlane.xlu0 %2272
    %v2274 = vsel %vm60, %v2270, 0.0
    %2275 = vadd.xlane.f32.xlu0 %v2274
    %v2276 = vpop.xlane.xlu0 %2275
    %v2277 = vsel %vm1152, %v38, 0.0
    %v2278 = vsel %vm1152, %v39, 0.0
    %v2279 = vsel %vm60, %v2277, 0.0
    %2280 = vadd.xlane.f32.xlu0 %v2279
    %v2281 = vpop.xlane.xlu0 %2280
    %v2282 = vsel %vm60, %v2278, 0.0
    %2283 = vadd.xlane.f32.xlu0 %v2282
    %v2284 = vpop.xlane.xlu0 %2283
    %v2285 = vsel %vm1285, %v38, 0.0
    %v2286 = vsel %vm1285, %v39, 0.0
    %v2287 = vsel %vm60, %v2285, 0.0
    %2288 = vadd.xlane.f32.xlu0 %v2287
    %v2289 = vpop.xlane.xlu0 %2288
    %v2290 = vsel %vm60, %v2286, 0.0
    %2291 = vadd.xlane.f32.xlu0 %v2290
    %v2292 = vpop.xlane.xlu0 %2291
    %v2293 = vsel %vm1296, %v38, 0.0
    %v2294 = vsel %vm1296, %v39, 0.0
    %v2295 = vsel %vm60, %v2293, 0.0
    %2296 = vadd.xlane.f32.xlu0 %v2295
    %v2297 = vpop.xlane.xlu0 %2296
    %v2298 = vsel %vm60, %v2294, 0.0
    %2299 = vadd.xlane.f32.xlu0 %v2298
    %v2300 = vpop.xlane.xlu0 %2299
    %v2301 = vsel %vm1309, %v38, 0.0
    %v2302 = vsel %vm1309, %v39, 0.0
    %v2303 = vsel %vm60, %v2301, 0.0
    %2304 = vadd.xlane.f32.xlu0 %v2303
    %v2305 = vpop.xlane.xlu0 %2304
    %v2306 = vsel %vm60, %v2302, 0.0
    %2307 = vadd.xlane.f32.xlu0 %v2306
    %v2308 = vpop.xlane.xlu0 %2307
    %v2309 = vsel %vm1336, %v38, 0.0
    %v2310 = vsel %vm1336, %v39, 0.0
    %v2311 = vsel %vm60, %v2309, 0.0
    %2312 = vadd.xlane.f32.xlu0 %v2311
    %v2313 = vpop.xlane.xlu0 %2312
    %v2314 = vsel %vm60, %v2310, 0.0
    %2315 = vadd.xlane.f32.xlu0 %v2314
    %v2316 = vpop.xlane.xlu0 %2315
    %v2317 = vsel %vm1347, %v38, 0.0
    %v2318 = vsel %vm1347, %v39, 0.0
    %v2319 = vsel %vm60, %v2317, 0.0
    %2320 = vadd.xlane.f32.xlu0 %v2319
    %v2321 = vpop.xlane.xlu0 %2320
    %v2322 = vsel %vm60, %v2318, 0.0
    %2323 = vadd.xlane.f32.xlu0 %v2322
    %v2324 = vpop.xlane.xlu0 %2323
    %v2325 = vsel %vm1360, %v38, 0.0
    %v2326 = vsel %vm1360, %v39, 0.0
    %v2327 = vsel %vm60, %v2325, 0.0
    %2328 = vadd.xlane.f32.xlu0 %v2327
    %v2329 = vpop.xlane.xlu0 %2328
    %v2330 = vsel %vm60, %v2326, 0.0
    %2331 = vadd.xlane.f32.xlu0 %v2330
    %v2332 = vpop.xlane.xlu0 %2331
    %vm2333 = vcmp.ne.f32.partialorder %v2217, 0.0
    %vm2334 = vcmp.ne.f32.partialorder %v2220, 0.0
    %vm2335 = vcmp.ne.f32.partialorder %v2225, 0.0
    %vm2336 = vcmp.ne.f32.partialorder %v2228, 0.0
    %vm2337 = vmor %vm2333, %vm2335
    %vm2338 = vmor %vm2334, %vm2336
    %vm2339 = vcmp.ne.f32.partialorder %v2233, 0.0
    %vm2340 = vcmp.ne.f32.partialorder %v2236, 0.0
    %vm2341 = vmor %vm2337, %vm2339
    %vm2342 = vmor %vm2338, %vm2340
    %v2343 = vsel %vm2341, 1, 0
    %v2344 = vsel %vm2342, 1, 0
    %v2345 = vcvt.s32.f32 %v2343
    %v2346 = vcvt.s32.f32 %v2344
    %vm2347 = vcmp.ne.f32.partialorder %v2241, 0.0
    %vm2348 = vcmp.ne.f32.partialorder %v2244, 0.0
    %vm2349 = vcmp.ne.f32.partialorder %v2249, 0.0
    %vm2350 = vcmp.ne.f32.partialorder %v2252, 0.0
    %vm2351 = vmor %vm2347, %vm2349
    %vm2352 = vmor %vm2348, %vm2350
    %vm2353 = vcmp.ne.f32.partialorder %v2257, 0.0
    %vm2354 = vcmp.ne.f32.partialorder %v2260, 0.0
    %vm2355 = vmor %vm2351, %vm2353
    %vm2356 = vmor %vm2352, %vm2354
    %v2357 = vsel %vm2355, 1, 0
    %v2358 = vsel %vm2356, 1, 0
    %v2359 = vcvt.s32.f32 %v2357
    %v2360 = vcvt.s32.f32 %v2358
    %vm2361 = vcmp.ne.f32.partialorder %v2265, 0.0
    %vm2362 = vcmp.ne.f32.partialorder %v2268, 0.0
    %vm2363 = vcmp.ne.f32.partialorder %v2273, 0.0
    %vm2364 = vcmp.ne.f32.partialorder %v2276, 0.0
    %vm2365 = vmor %vm2361, %vm2363
    %vm2366 = vmor %vm2362, %vm2364
    %vm2367 = vcmp.ne.f32.partialorder %v2281, 0.0
    %vm2368 = vcmp.ne.f32.partialorder %v2284, 0.0
    %vm2369 = vmor %vm2365, %vm2367
    %vm2370 = vmor %vm2366, %vm2368
    %v2371 = vsel %vm2369, 1, 0
    %v2372 = vsel %vm2370, 1, 0
    %v2373 = vcvt.s32.f32 %v2371
    %v2374 = vcvt.s32.f32 %v2372
    %vm2375 = vcmp.ne.f32.partialorder %v2289, 0.0
    %vm2376 = vcmp.ne.f32.partialorder %v2292, 0.0
    %vm2377 = vcmp.ne.f32.partialorder %v2297, 0.0
    %vm2378 = vcmp.ne.f32.partialorder %v2300, 0.0
    %vm2379 = vmor %vm2375, %vm2377
    %vm2380 = vmor %vm2376, %vm2378
    %vm2381 = vcmp.ne.f32.partialorder %v2305, 0.0
    %vm2382 = vcmp.ne.f32.partialorder %v2308, 0.0
    %vm2383 = vmor %vm2379, %vm2381
    %vm2384 = vmor %vm2380, %vm2382
    %v2385 = vsel %vm2383, 1, 0
    %v2386 = vsel %vm2384, 1, 0
    %v2387 = vcvt.s32.f32 %v2385
    %v2388 = vcvt.s32.f32 %v2386
    %vm2389 = vcmp.ne.f32.partialorder %v2313, 0.0
    %vm2390 = vcmp.ne.f32.partialorder %v2316, 0.0
    %vm2391 = vcmp.ne.f32.partialorder %v2321, 0.0
    %vm2392 = vcmp.ne.f32.partialorder %v2324, 0.0
    %vm2393 = vmor %vm2389, %vm2391
    %vm2394 = vmor %vm2390, %vm2392
    %vm2395 = vcmp.ne.f32.partialorder %v2329, 0.0
    %vm2396 = vcmp.ne.f32.partialorder %v2332, 0.0
    %vm2397 = vmor %vm2393, %vm2395
    %vm2398 = vmor %vm2394, %vm2396
    %v2399 = vsel %vm2397, 1, 0
    %v2400 = vsel %vm2398, 1, 0
    %v2401 = vcvt.s32.f32 %v2399
    %v2402 = vcvt.s32.f32 %v2400
    %v2403 = vadd.f32 %v2217, %v1073
    %v2404 = vadd.f32 %v2220, %v1074
    %v2405 = vmul.f32 %v2403, %v2345
    %v2406 = vmul.f32 %v2404, %v2346
    %v2407 = vadd.f32 %v2241, %v1332
    %v2408 = vadd.f32 %v2244, %v1333
    %v2409 = vmul.f32 %v2407, %v2359
    %v2410 = vmul.f32 %v2408, %v2360
    %v2411 = vadd.f32 %v2265, %v1591
    %v2412 = vadd.f32 %v2268, %v1592
    %v2413 = vmul.f32 %v2411, %v2373
    %v2414 = vmul.f32 %v2412, %v2374
    %v2415 = vadd.f32 %v2289, %v1850
    %v2416 = vadd.f32 %v2292, %v1851
    %v2417 = vmul.f32 %v2415, %v2387
    %v2418 = vmul.f32 %v2416, %v2388
    %v2419 = vadd.f32 %v2313, %v2109
    %v2420 = vadd.f32 %v2316, %v2110
    %v2421 = vmul.f32 %v2419, %v2401
    %v2422 = vmul.f32 %v2420, %v2402
    %v2423 = vadd.f32 %v2225, %v1124
    %v2424 = vadd.f32 %v2228, %v1125
    %v2425 = vmul.f32 %v2423, %v2345
    %v2426 = vmul.f32 %v2424, %v2346
    %v2427 = vadd.f32 %v2249, %v1383
    %v2428 = vadd.f32 %v2252, %v1384
    %v2429 = vmul.f32 %v2427, %v2359
    %v2430 = vmul.f32 %v2428, %v2360
    %v2431 = vadd.f32 %v2273, %v1642
    %v2432 = vadd.f32 %v2276, %v1643
    %v2433 = vmul.f32 %v2431, %v2373
    %v2434 = vmul.f32 %v2432, %v2374
    %v2435 = vadd.f32 %v2297, %v1901
    %v2436 = vadd.f32 %v2300, %v1902
    %v2437 = vmul.f32 %v2435, %v2387
    %v2438 = vmul.f32 %v2436, %v2388
    %v2439 = vadd.f32 %v2321, %v2160
    %v2440 = vadd.f32 %v2324, %v2161
    %v2441 = vmul.f32 %v2439, %v2401
    %v2442 = vmul.f32 %v2440, %v2402
    %v2443 = vadd.f32 %v2233, %v1175
    %v2444 = vadd.f32 %v2236, %v1176
    %v2445 = vmul.f32 %v2443, %v2345
    %v2446 = vmul.f32 %v2444, %v2346
    %v2447 = vadd.f32 %v2257, %v1434
    %v2448 = vadd.f32 %v2260, %v1435
    %v2449 = vmul.f32 %v2447, %v2359
    %v2450 = vmul.f32 %v2448, %v2360
    %v2451 = vadd.f32 %v2281, %v1693
    %v2452 = vadd.f32 %v2284, %v1694
    %v2453 = vmul.f32 %v2451, %v2373
    %v2454 = vmul.f32 %v2452, %v2374
    %v2455 = vadd.f32 %v2305, %v1952
    %v2456 = vadd.f32 %v2308, %v1953
    %v2457 = vmul.f32 %v2455, %v2387
    %v2458 = vmul.f32 %v2456, %v2388
    %v2459 = vadd.f32 %v2329, %v2211
    %v2460 = vadd.f32 %v2332, %v2212
    %v2461 = vmul.f32 %v2459, %v2401
    %v2462 = vmul.f32 %v2460, %v2402
    %v2463 = vadd.f32 %v2405, %v2405
    %v2464 = vadd.f32 %v2406, %v2406
    %vm2465 = vcmp.eq.f32.partialorder %v2463, 0.0
    %vm2466 = vcmp.eq.f32.partialorder %v2464, 0.0
    %v2467 = vand.u32 2147483647, %v2425
    %v2468 = vand.u32 2147483647, %v2426
    %vm2469 = vcmp.gt.f32.partialorder %v2425, 0.0
    %vm2470 = vcmp.gt.f32.partialorder %v2426, 0.0
    %vm2471 = vcmp.lt.f32.partialorder %v2425, 0.0
    %vm2472 = vcmp.lt.f32.partialorder %v2426, 0.0
    %v2473 = vsel %vm2471, -1.0, 0.0
    %v2474 = vsel %vm2472, -1.0, 0.0
    %v2475 = vsel %vm2469, 1.0, %v2473
    %v2476 = vsel %vm2470, 1.0, %v2474
    %vm2477 = vcmp.gt.f32.partialorder %v2467, 2.4142137
    %vm2478 = vcmp.gt.f32.partialorder %v2468, 2.4142137
    %vm2479 = vcmp.gt.f32.partialorder %v2467, 0.41421357
    %vm2480 = vcmp.gt.f32.partialorder %v2468, 0.41421357
    %v2481 = vsel %vm2479, 0.7853982, 0.0
    %v2482 = vsel %vm2480, 0.7853982, 0.0
    %v2483 = vsel %vm2477, 1.5707964, %v2481
    %v2484 = vsel %vm2478, 1.5707964, %v2482
    %v2485 = vmax.f32 %v2467, 1e-30
    %v2486 = vmax.f32 %v2468, 1e-30
    %v2487 = vrcp.pop %v2485
    %v2488 = vmul.f32 -1.0, %v2487
    %v2489 = vrcp.pop %v2486
    %v2490 = vmul.f32 -1.0, %v2489
    %v2491 = vsub.f32 %v2467, 1.0
    %v2492 = vsub.f32 %v2468, 1.0
    %v2493 = vadd.f32 %v2467, 1.0
    %v2494 = vadd.f32 %v2468, 1.0
    %v2495 = vrcp.pop %v2493
    %v2496 = vmul.f32 %v2491, %v2495
    %v2497 = vrcp.pop %v2494
    %v2498 = vmul.f32 %v2492, %v2497
    %v2499 = vsel %vm2479, %v2496, %v2467
    %v2500 = vsel %vm2480, %v2498, %v2468
    %v2501 = vsel %vm2477, %v2488, %v2499
    %v2502 = vsel %vm2478, %v2490, %v2500
    %v2503 = vmul.f32 %v2501, %v2501
    %v2504 = vmul.f32 %v2502, %v2502
    %v2505 = vmul.f32 %v2503, 0.080537446
    %v2506 = vmul.f32 %v2504, 0.080537446
    %v2507 = vsub.f32 %v2505, 0.13877685
    %v2508 = vsub.f32 %v2506, 0.13877685
    %v2509 = vmul.f32 %v2507, %v2503
    %v2510 = vmul.f32 %v2508, %v2504
    %v2511 = vadd.f32 %v2509, 0.19977711
    %v2512 = vadd.f32 %v2510, 0.19977711
    %v2513 = vmul.f32 %v2511, %v2503
    %v2514 = vmul.f32 %v2512, %v2504
    %v2515 = vsub.f32 %v2513, 0.3333295
    %v2516 = vsub.f32 %v2514, 0.3333295
    %v2517 = vmul.f32 %v2515, %v2503
    %v2518 = vmul.f32 %v2516, %v2504
    %v2519 = vmul.f32 %v2517, %v2501
    %v2520 = vmul.f32 %v2518, %v2502
    %v2521 = vadd.f32 %v2519, %v2501
    %v2522 = vadd.f32 %v2520, %v2502
    %v2523 = vadd.f32 %v2483, %v2521
    %v2524 = vadd.f32 %v2484, %v2522
    %v2525 = vmul.f32 %v2475, %v2523
    %v2526 = vmul.f32 %v2476, %v2524
    %v2527 = vsel %vm2471, -1.5707964, 0.0
    %v2528 = vsel %vm2472, -1.5707964, 0.0
    %v2529 = vsel %vm2469, 1.5707964, %v2527
    %v2530 = vsel %vm2470, 1.5707964, %v2528
    %v2531 = vsel %vm2465, %v2525, %v2529
    %v2532 = vsel %vm2466, %v2526, %v2530
    %v2533 = vadd.f32 %v2409, %v2409
    %v2534 = vadd.f32 %v2410, %v2410
    %vm2535 = vcmp.eq.f32.partialorder %v2533, 0.0
    %vm2536 = vcmp.eq.f32.partialorder %v2534, 0.0
    %v2537 = vand.u32 2147483647, %v2429
    %v2538 = vand.u32 2147483647, %v2430
    %vm2539 = vcmp.gt.f32.partialorder %v2429, 0.0
    %vm2540 = vcmp.gt.f32.partialorder %v2430, 0.0
    %vm2541 = vcmp.lt.f32.partialorder %v2429, 0.0
    %vm2542 = vcmp.lt.f32.partialorder %v2430, 0.0
    %v2543 = vsel %vm2541, -1.0, 0.0
    %v2544 = vsel %vm2542, -1.0, 0.0
    %v2545 = vsel %vm2539, 1.0, %v2543
    %v2546 = vsel %vm2540, 1.0, %v2544
    %vm2547 = vcmp.gt.f32.partialorder %v2537, 2.4142137
    %vm2548 = vcmp.gt.f32.partialorder %v2538, 2.4142137
    %vm2549 = vcmp.gt.f32.partialorder %v2537, 0.41421357
    %vm2550 = vcmp.gt.f32.partialorder %v2538, 0.41421357
    %v2551 = vsel %vm2549, 0.7853982, 0.0
    %v2552 = vsel %vm2550, 0.7853982, 0.0
    %v2553 = vsel %vm2547, 1.5707964, %v2551
    %v2554 = vsel %vm2548, 1.5707964, %v2552
    %v2555 = vmax.f32 %v2537, 1e-30
    %v2556 = vmax.f32 %v2538, 1e-30
    %v2557 = vrcp.pop %v2555
    %v2558 = vmul.f32 -1.0, %v2557
    %v2559 = vrcp.pop %v2556
    %v2560 = vmul.f32 -1.0, %v2559
    %v2561 = vsub.f32 %v2537, 1.0
    %v2562 = vsub.f32 %v2538, 1.0
    %v2563 = vadd.f32 %v2537, 1.0
    %v2564 = vadd.f32 %v2538, 1.0
    %v2565 = vrcp.pop %v2563
    %v2566 = vmul.f32 %v2561, %v2565
    %v2567 = vrcp.pop %v2564
    %v2568 = vmul.f32 %v2562, %v2567
    %v2569 = vsel %vm2549, %v2566, %v2537
    %v2570 = vsel %vm2550, %v2568, %v2538
    %v2571 = vsel %vm2547, %v2558, %v2569
    %v2572 = vsel %vm2548, %v2560, %v2570
    %v2573 = vmul.f32 %v2571, %v2571
    %v2574 = vmul.f32 %v2572, %v2572
    %v2575 = vmul.f32 %v2573, 0.080537446
    %v2576 = vmul.f32 %v2574, 0.080537446
    %v2577 = vsub.f32 %v2575, 0.13877685
    %v2578 = vsub.f32 %v2576, 0.13877685
    %v2579 = vmul.f32 %v2577, %v2573
    %v2580 = vmul.f32 %v2578, %v2574
    %v2581 = vadd.f32 %v2579, 0.19977711
    %v2582 = vadd.f32 %v2580, 0.19977711
    %v2583 = vmul.f32 %v2581, %v2573
    %v2584 = vmul.f32 %v2582, %v2574
    %v2585 = vsub.f32 %v2583, 0.3333295
    %v2586 = vsub.f32 %v2584, 0.3333295
    %v2587 = vmul.f32 %v2585, %v2573
    %v2588 = vmul.f32 %v2586, %v2574
    %v2589 = vmul.f32 %v2587, %v2571
    %v2590 = vmul.f32 %v2588, %v2572
    %v2591 = vadd.f32 %v2589, %v2571
    %v2592 = vadd.f32 %v2590, %v2572
    %v2593 = vadd.f32 %v2553, %v2591
    %v2594 = vadd.f32 %v2554, %v2592
    %v2595 = vmul.f32 %v2545, %v2593
    %v2596 = vmul.f32 %v2546, %v2594
    %v2597 = vsel %vm2541, -1.5707964, 0.0
    %v2598 = vsel %vm2542, -1.5707964, 0.0
    %v2599 = vsel %vm2539, 1.5707964, %v2597
    %v2600 = vsel %vm2540, 1.5707964, %v2598
    %v2601 = vsel %vm2535, %v2595, %v2599
    %v2602 = vsel %vm2536, %v2596, %v2600
    %v2603 = vadd.f32 %v2413, %v2413
    %v2604 = vadd.f32 %v2414, %v2414
    %vm2605 = vcmp.eq.f32.partialorder %v2603, 0.0
    %vm2606 = vcmp.eq.f32.partialorder %v2604, 0.0
    %v2607 = vand.u32 2147483647, %v2433
    %v2608 = vand.u32 2147483647, %v2434
    %vm2609 = vcmp.gt.f32.partialorder %v2433, 0.0
    %vm2610 = vcmp.gt.f32.partialorder %v2434, 0.0
    %vm2611 = vcmp.lt.f32.partialorder %v2433, 0.0
    %vm2612 = vcmp.lt.f32.partialorder %v2434, 0.0
    %v2613 = vsel %vm2611, -1.0, 0.0
    %v2614 = vsel %vm2612, -1.0, 0.0
    %v2615 = vsel %vm2609, 1.0, %v2613
    %v2616 = vsel %vm2610, 1.0, %v2614
    %vm2617 = vcmp.gt.f32.partialorder %v2607, 2.4142137
    %vm2618 = vcmp.gt.f32.partialorder %v2608, 2.4142137
    %vm2619 = vcmp.gt.f32.partialorder %v2607, 0.41421357
    %vm2620 = vcmp.gt.f32.partialorder %v2608, 0.41421357
    %v2621 = vsel %vm2619, 0.7853982, 0.0
    %v2622 = vsel %vm2620, 0.7853982, 0.0
    %v2623 = vsel %vm2617, 1.5707964, %v2621
    %v2624 = vsel %vm2618, 1.5707964, %v2622
    %v2625 = vmax.f32 %v2607, 1e-30
    %v2626 = vmax.f32 %v2608, 1e-30
    %v2627 = vrcp.pop %v2625
    %v2628 = vmul.f32 -1.0, %v2627
    %v2629 = vrcp.pop %v2626
    %v2630 = vmul.f32 -1.0, %v2629
    %v2631 = vsub.f32 %v2607, 1.0
    %v2632 = vsub.f32 %v2608, 1.0
    %v2633 = vadd.f32 %v2607, 1.0
    %v2634 = vadd.f32 %v2608, 1.0
    %v2635 = vrcp.pop %v2633
    %v2636 = vmul.f32 %v2631, %v2635
    %v2637 = vrcp.pop %v2634
    %v2638 = vmul.f32 %v2632, %v2637
    %v2639 = vsel %vm2619, %v2636, %v2607
    %v2640 = vsel %vm2620, %v2638, %v2608
    %v2641 = vsel %vm2617, %v2628, %v2639
    %v2642 = vsel %vm2618, %v2630, %v2640
    %v2643 = vmul.f32 %v2641, %v2641
    %v2644 = vmul.f32 %v2642, %v2642
    %v2645 = vmul.f32 %v2643, 0.080537446
    %v2646 = vmul.f32 %v2644, 0.080537446
    %v2647 = vsub.f32 %v2645, 0.13877685
    %v2648 = vsub.f32 %v2646, 0.13877685
    %v2649 = vmul.f32 %v2647, %v2643
    %v2650 = vmul.f32 %v2648, %v2644
    %v2651 = vadd.f32 %v2649, 0.19977711
    %v2652 = vadd.f32 %v2650, 0.19977711
    %v2653 = vmul.f32 %v2651, %v2643
    %v2654 = vmul.f32 %v2652, %v2644
    %v2655 = vsub.f32 %v2653, 0.3333295
    %v2656 = vsub.f32 %v2654, 0.3333295
    %v2657 = vmul.f32 %v2655, %v2643
    %v2658 = vmul.f32 %v2656, %v2644
    %v2659 = vmul.f32 %v2657, %v2641
    %v2660 = vmul.f32 %v2658, %v2642
    %v2661 = vadd.f32 %v2659, %v2641
    %v2662 = vadd.f32 %v2660, %v2642
    %v2663 = vadd.f32 %v2623, %v2661
    %v2664 = vadd.f32 %v2624, %v2662
    %v2665 = vmul.f32 %v2615, %v2663
    %v2666 = vmul.f32 %v2616, %v2664
    %v2667 = vsel %vm2611, -1.5707964, 0.0
    %v2668 = vsel %vm2612, -1.5707964, 0.0
    %v2669 = vsel %vm2609, 1.5707964, %v2667
    %v2670 = vsel %vm2610, 1.5707964, %v2668
    %v2671 = vsel %vm2605, %v2665, %v2669
    %v2672 = vsel %vm2606, %v2666, %v2670
    %v2673 = vadd.f32 %v2417, %v2417
    %v2674 = vadd.f32 %v2418, %v2418
    %vm2675 = vcmp.eq.f32.partialorder %v2673, 0.0
    %vm2676 = vcmp.eq.f32.partialorder %v2674, 0.0
    %v2677 = vand.u32 2147483647, %v2437
    %v2678 = vand.u32 2147483647, %v2438
    %vm2679 = vcmp.gt.f32.partialorder %v2437, 0.0
    %vm2680 = vcmp.gt.f32.partialorder %v2438, 0.0
    %vm2681 = vcmp.lt.f32.partialorder %v2437, 0.0
    %vm2682 = vcmp.lt.f32.partialorder %v2438, 0.0
    %v2683 = vsel %vm2681, -1.0, 0.0
    %v2684 = vsel %vm2682, -1.0, 0.0
    %v2685 = vsel %vm2679, 1.0, %v2683
    %v2686 = vsel %vm2680, 1.0, %v2684
    %vm2687 = vcmp.gt.f32.partialorder %v2677, 2.4142137
    %vm2688 = vcmp.gt.f32.partialorder %v2678, 2.4142137
    %vm2689 = vcmp.gt.f32.partialorder %v2677, 0.41421357
    %vm2690 = vcmp.gt.f32.partialorder %v2678, 0.41421357
    %v2691 = vsel %vm2689, 0.7853982, 0.0
    %v2692 = vsel %vm2690, 0.7853982, 0.0
    %v2693 = vsel %vm2687, 1.5707964, %v2691
    %v2694 = vsel %vm2688, 1.5707964, %v2692
    %v2695 = vmax.f32 %v2677, 1e-30
    %v2696 = vmax.f32 %v2678, 1e-30
    %v2697 = vrcp.pop %v2695
    %v2698 = vmul.f32 -1.0, %v2697
    %v2699 = vrcp.pop %v2696
    %v2700 = vmul.f32 -1.0, %v2699
    %v2701 = vsub.f32 %v2677, 1.0
    %v2702 = vsub.f32 %v2678, 1.0
    %v2703 = vadd.f32 %v2677, 1.0
    %v2704 = vadd.f32 %v2678, 1.0
    %v2705 = vrcp.pop %v2703
    %v2706 = vmul.f32 %v2701, %v2705
    %v2707 = vrcp.pop %v2704
    %v2708 = vmul.f32 %v2702, %v2707
    %v2709 = vsel %vm2689, %v2706, %v2677
    %v2710 = vsel %vm2690, %v2708, %v2678
    %v2711 = vsel %vm2687, %v2698, %v2709
    %v2712 = vsel %vm2688, %v2700, %v2710
    %v2713 = vmul.f32 %v2711, %v2711
    %v2714 = vmul.f32 %v2712, %v2712
    %v2715 = vmul.f32 %v2713, 0.080537446
    %v2716 = vmul.f32 %v2714, 0.080537446
    %v2717 = vsub.f32 %v2715, 0.13877685
    %v2718 = vsub.f32 %v2716, 0.13877685
    %v2719 = vmul.f32 %v2717, %v2713
    %v2720 = vmul.f32 %v2718, %v2714
    %v2721 = vadd.f32 %v2719, 0.19977711
    %v2722 = vadd.f32 %v2720, 0.19977711
    %v2723 = vmul.f32 %v2721, %v2713
    %v2724 = vmul.f32 %v2722, %v2714
    %v2725 = vsub.f32 %v2723, 0.3333295
    %v2726 = vsub.f32 %v2724, 0.3333295
    %v2727 = vmul.f32 %v2725, %v2713
    %v2728 = vmul.f32 %v2726, %v2714
    %v2729 = vmul.f32 %v2727, %v2711
    %v2730 = vmul.f32 %v2728, %v2712
    %v2731 = vadd.f32 %v2729, %v2711
    %v2732 = vadd.f32 %v2730, %v2712
    %v2733 = vadd.f32 %v2693, %v2731
    %v2734 = vadd.f32 %v2694, %v2732
    %v2735 = vmul.f32 %v2685, %v2733
    %v2736 = vmul.f32 %v2686, %v2734
    %v2737 = vsel %vm2681, -1.5707964, 0.0
    %v2738 = vsel %vm2682, -1.5707964, 0.0
    %v2739 = vsel %vm2679, 1.5707964, %v2737
    %v2740 = vsel %vm2680, 1.5707964, %v2738
    %v2741 = vsel %vm2675, %v2735, %v2739
    %v2742 = vsel %vm2676, %v2736, %v2740
    %v2743 = vadd.f32 %v2421, %v2421
    %v2744 = vadd.f32 %v2422, %v2422
    %vm2745 = vcmp.eq.f32.partialorder %v2743, 0.0
    %vm2746 = vcmp.eq.f32.partialorder %v2744, 0.0
    %v2747 = vand.u32 2147483647, %v2441
    %v2748 = vand.u32 2147483647, %v2442
    %vm2749 = vcmp.gt.f32.partialorder %v2441, 0.0
    %vm2750 = vcmp.gt.f32.partialorder %v2442, 0.0
    %vm2751 = vcmp.lt.f32.partialorder %v2441, 0.0
    %vm2752 = vcmp.lt.f32.partialorder %v2442, 0.0
    %v2753 = vsel %vm2751, -1.0, 0.0
    %v2754 = vsel %vm2752, -1.0, 0.0
    %v2755 = vsel %vm2749, 1.0, %v2753
    %v2756 = vsel %vm2750, 1.0, %v2754
    %vm2757 = vcmp.gt.f32.partialorder %v2747, 2.4142137
    %vm2758 = vcmp.gt.f32.partialorder %v2748, 2.4142137
    %vm2759 = vcmp.gt.f32.partialorder %v2747, 0.41421357
    %vm2760 = vcmp.gt.f32.partialorder %v2748, 0.41421357
    %v2761 = vsel %vm2759, 0.7853982, 0.0
    %v2762 = vsel %vm2760, 0.7853982, 0.0
    %v2763 = vsel %vm2757, 1.5707964, %v2761
    %v2764 = vsel %vm2758, 1.5707964, %v2762
    %v2765 = vmax.f32 %v2747, 1e-30
    %v2766 = vmax.f32 %v2748, 1e-30
    %v2767 = vrcp.pop %v2765
    %v2768 = vmul.f32 -1.0, %v2767
    %v2769 = vrcp.pop %v2766
    %v2770 = vmul.f32 -1.0, %v2769
    %v2771 = vsub.f32 %v2747, 1.0
    %v2772 = vsub.f32 %v2748, 1.0
    %v2773 = vadd.f32 %v2747, 1.0
    %v2774 = vadd.f32 %v2748, 1.0
    %v2775 = vrcp.pop %v2773
    %v2776 = vmul.f32 %v2771, %v2775
    %v2777 = vrcp.pop %v2774
    %v2778 = vmul.f32 %v2772, %v2777
    %v2779 = vsel %vm2759, %v2776, %v2747
    %v2780 = vsel %vm2760, %v2778, %v2748
    %v2781 = vsel %vm2757, %v2768, %v2779
    %v2782 = vsel %vm2758, %v2770, %v2780
    %v2783 = vmul.f32 %v2781, %v2781
    %v2784 = vmul.f32 %v2782, %v2782
    %v2785 = vmul.f32 %v2783, 0.080537446
    %v2786 = vmul.f32 %v2784, 0.080537446
    %v2787 = vsub.f32 %v2785, 0.13877685
    %v2788 = vsub.f32 %v2786, 0.13877685
    %v2789 = vmul.f32 %v2787, %v2783
    %v2790 = vmul.f32 %v2788, %v2784
    %v2791 = vadd.f32 %v2789, 0.19977711
    %v2792 = vadd.f32 %v2790, 0.19977711
    %v2793 = vmul.f32 %v2791, %v2783
    %v2794 = vmul.f32 %v2792, %v2784
    %v2795 = vsub.f32 %v2793, 0.3333295
    %v2796 = vsub.f32 %v2794, 0.3333295
    %v2797 = vmul.f32 %v2795, %v2783
    %v2798 = vmul.f32 %v2796, %v2784
    %v2799 = vmul.f32 %v2797, %v2781
    %v2800 = vmul.f32 %v2798, %v2782
    %v2801 = vadd.f32 %v2799, %v2781
    %v2802 = vadd.f32 %v2800, %v2782
    %v2803 = vadd.f32 %v2763, %v2801
    %v2804 = vadd.f32 %v2764, %v2802
    %v2805 = vmul.f32 %v2755, %v2803
    %v2806 = vmul.f32 %v2756, %v2804
    %v2807 = vsel %vm2751, -1.5707964, 0.0
    %v2808 = vsel %vm2752, -1.5707964, 0.0
    %v2809 = vsel %vm2749, 1.5707964, %v2807
    %v2810 = vsel %vm2750, 1.5707964, %v2808
    %v2811 = vsel %vm2745, %v2805, %v2809
    %v2812 = vsel %vm2746, %v2806, %v2810
    %v2813 = vmul.f32 %v2345, %v2405
    %v2814 = vmul.f32 %v2346, %v2406
    %v2815 = vmul.f32 %v2813, %v2405
    %v2816 = vmul.f32 %v2814, %v2406
    %v2817 = vadd.f32 %v2815, 0.0
    %v2818 = vadd.f32 %v2816, 0.0
    %v2819 = vmul.f32 %v2359, %v2409
    %v2820 = vmul.f32 %v2360, %v2410
    %v2821 = vmul.f32 %v2819, %v2409
    %v2822 = vmul.f32 %v2820, %v2410
    %v2823 = vadd.f32 %v2817, %v2821
    %v2824 = vadd.f32 %v2818, %v2822
    %v2825 = vmul.f32 %v2373, %v2413
    %v2826 = vmul.f32 %v2374, %v2414
    %v2827 = vmul.f32 %v2825, %v2413
    %v2828 = vmul.f32 %v2826, %v2414
    %v2829 = vadd.f32 %v2823, %v2827
    %v2830 = vadd.f32 %v2824, %v2828
    %v2831 = vmul.f32 %v2387, %v2417
    %v2832 = vmul.f32 %v2388, %v2418
    %v2833 = vmul.f32 %v2831, %v2417
    %v2834 = vmul.f32 %v2832, %v2418
    %v2835 = vadd.f32 %v2829, %v2833
    %v2836 = vadd.f32 %v2830, %v2834
    %v2837 = vmul.f32 %v2401, %v2421
    %v2838 = vmul.f32 %v2402, %v2422
    %v2839 = vmul.f32 %v2837, %v2421
    %v2840 = vmul.f32 %v2838, %v2422
    %v2841 = vadd.f32 %v2835, %v2839
    %v2842 = vadd.f32 %v2836, %v2840
    %v2843 = vmul.f32 %v2813, %v2425
    %v2844 = vmul.f32 %v2814, %v2426
    %v2845 = vadd.f32 %v2843, 0.0
    %v2846 = vadd.f32 %v2844, 0.0
    %v2847 = vmul.f32 %v2819, %v2429
    %v2848 = vmul.f32 %v2820, %v2430
    %v2849 = vadd.f32 %v2845, %v2847
    %v2850 = vadd.f32 %v2846, %v2848
    %v2851 = vmul.f32 %v2825, %v2433
    %v2852 = vmul.f32 %v2826, %v2434
    %v2853 = vadd.f32 %v2849, %v2851
    %v2854 = vadd.f32 %v2850, %v2852
    %v2855 = vmul.f32 %v2831, %v2437
    %v2856 = vmul.f32 %v2832, %v2438
    %v2857 = vadd.f32 %v2853, %v2855
    %v2858 = vadd.f32 %v2854, %v2856
    %v2859 = vmul.f32 %v2837, %v2441
    %v2860 = vmul.f32 %v2838, %v2442
    %v2861 = vadd.f32 %v2857, %v2859
    %v2862 = vadd.f32 %v2858, %v2860
    %v2863 = vadd.f32 %v2813, 0.0
    %v2864 = vadd.f32 %v2814, 0.0
    %v2865 = vadd.f32 %v2863, %v2819
    %v2866 = vadd.f32 %v2864, %v2820
    %v2867 = vadd.f32 %v2865, %v2825
    %v2868 = vadd.f32 %v2866, %v2826
    %v2869 = vadd.f32 %v2867, %v2831
    %v2870 = vadd.f32 %v2868, %v2832
    %v2871 = vadd.f32 %v2869, %v2837
    %v2872 = vadd.f32 %v2870, %v2838
    %v2873 = vmul.f32 %v2345, %v2425
    %v2874 = vmul.f32 %v2346, %v2426
    %v2875 = vmul.f32 %v2873, %v2425
    %v2876 = vmul.f32 %v2874, %v2426
    %v2877 = vadd.f32 %v2875, 0.0
    %v2878 = vadd.f32 %v2876, 0.0
    %v2879 = vmul.f32 %v2359, %v2429
    %v2880 = vmul.f32 %v2360, %v2430
    %v2881 = vmul.f32 %v2879, %v2429
    %v2882 = vmul.f32 %v2880, %v2430
    %v2883 = vadd.f32 %v2877, %v2881
    %v2884 = vadd.f32 %v2878, %v2882
    %v2885 = vmul.f32 %v2373, %v2433
    %v2886 = vmul.f32 %v2374, %v2434
    %v2887 = vmul.f32 %v2885, %v2433
    %v2888 = vmul.f32 %v2886, %v2434
    %v2889 = vadd.f32 %v2883, %v2887
    %v2890 = vadd.f32 %v2884, %v2888
    %v2891 = vmul.f32 %v2387, %v2437
    %v2892 = vmul.f32 %v2388, %v2438
    %v2893 = vmul.f32 %v2891, %v2437
    %v2894 = vmul.f32 %v2892, %v2438
    %v2895 = vadd.f32 %v2889, %v2893
    %v2896 = vadd.f32 %v2890, %v2894
    %v2897 = vmul.f32 %v2401, %v2441
    %v2898 = vmul.f32 %v2402, %v2442
    %v2899 = vmul.f32 %v2897, %v2441
    %v2900 = vmul.f32 %v2898, %v2442
    %v2901 = vadd.f32 %v2895, %v2899
    %v2902 = vadd.f32 %v2896, %v2900
    %v2903 = vadd.f32 %v2873, 0.0
    %v2904 = vadd.f32 %v2874, 0.0
    %v2905 = vadd.f32 %v2903, %v2879
    %v2906 = vadd.f32 %v2904, %v2880
    %v2907 = vadd.f32 %v2905, %v2885
    %v2908 = vadd.f32 %v2906, %v2886
    %v2909 = vadd.f32 %v2907, %v2891
    %v2910 = vadd.f32 %v2908, %v2892
    %v2911 = vadd.f32 %v2909, %v2897
    %v2912 = vadd.f32 %v2910, %v2898
    %v2913 = vadd.f32 %v2345, 0.0
    %v2914 = vadd.f32 %v2346, 0.0
    %v2915 = vadd.f32 %v2913, %v2359
    %v2916 = vadd.f32 %v2914, %v2360
    %v2917 = vadd.f32 %v2915, %v2373
    %v2918 = vadd.f32 %v2916, %v2374
    %v2919 = vadd.f32 %v2917, %v2387
    %v2920 = vadd.f32 %v2918, %v2388
    %v2921 = vadd.f32 %v2919, %v2401
    %v2922 = vadd.f32 %v2920, %v2402
    %v2923 = vmul.f32 %v2405, %v2405
    %v2924 = vmul.f32 %v2406, %v2406
    %v2925 = vmul.f32 %v2425, %v2425
    %v2926 = vmul.f32 %v2426, %v2426
    %v2927 = vadd.f32 %v2923, %v2925
    %v2928 = vadd.f32 %v2924, %v2926
    %v2929 = vsub.f32 0.0, %v2927
    %v2930 = vsub.f32 0.0, %v2928
    %v2931 = vmul.f32 %v2409, %v2409
    %v2932 = vmul.f32 %v2410, %v2410
    %v2933 = vmul.f32 %v2429, %v2429
    %v2934 = vmul.f32 %v2430, %v2430
    %v2935 = vadd.f32 %v2931, %v2933
    %v2936 = vadd.f32 %v2932, %v2934
    %v2937 = vsub.f32 0.0, %v2935
    %v2938 = vsub.f32 0.0, %v2936
    %v2939 = vmul.f32 %v2413, %v2413
    %v2940 = vmul.f32 %v2414, %v2414
    %v2941 = vmul.f32 %v2433, %v2433
    %v2942 = vmul.f32 %v2434, %v2434
    %v2943 = vadd.f32 %v2939, %v2941
    %v2944 = vadd.f32 %v2940, %v2942
    %v2945 = vsub.f32 0.0, %v2943
    %v2946 = vsub.f32 0.0, %v2944
    %v2947 = vmul.f32 %v2417, %v2417
    %v2948 = vmul.f32 %v2418, %v2418
    %v2949 = vmul.f32 %v2437, %v2437
    %v2950 = vmul.f32 %v2438, %v2438
    %v2951 = vadd.f32 %v2947, %v2949
    %v2952 = vadd.f32 %v2948, %v2950
    %v2953 = vsub.f32 0.0, %v2951
    %v2954 = vsub.f32 0.0, %v2952
    %v2955 = vmul.f32 %v2421, %v2421
    %v2956 = vmul.f32 %v2422, %v2422
    %v2957 = vmul.f32 %v2441, %v2441
    %v2958 = vmul.f32 %v2442, %v2442
    %v2959 = vadd.f32 %v2955, %v2957
    %v2960 = vadd.f32 %v2956, %v2958
    %v2961 = vsub.f32 0.0, %v2959
    %v2962 = vsub.f32 0.0, %v2960
    %v2963 = vmul.f32 %v2813, %v2929
    %v2964 = vmul.f32 %v2814, %v2930
    %v2965 = vadd.f32 %v2963, 0.0
    %v2966 = vadd.f32 %v2964, 0.0
    %v2967 = vmul.f32 %v2819, %v2937
    %v2968 = vmul.f32 %v2820, %v2938
    %v2969 = vadd.f32 %v2965, %v2967
    %v2970 = vadd.f32 %v2966, %v2968
    %v2971 = vmul.f32 %v2825, %v2945
    %v2972 = vmul.f32 %v2826, %v2946
    %v2973 = vadd.f32 %v2969, %v2971
    %v2974 = vadd.f32 %v2970, %v2972
    %v2975 = vmul.f32 %v2831, %v2953
    %v2976 = vmul.f32 %v2832, %v2954
    %v2977 = vadd.f32 %v2973, %v2975
    %v2978 = vadd.f32 %v2974, %v2976
    %v2979 = vmul.f32 %v2837, %v2961
    %v2980 = vmul.f32 %v2838, %v2962
    %v2981 = vadd.f32 %v2977, %v2979
    %v2982 = vadd.f32 %v2978, %v2980
    %v2983 = vmul.f32 %v2873, %v2929
    %v2984 = vmul.f32 %v2874, %v2930
    %v2985 = vadd.f32 %v2983, 0.0
    %v2986 = vadd.f32 %v2984, 0.0
    %v2987 = vmul.f32 %v2879, %v2937
    %v2988 = vmul.f32 %v2880, %v2938
    %v2989 = vadd.f32 %v2985, %v2987
    %v2990 = vadd.f32 %v2986, %v2988
    %v2991 = vmul.f32 %v2885, %v2945
    %v2992 = vmul.f32 %v2886, %v2946
    %v2993 = vadd.f32 %v2989, %v2991
    %v2994 = vadd.f32 %v2990, %v2992
    %v2995 = vmul.f32 %v2891, %v2953
    %v2996 = vmul.f32 %v2892, %v2954
    %v2997 = vadd.f32 %v2993, %v2995
    %v2998 = vadd.f32 %v2994, %v2996
    %v2999 = vmul.f32 %v2897, %v2961
    %v3000 = vmul.f32 %v2898, %v2962
    %v3001 = vadd.f32 %v2997, %v2999
    %v3002 = vadd.f32 %v2998, %v3000
    %v3003 = vmul.f32 %v2345, %v2929
    %v3004 = vmul.f32 %v2346, %v2930
    %v3005 = vadd.f32 %v3003, 0.0
    %v3006 = vadd.f32 %v3004, 0.0
    %v3007 = vmul.f32 %v2359, %v2937
    %v3008 = vmul.f32 %v2360, %v2938
    %v3009 = vadd.f32 %v3005, %v3007
    %v3010 = vadd.f32 %v3006, %v3008
    %v3011 = vmul.f32 %v2373, %v2945
    %v3012 = vmul.f32 %v2374, %v2946
    %v3013 = vadd.f32 %v3009, %v3011
    %v3014 = vadd.f32 %v3010, %v3012
    %v3015 = vmul.f32 %v2387, %v2953
    %v3016 = vmul.f32 %v2388, %v2954
    %v3017 = vadd.f32 %v3013, %v3015
    %v3018 = vadd.f32 %v3014, %v3016
    %v3019 = vmul.f32 %v2401, %v2961
    %v3020 = vmul.f32 %v2402, %v2962
    %v3021 = vadd.f32 %v3017, %v3019
    %v3022 = vadd.f32 %v3018, %v3020
    %v3023 = vmul.f32 %v2901, %v2921
    %v3024 = vmul.f32 %v2902, %v2922
    %v3025 = vmul.f32 %v2911, %v2911
    %v3026 = vmul.f32 %v2912, %v2912
    %v3027 = vsub.f32 %v3023, %v3025
    %v3028 = vsub.f32 %v3024, %v3026
    %v3029 = vmul.f32 %v2861, %v2921
    %v3030 = vmul.f32 %v2862, %v2922
    %v3031 = vmul.f32 %v2911, %v2871
    %v3032 = vmul.f32 %v2912, %v2872
    %v3033 = vsub.f32 %v3029, %v3031
    %v3034 = vsub.f32 %v3030, %v3032
    %v3035 = vmul.f32 %v2861, %v2911
    %v3036 = vmul.f32 %v2862, %v2912
    %v3037 = vmul.f32 %v2901, %v2871
    %v3038 = vmul.f32 %v2902, %v2872
    %v3039 = vsub.f32 %v3035, %v3037
    %v3040 = vsub.f32 %v3036, %v3038
    %v3041 = vmul.f32 %v2841, %v3027
    %v3042 = vmul.f32 %v2842, %v3028
    %v3043 = vmul.f32 %v2861, %v3033
    %v3044 = vmul.f32 %v2862, %v3034
    %v3045 = vsub.f32 %v3041, %v3043
    %v3046 = vsub.f32 %v3042, %v3044
    %v3047 = vmul.f32 %v2871, %v3039
    %v3048 = vmul.f32 %v2872, %v3040
    %v3049 = vadd.f32 %v3045, %v3047
    %v3050 = vadd.f32 %v3046, %v3048
    %v3051 = vand.u32 2147483647, %v2841
    %v3052 = vand.u32 2147483647, %v2842
    %v3053 = vand.u32 2147483647, %v3023
    %v3054 = vand.u32 2147483647, %v3024
    %v3055 = vadd.f32 %v3053, %v3025
    %v3056 = vadd.f32 %v3054, %v3026
    %v3057 = vmul.f32 %v3051, %v3055
    %v3058 = vmul.f32 %v3052, %v3056
    %v3059 = vand.u32 2147483647, %v2861
    %v3060 = vand.u32 2147483647, %v2862
    %v3061 = vand.u32 2147483647, %v3029
    %v3062 = vand.u32 2147483647, %v3030
    %v3063 = vand.u32 2147483647, %v3031
    %v3064 = vand.u32 2147483647, %v3032
    %v3065 = vadd.f32 %v3061, %v3063
    %v3066 = vadd.f32 %v3062, %v3064
    %v3067 = vmul.f32 %v3059, %v3065
    %v3068 = vmul.f32 %v3060, %v3066
    %v3069 = vadd.f32 %v3057, %v3067
    %v3070 = vadd.f32 %v3058, %v3068
    %v3071 = vand.u32 2147483647, %v2871
    %v3072 = vand.u32 2147483647, %v2872
    %v3073 = vand.u32 2147483647, %v3035
    %v3074 = vand.u32 2147483647, %v3036
    %v3075 = vand.u32 2147483647, %v3037
    %v3076 = vand.u32 2147483647, %v3038
    %v3077 = vadd.f32 %v3073, %v3075
    %v3078 = vadd.f32 %v3074, %v3076
    %v3079 = vmul.f32 %v3071, %v3077
    %v3080 = vmul.f32 %v3072, %v3078
    %v3081 = vadd.f32 %v3069, %v3079
    %v3082 = vadd.f32 %v3070, %v3080
    %vm3083 = vcmp.ge.f32.partialorder %v2921, 2.5
    %vm3084 = vcmp.ge.f32.partialorder %v2922, 2.5
    %v3085 = vand.u32 2147483647, %v3049
    %v3086 = vand.u32 2147483647, %v3050
    %v3087 = vmul.f32 %v3081, 1e-06
    %v3088 = vmul.f32 %v3082, 1e-06
    %vm3089 = vcmp.gt.f32.partialorder %v3085, %v3087
    %vm3090 = vcmp.gt.f32.partialorder %v3086, %v3088
    %vm3091 = vmand %vm3083, %vm3089
    %vm3092 = vmand %vm3084, %vm3090
    %v3093 = vsel %vm3091, %v3049, 1.0
    %v3094 = vsel %vm3092, %v3050, 1.0
    %v3095 = vrcp.pop %v3093
    %v3096 = vmul.f32 1.0, %v3095
    %v3097 = vrcp.pop %v3094
    %v3098 = vmul.f32 1.0, %v3097
    %v3099 = vmul.f32 %v2981, %v3027
    %v3100 = vmul.f32 %v2982, %v3028
    %v3101 = vmul.f32 %v3001, %v2921
    %v3102 = vmul.f32 %v3002, %v2922
    %v3103 = vmul.f32 %v2911, %v3021
    %v3104 = vmul.f32 %v2912, %v3022
    %v3105 = vsub.f32 %v3101, %v3103
    %v3106 = vsub.f32 %v3102, %v3104
    %v3107 = vmul.f32 %v2861, %v3105
    %v3108 = vmul.f32 %v2862, %v3106
    %v3109 = vsub.f32 %v3099, %v3107
    %v3110 = vsub.f32 %v3100, %v3108
    %v3111 = vmul.f32 %v3001, %v2911
    %v3112 = vmul.f32 %v3002, %v2912
    %v3113 = vmul.f32 %v2901, %v3021
    %v3114 = vmul.f32 %v2902, %v3022
    %v3115 = vsub.f32 %v3111, %v3113
    %v3116 = vsub.f32 %v3112, %v3114
    %v3117 = vmul.f32 %v2871, %v3115
    %v3118 = vmul.f32 %v2872, %v3116
    %v3119 = vadd.f32 %v3109, %v3117
    %v3120 = vadd.f32 %v3110, %v3118
    %v3121 = vmul.f32 %v3119, %v3096
    %v3122 = vmul.f32 %v3120, %v3098
    %v3123 = vmul.f32 %v2841, %v3105
    %v3124 = vmul.f32 %v2842, %v3106
    %v3125 = vmul.f32 %v2981, %v3033
    %v3126 = vmul.f32 %v2982, %v3034
    %v3127 = vsub.f32 %v3123, %v3125
    %v3128 = vsub.f32 %v3124, %v3126
    %v3129 = vmul.f32 %v2861, %v3021
    %v3130 = vmul.f32 %v2862, %v3022
    %v3131 = vmul.f32 %v3001, %v2871
    %v3132 = vmul.f32 %v3002, %v2872
    %v3133 = vsub.f32 %v3129, %v3131
    %v3134 = vsub.f32 %v3130, %v3132
    %v3135 = vmul.f32 %v2871, %v3133
    %v3136 = vmul.f32 %v2872, %v3134
    %v3137 = vadd.f32 %v3127, %v3135
    %v3138 = vadd.f32 %v3128, %v3136
    %v3139 = vmul.f32 %v3137, %v3096
    %v3140 = vmul.f32 %v3138, %v3098
    %v3141 = vsub.f32 %v3113, %v3111
    %v3142 = vsub.f32 %v3114, %v3112
    %v3143 = vmul.f32 %v2841, %v3141
    %v3144 = vmul.f32 %v2842, %v3142
    %v3145 = vmul.f32 %v2861, %v3133
    %v3146 = vmul.f32 %v2862, %v3134
    %v3147 = vsub.f32 %v3143, %v3145
    %v3148 = vsub.f32 %v3144, %v3146
    %v3149 = vmul.f32 %v2981, %v3039
    %v3150 = vmul.f32 %v2982, %v3040
    %v3151 = vadd.f32 %v3147, %v3149
    %v3152 = vadd.f32 %v3148, %v3150
    %v3153 = vmul.f32 %v3151, %v3096
    %v3154 = vmul.f32 %v3152, %v3098
    %v3155 = vmul.f32 %v3121, %v3121
    %v3156 = vmul.f32 %v3122, %v3122
    %v3157 = vmul.f32 %v3139, %v3139
    %v3158 = vmul.f32 %v3140, %v3140
    %v3159 = vadd.f32 %v3155, %v3157
    %v3160 = vadd.f32 %v3156, %v3158
    %v3161 = vmul.f32 %v3153, 4.0
    %v3162 = vmul.f32 %v3154, 4.0
    %v3163 = vsub.f32 %v3159, %v3161
    %v3164 = vsub.f32 %v3160, %v3162
    %v3165 = vmax.f32 %v3163, 0.0
    %v3166 = vmax.f32 %v3164, 0.0
    %v3167 = vrsqrt.pop %v3165
    %v3168 = vmul.f32 %v3165, %v3167
    %vm3169 = vcmp.eq.f32.partialorder %v3165, inf
    %v3170 = vsel %vm3169, %v3165, %v3168
    %vm3171 = vcmp.eq.f32.partialorder %v3165, 0.0
    %v3172 = vand.u32 %v3165, 2147483648
    %v3173 = vsel %vm3171, %v3172, %v3170
    %v3174 = vrsqrt.pop %v3166
    %v3175 = vmul.f32 %v3166, %v3174
    %vm3176 = vcmp.eq.f32.partialorder %v3166, inf
    %v3177 = vsel %vm3176, %v3166, %v3175
    %vm3178 = vcmp.eq.f32.partialorder %v3166, 0.0
    %v3179 = vand.u32 %v3166, 2147483648
    %v3180 = vsel %vm3178, %v3179, %v3177
    %v3181 = vrcp.pop 200.0
    %v3182 = vmul.f32 %v3173, %v3181
    %v3183 = vmul.f32 %v3180, %v3181
    %v3184 = vsel %vm3091, %v3182, 0.0
    %v3185 = vsel %vm3092, %v3183, 0.0
    %vm3186 = vcmp.gt.f32.partialorder %v2401, 0.5
    %vm3187 = vcmp.gt.f32.partialorder %v2402, 0.5
    %v3188 = vsel %vm3186, %v2421, %v2405
    %v3189 = vsel %vm3187, %v2422, %v2406
    %v3190 = vsel %vm3186, %v2441, %v2425
    %v3191 = vsel %vm3187, %v2442, %v2426
    %v3192 = vsel %vm3186, %v2461, %v2445
    %v3193 = vsel %vm3187, %v2462, %v2446
    %vm3194 = vcmp.gt.f32.partialorder %v2387, 0.5
    %vm3195 = vcmp.gt.f32.partialorder %v2388, 0.5
    %v3196 = vsel %vm3194, %v2417, %v3188
    %v3197 = vsel %vm3195, %v2418, %v3189
    %v3198 = vsel %vm3194, %v2437, %v3190
    %v3199 = vsel %vm3195, %v2438, %v3191
    %v3200 = vsel %vm3194, %v2457, %v3192
    %v3201 = vsel %vm3195, %v2458, %v3193
    %vm3202 = vcmp.gt.f32.partialorder %v2373, 0.5
    %vm3203 = vcmp.gt.f32.partialorder %v2374, 0.5
    %v3204 = vsel %vm3202, %v2413, %v3196
    %v3205 = vsel %vm3203, %v2414, %v3197
    %v3206 = vsel %vm3202, %v2433, %v3198
    %v3207 = vsel %vm3203, %v2434, %v3199
    %v3208 = vsel %vm3202, %v2453, %v3200
    %v3209 = vsel %vm3203, %v2454, %v3201
    %vm3210 = vcmp.gt.f32.partialorder %v2359, 0.5
    %vm3211 = vcmp.gt.f32.partialorder %v2360, 0.5
    %v3212 = vsel %vm3210, %v2409, %v3204
    %v3213 = vsel %vm3211, %v2410, %v3205
    %v3214 = vsel %vm3210, %v2429, %v3206
    %v3215 = vsel %vm3211, %v2430, %v3207
    %v3216 = vsel %vm3210, %v2449, %v3208
    %v3217 = vsel %vm3211, %v2450, %v3209
    %vm3218 = vcmp.gt.f32.partialorder %v2345, 0.5
    %vm3219 = vcmp.gt.f32.partialorder %v2346, 0.5
    %v3220 = vsel %vm3218, %v2405, %v3212
    %v3221 = vsel %vm3219, %v2406, %v3213
    %v3222 = vsel %vm3218, %v2425, %v3214
    %v3223 = vsel %vm3219, %v2426, %v3215
    %v3224 = vsel %vm3218, %v2445, %v3216
    %v3225 = vsel %vm3219, %v2446, %v3217
    %v3226 = vsel %vm3218, %v2405, %v2421
    %v3227 = vsel %vm3219, %v2406, %v2422
    %v3228 = vsel %vm3218, %v2425, %v2441
    %v3229 = vsel %vm3219, %v2426, %v2442
    %v3230 = vsel %vm3218, %v2445, %v2461
    %v3231 = vsel %vm3219, %v2446, %v2462
    %v3232 = vsel %vm3210, %v2409, %v3226
    %v3233 = vsel %vm3211, %v2410, %v3227
    %v3234 = vsel %vm3210, %v2429, %v3228
    %v3235 = vsel %vm3211, %v2430, %v3229
    %v3236 = vsel %vm3210, %v2449, %v3230
    %v3237 = vsel %vm3211, %v2450, %v3231
    %v3238 = vsel %vm3202, %v2413, %v3232
    %v3239 = vsel %vm3203, %v2414, %v3233
    %v3240 = vsel %vm3202, %v2433, %v3234
    %v3241 = vsel %vm3203, %v2434, %v3235
    %v3242 = vsel %vm3202, %v2453, %v3236
    %v3243 = vsel %vm3203, %v2454, %v3237
    %v3244 = vsel %vm3194, %v2417, %v3238
    %v3245 = vsel %vm3195, %v2418, %v3239
    %v3246 = vsel %vm3194, %v2437, %v3240
    %v3247 = vsel %vm3195, %v2438, %v3241
    %v3248 = vsel %vm3194, %v2457, %v3242
    %v3249 = vsel %vm3195, %v2458, %v3243
    %v3250 = vsel %vm3186, %v2421, %v3244
    %v3251 = vsel %vm3187, %v2422, %v3245
    %v3252 = vsel %vm3186, %v2441, %v3246
    %v3253 = vsel %vm3187, %v2442, %v3247
    %v3254 = vsel %vm3186, %v2461, %v3248
    %v3255 = vsel %vm3187, %v2462, %v3249
    %v3256 = vsub.f32 %v3254, %v3224
    %v3257 = vsub.f32 %v3255, %v3225
    %v3258 = vrcp.pop 100.0
    %v3259 = vmul.f32 %v3256, %v3258
    %v3260 = vmul.f32 %v3257, %v3258
    %v3261 = vsub.f32 %v3250, %v3220
    %v3262 = vsub.f32 %v3251, %v3221
    %v3263 = vmul.f32 %v3261, %v3261
    %v3264 = vmul.f32 %v3262, %v3262
    %v3265 = vsub.f32 %v3252, %v3222
    %v3266 = vsub.f32 %v3253, %v3223
    %v3267 = vmul.f32 %v3265, %v3265
    %v3268 = vmul.f32 %v3266, %v3266
    %v3269 = vadd.f32 %v3263, %v3267
    %v3270 = vadd.f32 %v3264, %v3268
    %v3271 = vrcp.pop 10000.0
    %v3272 = vmul.f32 %v3269, %v3271
    %v3273 = vmul.f32 %v3270, %v3271
    %v3274 = vmul.f32 %v3184, 2.0
    %v3275 = vmul.f32 %v3185, 2.0
    %v3276 = vmul.f32 %v3274, %v3184
    %v3277 = vmul.f32 %v3275, %v3185
    %v3278 = vsub.f32 %v3276, %v3272
    %v3279 = vsub.f32 %v3277, %v3273
    %v3280 = vadd.f32 %v3276, 1e-08
    %v3281 = vadd.f32 %v3277, 1e-08
    %v3282 = vrcp.pop %v3280
    %v3283 = vmul.f32 %v3278, %v3282
    %v3284 = vrcp.pop %v3281
    %v3285 = vmul.f32 %v3279, %v3284
    %vm3286 = vcmp.le.f32.partialorder %v3283, -0.999999
    %vm3287 = vcmp.le.f32.partialorder %v3285, -0.999999
    %vm3288 = vcmp.ge.f32.partialorder %v3283, 0.999999
    %vm3289 = vcmp.ge.f32.partialorder %v3285, 0.999999
    %v3290 = vsel %vm3288, 0.999999, %v3283
    %v3291 = vsel %vm3289, 0.999999, %v3285
    %v3292 = vsel %vm3286, -0.999999, %v3290
    %v3293 = vsel %vm3287, -0.999999, %v3291
    %v3294 = vmul.f32 %v3292, %v3292
    %v3295 = vmul.f32 %v3293, %v3293
    %v3296 = vsub.f32 1.0, %v3294
    %v3297 = vsub.f32 1.0, %v3295
    %v3298 = vmax.f32 %v3296, 1e-12
    %v3299 = vmax.f32 %v3297, 1e-12
    %v3300 = vrsqrt.pop %v3298
    %v3301 = vmul.f32 %v3298, %v3300
    %vm3302 = vcmp.eq.f32.partialorder %v3298, inf
    %v3303 = vsel %vm3302, %v3298, %v3301
    %vm3304 = vcmp.eq.f32.partialorder %v3298, 0.0
    %v3305 = vand.u32 %v3298, 2147483648
    %v3306 = vsel %vm3304, %v3305, %v3303
    %v3307 = vrsqrt.pop %v3299
    %v3308 = vmul.f32 %v3299, %v3307
    %vm3309 = vcmp.eq.f32.partialorder %v3299, inf
    %v3310 = vsel %vm3309, %v3299, %v3308
    %vm3311 = vcmp.eq.f32.partialorder %v3299, 0.0
    %v3312 = vand.u32 %v3299, 2147483648
    %v3313 = vsel %vm3311, %v3312, %v3310
    %v3314 = vrcp.pop %v3306
    %v3315 = vmul.f32 %v3292, %v3314
    %v3316 = vrcp.pop %v3313
    %v3317 = vmul.f32 %v3293, %v3316
    %v3318 = vand.u32 2147483647, %v3315
    %v3319 = vand.u32 2147483647, %v3317
    %vm3320 = vcmp.gt.f32.partialorder %v3315, 0.0
    %vm3321 = vcmp.gt.f32.partialorder %v3317, 0.0
    %vm3322 = vcmp.lt.f32.partialorder %v3315, 0.0
    %vm3323 = vcmp.lt.f32.partialorder %v3317, 0.0
    %v3324 = vsel %vm3322, -1.0, 0.0
    %v3325 = vsel %vm3323, -1.0, 0.0
    %v3326 = vsel %vm3320, 1.0, %v3324
    %v3327 = vsel %vm3321, 1.0, %v3325
    %vm3328 = vcmp.gt.f32.partialorder %v3318, 2.4142137
    %vm3329 = vcmp.gt.f32.partialorder %v3319, 2.4142137
    %vm3330 = vcmp.gt.f32.partialorder %v3318, 0.41421357
    %vm3331 = vcmp.gt.f32.partialorder %v3319, 0.41421357
    %v3332 = vsel %vm3330, 0.7853982, 0.0
    %v3333 = vsel %vm3331, 0.7853982, 0.0
    %v3334 = vsel %vm3328, 1.5707964, %v3332
    %v3335 = vsel %vm3329, 1.5707964, %v3333
    %v3336 = vmax.f32 %v3318, 1e-30
    %v3337 = vmax.f32 %v3319, 1e-30
    %v3338 = vrcp.pop %v3336
    %v3339 = vmul.f32 -1.0, %v3338
    %v3340 = vrcp.pop %v3337
    %v3341 = vmul.f32 -1.0, %v3340
    %v3342 = vsub.f32 %v3318, 1.0
    %v3343 = vsub.f32 %v3319, 1.0
    %v3344 = vadd.f32 %v3318, 1.0
    %v3345 = vadd.f32 %v3319, 1.0
    %v3346 = vrcp.pop %v3344
    %v3347 = vmul.f32 %v3342, %v3346
    %v3348 = vrcp.pop %v3345
    %v3349 = vmul.f32 %v3343, %v3348
    %v3350 = vsel %vm3330, %v3347, %v3318
    %v3351 = vsel %vm3331, %v3349, %v3319
    %v3352 = vsel %vm3328, %v3339, %v3350
    %v3353 = vsel %vm3329, %v3341, %v3351
    %v3354 = vmul.f32 %v3352, %v3352
    %v3355 = vmul.f32 %v3353, %v3353
    %v3356 = vmul.f32 %v3354, 0.080537446
    %v3357 = vmul.f32 %v3355, 0.080537446
    %v3358 = vsub.f32 %v3356, 0.13877685
    %v3359 = vsub.f32 %v3357, 0.13877685
    %v3360 = vmul.f32 %v3358, %v3354
    %v3361 = vmul.f32 %v3359, %v3355
    %v3362 = vadd.f32 %v3360, 0.19977711
    %v3363 = vadd.f32 %v3361, 0.19977711
    %v3364 = vmul.f32 %v3362, %v3354
    %v3365 = vmul.f32 %v3363, %v3355
    %v3366 = vsub.f32 %v3364, 0.3333295
    %v3367 = vsub.f32 %v3365, 0.3333295
    %v3368 = vmul.f32 %v3366, %v3354
    %v3369 = vmul.f32 %v3367, %v3355
    %v3370 = vmul.f32 %v3368, %v3352
    %v3371 = vmul.f32 %v3369, %v3353
    %v3372 = vadd.f32 %v3370, %v3352
    %v3373 = vadd.f32 %v3371, %v3353
    %v3374 = vadd.f32 %v3334, %v3372
    %v3375 = vadd.f32 %v3335, %v3373
    %v3376 = vmul.f32 %v3326, %v3374
    %v3377 = vmul.f32 %v3327, %v3375
    %v3378 = vsub.f32 1.5707964, %v3376
    %v3379 = vsub.f32 1.5707964, %v3377
    %v3380 = vrcp.pop %v3378
    %v3381 = vmul.f32 %v3259, %v3380
    %v3382 = vrcp.pop %v3379
    %v3383 = vmul.f32 %v3260, %v3382
    %v3384 = vsub.f32 %v2409, %v2405
    %v3385 = vsub.f32 %v2410, %v2406
    %v3386 = vmul.f32 %v3384, %v3384
    %v3387 = vmul.f32 %v3385, %v3385
    %v3388 = vsub.f32 %v2429, %v2425
    %v3389 = vsub.f32 %v2430, %v2426
    %v3390 = vmul.f32 %v3388, %v3388
    %v3391 = vmul.f32 %v3389, %v3389
    %v3392 = vadd.f32 %v3386, %v3390
    %v3393 = vadd.f32 %v3387, %v3391
    %v3394 = vsub.f32 %v2449, %v2445
    %v3395 = vsub.f32 %v2450, %v2446
    %v3396 = vmul.f32 %v3394, %v3394
    %v3397 = vmul.f32 %v3395, %v3395
    %v3398 = vadd.f32 %v3392, %v3396
    %v3399 = vadd.f32 %v3393, %v3397
    %v3400 = vrsqrt.pop %v3398
    %v3401 = vmul.f32 %v3398, %v3400
    %vm3402 = vcmp.eq.f32.partialorder %v3398, inf
    %v3403 = vsel %vm3402, %v3398, %v3401
    %vm3404 = vcmp.eq.f32.partialorder %v3398, 0.0
    %v3405 = vand.u32 %v3398, 2147483648
    %v3406 = vsel %vm3404, %v3405, %v3403
    %v3407 = vrsqrt.pop %v3399
    %v3408 = vmul.f32 %v3399, %v3407
    %vm3409 = vcmp.eq.f32.partialorder %v3399, inf
    %v3410 = vsel %vm3409, %v3399, %v3408
    %vm3411 = vcmp.eq.f32.partialorder %v3399, 0.0
    %v3412 = vand.u32 %v3399, 2147483648
    %v3413 = vsel %vm3411, %v3412, %v3410
    %v3414 = vsub.f32 %v2413, %v2409
    %v3415 = vsub.f32 %v2414, %v2410
    %v3416 = vmul.f32 %v3414, %v3414
    %v3417 = vmul.f32 %v3415, %v3415
    %v3418 = vsub.f32 %v2433, %v2429
    %v3419 = vsub.f32 %v2434, %v2430
    %v3420 = vmul.f32 %v3418, %v3418
    %v3421 = vmul.f32 %v3419, %v3419
    %v3422 = vadd.f32 %v3416, %v3420
    %v3423 = vadd.f32 %v3417, %v3421
    %v3424 = vsub.f32 %v2453, %v2449
    %v3425 = vsub.f32 %v2454, %v2450
    %v3426 = vmul.f32 %v3424, %v3424
    %v3427 = vmul.f32 %v3425, %v3425
    %v3428 = vadd.f32 %v3422, %v3426
    %v3429 = vadd.f32 %v3423, %v3427
    %v3430 = vrsqrt.pop %v3428
    %v3431 = vmul.f32 %v3428, %v3430
    %vm3432 = vcmp.eq.f32.partialorder %v3428, inf
    %v3433 = vsel %vm3432, %v3428, %v3431
    %vm3434 = vcmp.eq.f32.partialorder %v3428, 0.0
    %v3435 = vand.u32 %v3428, 2147483648
    %v3436 = vsel %vm3434, %v3435, %v3433
    %v3437 = vrsqrt.pop %v3429
    %v3438 = vmul.f32 %v3429, %v3437
    %vm3439 = vcmp.eq.f32.partialorder %v3429, inf
    %v3440 = vsel %vm3439, %v3429, %v3438
    %vm3441 = vcmp.eq.f32.partialorder %v3429, 0.0
    %v3442 = vand.u32 %v3429, 2147483648
    %v3443 = vsel %vm3441, %v3442, %v3440
    %v3444 = vsub.f32 %v2417, %v2413
    %v3445 = vsub.f32 %v2418, %v2414
    %v3446 = vmul.f32 %v3444, %v3444
    %v3447 = vmul.f32 %v3445, %v3445
    %v3448 = vsub.f32 %v2437, %v2433
    %v3449 = vsub.f32 %v2438, %v2434
    %v3450 = vmul.f32 %v3448, %v3448
    %v3451 = vmul.f32 %v3449, %v3449
    %v3452 = vadd.f32 %v3446, %v3450
    %v3453 = vadd.f32 %v3447, %v3451
    %v3454 = vsub.f32 %v2457, %v2453
    %v3455 = vsub.f32 %v2458, %v2454
    %v3456 = vmul.f32 %v3454, %v3454
    %v3457 = vmul.f32 %v3455, %v3455
    %v3458 = vadd.f32 %v3452, %v3456
    %v3459 = vadd.f32 %v3453, %v3457
    %v3460 = vrsqrt.pop %v3458
    %v3461 = vmul.f32 %v3458, %v3460
    %vm3462 = vcmp.eq.f32.partialorder %v3458, inf
    %v3463 = vsel %vm3462, %v3458, %v3461
    %vm3464 = vcmp.eq.f32.partialorder %v3458, 0.0
    %v3465 = vand.u32 %v3458, 2147483648
    %v3466 = vsel %vm3464, %v3465, %v3463
    %v3467 = vrsqrt.pop %v3459
    %v3468 = vmul.f32 %v3459, %v3467
    %vm3469 = vcmp.eq.f32.partialorder %v3459, inf
    %v3470 = vsel %vm3469, %v3459, %v3468
    %vm3471 = vcmp.eq.f32.partialorder %v3459, 0.0
    %v3472 = vand.u32 %v3459, 2147483648
    %v3473 = vsel %vm3471, %v3472, %v3470
    %v3474 = vsub.f32 %v2421, %v2417
    %v3475 = vsub.f32 %v2422, %v2418
    %v3476 = vmul.f32 %v3474, %v3474
    %v3477 = vmul.f32 %v3475, %v3475
    %v3478 = vsub.f32 %v2441, %v2437
    %v3479 = vsub.f32 %v2442, %v2438
    %v3480 = vmul.f32 %v3478, %v3478
    %v3481 = vmul.f32 %v3479, %v3479
    %v3482 = vadd.f32 %v3476, %v3480
    %v3483 = vadd.f32 %v3477, %v3481
    %v3484 = vsub.f32 %v2461, %v2457
    %v3485 = vsub.f32 %v2462, %v2458
    %v3486 = vmul.f32 %v3484, %v3484
    %v3487 = vmul.f32 %v3485, %v3485
    %v3488 = vadd.f32 %v3482, %v3486
    %v3489 = vadd.f32 %v3483, %v3487
    %v3490 = vrsqrt.pop %v3488
    %v3491 = vmul.f32 %v3488, %v3490
    %vm3492 = vcmp.eq.f32.partialorder %v3488, inf
    %v3493 = vsel %vm3492, %v3488, %v3491
    %vm3494 = vcmp.eq.f32.partialorder %v3488, 0.0
    %v3495 = vand.u32 %v3488, 2147483648
    %v3496 = vsel %vm3494, %v3495, %v3493
    %v3497 = vrsqrt.pop %v3489
    %v3498 = vmul.f32 %v3489, %v3497
    %vm3499 = vcmp.eq.f32.partialorder %v3489, inf
    %v3500 = vsel %vm3499, %v3489, %v3498
    %vm3501 = vcmp.eq.f32.partialorder %v3489, 0.0
    %v3502 = vand.u32 %v3489, 2147483648
    %v3503 = vsel %vm3501, %v3502, %v3500
    %v3504 = vsub.f32 %v2421, %v2405
    %v3505 = vsub.f32 %v2422, %v2406
    %v3506 = vmul.f32 %v3504, %v3504
    %v3507 = vmul.f32 %v3505, %v3505
    %v3508 = vsub.f32 %v2441, %v2425
    %v3509 = vsub.f32 %v2442, %v2426
    %v3510 = vmul.f32 %v3508, %v3508
    %v3511 = vmul.f32 %v3509, %v3509
    %v3512 = vadd.f32 %v3506, %v3510
    %v3513 = vadd.f32 %v3507, %v3511
    %v3514 = vsub.f32 %v2461, %v2445
    %v3515 = vsub.f32 %v2462, %v2446
    %v3516 = vmul.f32 %v3514, %v3514
    %v3517 = vmul.f32 %v3515, %v3515
    %v3518 = vadd.f32 %v3512, %v3516
    %v3519 = vadd.f32 %v3513, %v3517
    %v3520 = vrsqrt.pop %v3518
    %v3521 = vmul.f32 %v3518, %v3520
    %vm3522 = vcmp.eq.f32.partialorder %v3518, inf
    %v3523 = vsel %vm3522, %v3518, %v3521
    %vm3524 = vcmp.eq.f32.partialorder %v3518, 0.0
    %v3525 = vand.u32 %v3518, 2147483648
    %v3526 = vsel %vm3524, %v3525, %v3523
    %v3527 = vrsqrt.pop %v3519
    %v3528 = vmul.f32 %v3519, %v3527
    %vm3529 = vcmp.eq.f32.partialorder %v3519, inf
    %v3530 = vsel %vm3529, %v3519, %v3528
    %vm3531 = vcmp.eq.f32.partialorder %v3519, 0.0
    %v3532 = vand.u32 %v3519, 2147483648
    %v3533 = vsel %vm3531, %v3532, %v3530
    %v3534 = vsub.f32 %v2601, %v2531
    %v3535 = vsub.f32 %v2602, %v2532
    %v3536 = vsub.f32 %v2671, %v2601
    %v3537 = vsub.f32 %v2672, %v2602
    %v3538 = vsub.f32 %v2741, %v2671
    %v3539 = vsub.f32 %v2742, %v2672
    %v3540 = vsub.f32 %v2811, %v2741
    %v3541 = vsub.f32 %v2812, %v2742
    %v3542 = vsel %vm1001, %v2405, 0.0
    %v3543 = vsel %vm1001, %v2406, 0.0
    %v3544 = vadd.f32 %v3542, 0.0
    %v3545 = vadd.f32 %v3543, 0.0
    %v3546 = vsel %vm1013, %v2425, 0.0
    %v3547 = vsel %vm1013, %v2426, 0.0
    %v3548 = vadd.f32 %v3544, %v3546
    %v3549 = vadd.f32 %v3545, %v3547
    %v3550 = vsel %vm1024, %v2445, 0.0
    %v3551 = vsel %vm1024, %v2446, 0.0
    %v3552 = vadd.f32 %v3548, %v3550
    %v3553 = vadd.f32 %v3549, %v3551
    %v3554 = vsel %vm1077, %v2409, 0.0
    %v3555 = vsel %vm1077, %v2410, 0.0
    %v3556 = vadd.f32 %v3552, %v3554
    %v3557 = vadd.f32 %v3553, %v3555
    %v3558 = vsel %vm1088, %v2429, 0.0
    %v3559 = vsel %vm1088, %v2430, 0.0
    %v3560 = vadd.f32 %v3556, %v3558
    %v3561 = vadd.f32 %v3557, %v3559
    %v3562 = vsel %vm1101, %v2449, 0.0
    %v3563 = vsel %vm1101, %v2450, 0.0
    %v3564 = vadd.f32 %v3560, %v3562
    %v3565 = vadd.f32 %v3561, %v3563
    %v3566 = vsel %vm1128, %v2413, 0.0
    %v3567 = vsel %vm1128, %v2414, 0.0
    %v3568 = vadd.f32 %v3564, %v3566
    %v3569 = vadd.f32 %v3565, %v3567
    %v3570 = vsel %vm1139, %v2433, 0.0
    %v3571 = vsel %vm1139, %v2434, 0.0
    %v3572 = vadd.f32 %v3568, %v3570
    %v3573 = vadd.f32 %v3569, %v3571
    %v3574 = vsel %vm1152, %v2453, 0.0
    %v3575 = vsel %vm1152, %v2454, 0.0
    %v3576 = vadd.f32 %v3572, %v3574
    %v3577 = vadd.f32 %v3573, %v3575
    %v3578 = vsel %vm1285, %v2417, 0.0
    %v3579 = vsel %vm1285, %v2418, 0.0
    %v3580 = vadd.f32 %v3576, %v3578
    %v3581 = vadd.f32 %v3577, %v3579
    %v3582 = vsel %vm1296, %v2437, 0.0
    %v3583 = vsel %vm1296, %v2438, 0.0
    %v3584 = vadd.f32 %v3580, %v3582
    %v3585 = vadd.f32 %v3581, %v3583
    %v3586 = vsel %vm1309, %v2457, 0.0
    %v3587 = vsel %vm1309, %v2458, 0.0
    %v3588 = vadd.f32 %v3584, %v3586
    %v3589 = vadd.f32 %v3585, %v3587
    %v3590 = vsel %vm1336, %v2421, 0.0
    %v3591 = vsel %vm1336, %v2422, 0.0
    %v3592 = vadd.f32 %v3588, %v3590
    %v3593 = vadd.f32 %v3589, %v3591
    %v3594 = vsel %vm1347, %v2441, 0.0
    %v3595 = vsel %vm1347, %v2442, 0.0
    %v3596 = vadd.f32 %v3592, %v3594
    %v3597 = vadd.f32 %v3593, %v3595
    %v3598 = vsel %vm1360, %v2461, 0.0
    %v3599 = vsel %vm1360, %v2462, 0.0
    %v3600 = vadd.f32 %v3596, %v3598
    %v3601 = vadd.f32 %v3597, %v3599
    %v3602 = vsel %vm1387, %v3406, 0.0
    %v3603 = vsel %vm1387, %v3413, 0.0
    %v3604 = vadd.f32 %v3600, %v3602
    %v3605 = vadd.f32 %v3601, %v3603
    %v3606 = vsel %vm1398, %v3436, 0.0
    %v3607 = vsel %vm1398, %v3443, 0.0
    %v3608 = vadd.f32 %v3604, %v3606
    %v3609 = vadd.f32 %v3605, %v3607
    %v3610 = vsel %vm1411, %v3466, 0.0
    %v3611 = vsel %vm1411, %v3473, 0.0
    %v3612 = vadd.f32 %v3608, %v3610
    %v3613 = vadd.f32 %v3609, %v3611
    %v3614 = vsel %vm1544, %v3496, 0.0
    %v3615 = vsel %vm1544, %v3503, 0.0
    %v3616 = vadd.f32 %v3612, %v3614
    %v3617 = vadd.f32 %v3613, %v3615
    %v3618 = vsel %vm1568, %v3526, 0.0
    %v3619 = vsel %vm1568, %v3533, 0.0
    %v3620 = vadd.f32 %v3616, %v3618
    %v3621 = vadd.f32 %v3617, %v3619
    %v3622 = vsel %vm1595, %v3534, 0.0
    %v3623 = vsel %vm1595, %v3535, 0.0
    %v3624 = vadd.f32 %v3620, %v3622
    %v3625 = vadd.f32 %v3621, %v3623
    %v3626 = vsel %vm1606, %v3536, 0.0
    %v3627 = vsel %vm1606, %v3537, 0.0
    %v3628 = vadd.f32 %v3624, %v3626
    %v3629 = vadd.f32 %v3625, %v3627
    %v3630 = vsel %vm1619, %v3538, 0.0
    %v3631 = vsel %vm1619, %v3539, 0.0
    %v3632 = vadd.f32 %v3628, %v3630
    %v3633 = vadd.f32 %v3629, %v3631
    %v3634 = vsel %vm1646, %v3540, 0.0
    %v3635 = vsel %vm1646, %v3541, 0.0
    %v3636 = vadd.f32 %v3632, %v3634
    %v3637 = vadd.f32 %v3633, %v3635
    %v3638 = vsel %vm1814, %v3184, 0.0
    %v3639 = vsel %vm1814, %v3185, 0.0
    %v3640 = vadd.f32 %v3636, %v3638
    %v3641 = vadd.f32 %v3637, %v3639
    %v3642 = vsel %vm1827, %v3381, 0.0
    %v3643 = vsel %vm1827, %v3383, 0.0
    %v3644 = vadd.f32 %v3640, %v3642
    %v3645 = vadd.f32 %v3641, %v3643
    %v3646 = vmul.f32 %v3644, %v192
    %v3647 = vmul.f32 %v3645, %v404
    %v3648 = vpack.c.bf16 %v3647, %v3646
    %v3649 = vld [vmem:[%s4 + $0x110] sm:$0xff]
    %v3650 = vld [vmem:[%s4 + $0x118] sm:$0xff]
    %v3651 = vld [vmem:[%s4 + $0x120] sm:$0xff]
    %v3652 = vld [vmem:[%s4 + $0x128] sm:$0x3f]
    %v3653 = vpack.c.bf16 %v3650, %v3649
    %v3654 = vpack.c.bf16 %v3652, %v3651
    %v3655 = vld [vmem:[%s4 + $0x130] sm:$0x1]
    %v3656 = vlaneseq
    %v3657 = vshrl.u32 %v3656, 7
    %v3658 = vsub.s32 0, %v3657
    %v3659 = vrot.slane %v3655, %v3658
    %v3661 = vsel %vm60, %v3648, 0
    %v3664 = vsel %vm64, %v3654, 0
    %3666 = vmatprep.subr.bf16.mxu0 0
    %3667 = vmatpush1.bf16.msra.mxu0 %v3653
    %3668 = vmatprep.subr.bf16.mxu0 0
    %3669 = vmatpush1.bf16.msra.mxu0 %v3664
    %3670 = vmatprep.subr.bf16.mxu0 0
    %3671 = vmatpush1.bf16.msra.mxu0 0
    %3672 = vmatprep.subr.bf16.mxu0 0
    %3673 = vmatpush1.bf16.msra.mxu0 0
    %3674 = vmatprep.subr.bf16.mxu0 0
    %3675 = vmatpush1.bf16.msra.mxu0 0
    %3676 = vmatprep.subr.bf16.mxu0 0
    %3677 = vmatpush1.bf16.msra.mxu0 0
    %3678 = vmatprep.subr.bf16.mxu0 0
    %3679 = vmatpush1.bf16.msra.mxu0 0
    %3680 = vmatprep.subr.bf16.mxu0 0
    %3681 = vmatpush1.bf16.msra.mxu0 0
    %3682 = vmatprep.subr.bf16.mxu0 0
    %3683 = vmatpush1.bf16.msra.mxu0 0
    %3684 = vmatprep.subr.bf16.mxu0 0
    %3685 = vmatpush1.bf16.msra.mxu0 0
    %3686 = vmatprep.subr.bf16.mxu0 0
    %3687 = vmatpush1.bf16.msra.mxu0 0
    %3688 = vmatprep.subr.bf16.mxu0 0
    %3689 = vmatpush1.bf16.msra.mxu0 0
    %3690 = vmatprep.subr.bf16.mxu0 0
    %3691 = vmatpush1.bf16.msra.mxu0 0
    %3692 = vmatprep.subr.bf16.mxu0 0
    %3693 = vmatpush1.bf16.msra.mxu0 0
    %3694 = vmatprep.subr.bf16.mxu0 0
    %3695 = vmatpush1.bf16.msra.mxu0 0
    %3696 = vmatprep.subr.bf16.mxu0 0
    %3697 = vmatpush1.bf16.msra.mxu0 0
    %3698 = vmatprep.mubr.bf16.mxu0 0
    %3699 = vmatmul.mubr.bf16.gmra.mrb[0].mxu0 %v3661
    %v3700 = vpop.f32.mrb[0].mxu0
    %v3701 = vadd.f32 %v3659, %v3700
    %v3702 = vpop.f32.mrb[0].mxu0
    %v3703 = vpop.f32.mrb[0].mxu0
    %v3704 = vadd.f32 %v3659, %v3703
    %v3705 = vpop.f32.mrb[0].mxu0
    %3706 = vdwg.mxu0
    %v3707 = vtanh.pop %v3701
    %v3708 = vtanh.pop %v3704
    %v3709 = vld [vmem:[%s4 + $0x138] sm:$0xff]
    %v3710 = vld [vmem:[%s4 + $0x140] sm:$0xff]
    %v3711 = vld [vmem:[%s4 + $0x148] sm:$0xff]
    %v3712 = vld [vmem:[%s4 + $0x150] sm:$0x3f]
    %v3713 = vpack.c.bf16 %v3710, %v3709
    %v3714 = vpack.c.bf16 %v3712, %v3711
    %v3715 = vld [vmem:[%s4 + $0x158] sm:$0x1]
    %v3716 = vlaneseq
    %v3717 = vshrl.u32 %v3716, 7
    %v3718 = vsub.s32 0, %v3717
    %v3719 = vrot.slane %v3715, %v3718
    %v3721 = vsel %vm64, %v3714, 0
    %3723 = vmatprep.subr.bf16.mxu0 0
    %3724 = vmatpush1.bf16.msra.mxu0 %v3713
    %3725 = vmatprep.subr.bf16.mxu0 0
    %3726 = vmatpush1.bf16.msra.mxu0 %v3721
    %3727 = vmatprep.subr.bf16.mxu0 0
    %3728 = vmatpush1.bf16.msra.mxu0 0
    %3729 = vmatprep.subr.bf16.mxu0 0
    %3730 = vmatpush1.bf16.msra.mxu0 0
    %3731 = vmatprep.subr.bf16.mxu0 0
    %3732 = vmatpush1.bf16.msra.mxu0 0
    %3733 = vmatprep.subr.bf16.mxu0 0
    %3734 = vmatpush1.bf16.msra.mxu0 0
    %3735 = vmatprep.subr.bf16.mxu0 0
    %3736 = vmatpush1.bf16.msra.mxu0 0
    %3737 = vmatprep.subr.bf16.mxu0 0
    %3738 = vmatpush1.bf16.msra.mxu0 0
    %3739 = vmatprep.subr.bf16.mxu0 0
    %3740 = vmatpush1.bf16.msra.mxu0 0
    %3741 = vmatprep.subr.bf16.mxu0 0
    %3742 = vmatpush1.bf16.msra.mxu0 0
    %3743 = vmatprep.subr.bf16.mxu0 0
    %3744 = vmatpush1.bf16.msra.mxu0 0
    %3745 = vmatprep.subr.bf16.mxu0 0
    %3746 = vmatpush1.bf16.msra.mxu0 0
    %3747 = vmatprep.subr.bf16.mxu0 0
    %3748 = vmatpush1.bf16.msra.mxu0 0
    %3749 = vmatprep.subr.bf16.mxu0 0
    %3750 = vmatpush1.bf16.msra.mxu0 0
    %3751 = vmatprep.subr.bf16.mxu0 0
    %3752 = vmatpush1.bf16.msra.mxu0 0
    %3753 = vmatprep.subr.bf16.mxu0 0
    %3754 = vmatpush1.bf16.msra.mxu0 0
    %3755 = vmatprep.mubr.bf16.mxu0 0
    %3756 = vmatmul.mubr.bf16.gmra.mrb[0].mxu0 %v3661
    %v3757 = vpop.f32.mrb[0].mxu0
    %v3758 = vadd.f32 %v3719, %v3757
    %v3759 = vpop.f32.mrb[0].mxu0
    %v3760 = vpop.f32.mrb[0].mxu0
    %v3761 = vadd.f32 %v3719, %v3760
    %v3762 = vpop.f32.mrb[0].mxu0
    %3763 = vdwg.mxu0
    %v3764 = vsel %vm46, %v3758, -1e+30
    %v3765 = vsel %vm47, %v3761, -1e+30
    %v3766 = vlaneseq
    %v3767 = vshrl.u32 %v3766, 7
    %vm3768 = vcmask 7168
    %v3769 = vsel %vm3768, %v3764, -inf
    %v3770 = vrot.slane %v3769, 4
    %v3771 = vmax.f32 %v3769, %v3770
    %v3772 = vrot.slane %v3771, 2
    %v3773 = vmax.f32 %v3771, %v3772
    %v3774 = vrot.slane %v3773, 1
    %v3775 = vmax.f32 %v3773, %v3774
    %v3776 = vsub.f32 %v3764, %v3775
    %v3777 = vmul.f32 %v3776, 1.442695
    %v3778 = vpow.pop %v3777
    %v3779 = vmul.f32 %v3778, %v40
    %v3780 = vsel %vm3768, %v3779, 0.0
    %v3781 = vrot.slane %v3780, 4
    %v3782 = vadd.f32 %v3780, %v3781
    %v3783 = vrot.slane %v3782, 2
    %v3784 = vadd.f32 %v3782, %v3783
    %v3785 = vrot.slane %v3784, 1
    %v3786 = vadd.f32 %v3784, %v3785
    %v3787 = vmax.f32 %v3786, 1e-30
    %v3788 = vrcp.pop %v3787
    %v3789 = vmul.f32 %v3779, %v3788
    %3791 = vset.pattern.permute.xlu0 0
    %3792 = vperm.xlu0 %3791, %v3789
    %v3793 = vpop.permute.xlu0 %3792
    %v3795 = vmul.f32 %v3793, %v3707
    %v3796 = vsel %vm389, %v3795, 0.0
    %v3797 = vrot.slane %v3796, 4
    %v3798 = vadd.f32 %v3796, %v3797
    %v3799 = vrot.slane %v3798, 2
    %v3800 = vadd.f32 %v3798, %v3799
    %v3801 = vrot.slane %v3800, 1
    %v3802 = vadd.f32 %v3800, %v3801
    %vm3803 = vcmp.eq.s32.totalorder %v3767, 0
    %v3804 = vsel %vm3803, %v3802, 0.0
    %v3805 = vadd.f32 %v3804, 0.0
    %v3806 = vsel %vm3768, %v3765, -inf
    %v3807 = vrot.slane %v3806, 4
    %v3808 = vmax.f32 %v3806, %v3807
    %v3809 = vrot.slane %v3808, 2
    %v3810 = vmax.f32 %v3808, %v3809
    %v3811 = vrot.slane %v3810, 1
    %v3812 = vmax.f32 %v3810, %v3811
    %v3813 = vsub.f32 %v3765, %v3812
    %v3814 = vmul.f32 %v3813, 1.442695
    %v3815 = vpow.pop %v3814
    %v3816 = vmul.f32 %v3815, %v41
    %v3817 = vsel %vm3768, %v3816, 0.0
    %v3818 = vrot.slane %v3817, 4
    %v3819 = vadd.f32 %v3817, %v3818
    %v3820 = vrot.slane %v3819, 2
    %v3821 = vadd.f32 %v3819, %v3820
    %v3822 = vrot.slane %v3821, 1
    %v3823 = vadd.f32 %v3821, %v3822
    %v3824 = vmax.f32 %v3823, 1e-30
    %v3825 = vrcp.pop %v3824
    %v3826 = vmul.f32 %v3816, %v3825
    %3828 = vset.pattern.permute.xlu0 0
    %3829 = vperm.xlu0 %3828, %v3826
    %v3830 = vpop.permute.xlu0 %3829
    %v3832 = vmul.f32 %v3830, %v3708
    %v3833 = vsel %vm389, %v3832, 0.0
    %v3834 = vrot.slane %v3833, 4
    %v3835 = vadd.f32 %v3833, %v3834
    %v3836 = vrot.slane %v3835, 2
    %v3837 = vadd.f32 %v3835, %v3836
    %v3838 = vrot.slane %v3837, 1
    %v3839 = vadd.f32 %v3837, %v3838
    %vm3840 = vcmp.eq.s32.totalorder %v3767, 1
    %v3841 = vsel %vm3840, %v3839, 0.0
    %v3842 = vadd.f32 %v3805, %v3841
    %v3843 = vpack.c.bf16 %v3842, %v3842
    %v3844 = vld [vmem:[%s4 + $0x160] sm:$0xff]
    %v3845 = vld [vmem:[%s4 + $0x168] sm:$0xff]
    %v3846 = vld [vmem:[%s4 + $0x170] sm:$0xff]
    %v3847 = vld [vmem:[%s4 + $0x178] sm:$0xff]
    %v3848 = vpack.c.bf16 %v3845, %v3844
    %v3849 = vpack.c.bf16 %v3847, %v3846
    %v3850 = vld [vmem:[%s4 + $0x180] sm:$0x1]
    %v3851 = vlaneseq
    %v3852 = vshrl.u32 %v3851, 7
    %v3853 = vsub.s32 0, %v3852
    %v3854 = vrot.slane %v3850, %v3853
    %v3856 = vsel %vm389, %v3843, 0
    %3858 = vmatprep.subr.bf16.mxu0 0
    %3859 = vmatpush1.bf16.msra.mxu0 %v3848
    %3860 = vmatprep.subr.bf16.mxu0 0
    %3861 = vmatpush1.bf16.msra.mxu0 %v3849
    %3862 = vmatprep.subr.bf16.mxu0 0
    %3863 = vmatpush1.bf16.msra.mxu0 0
    %3864 = vmatprep.subr.bf16.mxu0 0
    %3865 = vmatpush1.bf16.msra.mxu0 0
    %3866 = vmatprep.subr.bf16.mxu0 0
    %3867 = vmatpush1.bf16.msra.mxu0 0
    %3868 = vmatprep.subr.bf16.mxu0 0
    %3869 = vmatpush1.bf16.msra.mxu0 0
    %3870 = vmatprep.subr.bf16.mxu0 0
    %3871 = vmatpush1.bf16.msra.mxu0 0
    %3872 = vmatprep.subr.bf16.mxu0 0
    %3873 = vmatpush1.bf16.msra.mxu0 0
    %3874 = vmatprep.subr.bf16.mxu0 0
    %3875 = vmatpush1.bf16.msra.mxu0 0
    %3876 = vmatprep.subr.bf16.mxu0 0
    %3877 = vmatpush1.bf16.msra.mxu0 0
    %3878 = vmatprep.subr.bf16.mxu0 0
    %3879 = vmatpush1.bf16.msra.mxu0 0
    %3880 = vmatprep.subr.bf16.mxu0 0
    %3881 = vmatpush1.bf16.msra.mxu0 0
    %3882 = vmatprep.subr.bf16.mxu0 0
    %3883 = vmatpush1.bf16.msra.mxu0 0
    %3884 = vmatprep.subr.bf16.mxu0 0
    %3885 = vmatpush1.bf16.msra.mxu0 0
    %3886 = vmatprep.subr.bf16.mxu0 0
    %3887 = vmatpush1.bf16.msra.mxu0 0
    %3888 = vmatprep.subr.bf16.mxu0 0
    %3889 = vmatpush1.bf16.msra.mxu0 0
    %3890 = vmatprep.mubr.bf16.mxu0 0
    %3891 = vmatmul.mubr.bf16.gmra.mrb[0].mxu0 %v3856
    %v3892 = vpop.f32.mrb[0].mxu0
    %v3893 = vadd.f32 %v3854, %v3892
    %v3894 = vpop.f32.mrb[0].mxu0
    %v3895 = vpop.f32.mrb[0].mxu0
    %v3896 = vpop.f32.mrb[0].mxu0
    %3897 = vdwg.mxu0
    %v3898 = vtanh.pop %v3893
    %v3899 = vpack.c.bf16 %v3898, %v3898
    %v3900 = vld [vmem:[%s4 + $0x188] sm:$0xff]
    %v3901 = vld [vmem:[%s4 + $0x190] sm:$0xff]
    %v3902 = vld [vmem:[%s4 + $0x198] sm:$0xff]
    %v3903 = vld [vmem:[%s4 + $0x1a0] sm:$0xff]
    %v3904 = vpack.c.bf16 %v3901, %v3900
    %v3905 = vpack.c.bf16 %v3903, %v3902
    %v3906 = vld [vmem:[%s4 + $0x1a8] sm:$0x1]
    %v3907 = vlaneseq
    %v3908 = vshrl.u32 %v3907, 7
    %v3909 = vsub.s32 0, %v3908
    %v3910 = vrot.slane %v3906, %v3909
    %v3912 = vsel %vm389, %v3899, 0
    %3914 = vmatprep.subr.bf16.mxu0 0
    %3915 = vmatpush1.bf16.msra.mxu0 %v3904
    %3916 = vmatprep.subr.bf16.mxu0 0
    %3917 = vmatpush1.bf16.msra.mxu0 %v3905
    %3918 = vmatprep.subr.bf16.mxu0 0
    %3919 = vmatpush1.bf16.msra.mxu0 0
    %3920 = vmatprep.subr.bf16.mxu0 0
    %3921 = vmatpush1.bf16.msra.mxu0 0
    %3922 = vmatprep.subr.bf16.mxu0 0
    %3923 = vmatpush1.bf16.msra.mxu0 0
    %3924 = vmatprep.subr.bf16.mxu0 0
    %3925 = vmatpush1.bf16.msra.mxu0 0
    %3926 = vmatprep.subr.bf16.mxu0 0
    %3927 = vmatpush1.bf16.msra.mxu0 0
    %3928 = vmatprep.subr.bf16.mxu0 0
    %3929 = vmatpush1.bf16.msra.mxu0 0
    %3930 = vmatprep.subr.bf16.mxu0 0
    %3931 = vmatpush1.bf16.msra.mxu0 0
    %3932 = vmatprep.subr.bf16.mxu0 0
    %3933 = vmatpush1.bf16.msra.mxu0 0
    %3934 = vmatprep.subr.bf16.mxu0 0
    %3935 = vmatpush1.bf16.msra.mxu0 0
    %3936 = vmatprep.subr.bf16.mxu0 0
    %3937 = vmatpush1.bf16.msra.mxu0 0
    %3938 = vmatprep.subr.bf16.mxu0 0
    %3939 = vmatpush1.bf16.msra.mxu0 0
    %3940 = vmatprep.subr.bf16.mxu0 0
    %3941 = vmatpush1.bf16.msra.mxu0 0
    %3942 = vmatprep.subr.bf16.mxu0 0
    %3943 = vmatpush1.bf16.msra.mxu0 0
    %3944 = vmatprep.subr.bf16.mxu0 0
    %3945 = vmatpush1.bf16.msra.mxu0 0
    %3946 = vmatprep.mubr.bf16.mxu0 0
    %3947 = vmatmul.mubr.bf16.gmra.mrb[0].mxu0 %v3912
    %v3948 = vpop.f32.mrb[0].mxu0
    %v3949 = vadd.f32 %v3910, %v3948
    %v3950 = vpop.f32.mrb[0].mxu0
    %v3951 = vpop.f32.mrb[0].mxu0
    %v3952 = vpop.f32.mrb[0].mxu0
    %3953 = vdwg.mxu0
    %3954 = vst [vmem:[#allocation6] sm:$0x3] %v3949
    %vm3955 = vcmp.eq.s32.totalorder %v916, 64
    %v3956 = vsel %vm3955, 1, 0
    %vm3957 = vcmp.eq.s32.totalorder %v3956, 1
    %v3958 = vsel %vm3957, %v2345, 0.0
    %v3959 = vsel %vm3957, %v2346, 0.0
    %v3960 = vadd.f32 %v913, %v3958
    %v3961 = vadd.f32 %v914, %v3959
    %vm3962 = vcmp.eq.s32.totalorder %v916, 65
    %v3963 = vsel %vm3962, 1, 0
    %vm3964 = vcmp.eq.s32.totalorder %v3963, 1
    %v3965 = vsel %vm3964, %v2359, 0.0
    %v3966 = vsel %vm3964, %v2360, 0.0
    %v3967 = vadd.f32 %v3960, %v3965
    %v3968 = vadd.f32 %v3961, %v3966
    %vm3969 = vcmp.eq.s32.totalorder %v916, 66
    %v3970 = vsel %vm3969, 1, 0
    %vm3971 = vcmp.eq.s32.totalorder %v3970, 1
    %v3972 = vsel %vm3971, %v2373, 0.0
    %v3973 = vsel %vm3971, %v2374, 0.0
    %v3974 = vadd.f32 %v3967, %v3972
    %v3975 = vadd.f32 %v3968, %v3973
    %vm3976 = vcmp.eq.s32.totalorder %v916, 67
    %v3977 = vsel %vm3976, 1, 0
    %vm3978 = vcmp.eq.s32.totalorder %v3977, 1
    %v3979 = vsel %vm3978, %v2387, 0.0
    %v3980 = vsel %vm3978, %v2388, 0.0
    %v3981 = vadd.f32 %v3974, %v3979
    %v3982 = vadd.f32 %v3975, %v3980
    %vm3983 = vcmp.eq.s32.totalorder %v916, 68
    %v3984 = vsel %vm3983, 1, 0
    %vm3985 = vcmp.eq.s32.totalorder %v3984, 1
    %v3986 = vsel %vm3985, %v2401, 0.0
    %v3987 = vsel %vm3985, %v2402, 0.0
    %v3988 = vadd.f32 %v3981, %v3986
    %v3989 = vadd.f32 %v3982, %v3987
    %3990 = vst [vmem:[%s5] sm:$0xff] %v3988
    %3991 = vst [vmem:[%s5 + $0x8] sm:$0xff] %v3989
    // Predicated region
    $region26: #{bipartite_attention_forward.1} parent=1 // pred_check
      _
    $region27: #{bipartite_attention_forward.1} parent=1 // pred_check_branch
      %3993 = sbr.rel (0) target = $region29
    $region28: #{bipartite_attention_forward.1} parent=1 // pred_region
      _
    $region29: #{bipartite_attention_forward.1} parent=1 // pred_fallthru
      _
    // Predicated region
    $region30: #{bipartite_attention_forward.1} parent=1 // pred_check
      _
    $region31: #{bipartite_attention_forward.1} parent=1 // pred_check_branch
      %3995 = sbr.rel (0) target = $region33
    $region32: #{bipartite_attention_forward.1} parent=1 // pred_region
      %s3997 = ssub.s32 32, 32
      %3998 = vsyncadd [#allocation5], %s3997
      %s4000 = sshll.u32 [#allocation6], 4
      %s4001 = int_to_ptr.vmem [resolvable:$true] %s4000
      %4003 = dma.vmem_to_hbm [thread:$0]  %s4001, 32, %s6, [#allocation5]
    $region33: #{bipartite_attention_forward.1} parent=1 // pred_fallthru
      _
    // Predicated region
    $region34: #{bipartite_attention_forward.1} parent=1 // pred_check
      _
    $region35: #{bipartite_attention_forward.1} parent=1 // pred_check_branch
      %4005 = sbr.rel (0) target = $region37
    $region36: #{bipartite_attention_forward.1} parent=1 // pred_region
      _
    $region37: #{bipartite_attention_forward.1} parent=1 // pred_fallthru
      _
    // Predicated region
    $region38: #{bipartite_attention_forward.1} parent=1 // pred_check
      _
    $region39: #{bipartite_attention_forward.1} parent=1 // pred_check_branch
      %4007 = sbr.rel (0) target = $region41
    $region40: #{bipartite_attention_forward.1} parent=1 // pred_region
      %4008 = dma.done [#allocation5], 32
    $region41: #{bipartite_attention_forward.1} parent=1 // pred_fallthru
      _
    %4009 = vsyncpa [#allocation4], 1
    %4010 = vsyncpa [#allocation5], 1

</llo_original>
